<compile_context>
chip_gen: v5e
topology: v5e:2x2
jax: 0.10.0
libtpu: 0.0.40
codegen_flags: <defaults>
</compile_context>

<pallas_src>
import jax
import jax.numpy as jnp
from jax.experimental import pallas as pl
from jax.experimental.pallas import tpu as pltpu


# ------------------------------ Pallas kernel -------------------------------

def _lenet_kernel(x_ref, w1_ref, b1_ref, c1e_ref, c1o_ref,
                  w2_ref, b2_ref, c2e_ref, c2o_ref,
                  f1_ref, fb1_ref, g_ref, w5_ref, fb2_ref, w6_ref, fb3_ref,
                  out_ref):
    f32, bf16 = jnp.float32, jnp.bfloat16
    xs = x_ref[...]                          # (n, 32) f32, n = TB*32 (row-stacked images)
    n = xs.shape[0]

    # ---- conv1 (1->6, k=5) + bias + ReLU. rows: 32 per image (valid 0..27); lane = wo*6+co
    L1 = n - 4
    y1 = jnp.dot(xs[0:L1, :].astype(bf16), w1_ref[0], preferred_element_type=f32)
    for kh in range(1, 5):
        y1 = y1 + jnp.dot(xs[kh:kh + L1, :].astype(bf16), w1_ref[kh],
                          preferred_element_type=f32)
    y1 = jnp.maximum(y1 + b1_ref[...], 0.0)                       # (n-4, 168) f32

    # ---- 2x2 max pool #1: H pairs via shifted VPU max (valid rows now at stride 2),
    #      W pairs via exact 0/1 lane-selector matmuls.
    m1 = jnp.maximum(y1[0:L1 - 1, :], y1[1:L1, :]).astype(bf16)   # (n-5, 168)
    p1 = jnp.maximum(jnp.dot(m1, c1e_ref[...], preferred_element_type=f32),
                     jnp.dot(m1, c1o_ref[...], preferred_element_type=f32))  # (n-5, 84)

    # ---- conv2 (6->16, k=5) + bias + ReLU (valid rows at stride 2 per image block)
    L2 = (n - 5) - 8
    y2 = jnp.dot(p1[0:L2, :].astype(bf16), w2_ref[0], preferred_element_type=f32)
    for kh in range(1, 5):
        y2 = y2 + jnp.dot(p1[2 * kh:2 * kh + L2, :].astype(bf16), w2_ref[kh],
                          preferred_element_type=f32)
    y2 = jnp.maximum(y2 + b2_ref[...], 0.0)                       # (n-13, 160) f32

    # ---- 2x2 max pool #2 (valid rows at stride 4 per image block)
    m2 = jnp.maximum(y2[0:L2 - 2, :], y2[2:L2, :]).astype(bf16)   # (n-15, 160)
    p2 = jnp.maximum(jnp.dot(m2, c2e_ref[...], preferred_element_type=f32),
                     jnp.dot(m2, c2o_ref[...], preferred_element_type=f32))  # (n-15, 80)

    # ---- fc1 (400->120): hp-banded dots; PyTorch NCHW flatten folded into F1's layout
    L3 = (n - 15) - 16
    zf = jnp.dot(p2[0:L3, :].astype(bf16), f1_ref[0], preferred_element_type=f32)
    for hp in range(1, 5):
        zf = zf + jnp.dot(p2[4 * hp:4 * hp + L3, :].astype(bf16), f1_ref[hp],
                          preferred_element_type=f32)             # (n-31, 120) f32

    # ---- compact the one valid fc1 row per image (row 32*b) with a tiny one-hot matmul
    z = jnp.dot(g_ref[...], zf.astype(bf16), preferred_element_type=f32)  # (TB, 120)
    z = jnp.maximum(z + fb1_ref[...], 0.0)

    # ---- fc2 (120->84) + ReLU, fc3 (84->10)
    z = jnp.maximum(jnp.dot(z.astype(bf16), w5_ref[...], preferred_element_type=f32)
                    + fb2_ref[...], 0.0)
    z = jnp.dot(z.astype(bf16), w6_ref[...], preferred_element_type=f32) + fb3_ref[...]

    out_ref[...] = z.astype(out_ref.dtype)                        # (TB, 10) logits


# ---------------------------- weight lowering (runs ONCE) --------------------

def _lower_params(params, tb):
    """Lower PyTorch-layout params to bf16 matmul operands for the packed row-stacked layout."""
    w1, b1, w2, b2, fw1, fb1, fw2, fb2, fw3, fb3 = params
    bf16, f32 = jnp.bfloat16, jnp.float32
    kw = jnp.arange(5)

    # conv1: W1[kh, win, wo*6+co] = w1[co, 0, kh, win-wo]  (0 <= win-wo < 5)
    win1, wo1 = jnp.arange(32), jnp.arange(28)
    e1 = (win1[None, :, None] == (wo1[None, None, :] + kw[:, None, None])).astype(f32)
    w1t = jnp.transpose(w1[:, 0, :, :], (1, 2, 0))                    # (kh, kw, co)
    W1 = jnp.einsum('xvw,hxc->hvwc', e1, w1t).reshape(5, 32, 28 * 6).astype(bf16)
    b1row = jnp.tile(b1, 28)[None, :].astype(f32)                     # (1, 168)

    # conv2: W2[kh, wpin*6+ci, wo*16+co] = w2[co, ci, kh, wpin-wo]
    win2, wo2 = jnp.arange(14), jnp.arange(10)
    e2 = (win2[None, :, None] == (wo2[None, None, :] + kw[:, None, None])).astype(f32)
    w2t = jnp.transpose(w2, (2, 3, 1, 0))                             # (kh, kw, ci, co)
    W2 = jnp.einsum('xvw,hxic->hviwc', e2, w2t).reshape(5, 14 * 6, 10 * 16).astype(bf16)
    b2row = jnp.tile(b2, 10)[None, :].astype(f32)                     # (1, 160)

    # 2x2 pool W-direction (lane) selectors: exact 0/1, representable exactly in bf16
    def lane_sel(n_w_in, n_c, n_w_out):
        r = jnp.arange(n_w_in * n_c)[:, None]
        q = jnp.arange(n_w_out * n_c)[None, :]
        wp, c = q // n_c, q % n_c
        ce = (r == (2 * wp) * n_c + c).astype(bf16)
        co = (r == (2 * wp + 1) * n_c + c).astype(bf16)
        return ce, co
    C1e, C1o = lane_sel(28, 6, 14)                                    # (168, 84)
    C2e, C2o = lane_sel(10, 16, 5)                                    # (160, 80)

    # fc1: fold PyTorch NCHW flatten (idx = c*25 + hp*5 + wp) into (hp, lane=wp*16+c, j)
    F1 = jnp.transpose(fw1.reshape(120, 16, 5, 5), (2, 3, 1, 0)).reshape(5, 80, 120).astype(bf16)
    fb1row = fb1[None, :].astype(f32)

    # one-hot row-compaction matrix: picks row 32*b (the single valid fc1 row per image)
    L3 = tb * 32 - 31
    G = (jnp.arange(L3)[None, :] == 32 * jnp.arange(tb)[:, None]).astype(bf16)   # (TB, L3)

    W5, fb2row = fw2.T.astype(bf16), fb2[None, :].astype(f32)         # (120, 84), (1, 84)
    W6, fb3row = fw3.T.astype(bf16), fb3[None, :].astype(f32)         # (84, 10),  (1, 10)

    return (W1, b1row, C1e, C1o, W2, b2row, C2e, C2o, F1, fb1row, G, W5, fb2row, W6, fb3row)


# ------------------------------- forward -------------------------------------

def _const_spec(a):
    nd = a.ndim
    return pl.BlockSpec(a.shape, lambda b, _nd=nd: (0,) * _nd)


def _lenet_pallas(x2d, low, tb):
    n_imgs = x2d.shape[0] // 32
    in_specs = [pl.BlockSpec((tb * 32, 32), lambda b: (b, 0))]
    in_specs += [_const_spec(a) for a in low]
    return pl.pallas_call(
        _lenet_kernel,
        out_shape=jax.ShapeDtypeStruct((n_imgs, 10), jnp.float32),
        grid=(n_imgs // tb,),
        in_specs=in_specs,
        out_specs=pl.BlockSpec((tb, 10), lambda b: (b, 0)),
        compiler_params=pltpu.CompilerParams(dimension_semantics=("parallel",)),
    )(x2d, *low)


def make_net_forward(params, tb=8):
    """Lower weights once, return a jitted forward. tb*32 rows per dot (>=256 fills the
    v6e/v7x MXU; >=128 for v5e). Keep batch/tb >= 2 so v7x uses both TensorCores."""
    assert tb % 8 == 0, "tb must be a multiple of 8 (sublane tiling of the output block)"
    low = _lower_params(params, tb)

    @jax.jit
    def fwd(x):                                # x: (B, 1, 32, 32) f32
        B = x.shape[0]
        bp = ((B + tb - 1) // tb) * tb
        xp = x if bp == B else jnp.pad(x, ((0, bp - B), (0, 0), (0, 0), (0, 0)))
        x2d = xp.reshape(bp * 32, 32)          # row-stack images (free reshape in HBM)
        return _lenet_pallas(x2d, low, tb)[:B]

    return fwd


# ------------------------------ reference ------------------------------------

def reference_forward(x, params):
    """Pure-JAX reference (lax conv / reduce_window) for correctness checking."""
    w1, b1, w2, b2, fw1, fb1, fw2, fb2, fw3, fb3 = params

    def conv(x, w, b):
        y = jax.lax.conv_general_dilated(
            x, w, (1, 1), 'VALID', dimension_numbers=('NCHW', 'OIHW', 'NCHW'))
        return y + b[None, :, None, None]

    def pool(x):
        return jax.lax.reduce_window(x, -jnp.inf, jax.lax.max,
                                     (1, 1, 2, 2), (1, 1, 2, 2), 'VALID')

    y = pool(jax.nn.relu(conv(x, w1, b1)))
    y = pool(jax.nn.relu(conv(y, w2, b2)))
    y = y.reshape(x.shape[0], -1)
    y = jax.nn.relu(y @ fw1.T + fb1)
    y = jax.nn.relu(y @ fw2.T + fb2)
    return y @ fw3.T + fb3


def init_params(key):
    """PyTorch-default-style U(-1/sqrt(fan_in), 1/sqrt(fan_in)) parameters."""
    def uni(k, shape, fan_in):
        bound = 1.0 / jnp.sqrt(fan_in)
        return jax.random.uniform(k, shape, jnp.float32, -bound, bound)

    ks = jax.random.split(key, 10)
    w1 = uni(ks[0], (6, 1, 5, 5), 1 * 5 * 5)
    b1 = uni(ks[1], (6,), 1 * 5 * 5)
    w2 = uni(ks[2], (16, 6, 5, 5), 6 * 5 * 5)
    b2 = uni(ks[3], (16,), 6 * 5 * 5)
    fw1 = uni(ks[4], (120, 400), 400)
    fb1 = uni(ks[5], (120,), 400)
    fw2 = uni(ks[6], (84, 120), 120)
    fb2 = uni(ks[7], (84,), 120)
    fw3 = uni(ks[8], (10, 84), 84)
    fb3 = uni(ks[9], (10,), 84)
    return (w1, b1, w2, b2, fw1, fb1, fw2, fb2, fw3, fb3)


if __name__ == "__main__":
    key = jax.random.PRNGKey(0)
    k_x, k_p = jax.random.split(key)
    # LeNet geometry requires 32x32 single-channel input; batch 16 with TB=8 -> 2 grid steps.
    B = 16
    x = jax.random.normal(k_x, (B, 1, 32, 32), jnp.float32)
    params = init_params(k_p)

    fwd = make_net_forward(params, tb=8)       # weight lowering hoisted: runs once here
    out = jax.block_until_ready(fwd(x))
    ref = jax.block_until_ready(reference_forward(x, params))

    assert out.shape == (B, 10), out.shape
    assert bool(jnp.all(jnp.isfinite(out)))
    # bf16 matmul operands with f32 accumulation -> tolerance slightly looser than f32.
    assert jnp.allclose(out, ref, rtol=2e-2, atol=2e-2), (
        f"max abs err {float(jnp.max(jnp.abs(out - ref)))}")
    print("KERNEL_OK")
</pallas_src>

<mosaic_0001>
module attributes {stable_mosaic.version = 11 : i64} {
  func.func @_lenet_kernel(%arg0: i32, %arg1: memref<256x32xf32, #tpu.memory_space<vmem>>, %arg2: memref<5x32x168xbf16, #tpu.memory_space<vmem>>, %arg3: memref<1x168xf32, #tpu.memory_space<vmem>>, %arg4: memref<168x84xbf16, #tpu.memory_space<vmem>>, %arg5: memref<168x84xbf16, #tpu.memory_space<vmem>>, %arg6: memref<5x84x160xbf16, #tpu.memory_space<vmem>>, %arg7: memref<1x160xf32, #tpu.memory_space<vmem>>, %arg8: memref<160x80xbf16, #tpu.memory_space<vmem>>, %arg9: memref<160x80xbf16, #tpu.memory_space<vmem>>, %arg10: memref<5x80x120xbf16, #tpu.memory_space<vmem>>, %arg11: memref<1x120xf32, #tpu.memory_space<vmem>>, %arg12: memref<8x225xbf16, #tpu.memory_space<vmem>>, %arg13: memref<120x84xbf16, #tpu.memory_space<vmem>>, %arg14: memref<1x84xf32, #tpu.memory_space<vmem>>, %arg15: memref<84x10xbf16, #tpu.memory_space<vmem>>, %arg16: memref<1x10xf32, #tpu.memory_space<vmem>>, %arg17: memref<8x10xf32, #tpu.memory_space<vmem>>) attributes {dimension_semantics = [#tpu.dimension_semantics<parallel>], iteration_bounds = array<i64: 2>, scalar_prefetch = 0 : i64, scratch_operands = 0 : i64, tpu.core_type = #tpu.core_type<tc>, window_params = [{transform_indices = @transform_0, window_bounds = array<i64: 256, 32>}, {pipeline_mode = #tpu.pipeline_mode<synchronous>, transform_indices = @transform_1, window_bounds = array<i64: 5, 32, 168>}, {pipeline_mode = #tpu.pipeline_mode<synchronous>, transform_indices = @transform_2, window_bounds = array<i64: 1, 168>}, {pipeline_mode = #tpu.pipeline_mode<synchronous>, transform_indices = @transform_3, window_bounds = array<i64: 168, 84>}, {pipeline_mode = #tpu.pipeline_mode<synchronous>, transform_indices = @transform_4, window_bounds = array<i64: 168, 84>}, {pipeline_mode = #tpu.pipeline_mode<synchronous>, transform_indices = @transform_5, window_bounds = array<i64: 5, 84, 160>}, {pipeline_mode = #tpu.pipeline_mode<synchronous>, transform_indices = @transform_6, window_bounds = array<i64: 1, 160>}, {pipeline_mode = #tpu.pipeline_mode<synchronous>, transform_indices = @transform_7, window_bounds = array<i64: 160, 80>}, {pipeline_mode = #tpu.pipeline_mode<synchronous>, transform_indices = @transform_8, window_bounds = array<i64: 160, 80>}, {pipeline_mode = #tpu.pipeline_mode<synchronous>, transform_indices = @transform_9, window_bounds = array<i64: 5, 80, 120>}, {pipeline_mode = #tpu.pipeline_mode<synchronous>, transform_indices = @transform_10, window_bounds = array<i64: 1, 120>}, {pipeline_mode = #tpu.pipeline_mode<synchronous>, transform_indices = @transform_11, window_bounds = array<i64: 8, 225>}, {pipeline_mode = #tpu.pipeline_mode<synchronous>, transform_indices = @transform_12, window_bounds = array<i64: 120, 84>}, {pipeline_mode = #tpu.pipeline_mode<synchronous>, transform_indices = @transform_13, window_bounds = array<i64: 1, 84>}, {pipeline_mode = #tpu.pipeline_mode<synchronous>, transform_indices = @transform_14, window_bounds = array<i64: 84, 10>}, {pipeline_mode = #tpu.pipeline_mode<synchronous>, transform_indices = @transform_15, window_bounds = array<i64: 1, 10>}, {transform_indices = @transform_16, window_bounds = array<i64: 8, 10>}]} {
    %c0 = arith.constant 0 : index
    %c0_0 = arith.constant 0 : index
    %0 = vector.load %arg1[%c0, %c0_0] : memref<256x32xf32, #tpu.memory_space<vmem>>, vector<256x32xf32>
    %1 = vector.extract_strided_slice %0 {offsets = [0, 0], sizes = [252, 32], strides = [1, 1]} : vector<256x32xf32> to vector<252x32xf32>
    %2 = arith.truncf %1 : vector<252x32xf32> to vector<252x32xbf16>
    %c0_1 = arith.constant 0 : index
    %c0_2 = arith.constant 0 : index
    %c0_3 = arith.constant 0 : index
    %3 = vector.load %arg2[%c0_1, %c0_2, %c0_3] : memref<5x32x168xbf16, #tpu.memory_space<vmem>>, vector<1x32x168xbf16>
    %4 = vector.shape_cast %3 : vector<1x32x168xbf16> to vector<32x168xbf16>
    %cst = arith.constant dense<0.000000e+00> : vector<252x168xf32>
    %5 = tpu.matmul %2, %4, %cst {dimension_numbers = #tpu.dot_dimension_numbers<[1], [0], [0], [1], [0, 0, 1, 1], [], []>} : vector<252x32xbf16>, vector<32x168xbf16>, vector<252x168xf32> -> vector<252x168xf32>
    %6 = vector.extract_strided_slice %0 {offsets = [1, 0], sizes = [252, 32], strides = [1, 1]} : vector<256x32xf32> to vector<252x32xf32>
    %7 = arith.truncf %6 : vector<252x32xf32> to vector<252x32xbf16>
    %c1 = arith.constant 1 : index
    %c0_4 = arith.constant 0 : index
    %c0_5 = arith.constant 0 : index
    %8 = vector.load %arg2[%c1, %c0_4, %c0_5] : memref<5x32x168xbf16, #tpu.memory_space<vmem>>, vector<1x32x168xbf16>
    %9 = vector.shape_cast %8 : vector<1x32x168xbf16> to vector<32x168xbf16>
    %cst_6 = arith.constant dense<0.000000e+00> : vector<252x168xf32>
    %10 = tpu.matmul %7, %9, %cst_6 {dimension_numbers = #tpu.dot_dimension_numbers<[1], [0], [0], [1], [0, 0, 1, 1], [], []>} : vector<252x32xbf16>, vector<32x168xbf16>, vector<252x168xf32> -> vector<252x168xf32>
    %11 = arith.addf %5, %10 : vector<252x168xf32>
    %12 = vector.extract_strided_slice %0 {offsets = [2, 0], sizes = [252, 32], strides = [1, 1]} : vector<256x32xf32> to vector<252x32xf32>
    %13 = arith.truncf %12 : vector<252x32xf32> to vector<252x32xbf16>
    %c2 = arith.constant 2 : index
    %c0_7 = arith.constant 0 : index
    %c0_8 = arith.constant 0 : index
    %14 = vector.load %arg2[%c2, %c0_7, %c0_8] : memref<5x32x168xbf16, #tpu.memory_space<vmem>>, vector<1x32x168xbf16>
    %15 = vector.shape_cast %14 : vector<1x32x168xbf16> to vector<32x168xbf16>
    %cst_9 = arith.constant dense<0.000000e+00> : vector<252x168xf32>
    %16 = tpu.matmul %13, %15, %cst_9 {dimension_numbers = #tpu.dot_dimension_numbers<[1], [0], [0], [1], [0, 0, 1, 1], [], []>} : vector<252x32xbf16>, vector<32x168xbf16>, vector<252x168xf32> -> vector<252x168xf32>
    %17 = arith.addf %11, %16 : vector<252x168xf32>
    %18 = vector.extract_strided_slice %0 {offsets = [3, 0], sizes = [252, 32], strides = [1, 1]} : vector<256x32xf32> to vector<252x32xf32>
    %19 = arith.truncf %18 : vector<252x32xf32> to vector<252x32xbf16>
    %c3 = arith.constant 3 : index
    %c0_10 = arith.constant 0 : index
    %c0_11 = arith.constant 0 : index
    %20 = vector.load %arg2[%c3, %c0_10, %c0_11] : memref<5x32x168xbf16, #tpu.memory_space<vmem>>, vector<1x32x168xbf16>
    %21 = vector.shape_cast %20 : vector<1x32x168xbf16> to vector<32x168xbf16>
    %cst_12 = arith.constant dense<0.000000e+00> : vector<252x168xf32>
    %22 = tpu.matmul %19, %21, %cst_12 {dimension_numbers = #tpu.dot_dimension_numbers<[1], [0], [0], [1], [0, 0, 1, 1], [], []>} : vector<252x32xbf16>, vector<32x168xbf16>, vector<252x168xf32> -> vector<252x168xf32>
    %23 = arith.addf %17, %22 : vector<252x168xf32>
    %24 = vector.extract_strided_slice %0 {offsets = [4, 0], sizes = [252, 32], strides = [1, 1]} : vector<256x32xf32> to vector<252x32xf32>
    %25 = arith.truncf %24 : vector<252x32xf32> to vector<252x32xbf16>
    %c4 = arith.constant 4 : index
    %c0_13 = arith.constant 0 : index
    %c0_14 = arith.constant 0 : index
    %26 = vector.load %arg2[%c4, %c0_13, %c0_14] : memref<5x32x168xbf16, #tpu.memory_space<vmem>>, vector<1x32x168xbf16>
    %27 = vector.shape_cast %26 : vector<1x32x168xbf16> to vector<32x168xbf16>
    %cst_15 = arith.constant dense<0.000000e+00> : vector<252x168xf32>
    %28 = tpu.matmul %25, %27, %cst_15 {dimension_numbers = #tpu.dot_dimension_numbers<[1], [0], [0], [1], [0, 0, 1, 1], [], []>} : vector<252x32xbf16>, vector<32x168xbf16>, vector<252x168xf32> -> vector<252x168xf32>
    %29 = arith.addf %23, %28 : vector<252x168xf32>
    %c0_16 = arith.constant 0 : index
    %c0_17 = arith.constant 0 : index
    %30 = vector.load %arg3[%c0_16, %c0_17] : memref<1x168xf32, #tpu.memory_space<vmem>>, vector<1x168xf32>
    %31 = vector.broadcast %30 : vector<1x168xf32> to vector<252x168xf32>
    %32 = arith.addf %29, %31 : vector<252x168xf32>
    %cst_18 = arith.constant 0.000000e+00 : f32
    %33 = vector.broadcast %cst_18 : f32 to vector<252x168xf32>
    %34 = arith.maximumf %32, %33 : vector<252x168xf32>
    %35 = vector.extract_strided_slice %34 {offsets = [0, 0], sizes = [251, 168], strides = [1, 1]} : vector<252x168xf32> to vector<251x168xf32>
    %36 = vector.extract_strided_slice %34 {offsets = [1, 0], sizes = [251, 168], strides = [1, 1]} : vector<252x168xf32> to vector<251x168xf32>
    %37 = arith.maximumf %35, %36 : vector<251x168xf32>
    %38 = arith.truncf %37 : vector<251x168xf32> to vector<251x168xbf16>
    %c0_19 = arith.constant 0 : index
    %c0_20 = arith.constant 0 : index
    %39 = vector.load %arg4[%c0_19, %c0_20] : memref<168x84xbf16, #tpu.memory_space<vmem>>, vector<168x84xbf16>
    %cst_21 = arith.constant dense<0.000000e+00> : vector<251x84xf32>
    %40 = tpu.matmul %38, %39, %cst_21 {dimension_numbers = #tpu.dot_dimension_numbers<[1], [0], [0], [1], [0, 0, 1, 1], [], []>} : vector<251x168xbf16>, vector<168x84xbf16>, vector<251x84xf32> -> vector<251x84xf32>
    %c0_22 = arith.constant 0 : index
    %c0_23 = arith.constant 0 : index
    %41 = vector.load %arg5[%c0_22, %c0_23] : memref<168x84xbf16, #tpu.memory_space<vmem>>, vector<168x84xbf16>
    %cst_24 = arith.constant dense<0.000000e+00> : vector<251x84xf32>
    %42 = tpu.matmul %38, %41, %cst_24 {dimension_numbers = #tpu.dot_dimension_numbers<[1], [0], [0], [1], [0, 0, 1, 1], [], []>} : vector<251x168xbf16>, vector<168x84xbf16>, vector<251x84xf32> -> vector<251x84xf32>
    %43 = arith.maximumf %40, %42 : vector<251x84xf32>
    %44 = vector.extract_strided_slice %43 {offsets = [0, 0], sizes = [243, 84], strides = [1, 1]} : vector<251x84xf32> to vector<243x84xf32>
    %45 = arith.truncf %44 : vector<243x84xf32> to vector<243x84xbf16>
    %c0_25 = arith.constant 0 : index
    %c0_26 = arith.constant 0 : index
    %c0_27 = arith.constant 0 : index
    %46 = vector.load %arg6[%c0_25, %c0_26, %c0_27] : memref<5x84x160xbf16, #tpu.memory_space<vmem>>, vector<1x84x160xbf16>
    %47 = vector.shape_cast %46 : vector<1x84x160xbf16> to vector<84x160xbf16>
    %cst_28 = arith.constant dense<0.000000e+00> : vector<243x160xf32>
    %48 = tpu.matmul %45, %47, %cst_28 {dimension_numbers = #tpu.dot_dimension_numbers<[1], [0], [0], [1], [0, 0, 1, 1], [], []>} : vector<243x84xbf16>, vector<84x160xbf16>, vector<243x160xf32> -> vector<243x160xf32>
    %49 = vector.extract_strided_slice %43 {offsets = [2, 0], sizes = [243, 84], strides = [1, 1]} : vector<251x84xf32> to vector<243x84xf32>
    %50 = arith.truncf %49 : vector<243x84xf32> to vector<243x84xbf16>
    %c1_29 = arith.constant 1 : index
    %c0_30 = arith.constant 0 : index
    %c0_31 = arith.constant 0 : index
    %51 = vector.load %arg6[%c1_29, %c0_30, %c0_31] : memref<5x84x160xbf16, #tpu.memory_space<vmem>>, vector<1x84x160xbf16>
    %52 = vector.shape_cast %51 : vector<1x84x160xbf16> to vector<84x160xbf16>
    %cst_32 = arith.constant dense<0.000000e+00> : vector<243x160xf32>
    %53 = tpu.matmul %50, %52, %cst_32 {dimension_numbers = #tpu.dot_dimension_numbers<[1], [0], [0], [1], [0, 0, 1, 1], [], []>} : vector<243x84xbf16>, vector<84x160xbf16>, vector<243x160xf32> -> vector<243x160xf32>
    %54 = arith.addf %48, %53 : vector<243x160xf32>
    %55 = vector.extract_strided_slice %43 {offsets = [4, 0], sizes = [243, 84], strides = [1, 1]} : vector<251x84xf32> to vector<243x84xf32>
    %56 = arith.truncf %55 : vector<243x84xf32> to vector<243x84xbf16>
    %c2_33 = arith.constant 2 : index
    %c0_34 = arith.constant 0 : index
    %c0_35 = arith.constant 0 : index
    %57 = vector.load %arg6[%c2_33, %c0_34, %c0_35] : memref<5x84x160xbf16, #tpu.memory_space<vmem>>, vector<1x84x160xbf16>
    %58 = vector.shape_cast %57 : vector<1x84x160xbf16> to vector<84x160xbf16>
    %cst_36 = arith.constant dense<0.000000e+00> : vector<243x160xf32>
    %59 = tpu.matmul %56, %58, %cst_36 {dimension_numbers = #tpu.dot_dimension_numbers<[1], [0], [0], [1], [0, 0, 1, 1], [], []>} : vector<243x84xbf16>, vector<84x160xbf16>, vector<243x160xf32> -> vector<243x160xf32>
    %60 = arith.addf %54, %59 : vector<243x160xf32>
    %61 = vector.extract_strided_slice %43 {offsets = [6, 0], sizes = [243, 84], strides = [1, 1]} : vector<251x84xf32> to vector<243x84xf32>
    %62 = arith.truncf %61 : vector<243x84xf32> to vector<243x84xbf16>
    %c3_37 = arith.constant 3 : index
    %c0_38 = arith.constant 0 : index
    %c0_39 = arith.constant 0 : index
    %63 = vector.load %arg6[%c3_37, %c0_38, %c0_39] : memref<5x84x160xbf16, #tpu.memory_space<vmem>>, vector<1x84x160xbf16>
    %64 = vector.shape_cast %63 : vector<1x84x160xbf16> to vector<84x160xbf16>
    %cst_40 = arith.constant dense<0.000000e+00> : vector<243x160xf32>
    %65 = tpu.matmul %62, %64, %cst_40 {dimension_numbers = #tpu.dot_dimension_numbers<[1], [0], [0], [1], [0, 0, 1, 1], [], []>} : vector<243x84xbf16>, vector<84x160xbf16>, vector<243x160xf32> -> vector<243x160xf32>
    %66 = arith.addf %60, %65 : vector<243x160xf32>
    %67 = vector.extract_strided_slice %43 {offsets = [8, 0], sizes = [243, 84], strides = [1, 1]} : vector<251x84xf32> to vector<243x84xf32>
    %68 = arith.truncf %67 : vector<243x84xf32> to vector<243x84xbf16>
    %c4_41 = arith.constant 4 : index
    %c0_42 = arith.constant 0 : index
    %c0_43 = arith.constant 0 : index
    %69 = vector.load %arg6[%c4_41, %c0_42, %c0_43] : memref<5x84x160xbf16, #tpu.memory_space<vmem>>, vector<1x84x160xbf16>
    %70 = vector.shape_cast %69 : vector<1x84x160xbf16> to vector<84x160xbf16>
    %cst_44 = arith.constant dense<0.000000e+00> : vector<243x160xf32>
    %71 = tpu.matmul %68, %70, %cst_44 {dimension_numbers = #tpu.dot_dimension_numbers<[1], [0], [0], [1], [0, 0, 1, 1], [], []>} : vector<243x84xbf16>, vector<84x160xbf16>, vector<243x160xf32> -> vector<243x160xf32>
    %72 = arith.addf %66, %71 : vector<243x160xf32>
    %c0_45 = arith.constant 0 : index
    %c0_46 = arith.constant 0 : index
    %73 = vector.load %arg7[%c0_45, %c0_46] : memref<1x160xf32, #tpu.memory_space<vmem>>, vector<1x160xf32>
    %74 = vector.broadcast %73 : vector<1x160xf32> to vector<243x160xf32>
    %75 = arith.addf %72, %74 : vector<243x160xf32>
    %cst_47 = arith.constant 0.000000e+00 : f32
    %76 = vector.broadcast %cst_47 : f32 to vector<243x160xf32>
    %77 = arith.maximumf %75, %76 : vector<243x160xf32>
    %78 = vector.extract_strided_slice %77 {offsets = [0, 0], sizes = [241, 160], strides = [1, 1]} : vector<243x160xf32> to vector<241x160xf32>
    %79 = vector.extract_strided_slice %77 {offsets = [2, 0], sizes = [241, 160], strides = [1, 1]} : vector<243x160xf32> to vector<241x160xf32>
    %80 = arith.maximumf %78, %79 : vector<241x160xf32>
    %81 = arith.truncf %80 : vector<241x160xf32> to vector<241x160xbf16>
    %c0_48 = arith.constant 0 : index
    %c0_49 = arith.constant 0 : index
    %82 = vector.load %arg8[%c0_48, %c0_49] : memref<160x80xbf16, #tpu.memory_space<vmem>>, vector<160x80xbf16>
    %cst_50 = arith.constant dense<0.000000e+00> : vector<241x80xf32>
    %83 = tpu.matmul %81, %82, %cst_50 {dimension_numbers = #tpu.dot_dimension_numbers<[1], [0], [0], [1], [0, 0, 1, 1], [], []>} : vector<241x160xbf16>, vector<160x80xbf16>, vector<241x80xf32> -> vector<241x80xf32>
    %c0_51 = arith.constant 0 : index
    %c0_52 = arith.constant 0 : index
    %84 = vector.load %arg9[%c0_51, %c0_52] : memref<160x80xbf16, #tpu.memory_space<vmem>>, vector<160x80xbf16>
    %cst_53 = arith.constant dense<0.000000e+00> : vector<241x80xf32>
    %85 = tpu.matmul %81, %84, %cst_53 {dimension_numbers = #tpu.dot_dimension_numbers<[1], [0], [0], [1], [0, 0, 1, 1], [], []>} : vector<241x160xbf16>, vector<160x80xbf16>, vector<241x80xf32> -> vector<241x80xf32>
    %86 = arith.maximumf %83, %85 : vector<241x80xf32>
    %87 = vector.extract_strided_slice %86 {offsets = [0, 0], sizes = [225, 80], strides = [1, 1]} : vector<241x80xf32> to vector<225x80xf32>
    %88 = arith.truncf %87 : vector<225x80xf32> to vector<225x80xbf16>
    %c0_54 = arith.constant 0 : index
    %c0_55 = arith.constant 0 : index
    %c0_56 = arith.constant 0 : index
    %89 = vector.load %arg10[%c0_54, %c0_55, %c0_56] : memref<5x80x120xbf16, #tpu.memory_space<vmem>>, vector<1x80x120xbf16>
    %90 = vector.shape_cast %89 : vector<1x80x120xbf16> to vector<80x120xbf16>
    %cst_57 = arith.constant dense<0.000000e+00> : vector<225x120xf32>
    %91 = tpu.matmul %88, %90, %cst_57 {dimension_numbers = #tpu.dot_dimension_numbers<[1], [0], [0], [1], [0, 0, 1, 1], [], []>} : vector<225x80xbf16>, vector<80x120xbf16>, vector<225x120xf32> -> vector<225x120xf32>
    %92 = vector.extract_strided_slice %86 {offsets = [4, 0], sizes = [225, 80], strides = [1, 1]} : vector<241x80xf32> to vector<225x80xf32>
    %93 = arith.truncf %92 : vector<225x80xf32> to vector<225x80xbf16>
    %c1_58 = arith.constant 1 : index
    %c0_59 = arith.constant 0 : index
    %c0_60 = arith.constant 0 : index
    %94 = vector.load %arg10[%c1_58, %c0_59, %c0_60] : memref<5x80x120xbf16, #tpu.memory_space<vmem>>, vector<1x80x120xbf16>
    %95 = vector.shape_cast %94 : vector<1x80x120xbf16> to vector<80x120xbf16>
    %cst_61 = arith.constant dense<0.000000e+00> : vector<225x120xf32>
    %96 = tpu.matmul %93, %95, %cst_61 {dimension_numbers = #tpu.dot_dimension_numbers<[1], [0], [0], [1], [0, 0, 1, 1], [], []>} : vector<225x80xbf16>, vector<80x120xbf16>, vector<225x120xf32> -> vector<225x120xf32>
    %97 = arith.addf %91, %96 : vector<225x120xf32>
    %98 = vector.extract_strided_slice %86 {offsets = [8, 0], sizes = [225, 80], strides = [1, 1]} : vector<241x80xf32> to vector<225x80xf32>
    %99 = arith.truncf %98 : vector<225x80xf32> to vector<225x80xbf16>
    %c2_62 = arith.constant 2 : index
    %c0_63 = arith.constant 0 : index
    %c0_64 = arith.constant 0 : index
    %100 = vector.load %arg10[%c2_62, %c0_63, %c0_64] : memref<5x80x120xbf16, #tpu.memory_space<vmem>>, vector<1x80x120xbf16>
    %101 = vector.shape_cast %100 : vector<1x80x120xbf16> to vector<80x120xbf16>
    %cst_65 = arith.constant dense<0.000000e+00> : vector<225x120xf32>
    %102 = tpu.matmul %99, %101, %cst_65 {dimension_numbers = #tpu.dot_dimension_numbers<[1], [0], [0], [1], [0, 0, 1, 1], [], []>} : vector<225x80xbf16>, vector<80x120xbf16>, vector<225x120xf32> -> vector<225x120xf32>
    %103 = arith.addf %97, %102 : vector<225x120xf32>
    %104 = vector.extract_strided_slice %86 {offsets = [12, 0], sizes = [225, 80], strides = [1, 1]} : vector<241x80xf32> to vector<225x80xf32>
    %105 = arith.truncf %104 : vector<225x80xf32> to vector<225x80xbf16>
    %c3_66 = arith.constant 3 : index
    %c0_67 = arith.constant 0 : index
    %c0_68 = arith.constant 0 : index
    %106 = vector.load %arg10[%c3_66, %c0_67, %c0_68] : memref<5x80x120xbf16, #tpu.memory_space<vmem>>, vector<1x80x120xbf16>
    %107 = vector.shape_cast %106 : vector<1x80x120xbf16> to vector<80x120xbf16>
    %cst_69 = arith.constant dense<0.000000e+00> : vector<225x120xf32>
    %108 = tpu.matmul %105, %107, %cst_69 {dimension_numbers = #tpu.dot_dimension_numbers<[1], [0], [0], [1], [0, 0, 1, 1], [], []>} : vector<225x80xbf16>, vector<80x120xbf16>, vector<225x120xf32> -> vector<225x120xf32>
    %109 = arith.addf %103, %108 : vector<225x120xf32>
    %110 = vector.extract_strided_slice %86 {offsets = [16, 0], sizes = [225, 80], strides = [1, 1]} : vector<241x80xf32> to vector<225x80xf32>
    %111 = arith.truncf %110 : vector<225x80xf32> to vector<225x80xbf16>
    %c4_70 = arith.constant 4 : index
    %c0_71 = arith.constant 0 : index
    %c0_72 = arith.constant 0 : index
    %112 = vector.load %arg10[%c4_70, %c0_71, %c0_72] : memref<5x80x120xbf16, #tpu.memory_space<vmem>>, vector<1x80x120xbf16>
    %113 = vector.shape_cast %112 : vector<1x80x120xbf16> to vector<80x120xbf16>
    %cst_73 = arith.constant dense<0.000000e+00> : vector<225x120xf32>
    %114 = tpu.matmul %111, %113, %cst_73 {dimension_numbers = #tpu.dot_dimension_numbers<[1], [0], [0], [1], [0, 0, 1, 1], [], []>} : vector<225x80xbf16>, vector<80x120xbf16>, vector<225x120xf32> -> vector<225x120xf32>
    %115 = arith.addf %109, %114 : vector<225x120xf32>
    %c0_74 = arith.constant 0 : index
    %c0_75 = arith.constant 0 : index
    %116 = vector.load %arg12[%c0_74, %c0_75] : memref<8x225xbf16, #tpu.memory_space<vmem>>, vector<8x225xbf16>
    %117 = arith.truncf %115 : vector<225x120xf32> to vector<225x120xbf16>
    %cst_76 = arith.constant dense<0.000000e+00> : vector<8x120xf32>
    %118 = tpu.matmul %116, %117, %cst_76 {dimension_numbers = #tpu.dot_dimension_numbers<[1], [0], [0], [1], [0, 0, 1, 1], [], []>} : vector<8x225xbf16>, vector<225x120xbf16>, vector<8x120xf32> -> vector<8x120xf32>
    %c0_77 = arith.constant 0 : index
    %c0_78 = arith.constant 0 : index
    %119 = vector.load %arg11[%c0_77, %c0_78] : memref<1x120xf32, #tpu.memory_space<vmem>>, vector<1x120xf32>
    %120 = vector.broadcast %119 : vector<1x120xf32> to vector<8x120xf32>
    %121 = arith.addf %118, %120 : vector<8x120xf32>
    %cst_79 = arith.constant 0.000000e+00 : f32
    %122 = vector.broadcast %cst_79 : f32 to vector<8x120xf32>
    %123 = arith.maximumf %121, %122 : vector<8x120xf32>
    %124 = arith.truncf %123 : vector<8x120xf32> to vector<8x120xbf16>
    %c0_80 = arith.constant 0 : index
    %c0_81 = arith.constant 0 : index
    %125 = vector.load %arg13[%c0_80, %c0_81] : memref<120x84xbf16, #tpu.memory_space<vmem>>, vector<120x84xbf16>
    %cst_82 = arith.constant dense<0.000000e+00> : vector<8x84xf32>
    %126 = tpu.matmul %124, %125, %cst_82 {dimension_numbers = #tpu.dot_dimension_numbers<[1], [0], [0], [1], [0, 0, 1, 1], [], []>} : vector<8x120xbf16>, vector<120x84xbf16>, vector<8x84xf32> -> vector<8x84xf32>
    %c0_83 = arith.constant 0 : index
    %c0_84 = arith.constant 0 : index
    %127 = vector.load %arg14[%c0_83, %c0_84] : memref<1x84xf32, #tpu.memory_space<vmem>>, vector<1x84xf32>
    %128 = vector.broadcast %127 : vector<1x84xf32> to vector<8x84xf32>
    %129 = arith.addf %126, %128 : vector<8x84xf32>
    %cst_85 = arith.constant 0.000000e+00 : f32
    %130 = vector.broadcast %cst_85 : f32 to vector<8x84xf32>
    %131 = arith.maximumf %129, %130 : vector<8x84xf32>
    %132 = arith.truncf %131 : vector<8x84xf32> to vector<8x84xbf16>
    %c0_86 = arith.constant 0 : index
    %c0_87 = arith.constant 0 : index
    %133 = vector.load %arg15[%c0_86, %c0_87] : memref<84x10xbf16, #tpu.memory_space<vmem>>, vector<84x10xbf16>
    %cst_88 = arith.constant dense<0.000000e+00> : vector<8x10xf32>
    %134 = tpu.matmul %132, %133, %cst_88 {dimension_numbers = #tpu.dot_dimension_numbers<[1], [0], [0], [1], [0, 0, 1, 1], [], []>} : vector<8x84xbf16>, vector<84x10xbf16>, vector<8x10xf32> -> vector<8x10xf32>
    %c0_89 = arith.constant 0 : index
    %c0_90 = arith.constant 0 : index
    %135 = vector.load %arg16[%c0_89, %c0_90] : memref<1x10xf32, #tpu.memory_space<vmem>>, vector<1x10xf32>
    %136 = vector.broadcast %135 : vector<1x10xf32> to vector<8x10xf32>
    %137 = arith.addf %134, %136 : vector<8x10xf32>
    %c0_91 = arith.constant 0 : index
    %c0_92 = arith.constant 0 : index
    %138 = vector.load %arg17[%c0_91, %c0_92] : memref<8x10xf32, #tpu.memory_space<vmem>>, vector<8x10xf32>
    tpu.vector_store %arg17[%c0_91, %c0_92], %137 {strides = array<i32>} : memref<8x10xf32, #tpu.memory_space<vmem>>, vector<8x10xf32>,
    return
  }
  func.func @transform_0(%arg0: i32) -> (i32, i32) {
    %c0_i32 = arith.constant 0 : i32
    %c0_i32_0 = arith.constant 0 : i32
    return %arg0, %c0_i32 : i32, i32
  }
  func.func @transform_1(%arg0: i32) -> (i32, i32, i32) {
    %c0_i32 = arith.constant 0 : i32
    %c0_i32_0 = arith.constant 0 : i32
    %c0_i32_1 = arith.constant 0 : i32
    %c0_i32_2 = arith.constant 0 : i32
    return %c0_i32, %c0_i32_0, %c0_i32_1 : i32, i32, i32
  }
  func.func @transform_2(%arg0: i32) -> (i32, i32) {
    %c0_i32 = arith.constant 0 : i32
    %c0_i32_0 = arith.constant 0 : i32
    %c0_i32_1 = arith.constant 0 : i32
    return %c0_i32, %c0_i32_0 : i32, i32
  }
  func.func @transform_3(%arg0: i32) -> (i32, i32) {
    %c0_i32 = arith.constant 0 : i32
    %c0_i32_0 = arith.constant 0 : i32
    %c0_i32_1 = arith.constant 0 : i32
    return %c0_i32, %c0_i32_0 : i32, i32
  }
  func.func @transform_4(%arg0: i32) -> (i32, i32) {
    %c0_i32 = arith.constant 0 : i32
    %c0_i32_0 = arith.constant 0 : i32
    %c0_i32_1 = arith.constant 0 : i32
    return %c0_i32, %c0_i32_0 : i32, i32
  }
  func.func @transform_5(%arg0: i32) -> (i32, i32, i32) {
    %c0_i32 = arith.constant 0 : i32
    %c0_i32_0 = arith.constant 0 : i32
    %c0_i32_1 = arith.constant 0 : i32
    %c0_i32_2 = arith.constant 0 : i32
    return %c0_i32, %c0_i32_0, %c0_i32_1 : i32, i32, i32
  }
  func.func @transform_6(%arg0: i32) -> (i32, i32) {
    %c0_i32 = arith.constant 0 : i32
    %c0_i32_0 = arith.constant 0 : i32
    %c0_i32_1 = arith.constant 0 : i32
    return %c0_i32, %c0_i32_0 : i32, i32
  }
  func.func @transform_7(%arg0: i32) -> (i32, i32) {
    %c0_i32 = arith.constant 0 : i32
    %c0_i32_0 = arith.constant 0 : i32
    %c0_i32_1 = arith.constant 0 : i32
    return %c0_i32, %c0_i32_0 : i32, i32
  }
  func.func @transform_8(%arg0: i32) -> (i32, i32) {
    %c0_i32 = arith.constant 0 : i32
    %c0_i32_0 = arith.constant 0 : i32
    %c0_i32_1 = arith.constant 0 : i32
    return %c0_i32, %c0_i32_0 : i32, i32
  }
  func.func @transform_9(%arg0: i32) -> (i32, i32, i32) {
    %c0_i32 = arith.constant 0 : i32
    %c0_i32_0 = arith.constant 0 : i32
    %c0_i32_1 = arith.constant 0 : i32
    %c0_i32_2 = arith.constant 0 : i32
    return %c0_i32, %c0_i32_0, %c0_i32_1 : i32, i32, i32
  }
  func.func @transform_10(%arg0: i32) -> (i32, i32) {
    %c0_i32 = arith.constant 0 : i32
    %c0_i32_0 = arith.constant 0 : i32
    %c0_i32_1 = arith.constant 0 : i32
    return %c0_i32, %c0_i32_0 : i32, i32
  }
  func.func @transform_11(%arg0: i32) -> (i32, i32) {
    %c0_i32 = arith.constant 0 : i32
    %c0_i32_0 = arith.constant 0 : i32
    %c0_i32_1 = arith.constant 0 : i32
    return %c0_i32, %c0_i32_0 : i32, i32
  }
  func.func @transform_12(%arg0: i32) -> (i32, i32) {
    %c0_i32 = arith.constant 0 : i32
    %c0_i32_0 = arith.constant 0 : i32
    %c0_i32_1 = arith.constant 0 : i32
    return %c0_i32, %c0_i32_0 : i32, i32
  }
  func.func @transform_13(%arg0: i32) -> (i32, i32) {
    %c0_i32 = arith.constant 0 : i32
    %c0_i32_0 = arith.constant 0 : i32
    %c0_i32_1 = arith.constant 0 : i32
    return %c0_i32, %c0_i32_0 : i32, i32
  }
  func.func @transform_14(%arg0: i32) -> (i32, i32) {
    %c0_i32 = arith.constant 0 : i32
    %c0_i32_0 = arith.constant 0 : i32
    %c0_i32_1 = arith.constant 0 : i32
    return %c0_i32, %c0_i32_0 : i32, i32
  }
  func.func @transform_15(%arg0: i32) -> (i32, i32) {
    %c0_i32 = arith.constant 0 : i32
    %c0_i32_0 = arith.constant 0 : i32
    %c0_i32_1 = arith.constant 0 : i32
    return %c0_i32, %c0_i32_0 : i32, i32
  }
  func.func @transform_16(%arg0: i32) -> (i32, i32) {
    %c0_i32 = arith.constant 0 : i32
    %c0_i32_0 = arith.constant 0 : i32
    return %arg0, %c0_i32 : i32, i32
  }
}

</mosaic_0001>

<llo_original>
// kernel: fwd.1
$region0: #{fwd.1}
  #allocation0 [shape = 'u32[]', space=smem, size = 0x4, offset = 0x4, fixed_abs, tag = 'smem constant byte address 0x4 - core index']
  #allocation1 [shape = 'u32[72,128]{1,0:T(1,128)}', space=vmem, size = 0x9000, scoped, tag = 'internal scratch']
  %s0 = inlined_call_operand.hbm [shape: f32[512,32], index: 0, kind: input, shape index: {}]
  %s1 = inlined_call_operand.hbm [shape: bf16[5,32,168], index: 1, kind: input, shape index: {}]
  %s2 = inlined_call_operand.hbm [shape: f32[1,168], index: 2, kind: input, shape index: {}]
  %s3 = inlined_call_operand.hbm [shape: bf16[168,84], index: 3, kind: input, shape index: {}]
  %s4 = inlined_call_operand.hbm [shape: bf16[168,84], index: 4, kind: input, shape index: {}]
  %s5 = inlined_call_operand.hbm [shape: bf16[5,84,160], index: 5, kind: input, shape index: {}]
  %s6 = inlined_call_operand.vmem [shape: f32[1,160], index: 6, kind: input, shape index: {}]
  %s7 = inlined_call_operand.hbm [shape: bf16[160,80], index: 7, kind: input, shape index: {}]
  %s8 = inlined_call_operand.hbm [shape: bf16[160,80], index: 8, kind: input, shape index: {}]
  %s9 = inlined_call_operand.hbm [shape: bf16[5,80,120], index: 9, kind: input, shape index: {}]
  %s10 = inlined_call_operand.hbm [shape: f32[1,120], index: 10, kind: input, shape index: {}]
  %s11 = inlined_call_operand.vmem [shape: bf16[8,225], index: 11, kind: input, shape index: {}]
  %s12 = inlined_call_operand.hbm [shape: bf16[120,84], index: 12, kind: input, shape index: {}]
  %s13 = inlined_call_operand.vmem [shape: f32[1,84], index: 13, kind: input, shape index: {}]
  %s14 = inlined_call_operand.hbm [shape: bf16[84,10], index: 14, kind: input, shape index: {}]
  %s15 = inlined_call_operand.vmem [shape: f32[1,10], index: 15, kind: input, shape index: {}]
  %s16 = inlined_call_operand.hbm [shape: f32[16,10], index: 16, kind: output, shape index: {}]
  %s17 = sld [smem:[#allocation0]]
  $region145: #{fwd.1} parent=0
    _
  %s19 = ssub.s32 1, %s17
  %s20 = scalar_select 0, %s19, %s17
  $region1: #{fwd.1} parent=0
    #allocation2 [shape = 'u8[262144]{0}', space=vmem, size = 0x40000, scoped, tag = 'input window, operand 0']
    #allocation3 [shape = 's32[2]{0}', space=sflag, size = 0x8, scoped, tag = 'scoped memory for fwd.1']
    #allocation4 [shape = 's32[2]{0}', space=sflag, size = 0x8, scoped, tag = 'scoped memory for fwd.1']
    #allocation5 [shape = 'u8[81920]{0}', space=vmem, size = 0x14000, scoped, tag = 'input window, operand 1, single buffered']
    #allocation6 [shape = 's32[1]{0}', space=sflag, size = 0x4, scoped, tag = 'scoped memory for fwd.1']
    #allocation7 [shape = 'u8[1024]{0}', space=vmem, size = 0x400, scoped, tag = 'input window, operand 2, single buffered']
    #allocation8 [shape = 'u8[43008]{0}', space=vmem, size = 0xa800, scoped, tag = 'input window, operand 3, single buffered']
    #allocation9 [shape = 's32[1]{0}', space=sflag, size = 0x4, scoped, tag = 'scoped memory for fwd.1']
    #allocation10 [shape = 'u8[43008]{0}', space=vmem, size = 0xa800, scoped, tag = 'input window, operand 4, single buffered']
    #allocation11 [shape = 'u8[225280]{0}', space=vmem, size = 0x37000, scoped, tag = 'input window, operand 5, single buffered']
    #allocation12 [shape = 's32[1]{0}', space=sflag, size = 0x4, scoped, tag = 'scoped memory for fwd.1']
    #allocation13 [shape = 'u8[40960]{0}', space=vmem, size = 0xa000, scoped, tag = 'input window, operand 7, single buffered']
    #allocation14 [shape = 'u8[40960]{0}', space=vmem, size = 0xa000, scoped, tag = 'input window, operand 8, single buffered']
    #allocation15 [shape = 's32[1]{0}', space=sflag, size = 0x4, scoped, tag = 'scoped memory for fwd.1']
    #allocation16 [shape = 'u8[102400]{0}', space=vmem, size = 0x19000, scoped, tag = 'input window, operand 9, single buffered']
    #allocation17 [shape = 'u8[512]{0}', space=vmem, size = 0x400, scoped, tag = 'input window, operand 10, single buffered']
    #allocation18 [shape = 's32[1]{0}', space=sflag, size = 0x4, scoped, tag = 'scoped memory for fwd.1']
    #allocation19 [shape = 'u8[30720]{0}', space=vmem, size = 0x7800, scoped, tag = 'input window, operand 12, single buffered']
    #allocation20 [shape = 'u8[22528]{0}', space=vmem, size = 0x5800, scoped, tag = 'input window, operand 14, single buffered']
    #allocation21 [shape = 's32[1]{0}', space=sflag, size = 0x4, scoped, tag = 'scoped memory for fwd.1']
    #allocation22 [shape = 'u8[8192]{0}', space=vmem, size = 0x2000, scoped, tag = 'output window, operand 0']
    %21 = vsyncpa [#allocation3], 0
    %s22 = scalar_lea.sflag [#allocation3], 1
    %23 = vsyncpa %s22, 0
    %24 = vsyncpa [#allocation6], 0
    %25 = vsyncpa [#allocation9], 0
    %26 = vsyncpa [#allocation12], 0
    %27 = vsyncpa [#allocation15], 0
    %28 = vsyncpa [#allocation18], 0
    %29 = vsyncpa [#allocation21], 0
    %30 = vsyncpa [#allocation4], 0
    %s31 = scalar_lea.sflag [#allocation4], 1
    %32 = vsyncpa %s31, 0
    loop: start=0, step=1, limit=4
    $region2: #{fwd.1} parent=1 // loop_pre_header
      _
    $region3: #{fwd.1} parent=1 // loop_header
      %s34 = sphi 0, %s38
      %p35 = scmp.ge.s32.totalorder %s34, 4
      %s44 = sphi 0, %s46
      %s47 = sphi 0, %s44
      %s48 = sphi 0, %s47
      %s64 = sphi 0, %s48
      %s68 = sphi 0, %s68
      %s70 = sphi 0, %s68
      %s71 = sphi 0, %s70
      %s85 = sphi 0, %s71
      %s89 = sphi 0, %s89
      %s91 = sphi 0, %s89
      %s92 = sphi 0, %s91
      %s106 = sphi 0, %s92
      %s110 = sphi 0, %s110
      %s112 = sphi 0, %s110
      %s113 = sphi 0, %s112
      %s127 = sphi 0, %s113
      %s131 = sphi 0, %s131
      %s133 = sphi 0, %s131
      %s134 = sphi 0, %s133
      %s148 = sphi 0, %s134
      %s152 = sphi 0, %s152
      %s154 = sphi 0, %s152
      %s155 = sphi 0, %s154
      %s169 = sphi 0, %s155
      %s173 = sphi 0, %s173
      %s175 = sphi 0, %s173
      %s176 = sphi 0, %s175
      %s190 = sphi 0, %s176
      %s194 = sphi 0, %s194
      %s196 = sphi 0, %s194
      %s197 = sphi 0, %s196
      %s211 = sphi 0, %s197
      %s215 = sphi 0, %s215
      %s217 = sphi 0, %s215
      %s218 = sphi 0, %s217
      %s232 = sphi 0, %s218
      %s236 = sphi 0, %s236
      %s238 = sphi 0, %s236
      %s239 = sphi 0, %s238
      %s253 = sphi 0, %s239
      %s257 = sphi 0, %s257
      %s259 = sphi 0, %s257
      %s260 = sphi 0, %s259
      %s274 = sphi 0, %s260
      %s278 = sphi 0, %s278
      %s280 = sphi 0, %s278
      %s281 = sphi 0, %s280
      %s295 = sphi 0, %s281
      %s299 = sphi 0, %s299
      %s301 = sphi 0, %s299
      %s302 = sphi 0, %s301
      %s316 = sphi 0, %s302
      %s320 = sphi 0, %s320
      %s322 = sphi 0, %s320
      %s323 = sphi 0, %s322
      %s337 = sphi 0, %s323
      %s341 = sphi 0, %s341
      %s343 = sphi 0, %s341
      %s344 = sphi 0, %s343
      %s358 = sphi 0, %s344
      %s362 = sphi 0, %s362
      %s364 = sphi 0, %s362
      %s365 = sphi 0, %s364
      %s379 = sphi 0, %s365
      %s385 = sphi 0, %s387
      %s388 = sphi 0, %s385
      %s389 = sphi 0, %s388
      %s405 = sphi 0, %s389
    $region4: #{fwd.1} parent=1 // loop_header_branch
      %37 = sbr.rel (%p35) target = $region8
    $region5: #{fwd.1} parent=1 // loop_body
      %s39 = ssub.s32 %s34, 1
      %s40 = ssub.s32 %s34, 2
      %s41 = sadd.s32 %s34, 1
      %s42 = ssub.s32 %s34, %s41
      %p43 = scmp.eq.s32.totalorder %s42, 0
      %s45 = sadd.s32 %s44, 1
      %s46 = scalar_select %p43, %s44, %s45
      %p49 = pneg %p43
      %p50 = scmp.eq.s32.totalorder %s34, 1
      %p51 = por %p49, %p50
      %p52 = scmp.ne.s32.totalorder %s44, %s47
      %p53 = scmp.eq.s32.totalorder %s34, 0
      %p54 = por %p52, %p53
      %p55 = scmp.ne.s32.totalorder %s44, %s47
      %p56 = scmp.eq.s32.totalorder %s39, 1
      %p57 = por %p55, %p56
      %p58 = scmp.ne.s32.totalorder %s47, %s48
      %p59 = scmp.eq.s32.totalorder %s39, 0
      %p60 = por %p58, %p59
      %p61 = scmp.ne.s32.totalorder %s47, %s48
      %p62 = scmp.eq.s32.totalorder %s40, 1
      %p63 = por %p61, %p62
      %p65 = scmp.ne.s32.totalorder %s48, %s64
      %p66 = scmp.eq.s32.totalorder %s40, 0
      %p67 = por %p65, %p66
      %s69 = sadd.s32 %s68, 1
      %p72 = scmp.eq.s32.totalorder %s34, 1
      %p73 = scmp.ne.s32.totalorder %s68, %s70
      %p74 = scmp.eq.s32.totalorder %s34, 0
      %p75 = por %p73, %p74
      %p76 = scmp.ne.s32.totalorder %s68, %s70
      %p77 = scmp.eq.s32.totalorder %s39, 1
      %p78 = por %p76, %p77
      %p79 = scmp.ne.s32.totalorder %s70, %s71
      %p80 = scmp.eq.s32.totalorder %s39, 0
      %p81 = por %p79, %p80
      %p82 = scmp.ne.s32.totalorder %s70, %s71
      %p83 = scmp.eq.s32.totalorder %s40, 1
      %p84 = por %p82, %p83
      %p86 = scmp.ne.s32.totalorder %s71, %s85
      %p87 = scmp.eq.s32.totalorder %s40, 0
      %p88 = por %p86, %p87
      %s90 = sadd.s32 %s89, 1
      %p93 = scmp.eq.s32.totalorder %s34, 1
      %p94 = scmp.ne.s32.totalorder %s89, %s91
      %p95 = scmp.eq.s32.totalorder %s34, 0
      %p96 = por %p94, %p95
      %p97 = scmp.ne.s32.totalorder %s89, %s91
      %p98 = scmp.eq.s32.totalorder %s39, 1
      %p99 = por %p97, %p98
      %p100 = scmp.ne.s32.totalorder %s91, %s92
      %p101 = scmp.eq.s32.totalorder %s39, 0
      %p102 = por %p100, %p101
      %p103 = scmp.ne.s32.totalorder %s91, %s92
      %p104 = scmp.eq.s32.totalorder %s40, 1
      %p105 = por %p103, %p104
      %p107 = scmp.ne.s32.totalorder %s92, %s106
      %p108 = scmp.eq.s32.totalorder %s40, 0
      %p109 = por %p107, %p108
      %s111 = sadd.s32 %s110, 1
      %p114 = scmp.eq.s32.totalorder %s34, 1
      %p115 = scmp.ne.s32.totalorder %s110, %s112
      %p116 = scmp.eq.s32.totalorder %s34, 0
      %p117 = por %p115, %p116
      %p118 = scmp.ne.s32.totalorder %s110, %s112
      %p119 = scmp.eq.s32.totalorder %s39, 1
      %p120 = por %p118, %p119
      %p121 = scmp.ne.s32.totalorder %s112, %s113
      %p122 = scmp.eq.s32.totalorder %s39, 0
      %p123 = por %p121, %p122
      %p124 = scmp.ne.s32.totalorder %s112, %s113
      %p125 = scmp.eq.s32.totalorder %s40, 1
      %p126 = por %p124, %p125
      %p128 = scmp.ne.s32.totalorder %s113, %s127
      %p129 = scmp.eq.s32.totalorder %s40, 0
      %p130 = por %p128, %p129
      %s132 = sadd.s32 %s131, 1
      %p135 = scmp.eq.s32.totalorder %s34, 1
      %p136 = scmp.ne.s32.totalorder %s131, %s133
      %p137 = scmp.eq.s32.totalorder %s34, 0
      %p138 = por %p136, %p137
      %p139 = scmp.ne.s32.totalorder %s131, %s133
      %p140 = scmp.eq.s32.totalorder %s39, 1
      %p141 = por %p139, %p140
      %p142 = scmp.ne.s32.totalorder %s133, %s134
      %p143 = scmp.eq.s32.totalorder %s39, 0
      %p144 = por %p142, %p143
      %p145 = scmp.ne.s32.totalorder %s133, %s134
      %p146 = scmp.eq.s32.totalorder %s40, 1
      %p147 = por %p145, %p146
      %p149 = scmp.ne.s32.totalorder %s134, %s148
      %p150 = scmp.eq.s32.totalorder %s40, 0
      %p151 = por %p149, %p150
      %s153 = sadd.s32 %s152, 1
      %p156 = scmp.eq.s32.totalorder %s34, 1
      %p157 = scmp.ne.s32.totalorder %s152, %s154
      %p158 = scmp.eq.s32.totalorder %s34, 0
      %p159 = por %p157, %p158
      %p160 = scmp.ne.s32.totalorder %s152, %s154
      %p161 = scmp.eq.s32.totalorder %s39, 1
      %p162 = por %p160, %p161
      %p163 = scmp.ne.s32.totalorder %s154, %s155
      %p164 = scmp.eq.s32.totalorder %s39, 0
      %p165 = por %p163, %p164
      %p166 = scmp.ne.s32.totalorder %s154, %s155
      %p167 = scmp.eq.s32.totalorder %s40, 1
      %p168 = por %p166, %p167
      %p170 = scmp.ne.s32.totalorder %s155, %s169
      %p171 = scmp.eq.s32.totalorder %s40, 0
      %p172 = por %p170, %p171
      %s174 = sadd.s32 %s173, 1
      %p177 = scmp.eq.s32.totalorder %s34, 1
      %p178 = scmp.ne.s32.totalorder %s173, %s175
      %p179 = scmp.eq.s32.totalorder %s34, 0
      %p180 = por %p178, %p179
      %p181 = scmp.ne.s32.totalorder %s173, %s175
      %p182 = scmp.eq.s32.totalorder %s39, 1
      %p183 = por %p181, %p182
      %p184 = scmp.ne.s32.totalorder %s175, %s176
      %p185 = scmp.eq.s32.totalorder %s39, 0
      %p186 = por %p184, %p185
      %p187 = scmp.ne.s32.totalorder %s175, %s176
      %p188 = scmp.eq.s32.totalorder %s40, 1
      %p189 = por %p187, %p188
      %p191 = scmp.ne.s32.totalorder %s176, %s190
      %p192 = scmp.eq.s32.totalorder %s40, 0
      %p193 = por %p191, %p192
      %s195 = sadd.s32 %s194, 1
      %p198 = scmp.eq.s32.totalorder %s34, 1
      %p199 = scmp.ne.s32.totalorder %s194, %s196
      %p200 = scmp.eq.s32.totalorder %s34, 0
      %p201 = por %p199, %p200
      %p202 = scmp.ne.s32.totalorder %s194, %s196
      %p203 = scmp.eq.s32.totalorder %s39, 1
      %p204 = por %p202, %p203
      %p205 = scmp.ne.s32.totalorder %s196, %s197
      %p206 = scmp.eq.s32.totalorder %s39, 0
      %p207 = por %p205, %p206
      %p208 = scmp.ne.s32.totalorder %s196, %s197
      %p209 = scmp.eq.s32.totalorder %s40, 1
      %p210 = por %p208, %p209
      %p212 = scmp.ne.s32.totalorder %s197, %s211
      %p213 = scmp.eq.s32.totalorder %s40, 0
      %p214 = por %p212, %p213
      %s216 = sadd.s32 %s215, 1
      %p219 = scmp.eq.s32.totalorder %s34, 1
      %p220 = scmp.ne.s32.totalorder %s215, %s217
      %p221 = scmp.eq.s32.totalorder %s34, 0
      %p222 = por %p220, %p221
      %p223 = scmp.ne.s32.totalorder %s215, %s217
      %p224 = scmp.eq.s32.totalorder %s39, 1
      %p225 = por %p223, %p224
      %p226 = scmp.ne.s32.totalorder %s217, %s218
      %p227 = scmp.eq.s32.totalorder %s39, 0
      %p228 = por %p226, %p227
      %p229 = scmp.ne.s32.totalorder %s217, %s218
      %p230 = scmp.eq.s32.totalorder %s40, 1
      %p231 = por %p229, %p230
      %p233 = scmp.ne.s32.totalorder %s218, %s232
      %p234 = scmp.eq.s32.totalorder %s40, 0
      %p235 = por %p233, %p234
      %s237 = sadd.s32 %s236, 1
      %p240 = scmp.eq.s32.totalorder %s34, 1
      %p241 = scmp.ne.s32.totalorder %s236, %s238
      %p242 = scmp.eq.s32.totalorder %s34, 0
      %p243 = por %p241, %p242
      %p244 = scmp.ne.s32.totalorder %s236, %s238
      %p245 = scmp.eq.s32.totalorder %s39, 1
      %p246 = por %p244, %p245
      %p247 = scmp.ne.s32.totalorder %s238, %s239
      %p248 = scmp.eq.s32.totalorder %s39, 0
      %p249 = por %p247, %p248
      %p250 = scmp.ne.s32.totalorder %s238, %s239
      %p251 = scmp.eq.s32.totalorder %s40, 1
      %p252 = por %p250, %p251
      %p254 = scmp.ne.s32.totalorder %s239, %s253
      %p255 = scmp.eq.s32.totalorder %s40, 0
      %p256 = por %p254, %p255
      %s258 = sadd.s32 %s257, 1
      %p261 = scmp.eq.s32.totalorder %s34, 1
      %p262 = scmp.ne.s32.totalorder %s257, %s259
      %p263 = scmp.eq.s32.totalorder %s34, 0
      %p264 = por %p262, %p263
      %p265 = scmp.ne.s32.totalorder %s257, %s259
      %p266 = scmp.eq.s32.totalorder %s39, 1
      %p267 = por %p265, %p266
      %p268 = scmp.ne.s32.totalorder %s259, %s260
      %p269 = scmp.eq.s32.totalorder %s39, 0
      %p270 = por %p268, %p269
      %p271 = scmp.ne.s32.totalorder %s259, %s260
      %p272 = scmp.eq.s32.totalorder %s40, 1
      %p273 = por %p271, %p272
      %p275 = scmp.ne.s32.totalorder %s260, %s274
      %p276 = scmp.eq.s32.totalorder %s40, 0
      %p277 = por %p275, %p276
      %s279 = sadd.s32 %s278, 1
      %p282 = scmp.eq.s32.totalorder %s34, 1
      %p283 = scmp.ne.s32.totalorder %s278, %s280
      %p284 = scmp.eq.s32.totalorder %s34, 0
      %p285 = por %p283, %p284
      %p286 = scmp.ne.s32.totalorder %s278, %s280
      %p287 = scmp.eq.s32.totalorder %s39, 1
      %p288 = por %p286, %p287
      %p289 = scmp.ne.s32.totalorder %s280, %s281
      %p290 = scmp.eq.s32.totalorder %s39, 0
      %p291 = por %p289, %p290
      %p292 = scmp.ne.s32.totalorder %s280, %s281
      %p293 = scmp.eq.s32.totalorder %s40, 1
      %p294 = por %p292, %p293
      %p296 = scmp.ne.s32.totalorder %s281, %s295
      %p297 = scmp.eq.s32.totalorder %s40, 0
      %p298 = por %p296, %p297
      %s300 = sadd.s32 %s299, 1
      %p303 = scmp.eq.s32.totalorder %s34, 1
      %p304 = scmp.ne.s32.totalorder %s299, %s301
      %p305 = scmp.eq.s32.totalorder %s34, 0
      %p306 = por %p304, %p305
      %p307 = scmp.ne.s32.totalorder %s299, %s301
      %p308 = scmp.eq.s32.totalorder %s39, 1
      %p309 = por %p307, %p308
      %p310 = scmp.ne.s32.totalorder %s301, %s302
      %p311 = scmp.eq.s32.totalorder %s39, 0
      %p312 = por %p310, %p311
      %p313 = scmp.ne.s32.totalorder %s301, %s302
      %p314 = scmp.eq.s32.totalorder %s40, 1
      %p315 = por %p313, %p314
      %p317 = scmp.ne.s32.totalorder %s302, %s316
      %p318 = scmp.eq.s32.totalorder %s40, 0
      %p319 = por %p317, %p318
      %s321 = sadd.s32 %s320, 1
      %p324 = scmp.eq.s32.totalorder %s34, 1
      %p325 = scmp.ne.s32.totalorder %s320, %s322
      %p326 = scmp.eq.s32.totalorder %s34, 0
      %p327 = por %p325, %p326
      %p328 = scmp.ne.s32.totalorder %s320, %s322
      %p329 = scmp.eq.s32.totalorder %s39, 1
      %p330 = por %p328, %p329
      %p331 = scmp.ne.s32.totalorder %s322, %s323
      %p332 = scmp.eq.s32.totalorder %s39, 0
      %p333 = por %p331, %p332
      %p334 = scmp.ne.s32.totalorder %s322, %s323
      %p335 = scmp.eq.s32.totalorder %s40, 1
      %p336 = por %p334, %p335
      %p338 = scmp.ne.s32.totalorder %s323, %s337
      %p339 = scmp.eq.s32.totalorder %s40, 0
      %p340 = por %p338, %p339
      %s342 = sadd.s32 %s341, 1
      %p345 = scmp.eq.s32.totalorder %s34, 1
      %p346 = scmp.ne.s32.totalorder %s341, %s343
      %p347 = scmp.eq.s32.totalorder %s34, 0
      %p348 = por %p346, %p347
      %p349 = scmp.ne.s32.totalorder %s341, %s343
      %p350 = scmp.eq.s32.totalorder %s39, 1
      %p351 = por %p349, %p350
      %p352 = scmp.ne.s32.totalorder %s343, %s344
      %p353 = scmp.eq.s32.totalorder %s39, 0
      %p354 = por %p352, %p353
      %p355 = scmp.ne.s32.totalorder %s343, %s344
      %p356 = scmp.eq.s32.totalorder %s40, 1
      %p357 = por %p355, %p356
      %p359 = scmp.ne.s32.totalorder %s344, %s358
      %p360 = scmp.eq.s32.totalorder %s40, 0
      %p361 = por %p359, %p360
      %s363 = sadd.s32 %s362, 1
      %p366 = scmp.eq.s32.totalorder %s34, 1
      %p367 = scmp.ne.s32.totalorder %s362, %s364
      %p368 = scmp.eq.s32.totalorder %s34, 0
      %p369 = por %p367, %p368
      %p370 = scmp.ne.s32.totalorder %s362, %s364
      %p371 = scmp.eq.s32.totalorder %s39, 1
      %p372 = por %p370, %p371
      %p373 = scmp.ne.s32.totalorder %s364, %s365
      %p374 = scmp.eq.s32.totalorder %s39, 0
      %p375 = por %p373, %p374
      %p376 = scmp.ne.s32.totalorder %s364, %s365
      %p377 = scmp.eq.s32.totalorder %s40, 1
      %p378 = por %p376, %p377
      %p380 = scmp.ne.s32.totalorder %s365, %s379
      %p381 = scmp.eq.s32.totalorder %s40, 0
      %p382 = por %p380, %p381
      %s383 = ssub.s32 %s34, %s41
      %p384 = scmp.eq.s32.totalorder %s383, 0
      %s386 = sadd.s32 %s385, 1
      %s387 = scalar_select %p384, %s385, %s386
      %p390 = pneg %p384
      %p391 = scmp.eq.s32.totalorder %s34, 1
      %p392 = por %p390, %p391
      %p393 = scmp.ne.s32.totalorder %s385, %s388
      %p394 = scmp.eq.s32.totalorder %s34, 0
      %p395 = por %p393, %p394
      %p396 = scmp.ne.s32.totalorder %s385, %s388
      %p397 = scmp.eq.s32.totalorder %s39, 1
      %p398 = por %p396, %p397
      %p399 = scmp.ne.s32.totalorder %s388, %s389
      %p400 = scmp.eq.s32.totalorder %s39, 0
      %p401 = por %p399, %p400
      %p402 = scmp.ne.s32.totalorder %s388, %s389
      %p403 = scmp.eq.s32.totalorder %s40, 1
      %p404 = por %p402, %p403
      %p406 = scmp.ne.s32.totalorder %s389, %s405
      %p407 = scmp.eq.s32.totalorder %s40, 0
      %p408 = por %p406, %p407
      %p409 = scmp.le.s32.totalorder 1, %s34
      %p410 = scmp.lt.s32.totalorder %s34, 3
      %p411 = pnand %p409, %p410
      %p412 = pneg %p411
      // Predicated region
      $region9: #{fwd.1} parent=5 // pred_check
        _
      $region10: #{fwd.1} parent=5 // pred_check_branch
        %414 = sbr.rel (%p411) target = $region12
      $region11: #{fwd.1} parent=5 // pred_region
        %s415 = ssub.s32 %s34, 1
        // Predicated region
        $region13: #{fwd.1} parent=11 // pred_check
          %p416 = pneg %p81
        $region14: #{fwd.1} parent=11 // pred_check_branch
          %418 = sbr.rel (%p416) target = $region16
        $region15: #{fwd.1} parent=11 // pred_region
          %420 = vsyncadd [#allocation6], 0
          %s421 = sshll.u32 %s1, 4
          %s422 = int_to_ptr.hbm [resolvable:$true] %s421
          %s423 = sshll.u32 [#allocation5], 4
          %s424 = int_to_ptr.vmem [resolvable:$true] %s423
          %429 = dma.hbm_to_vmem [thread:$0]  %s422, 2560, %s424, [#allocation6], 128, 128, 8
        $region16: #{fwd.1} parent=11 // pred_fallthru
          _
        // Predicated region
        $region17: #{fwd.1} parent=11 // pred_check
          %p430 = pneg %p102
        $region18: #{fwd.1} parent=11 // pred_check_branch
          %432 = sbr.rel (%p430) target = $region20
        $region19: #{fwd.1} parent=11 // pred_region
          %434 = vsyncadd [#allocation6], 0
          %s436 = sshll.u32 %s2, 4
          %s437 = int_to_ptr.hbm [resolvable:$true] %s436
          %s438 = sshll.u32 [#allocation7], 4
          %s439 = int_to_ptr.vmem [resolvable:$true] %s438
          %441 = dma.hbm_to_vmem [thread:$0]  %s437, 32, %s439, [#allocation6]
        $region20: #{fwd.1} parent=11 // pred_fallthru
          _
        // Predicated region
        $region21: #{fwd.1} parent=11 // pred_check
          %p442 = pneg %p123
        $region22: #{fwd.1} parent=11 // pred_check_branch
          %444 = sbr.rel (%p442) target = $region24
        $region23: #{fwd.1} parent=11 // pred_region
          %446 = vsyncadd [#allocation9], 0
          %s447 = sshll.u32 %s3, 4
          %s448 = int_to_ptr.hbm [resolvable:$true] %s447
          %s449 = sshll.u32 [#allocation8], 4
          %s450 = int_to_ptr.vmem [resolvable:$true] %s449
          %455 = dma.hbm_to_vmem [thread:$0]  %s448, 1344, %s450, [#allocation9], 64, 64, 4
        $region24: #{fwd.1} parent=11 // pred_fallthru
          _
        // Predicated region
        $region25: #{fwd.1} parent=11 // pred_check
          %p456 = pneg %p144
        $region26: #{fwd.1} parent=11 // pred_check_branch
          %458 = sbr.rel (%p456) target = $region28
        $region27: #{fwd.1} parent=11 // pred_region
          %460 = vsyncadd [#allocation9], 0
          %s461 = sshll.u32 %s4, 4
          %s462 = int_to_ptr.hbm [resolvable:$true] %s461
          %s463 = sshll.u32 [#allocation10], 4
          %s464 = int_to_ptr.vmem [resolvable:$true] %s463
          %469 = dma.hbm_to_vmem [thread:$0]  %s462, 1344, %s464, [#allocation9], 64, 64, 4
        $region28: #{fwd.1} parent=11 // pred_fallthru
          _
        // Predicated region
        $region29: #{fwd.1} parent=11 // pred_check
          %p470 = pneg %p165
        $region30: #{fwd.1} parent=11 // pred_check_branch
          %472 = sbr.rel (%p470) target = $region32
        $region31: #{fwd.1} parent=11 // pred_region
          %474 = vsyncadd [#allocation12], 0
          %s475 = sshll.u32 %s5, 4
          %s476 = int_to_ptr.hbm [resolvable:$true] %s475
          %s477 = sshll.u32 [#allocation11], 4
          %s478 = int_to_ptr.vmem [resolvable:$true] %s477
          %483 = dma.hbm_to_vmem [thread:$0]  %s476, 7040, %s478, [#allocation12], 128, 128, 8
        $region32: #{fwd.1} parent=11 // pred_fallthru
          _
        // Predicated region
        $region33: #{fwd.1} parent=11 // pred_check
          %p484 = pneg %p186
        $region34: #{fwd.1} parent=11 // pred_check_branch
          %486 = sbr.rel (%p484) target = $region36
        $region35: #{fwd.1} parent=11 // pred_region
          _
        $region36: #{fwd.1} parent=11 // pred_fallthru
          _
        // Predicated region
        $region37: #{fwd.1} parent=11 // pred_check
          %p487 = pneg %p207
        $region38: #{fwd.1} parent=11 // pred_check_branch
          %489 = sbr.rel (%p487) target = $region40
        $region39: #{fwd.1} parent=11 // pred_region
          %491 = vsyncadd [#allocation12], 0
          %s492 = sshll.u32 %s7, 4
          %s493 = int_to_ptr.hbm [resolvable:$true] %s492
          %s494 = sshll.u32 [#allocation13], 4
          %s495 = int_to_ptr.vmem [resolvable:$true] %s494
          %500 = dma.hbm_to_vmem [thread:$0]  %s493, 1280, %s495, [#allocation12], 64, 64, 4
        $region40: #{fwd.1} parent=11 // pred_fallthru
          _
        // Predicated region
        $region41: #{fwd.1} parent=11 // pred_check
          %p501 = pneg %p228
        $region42: #{fwd.1} parent=11 // pred_check_branch
          %503 = sbr.rel (%p501) target = $region44
        $region43: #{fwd.1} parent=11 // pred_region
          %505 = vsyncadd [#allocation15], 0
          %s506 = sshll.u32 %s8, 4
          %s507 = int_to_ptr.hbm [resolvable:$true] %s506
          %s508 = sshll.u32 [#allocation14], 4
          %s509 = int_to_ptr.vmem [resolvable:$true] %s508
          %514 = dma.hbm_to_vmem [thread:$0]  %s507, 1280, %s509, [#allocation15], 64, 64, 4
        $region44: #{fwd.1} parent=11 // pred_fallthru
          _
        // Predicated region
        $region45: #{fwd.1} parent=11 // pred_check
          %p515 = pneg %p249
        $region46: #{fwd.1} parent=11 // pred_check_branch
          %517 = sbr.rel (%p515) target = $region48
        $region47: #{fwd.1} parent=11 // pred_region
          %519 = vsyncadd [#allocation15], 0
          %s520 = sshll.u32 %s9, 4
          %s521 = int_to_ptr.hbm [resolvable:$true] %s520
          %s522 = sshll.u32 [#allocation16], 4
          %s523 = int_to_ptr.vmem [resolvable:$true] %s522
          %528 = dma.hbm_to_vmem [thread:$0]  %s521, 3200, %s523, [#allocation15], 64, 64, 4
        $region48: #{fwd.1} parent=11 // pred_fallthru
          _
        // Predicated region
        $region49: #{fwd.1} parent=11 // pred_check
          %p529 = pneg %p270
        $region50: #{fwd.1} parent=11 // pred_check_branch
          %531 = sbr.rel (%p529) target = $region52
        $region51: #{fwd.1} parent=11 // pred_region
          %533 = vsyncadd [#allocation18], 0
          %s535 = sshll.u32 %s10, 4
          %s536 = int_to_ptr.hbm [resolvable:$true] %s535
          %s537 = sshll.u32 [#allocation17], 4
          %s538 = int_to_ptr.vmem [resolvable:$true] %s537
          %540 = dma.hbm_to_vmem [thread:$0]  %s536, 16, %s538, [#allocation18]
        $region52: #{fwd.1} parent=11 // pred_fallthru
          _
        // Predicated region
        $region53: #{fwd.1} parent=11 // pred_check
          %p541 = pneg %p291
        $region54: #{fwd.1} parent=11 // pred_check_branch
          %543 = sbr.rel (%p541) target = $region56
        $region55: #{fwd.1} parent=11 // pred_region
          _
        $region56: #{fwd.1} parent=11 // pred_fallthru
          _
        // Predicated region
        $region57: #{fwd.1} parent=11 // pred_check
          %p544 = pneg %p312
        $region58: #{fwd.1} parent=11 // pred_check_branch
          %546 = sbr.rel (%p544) target = $region60
        $region59: #{fwd.1} parent=11 // pred_region
          %548 = vsyncadd [#allocation18], 0
          %s549 = sshll.u32 %s12, 4
          %s550 = int_to_ptr.hbm [resolvable:$true] %s549
          %s551 = sshll.u32 [#allocation19], 4
          %s552 = int_to_ptr.vmem [resolvable:$true] %s551
          %557 = dma.hbm_to_vmem [thread:$0]  %s550, 960, %s552, [#allocation18], 64, 64, 4
        $region60: #{fwd.1} parent=11 // pred_fallthru
          _
        // Predicated region
        $region61: #{fwd.1} parent=11 // pred_check
          %p558 = pneg %p333
        $region62: #{fwd.1} parent=11 // pred_check_branch
          %560 = sbr.rel (%p558) target = $region64
        $region63: #{fwd.1} parent=11 // pred_region
          _
        $region64: #{fwd.1} parent=11 // pred_fallthru
          _
        // Predicated region
        $region65: #{fwd.1} parent=11 // pred_check
          %p561 = pneg %p354
        $region66: #{fwd.1} parent=11 // pred_check_branch
          %563 = sbr.rel (%p561) target = $region68
        $region67: #{fwd.1} parent=11 // pred_region
          %565 = vsyncadd [#allocation21], 0
          %s566 = sshll.u32 %s14, 4
          %s567 = int_to_ptr.hbm [resolvable:$true] %s566
          %s568 = sshll.u32 [#allocation20], 4
          %s569 = int_to_ptr.vmem [resolvable:$true] %s568
          %574 = dma.hbm_to_vmem [thread:$0]  %s567, 704, %s569, [#allocation21], 64, 64, 4
        $region68: #{fwd.1} parent=11 // pred_fallthru
          _
        // Predicated region
        $region69: #{fwd.1} parent=11 // pred_check
          %p575 = pneg %p375
        $region70: #{fwd.1} parent=11 // pred_check_branch
          %577 = sbr.rel (%p575) target = $region72
        $region71: #{fwd.1} parent=11 // pred_region
          _
        $region72: #{fwd.1} parent=11 // pred_fallthru
          _
      $region12: #{fwd.1} parent=5 // pred_fallthru
        _
      %p578 = scmp.lt.s32.totalorder %s34, 2
      // Predicated region
      $region73: #{fwd.1} parent=5 // pred_check
        %p579 = pneg %p578
      $region74: #{fwd.1} parent=5 // pred_check_branch
        %581 = sbr.rel (%p579) target = $region76
      $region75: #{fwd.1} parent=5 // pred_region
        // Predicated region
        $region77: #{fwd.1} parent=75 // pred_check
          %p582 = pneg %p54
        $region78: #{fwd.1} parent=75 // pred_check_branch
          %584 = sbr.rel (%p582) target = $region80
        $region79: #{fwd.1} parent=75 // pred_region
          %s585 = sand.u32 %s44, 1
          %s586 = scalar_lea.sflag [#allocation3], %s585
          %s587 = sand.u32 %s44, 1
          %s588 = smul.addr %s587, 256
          %s589 = scalar_lea.vmem [#allocation2], %s588
          %s590 = smul.u32 32, %s34
          %592 = vsyncadd %s586, 0
          %s593 = smul.addr %s590, 8
          %s594 = scalar_lea.hbm %s0, %s593
          %s595 = sshll.u32 %s594, 4
          %s596 = int_to_ptr.hbm [resolvable:$true] %s595
          %s597 = sshll.u32 %s589, 4
          %s598 = int_to_ptr.vmem [resolvable:$true] %s597
          %603 = dma.hbm_to_vmem [thread:$0]  %s596, 4096, %s598, %s586, 128, 128, 8
        $region80: #{fwd.1} parent=75 // pred_fallthru
          _
      $region76: #{fwd.1} parent=5 // pred_fallthru
        _
      %p604 = scmp.le.s32.totalorder 1, %s34
      %p605 = scmp.lt.s32.totalorder %s34, 3
      %p606 = pnand %p604, %p605
      %p607 = pneg %p606
      // Predicated region
      $region81: #{fwd.1} parent=5 // pred_check
        _
      $region82: #{fwd.1} parent=5 // pred_check_branch
        %609 = sbr.rel (%p606) target = $region84
      $region83: #{fwd.1} parent=5 // pred_region
        %s610 = ssub.s32 %s34, 1
        %s611 = sand.u32 %s47, 1
        %s612 = scalar_lea.sflag [#allocation3], %s611
        %s613 = sand.u32 %s47, 1
        %s614 = smul.addr %s613, 256
        %s615 = scalar_lea.vmem [#allocation2], %s614
        // Predicated region
        $region85: #{fwd.1} parent=83 // pred_check
          %p616 = pneg %p60
        $region86: #{fwd.1} parent=83 // pred_check_branch
          %618 = sbr.rel (%p616) target = $region88
        $region87: #{fwd.1} parent=83 // pred_region
          %620 = dma.done %s612, 4096
        $region88: #{fwd.1} parent=83 // pred_fallthru
          _
        // Predicated region
        $region89: #{fwd.1} parent=83 // pred_check
          %p621 = pneg %p81
        $region90: #{fwd.1} parent=83 // pred_check_branch
          %623 = sbr.rel (%p621) target = $region92
        $region91: #{fwd.1} parent=83 // pred_region
          %625 = dma.done [#allocation6], 2560
        $region92: #{fwd.1} parent=83 // pred_fallthru
          _
        // Predicated region
        $region93: #{fwd.1} parent=83 // pred_check
          %p626 = pneg %p102
        $region94: #{fwd.1} parent=83 // pred_check_branch
          %628 = sbr.rel (%p626) target = $region96
        $region95: #{fwd.1} parent=83 // pred_region
          %630 = dma.done [#allocation6], 32
        $region96: #{fwd.1} parent=83 // pred_fallthru
          _
        // Predicated region
        $region97: #{fwd.1} parent=83 // pred_check
          %p631 = pneg %p123
        $region98: #{fwd.1} parent=83 // pred_check_branch
          %633 = sbr.rel (%p631) target = $region100
        $region99: #{fwd.1} parent=83 // pred_region
          %635 = dma.done [#allocation9], 1344
        $region100: #{fwd.1} parent=83 // pred_fallthru
          _
        // Predicated region
        $region101: #{fwd.1} parent=83 // pred_check
          %p636 = pneg %p144
        $region102: #{fwd.1} parent=83 // pred_check_branch
          %638 = sbr.rel (%p636) target = $region104
        $region103: #{fwd.1} parent=83 // pred_region
          %640 = dma.done [#allocation9], 1344
        $region104: #{fwd.1} parent=83 // pred_fallthru
          _
        // Predicated region
        $region105: #{fwd.1} parent=83 // pred_check
          %p641 = pneg %p165
        $region106: #{fwd.1} parent=83 // pred_check_branch
          %643 = sbr.rel (%p641) target = $region108
        $region107: #{fwd.1} parent=83 // pred_region
          %645 = dma.done [#allocation12], 7040
        $region108: #{fwd.1} parent=83 // pred_fallthru
          _
        // Predicated region
        $region109: #{fwd.1} parent=83 // pred_check
          %p646 = pneg %p207
        $region110: #{fwd.1} parent=83 // pred_check_branch
          %648 = sbr.rel (%p646) target = $region112
        $region111: #{fwd.1} parent=83 // pred_region
          %650 = dma.done [#allocation12], 1280
        $region112: #{fwd.1} parent=83 // pred_fallthru
          _
        // Predicated region
        $region113: #{fwd.1} parent=83 // pred_check
          %p651 = pneg %p228
        $region114: #{fwd.1} parent=83 // pred_check_branch
          %653 = sbr.rel (%p651) target = $region116
        $region115: #{fwd.1} parent=83 // pred_region
          %655 = dma.done [#allocation15], 1280
        $region116: #{fwd.1} parent=83 // pred_fallthru
          _
        // Predicated region
        $region117: #{fwd.1} parent=83 // pred_check
          %p656 = pneg %p249
        $region118: #{fwd.1} parent=83 // pred_check_branch
          %658 = sbr.rel (%p656) target = $region120
        $region119: #{fwd.1} parent=83 // pred_region
          %660 = dma.done [#allocation15], 3200
        $region120: #{fwd.1} parent=83 // pred_fallthru
          _
        // Predicated region
        $region121: #{fwd.1} parent=83 // pred_check
          %p661 = pneg %p270
        $region122: #{fwd.1} parent=83 // pred_check_branch
          %663 = sbr.rel (%p661) target = $region124
        $region123: #{fwd.1} parent=83 // pred_region
          %665 = dma.done [#allocation18], 16
        $region124: #{fwd.1} parent=83 // pred_fallthru
          _
        // Predicated region
        $region125: #{fwd.1} parent=83 // pred_check
          %p666 = pneg %p312
        $region126: #{fwd.1} parent=83 // pred_check_branch
          %668 = sbr.rel (%p666) target = $region128
        $region127: #{fwd.1} parent=83 // pred_region
          %670 = dma.done [#allocation18], 960
        $region128: #{fwd.1} parent=83 // pred_fallthru
          _
        // Predicated region
        $region129: #{fwd.1} parent=83 // pred_check
          %p671 = pneg %p354
        $region130: #{fwd.1} parent=83 // pred_check_branch
          %673 = sbr.rel (%p671) target = $region132
        $region131: #{fwd.1} parent=83 // pred_region
          %675 = dma.done [#allocation21], 704
        $region132: #{fwd.1} parent=83 // pred_fallthru
          _
        %s676 = sand.u32 %s47, 1
        %s677 = scalar_lea.sflag [#allocation3], %s676
        %s678 = sand.u32 %s47, 1
        %s679 = smul.addr %s678, 256
        %s680 = scalar_lea.vmem [#allocation2], %s679
        %p681 = pneg %p60
        %p682 = pneg %p57
        %p683 = pneg %p81
        %p684 = pneg %p78
        %p685 = pneg %p102
        %p686 = pneg %p99
        %p687 = pneg %p123
        %p688 = pneg %p120
        %p689 = pneg %p144
        %p690 = pneg %p141
        %p691 = pneg %p165
        %p692 = pneg %p162
        %p693 = pneg %p186
        %p694 = pneg %p183
        %p695 = pneg %p207
        %p696 = pneg %p204
        %p697 = pneg %p228
        %p698 = pneg %p225
        %p699 = pneg %p249
        %p700 = pneg %p246
        %p701 = pneg %p270
        %p702 = pneg %p267
        %p703 = pneg %p291
        %p704 = pneg %p288
        %p705 = pneg %p312
        %p706 = pneg %p309
        %p707 = pneg %p333
        %p708 = pneg %p330
        %p709 = pneg %p354
        %p710 = pneg %p351
        %p711 = pneg %p375
        %p712 = pneg %p372
        %p713 = pneg %p401
        %p714 = pneg %p398
        %s715 = sand.u32 %s388, 1
        %s716 = scalar_lea.sflag [#allocation4], %s715
        %s717 = sand.u32 %s388, 1
        %s718 = smul.addr %s717, 8
        %s719 = scalar_lea.vmem [#allocation22], %s718
        %s720 = smul.u32 32, %s39
        %v722 = vld [vmem:[%s615] sm:$0xff]
        %v723 = vld [vmem:[%s615 + $0x8] sm:$0xff]
        %v724 = vld [vmem:[%s615 + $0x10] sm:$0xff]
        %v725 = vld [vmem:[%s615 + $0x18] sm:$0xff]
        %v726 = vld [vmem:[%s615 + $0x20] sm:$0xff]
        %v727 = vld [vmem:[%s615 + $0x28] sm:$0xff]
        %v728 = vld [vmem:[%s615 + $0x30] sm:$0xff]
        %v729 = vld [vmem:[%s615 + $0x38] sm:$0xff]
        %v730 = vld [vmem:[%s615 + $0x40] sm:$0xff]
        %v731 = vld [vmem:[%s615 + $0x48] sm:$0xff]
        %v732 = vld [vmem:[%s615 + $0x50] sm:$0xff]
        %v733 = vld [vmem:[%s615 + $0x58] sm:$0xff]
        %v734 = vld [vmem:[%s615 + $0x60] sm:$0xff]
        %v735 = vld [vmem:[%s615 + $0x68] sm:$0xff]
        %v736 = vld [vmem:[%s615 + $0x70] sm:$0xff]
        %v737 = vld [vmem:[%s615 + $0x78] sm:$0xff]
        %v738 = vld [vmem:[%s615 + $0x80] sm:$0xff]
        %v739 = vld [vmem:[%s615 + $0x88] sm:$0xff]
        %v740 = vld [vmem:[%s615 + $0x90] sm:$0xff]
        %v741 = vld [vmem:[%s615 + $0x98] sm:$0xff]
        %v742 = vld [vmem:[%s615 + $0xa0] sm:$0xff]
        %v743 = vld [vmem:[%s615 + $0xa8] sm:$0xff]
        %v744 = vld [vmem:[%s615 + $0xb0] sm:$0xff]
        %v745 = vld [vmem:[%s615 + $0xb8] sm:$0xff]
        %v746 = vld [vmem:[%s615 + $0xc0] sm:$0xff]
        %v747 = vld [vmem:[%s615 + $0xc8] sm:$0xff]
        %v748 = vld [vmem:[%s615 + $0xd0] sm:$0xff]
        %v749 = vld [vmem:[%s615 + $0xd8] sm:$0xff]
        %v750 = vld [vmem:[%s615 + $0xe0] sm:$0xff]
        %v751 = vld [vmem:[%s615 + $0xe8] sm:$0xff]
        %v752 = vld [vmem:[%s615 + $0xf0] sm:$0xff]
        %v753 = vld [vmem:[%s615 + $0xf8] sm:$0xff]
        %v754 = vpack.c.bf16 %v723, %v722
        %v755 = vpack.c.bf16 %v725, %v724
        %v756 = vpack.c.bf16 %v727, %v726
        %v757 = vpack.c.bf16 %v729, %v728
        %v758 = vpack.c.bf16 %v731, %v730
        %v759 = vpack.c.bf16 %v733, %v732
        %v760 = vpack.c.bf16 %v735, %v734
        %v761 = vpack.c.bf16 %v737, %v736
        %v762 = vpack.c.bf16 %v739, %v738
        %v763 = vpack.c.bf16 %v741, %v740
        %v764 = vpack.c.bf16 %v743, %v742
        %v765 = vpack.c.bf16 %v745, %v744
        %v766 = vpack.c.bf16 %v747, %v746
        %v767 = vpack.c.bf16 %v749, %v748
        %v768 = vpack.c.bf16 %v751, %v750
        %v769 = vpack.c.bf16 %v753, %v752
        %v770 = vld [vmem:[#allocation5] sm:$0xff]
        %v771 = vld [vmem:[#allocation5 + $0x8] sm:$0xff]
        %v772 = vld [vmem:[#allocation5 + $0x10] sm:$0xff]
        %v773 = vld [vmem:[#allocation5 + $0x18] sm:$0xff]
        %s774 = scalar_lea.vmem [#allocation5], 32
        %v775 = vld [vmem:[%s774] sm:$0xff]
        %v776 = vld [vmem:[%s774 + $0x8] sm:$0xff]
        %v777 = vld [vmem:[%s774 + $0x10] sm:$0xff]
        %v778 = vld [vmem:[%s774 + $0x18] sm:$0xff]
        %vm779 = vsmask.f32 7424
        %v781 = vshrl.u32 %v754, 16
        %v783 = vshll.u32 %v754, 16
        %v785 = vrot.slane %v783, 1
        %v786 = vor.u32 %v781, %v785
        %v788 = vshll.u32 %v755, 16
        %v790 = vrot.slane %v788, 1
        %v791 = vsel %vm779, %v786, %v790
        %v792 = vshrl.u32 %v755, 16
        %v794 = vor.u32 %v792, %v790
        %v796 = vshll.u32 %v756, 16
        %v798 = vrot.slane %v796, 1
        %v799 = vsel %vm779, %v794, %v798
        %v800 = vshrl.u32 %v756, 16
        %v802 = vor.u32 %v800, %v798
        %v804 = vshll.u32 %v757, 16
        %v806 = vrot.slane %v804, 1
        %v807 = vsel %vm779, %v802, %v806
        %v808 = vshrl.u32 %v757, 16
        %v810 = vor.u32 %v808, %v806
        %v812 = vshll.u32 %v758, 16
        %v814 = vrot.slane %v812, 1
        %v815 = vsel %vm779, %v810, %v814
        %v816 = vshrl.u32 %v758, 16
        %v818 = vor.u32 %v816, %v814
        %v820 = vshll.u32 %v759, 16
        %v822 = vrot.slane %v820, 1
        %v823 = vsel %vm779, %v818, %v822
        %v824 = vshrl.u32 %v759, 16
        %v826 = vor.u32 %v824, %v822
        %v828 = vshll.u32 %v760, 16
        %v830 = vrot.slane %v828, 1
        %v831 = vsel %vm779, %v826, %v830
        %v832 = vshrl.u32 %v760, 16
        %v834 = vor.u32 %v832, %v830
        %v836 = vshll.u32 %v761, 16
        %v838 = vrot.slane %v836, 1
        %v839 = vsel %vm779, %v834, %v838
        %v840 = vshrl.u32 %v761, 16
        %v842 = vor.u32 %v840, %v838
        %v844 = vshll.u32 %v762, 16
        %v846 = vrot.slane %v844, 1
        %v847 = vsel %vm779, %v842, %v846
        %v848 = vshrl.u32 %v762, 16
        %v850 = vor.u32 %v848, %v846
        %v852 = vshll.u32 %v763, 16
        %v854 = vrot.slane %v852, 1
        %v855 = vsel %vm779, %v850, %v854
        %v856 = vshrl.u32 %v763, 16
        %v858 = vor.u32 %v856, %v854
        %v860 = vshll.u32 %v764, 16
        %v862 = vrot.slane %v860, 1
        %v863 = vsel %vm779, %v858, %v862
        %v864 = vshrl.u32 %v764, 16
        %v866 = vor.u32 %v864, %v862
        %v868 = vshll.u32 %v765, 16
        %v870 = vrot.slane %v868, 1
        %v871 = vsel %vm779, %v866, %v870
        %v872 = vshrl.u32 %v765, 16
        %v874 = vor.u32 %v872, %v870
        %v876 = vshll.u32 %v766, 16
        %v878 = vrot.slane %v876, 1
        %v879 = vsel %vm779, %v874, %v878
        %v880 = vshrl.u32 %v766, 16
        %v882 = vor.u32 %v880, %v878
        %v884 = vshll.u32 %v767, 16
        %v886 = vrot.slane %v884, 1
        %v887 = vsel %vm779, %v882, %v886
        %v888 = vshrl.u32 %v767, 16
        %v890 = vor.u32 %v888, %v886
        %v892 = vshll.u32 %v768, 16
        %v894 = vrot.slane %v892, 1
        %v895 = vsel %vm779, %v890, %v894
        %v896 = vshrl.u32 %v768, 16
        %v898 = vor.u32 %v896, %v894
        %v900 = vshll.u32 %v769, 16
        %v902 = vrot.slane %v900, 1
        %v903 = vsel %vm779, %v898, %v902
        %v904 = vshrl.u32 %v769, 16
        %v906 = vor.u32 %v904, %v902
        %v911 = vunpack.c.l.b16 %v775
        %v912 = vunpack.c.h.b16 %v775
        %v913 = vunpack.c.l.b16 %v776
        %v914 = vunpack.c.h.b16 %v776
        %v915 = vunpack.c.l.b16 %v777
        %v916 = vunpack.c.h.b16 %v777
        %v917 = vunpack.c.l.b16 %v778
        %v918 = vunpack.c.h.b16 %v778
        %v919 = vpack.c.b16 %v913, %v911
        %v920 = vpack.c.b16 %v914, %v912
        %v921 = vpack.c.b16 %v917, %v915
        %v922 = vpack.c.b16 %v918, %v916
        %vm927 = vcmask 261120
        %v929 = vsel %vm927, %v791, 0
        %v932 = vsel %vm927, %v799, 0
        %v935 = vsel %vm927, %v807, 0
        %v938 = vsel %vm927, %v815, 0
        %v941 = vsel %vm927, %v823, 0
        %v944 = vsel %vm927, %v831, 0
        %v947 = vsel %vm927, %v839, 0
        %v950 = vsel %vm927, %v847, 0
        %v953 = vsel %vm927, %v855, 0
        %v956 = vsel %vm927, %v863, 0
        %v959 = vsel %vm927, %v871, 0
        %v962 = vsel %vm927, %v879, 0
        %v965 = vsel %vm927, %v887, 0
        %v968 = vsel %vm927, %v895, 0
        %v971 = vsel %vm927, %v903, 0
        %v974 = vsel %vm927, %v906, 0
        %976 = vmatpush.bf16.msra.mxu0 0
        %977 = vmatpush.bf16.msra.mxu0 0
        %978 = vmatpush.bf16.msra.mxu0 0
        %979 = vmatpush.bf16.msra.mxu0 0
        %980 = vmatpush.bf16.msra.mxu0 0
        %981 = vmatpush.bf16.msra.mxu0 0
        %982 = vmatpush.bf16.msra.mxu0 %v921
        %983 = vmatpush.bf16.msra.mxu0 %v919
        %984 = vmatmul.bf16.gmra.mxu0 %v929
        %v985 = vpop.f32.mrf.mxu0
        %v986 = vadd.f32 0.0, %v985
        %v987 = vpop.f32.mrf.mxu0
        %v988 = vadd.f32 0.0, %v987
        %989 = vmatmul.bf16.gmra.mxu0 %v932
        %v990 = vpop.f32.mrf.mxu0
        %v991 = vadd.f32 0.0, %v990
        %v992 = vpop.f32.mrf.mxu0
        %v993 = vadd.f32 0.0, %v992
        %994 = vmatmul.bf16.gmra.mxu0 %v935
        %v995 = vpop.f32.mrf.mxu0
        %v996 = vadd.f32 0.0, %v995
        %v997 = vpop.f32.mrf.mxu0
        %v998 = vadd.f32 0.0, %v997
        %999 = vmatmul.bf16.gmra.mxu0 %v938
        %v1000 = vpop.f32.mrf.mxu0
        %v1001 = vadd.f32 0.0, %v1000
        %v1002 = vpop.f32.mrf.mxu0
        %v1003 = vadd.f32 0.0, %v1002
        %1004 = vmatmul.bf16.gmra.mxu0 %v941
        %v1005 = vpop.f32.mrf.mxu0
        %v1006 = vadd.f32 0.0, %v1005
        %v1007 = vpop.f32.mrf.mxu0
        %v1008 = vadd.f32 0.0, %v1007
        %1009 = vmatmul.bf16.gmra.mxu0 %v944
        %v1010 = vpop.f32.mrf.mxu0
        %v1011 = vadd.f32 0.0, %v1010
        %v1012 = vpop.f32.mrf.mxu0
        %v1013 = vadd.f32 0.0, %v1012
        %1014 = vmatmul.bf16.gmra.mxu0 %v947
        %v1015 = vpop.f32.mrf.mxu0
        %v1016 = vadd.f32 0.0, %v1015
        %v1017 = vpop.f32.mrf.mxu0
        %v1018 = vadd.f32 0.0, %v1017
        %1019 = vmatmul.bf16.gmra.mxu0 %v950
        %v1020 = vpop.f32.mrf.mxu0
        %v1021 = vadd.f32 0.0, %v1020
        %v1022 = vpop.f32.mrf.mxu0
        %v1023 = vadd.f32 0.0, %v1022
        %1024 = vmatmul.bf16.gmra.mxu0 %v953
        %v1025 = vpop.f32.mrf.mxu0
        %v1026 = vadd.f32 0.0, %v1025
        %v1027 = vpop.f32.mrf.mxu0
        %v1028 = vadd.f32 0.0, %v1027
        %1029 = vmatmul.bf16.gmra.mxu0 %v956
        %v1030 = vpop.f32.mrf.mxu0
        %v1031 = vadd.f32 0.0, %v1030
        %v1032 = vpop.f32.mrf.mxu0
        %v1033 = vadd.f32 0.0, %v1032
        %1034 = vmatmul.bf16.gmra.mxu0 %v959
        %v1035 = vpop.f32.mrf.mxu0
        %v1036 = vadd.f32 0.0, %v1035
        %v1037 = vpop.f32.mrf.mxu0
        %v1038 = vadd.f32 0.0, %v1037
        %1039 = vmatmul.bf16.gmra.mxu0 %v962
        %v1040 = vpop.f32.mrf.mxu0
        %v1041 = vadd.f32 0.0, %v1040
        %v1042 = vpop.f32.mrf.mxu0
        %v1043 = vadd.f32 0.0, %v1042
        %1044 = vmatmul.bf16.gmra.mxu0 %v965
        %v1045 = vpop.f32.mrf.mxu0
        %v1046 = vadd.f32 0.0, %v1045
        %v1047 = vpop.f32.mrf.mxu0
        %v1048 = vadd.f32 0.0, %v1047
        %1049 = vmatmul.bf16.gmra.mxu0 %v968
        %v1050 = vpop.f32.mrf.mxu0
        %v1051 = vadd.f32 0.0, %v1050
        %v1052 = vpop.f32.mrf.mxu0
        %v1053 = vadd.f32 0.0, %v1052
        %1054 = vmatmul.bf16.gmra.mxu0 %v971
        %v1055 = vpop.f32.mrf.mxu0
        %v1056 = vadd.f32 0.0, %v1055
        %v1057 = vpop.f32.mrf.mxu0
        %v1058 = vadd.f32 0.0, %v1057
        %1059 = vmatmul.bf16.gmra.mxu0 %v974
        %v1060 = vpop.f32.mrf.mxu0
        %v1061 = vadd.f32 0.0, %v1060
        %v1062 = vpop.f32.mrf.mxu0
        %v1063 = vadd.f32 0.0, %v1062
        %1064 = vdwg.mxu0
        %1065 = vmatpush.bf16.msra.mxu0 0
        %1066 = vmatpush.bf16.msra.mxu0 0
        %1067 = vmatpush.bf16.msra.mxu0 0
        %1068 = vmatpush.bf16.msra.mxu0 0
        %1069 = vmatpush.bf16.msra.mxu0 0
        %1070 = vmatpush.bf16.msra.mxu0 0
        %1071 = vmatpush.bf16.msra.mxu0 %v922
        %1072 = vmatpush.bf16.msra.mxu0 %v920
        %1073 = vmatmul.bf16.gmra.mxu0 %v929
        %v1074 = vpop.f32.mrf.mxu0
        %v1075 = vadd.f32 0.0, %v1074
        %v1076 = vpop.f32.mrf.mxu0
        %v1077 = vadd.f32 0.0, %v1076
        %1078 = vmatmul.bf16.gmra.mxu0 %v932
        %v1079 = vpop.f32.mrf.mxu0
        %v1080 = vadd.f32 0.0, %v1079
        %v1081 = vpop.f32.mrf.mxu0
        %v1082 = vadd.f32 0.0, %v1081
        %1083 = vmatmul.bf16.gmra.mxu0 %v935
        %v1084 = vpop.f32.mrf.mxu0
        %v1085 = vadd.f32 0.0, %v1084
        %v1086 = vpop.f32.mrf.mxu0
        %v1087 = vadd.f32 0.0, %v1086
        %1088 = vmatmul.bf16.gmra.mxu0 %v938
        %v1089 = vpop.f32.mrf.mxu0
        %v1090 = vadd.f32 0.0, %v1089
        %v1091 = vpop.f32.mrf.mxu0
        %v1092 = vadd.f32 0.0, %v1091
        %1093 = vmatmul.bf16.gmra.mxu0 %v941
        %v1094 = vpop.f32.mrf.mxu0
        %v1095 = vadd.f32 0.0, %v1094
        %v1096 = vpop.f32.mrf.mxu0
        %v1097 = vadd.f32 0.0, %v1096
        %1098 = vmatmul.bf16.gmra.mxu0 %v944
        %v1099 = vpop.f32.mrf.mxu0
        %v1100 = vadd.f32 0.0, %v1099
        %v1101 = vpop.f32.mrf.mxu0
        %v1102 = vadd.f32 0.0, %v1101
        %1103 = vmatmul.bf16.gmra.mxu0 %v947
        %v1104 = vpop.f32.mrf.mxu0
        %v1105 = vadd.f32 0.0, %v1104
        %v1106 = vpop.f32.mrf.mxu0
        %v1107 = vadd.f32 0.0, %v1106
        %1108 = vmatmul.bf16.gmra.mxu0 %v950
        %v1109 = vpop.f32.mrf.mxu0
        %v1110 = vadd.f32 0.0, %v1109
        %v1111 = vpop.f32.mrf.mxu0
        %v1112 = vadd.f32 0.0, %v1111
        %1113 = vmatmul.bf16.gmra.mxu0 %v953
        %v1114 = vpop.f32.mrf.mxu0
        %v1115 = vadd.f32 0.0, %v1114
        %v1116 = vpop.f32.mrf.mxu0
        %v1117 = vadd.f32 0.0, %v1116
        %1118 = vmatmul.bf16.gmra.mxu0 %v956
        %v1119 = vpop.f32.mrf.mxu0
        %v1120 = vadd.f32 0.0, %v1119
        %v1121 = vpop.f32.mrf.mxu0
        %v1122 = vadd.f32 0.0, %v1121
        %1123 = vmatmul.bf16.gmra.mxu0 %v959
        %v1124 = vpop.f32.mrf.mxu0
        %v1125 = vadd.f32 0.0, %v1124
        %v1126 = vpop.f32.mrf.mxu0
        %v1127 = vadd.f32 0.0, %v1126
        %1128 = vmatmul.bf16.gmra.mxu0 %v962
        %v1129 = vpop.f32.mrf.mxu0
        %v1130 = vadd.f32 0.0, %v1129
        %v1131 = vpop.f32.mrf.mxu0
        %v1132 = vadd.f32 0.0, %v1131
        %1133 = vmatmul.bf16.gmra.mxu0 %v965
        %v1134 = vpop.f32.mrf.mxu0
        %v1135 = vadd.f32 0.0, %v1134
        %v1136 = vpop.f32.mrf.mxu0
        %v1137 = vadd.f32 0.0, %v1136
        %1138 = vmatmul.bf16.gmra.mxu0 %v968
        %v1139 = vpop.f32.mrf.mxu0
        %v1140 = vadd.f32 0.0, %v1139
        %v1141 = vpop.f32.mrf.mxu0
        %v1142 = vadd.f32 0.0, %v1141
        %1143 = vmatmul.bf16.gmra.mxu0 %v971
        %v1144 = vpop.f32.mrf.mxu0
        %v1145 = vadd.f32 0.0, %v1144
        %v1146 = vpop.f32.mrf.mxu0
        %v1147 = vadd.f32 0.0, %v1146
        %1148 = vmatmul.bf16.gmra.mxu0 %v974
        %v1149 = vpop.f32.mrf.mxu0
        %v1150 = vadd.f32 0.0, %v1149
        %v1151 = vpop.f32.mrf.mxu0
        %v1152 = vadd.f32 0.0, %v1151
        %1153 = vdwg.mxu0
        %v1158 = vunpack.c.l.b16 %v770
        %v1159 = vunpack.c.h.b16 %v770
        %v1160 = vunpack.c.l.b16 %v771
        %v1161 = vunpack.c.h.b16 %v771
        %v1162 = vunpack.c.l.b16 %v772
        %v1163 = vunpack.c.h.b16 %v772
        %v1164 = vunpack.c.l.b16 %v773
        %v1165 = vunpack.c.h.b16 %v773
        %v1166 = vpack.c.b16 %v1160, %v1158
        %v1167 = vpack.c.b16 %v1161, %v1159
        %v1168 = vpack.c.b16 %v1164, %v1162
        %v1169 = vpack.c.b16 %v1165, %v1163
        %v1174 = vsel %vm927, %v754, 0
        %v1176 = vsel %vm927, %v755, 0
        %v1178 = vsel %vm927, %v756, 0
        %v1180 = vsel %vm927, %v757, 0
        %v1182 = vsel %vm927, %v758, 0
        %v1184 = vsel %vm927, %v759, 0
        %v1186 = vsel %vm927, %v760, 0
        %v1188 = vsel %vm927, %v761, 0
        %v1190 = vsel %vm927, %v762, 0
        %v1192 = vsel %vm927, %v763, 0
        %v1194 = vsel %vm927, %v764, 0
        %v1196 = vsel %vm927, %v765, 0
        %v1198 = vsel %vm927, %v766, 0
        %v1200 = vsel %vm927, %v767, 0
        %v1202 = vsel %vm927, %v768, 0
        %v1204 = vsel %vm927, %v769, 0
        %1206 = vmatpush.bf16.msra.mxu0 0
        %1207 = vmatpush.bf16.msra.mxu0 0
        %1208 = vmatpush.bf16.msra.mxu0 0
        %1209 = vmatpush.bf16.msra.mxu0 0
        %1210 = vmatpush.bf16.msra.mxu0 0
        %1211 = vmatpush.bf16.msra.mxu0 0
        %1212 = vmatpush.bf16.msra.mxu0 %v1168
        %1213 = vmatpush.bf16.msra.mxu0 %v1166
        %1214 = vmatmul.bf16.gmra.mxu0 %v1174
        %v1215 = vpop.f32.mrf.mxu0
        %v1216 = vadd.f32 %v986, %v1215
        %v1217 = vpop.f32.mrf.mxu0
        %v1218 = vadd.f32 %v988, %v1217
        %1219 = vmatmul.bf16.gmra.mxu0 %v1176
        %v1220 = vpop.f32.mrf.mxu0
        %v1221 = vadd.f32 %v991, %v1220
        %v1222 = vpop.f32.mrf.mxu0
        %v1223 = vadd.f32 %v993, %v1222
        %1224 = vmatmul.bf16.gmra.mxu0 %v1178
        %v1225 = vpop.f32.mrf.mxu0
        %v1226 = vadd.f32 %v996, %v1225
        %v1227 = vpop.f32.mrf.mxu0
        %v1228 = vadd.f32 %v998, %v1227
        %1229 = vmatmul.bf16.gmra.mxu0 %v1180
        %v1230 = vpop.f32.mrf.mxu0
        %v1231 = vadd.f32 %v1001, %v1230
        %v1232 = vpop.f32.mrf.mxu0
        %v1233 = vadd.f32 %v1003, %v1232
        %1234 = vmatmul.bf16.gmra.mxu0 %v1182
        %v1235 = vpop.f32.mrf.mxu0
        %v1236 = vadd.f32 %v1006, %v1235
        %v1237 = vpop.f32.mrf.mxu0
        %v1238 = vadd.f32 %v1008, %v1237
        %1239 = vmatmul.bf16.gmra.mxu0 %v1184
        %v1240 = vpop.f32.mrf.mxu0
        %v1241 = vadd.f32 %v1011, %v1240
        %v1242 = vpop.f32.mrf.mxu0
        %v1243 = vadd.f32 %v1013, %v1242
        %1244 = vmatmul.bf16.gmra.mxu0 %v1186
        %v1245 = vpop.f32.mrf.mxu0
        %v1246 = vadd.f32 %v1016, %v1245
        %v1247 = vpop.f32.mrf.mxu0
        %v1248 = vadd.f32 %v1018, %v1247
        %1249 = vmatmul.bf16.gmra.mxu0 %v1188
        %v1250 = vpop.f32.mrf.mxu0
        %v1251 = vadd.f32 %v1021, %v1250
        %v1252 = vpop.f32.mrf.mxu0
        %v1253 = vadd.f32 %v1023, %v1252
        %1254 = vmatmul.bf16.gmra.mxu0 %v1190
        %v1255 = vpop.f32.mrf.mxu0
        %v1256 = vadd.f32 %v1026, %v1255
        %v1257 = vpop.f32.mrf.mxu0
        %v1258 = vadd.f32 %v1028, %v1257
        %1259 = vmatmul.bf16.gmra.mxu0 %v1192
        %v1260 = vpop.f32.mrf.mxu0
        %v1261 = vadd.f32 %v1031, %v1260
        %v1262 = vpop.f32.mrf.mxu0
        %v1263 = vadd.f32 %v1033, %v1262
        %1264 = vmatmul.bf16.gmra.mxu0 %v1194
        %v1265 = vpop.f32.mrf.mxu0
        %v1266 = vadd.f32 %v1036, %v1265
        %v1267 = vpop.f32.mrf.mxu0
        %v1268 = vadd.f32 %v1038, %v1267
        %1269 = vmatmul.bf16.gmra.mxu0 %v1196
        %v1270 = vpop.f32.mrf.mxu0
        %v1271 = vadd.f32 %v1041, %v1270
        %v1272 = vpop.f32.mrf.mxu0
        %v1273 = vadd.f32 %v1043, %v1272
        %1274 = vmatmul.bf16.gmra.mxu0 %v1198
        %v1275 = vpop.f32.mrf.mxu0
        %v1276 = vadd.f32 %v1046, %v1275
        %v1277 = vpop.f32.mrf.mxu0
        %v1278 = vadd.f32 %v1048, %v1277
        %1279 = vmatmul.bf16.gmra.mxu0 %v1200
        %v1280 = vpop.f32.mrf.mxu0
        %v1281 = vadd.f32 %v1051, %v1280
        %v1282 = vpop.f32.mrf.mxu0
        %v1283 = vadd.f32 %v1053, %v1282
        %1284 = vmatmul.bf16.gmra.mxu0 %v1202
        %v1285 = vpop.f32.mrf.mxu0
        %v1286 = vadd.f32 %v1056, %v1285
        %v1287 = vpop.f32.mrf.mxu0
        %v1288 = vadd.f32 %v1058, %v1287
        %1289 = vmatmul.bf16.gmra.mxu0 %v1204
        %v1290 = vpop.f32.mrf.mxu0
        %v1291 = vadd.f32 %v1061, %v1290
        %v1292 = vpop.f32.mrf.mxu0
        %v1293 = vadd.f32 %v1063, %v1292
        %1294 = vdwg.mxu0
        %1295 = vmatpush.bf16.msra.mxu0 0
        %1296 = vmatpush.bf16.msra.mxu0 0
        %1297 = vmatpush.bf16.msra.mxu0 0
        %1298 = vmatpush.bf16.msra.mxu0 0
        %1299 = vmatpush.bf16.msra.mxu0 0
        %1300 = vmatpush.bf16.msra.mxu0 0
        %1301 = vmatpush.bf16.msra.mxu0 %v1169
        %1302 = vmatpush.bf16.msra.mxu0 %v1167
        %1303 = vmatmul.bf16.gmra.mxu0 %v1174
        %v1304 = vpop.f32.mrf.mxu0
        %v1305 = vadd.f32 %v1075, %v1304
        %v1306 = vpop.f32.mrf.mxu0
        %v1307 = vadd.f32 %v1077, %v1306
        %1308 = vmatmul.bf16.gmra.mxu0 %v1176
        %v1309 = vpop.f32.mrf.mxu0
        %v1310 = vadd.f32 %v1080, %v1309
        %v1311 = vpop.f32.mrf.mxu0
        %v1312 = vadd.f32 %v1082, %v1311
        %1313 = vmatmul.bf16.gmra.mxu0 %v1178
        %v1314 = vpop.f32.mrf.mxu0
        %v1315 = vadd.f32 %v1085, %v1314
        %v1316 = vpop.f32.mrf.mxu0
        %v1317 = vadd.f32 %v1087, %v1316
        %1318 = vmatmul.bf16.gmra.mxu0 %v1180
        %v1319 = vpop.f32.mrf.mxu0
        %v1320 = vadd.f32 %v1090, %v1319
        %v1321 = vpop.f32.mrf.mxu0
        %v1322 = vadd.f32 %v1092, %v1321
        %1323 = vmatmul.bf16.gmra.mxu0 %v1182
        %v1324 = vpop.f32.mrf.mxu0
        %v1325 = vadd.f32 %v1095, %v1324
        %v1326 = vpop.f32.mrf.mxu0
        %v1327 = vadd.f32 %v1097, %v1326
        %1328 = vmatmul.bf16.gmra.mxu0 %v1184
        %v1329 = vpop.f32.mrf.mxu0
        %v1330 = vadd.f32 %v1100, %v1329
        %v1331 = vpop.f32.mrf.mxu0
        %v1332 = vadd.f32 %v1102, %v1331
        %1333 = vmatmul.bf16.gmra.mxu0 %v1186
        %v1334 = vpop.f32.mrf.mxu0
        %v1335 = vadd.f32 %v1105, %v1334
        %v1336 = vpop.f32.mrf.mxu0
        %v1337 = vadd.f32 %v1107, %v1336
        %1338 = vmatmul.bf16.gmra.mxu0 %v1188
        %v1339 = vpop.f32.mrf.mxu0
        %v1340 = vadd.f32 %v1110, %v1339
        %v1341 = vpop.f32.mrf.mxu0
        %v1342 = vadd.f32 %v1112, %v1341
        %1343 = vmatmul.bf16.gmra.mxu0 %v1190
        %v1344 = vpop.f32.mrf.mxu0
        %v1345 = vadd.f32 %v1115, %v1344
        %v1346 = vpop.f32.mrf.mxu0
        %v1347 = vadd.f32 %v1117, %v1346
        %1348 = vmatmul.bf16.gmra.mxu0 %v1192
        %v1349 = vpop.f32.mrf.mxu0
        %v1350 = vadd.f32 %v1120, %v1349
        %v1351 = vpop.f32.mrf.mxu0
        %v1352 = vadd.f32 %v1122, %v1351
        %1353 = vmatmul.bf16.gmra.mxu0 %v1194
        %v1354 = vpop.f32.mrf.mxu0
        %v1355 = vadd.f32 %v1125, %v1354
        %v1356 = vpop.f32.mrf.mxu0
        %v1357 = vadd.f32 %v1127, %v1356
        %1358 = vmatmul.bf16.gmra.mxu0 %v1196
        %v1359 = vpop.f32.mrf.mxu0
        %v1360 = vadd.f32 %v1130, %v1359
        %v1361 = vpop.f32.mrf.mxu0
        %v1362 = vadd.f32 %v1132, %v1361
        %1363 = vmatmul.bf16.gmra.mxu0 %v1198
        %v1364 = vpop.f32.mrf.mxu0
        %v1365 = vadd.f32 %v1135, %v1364
        %v1366 = vpop.f32.mrf.mxu0
        %v1367 = vadd.f32 %v1137, %v1366
        %1368 = vmatmul.bf16.gmra.mxu0 %v1200
        %v1369 = vpop.f32.mrf.mxu0
        %v1370 = vadd.f32 %v1140, %v1369
        %v1371 = vpop.f32.mrf.mxu0
        %v1372 = vadd.f32 %v1142, %v1371
        %1373 = vmatmul.bf16.gmra.mxu0 %v1202
        %v1374 = vpop.f32.mrf.mxu0
        %v1375 = vadd.f32 %v1145, %v1374
        %v1376 = vpop.f32.mrf.mxu0
        %v1377 = vadd.f32 %v1147, %v1376
        %1378 = vmatmul.bf16.gmra.mxu0 %v1204
        %v1379 = vpop.f32.mrf.mxu0
        %v1380 = vadd.f32 %v1150, %v1379
        %v1381 = vpop.f32.mrf.mxu0
        %v1382 = vadd.f32 %v1152, %v1381
        %1383 = vdwg.mxu0
        %s1384 = scalar_lea.vmem [#allocation5], 64
        %v1385 = vld [vmem:[%s1384] sm:$0xff]
        %v1386 = vld [vmem:[%s1384 + $0x8] sm:$0xff]
        %v1387 = vld [vmem:[%s1384 + $0x10] sm:$0xff]
        %v1388 = vld [vmem:[%s1384 + $0x18] sm:$0xff]
        %vm1405 = vcmask 1046528
        %v1406 = vrot.slane %v754, 1
        %v1407 = vrot.slane %v755, 1
        %v1408 = vsel %vm1405, %v1406, %v1407
        %v1409 = vrot.slane %v756, 1
        %v1410 = vsel %vm1405, %v1407, %v1409
        %v1411 = vrot.slane %v757, 1
        %v1412 = vsel %vm1405, %v1409, %v1411
        %v1413 = vrot.slane %v758, 1
        %v1414 = vsel %vm1405, %v1411, %v1413
        %v1415 = vrot.slane %v759, 1
        %v1416 = vsel %vm1405, %v1413, %v1415
        %v1417 = vrot.slane %v760, 1
        %v1418 = vsel %vm1405, %v1415, %v1417
        %v1419 = vrot.slane %v761, 1
        %v1420 = vsel %vm1405, %v1417, %v1419
        %v1421 = vrot.slane %v762, 1
        %v1422 = vsel %vm1405, %v1419, %v1421
        %v1423 = vrot.slane %v763, 1
        %v1424 = vsel %vm1405, %v1421, %v1423
        %v1425 = vrot.slane %v764, 1
        %v1426 = vsel %vm1405, %v1423, %v1425
        %v1427 = vrot.slane %v765, 1
        %v1428 = vsel %vm1405, %v1425, %v1427
        %v1429 = vrot.slane %v766, 1
        %v1430 = vsel %vm1405, %v1427, %v1429
        %v1431 = vrot.slane %v767, 1
        %v1432 = vsel %vm1405, %v1429, %v1431
        %v1433 = vrot.slane %v768, 1
        %v1434 = vsel %vm1405, %v1431, %v1433
        %v1435 = vrot.slane %v769, 1
        %v1436 = vsel %vm1405, %v1433, %v1435
        %v1441 = vunpack.c.l.b16 %v1385
        %v1442 = vunpack.c.h.b16 %v1385
        %v1443 = vunpack.c.l.b16 %v1386
        %v1444 = vunpack.c.h.b16 %v1386
        %v1445 = vunpack.c.l.b16 %v1387
        %v1446 = vunpack.c.h.b16 %v1387
        %v1447 = vunpack.c.l.b16 %v1388
        %v1448 = vunpack.c.h.b16 %v1388
        %v1449 = vpack.c.b16 %v1443, %v1441
        %v1450 = vpack.c.b16 %v1444, %v1442
        %v1451 = vpack.c.b16 %v1447, %v1445
        %v1452 = vpack.c.b16 %v1448, %v1446
        %v1458 = vsel %vm927, %v1408, 0
        %v1461 = vsel %vm927, %v1410, 0
        %v1464 = vsel %vm927, %v1412, 0
        %v1467 = vsel %vm927, %v1414, 0
        %v1470 = vsel %vm927, %v1416, 0
        %v1473 = vsel %vm927, %v1418, 0
        %v1476 = vsel %vm927, %v1420, 0
        %v1479 = vsel %vm927, %v1422, 0
        %v1482 = vsel %vm927, %v1424, 0
        %v1485 = vsel %vm927, %v1426, 0
        %v1488 = vsel %vm927, %v1428, 0
        %v1491 = vsel %vm927, %v1430, 0
        %v1494 = vsel %vm927, %v1432, 0
        %v1497 = vsel %vm927, %v1434, 0
        %v1500 = vsel %vm927, %v1436, 0
        %v1503 = vsel %vm927, %v1435, 0
        %1505 = vmatpush.bf16.msra.mxu0 0
        %1506 = vmatpush.bf16.msra.mxu0 0
        %1507 = vmatpush.bf16.msra.mxu0 0
        %1508 = vmatpush.bf16.msra.mxu0 0
        %1509 = vmatpush.bf16.msra.mxu0 0
        %1510 = vmatpush.bf16.msra.mxu0 0
        %1511 = vmatpush.bf16.msra.mxu0 %v1451
        %1512 = vmatpush.bf16.msra.mxu0 %v1449
        %1513 = vmatmul.bf16.gmra.mxu0 %v1458
        %v1514 = vpop.f32.mrf.mxu0
        %v1515 = vadd.f32 0.0, %v1514
        %v1516 = vpop.f32.mrf.mxu0
        %v1517 = vadd.f32 0.0, %v1516
        %1518 = vmatmul.bf16.gmra.mxu0 %v1461
        %v1519 = vpop.f32.mrf.mxu0
        %v1520 = vadd.f32 0.0, %v1519
        %v1521 = vpop.f32.mrf.mxu0
        %v1522 = vadd.f32 0.0, %v1521
        %1523 = vmatmul.bf16.gmra.mxu0 %v1464
        %v1524 = vpop.f32.mrf.mxu0
        %v1525 = vadd.f32 0.0, %v1524
        %v1526 = vpop.f32.mrf.mxu0
        %v1527 = vadd.f32 0.0, %v1526
        %1528 = vmatmul.bf16.gmra.mxu0 %v1467
        %v1529 = vpop.f32.mrf.mxu0
        %v1530 = vadd.f32 0.0, %v1529
        %v1531 = vpop.f32.mrf.mxu0
        %v1532 = vadd.f32 0.0, %v1531
        %1533 = vmatmul.bf16.gmra.mxu0 %v1470
        %v1534 = vpop.f32.mrf.mxu0
        %v1535 = vadd.f32 0.0, %v1534
        %v1536 = vpop.f32.mrf.mxu0
        %v1537 = vadd.f32 0.0, %v1536
        %1538 = vmatmul.bf16.gmra.mxu0 %v1473
        %v1539 = vpop.f32.mrf.mxu0
        %v1540 = vadd.f32 0.0, %v1539
        %v1541 = vpop.f32.mrf.mxu0
        %v1542 = vadd.f32 0.0, %v1541
        %1543 = vmatmul.bf16.gmra.mxu0 %v1476
        %v1544 = vpop.f32.mrf.mxu0
        %v1545 = vadd.f32 0.0, %v1544
        %v1546 = vpop.f32.mrf.mxu0
        %v1547 = vadd.f32 0.0, %v1546
        %1548 = vmatmul.bf16.gmra.mxu0 %v1479
        %v1549 = vpop.f32.mrf.mxu0
        %v1550 = vadd.f32 0.0, %v1549
        %v1551 = vpop.f32.mrf.mxu0
        %v1552 = vadd.f32 0.0, %v1551
        %1553 = vmatmul.bf16.gmra.mxu0 %v1482
        %v1554 = vpop.f32.mrf.mxu0
        %v1555 = vadd.f32 0.0, %v1554
        %v1556 = vpop.f32.mrf.mxu0
        %v1557 = vadd.f32 0.0, %v1556
        %1558 = vmatmul.bf16.gmra.mxu0 %v1485
        %v1559 = vpop.f32.mrf.mxu0
        %v1560 = vadd.f32 0.0, %v1559
        %v1561 = vpop.f32.mrf.mxu0
        %v1562 = vadd.f32 0.0, %v1561
        %1563 = vmatmul.bf16.gmra.mxu0 %v1488
        %v1564 = vpop.f32.mrf.mxu0
        %v1565 = vadd.f32 0.0, %v1564
        %v1566 = vpop.f32.mrf.mxu0
        %v1567 = vadd.f32 0.0, %v1566
        %1568 = vmatmul.bf16.gmra.mxu0 %v1491
        %v1569 = vpop.f32.mrf.mxu0
        %v1570 = vadd.f32 0.0, %v1569
        %v1571 = vpop.f32.mrf.mxu0
        %v1572 = vadd.f32 0.0, %v1571
        %1573 = vmatmul.bf16.gmra.mxu0 %v1494
        %v1574 = vpop.f32.mrf.mxu0
        %v1575 = vadd.f32 0.0, %v1574
        %v1576 = vpop.f32.mrf.mxu0
        %v1577 = vadd.f32 0.0, %v1576
        %1578 = vmatmul.bf16.gmra.mxu0 %v1497
        %v1579 = vpop.f32.mrf.mxu0
        %v1580 = vadd.f32 0.0, %v1579
        %v1581 = vpop.f32.mrf.mxu0
        %v1582 = vadd.f32 0.0, %v1581
        %1583 = vmatmul.bf16.gmra.mxu0 %v1500
        %v1584 = vpop.f32.mrf.mxu0
        %v1585 = vadd.f32 0.0, %v1584
        %v1586 = vpop.f32.mrf.mxu0
        %v1587 = vadd.f32 0.0, %v1586
        %1588 = vmatmul.bf16.gmra.mxu0 %v1503
        %v1589 = vpop.f32.mrf.mxu0
        %v1590 = vadd.f32 0.0, %v1589
        %v1591 = vpop.f32.mrf.mxu0
        %v1592 = vadd.f32 0.0, %v1591
        %1593 = vdwg.mxu0
        %1594 = vmatpush.bf16.msra.mxu0 0
        %1595 = vmatpush.bf16.msra.mxu0 0
        %1596 = vmatpush.bf16.msra.mxu0 0
        %1597 = vmatpush.bf16.msra.mxu0 0
        %1598 = vmatpush.bf16.msra.mxu0 0
        %1599 = vmatpush.bf16.msra.mxu0 0
        %1600 = vmatpush.bf16.msra.mxu0 %v1452
        %1601 = vmatpush.bf16.msra.mxu0 %v1450
        %1602 = vmatmul.bf16.gmra.mxu0 %v1458
        %v1603 = vpop.f32.mrf.mxu0
        %v1604 = vadd.f32 0.0, %v1603
        %v1605 = vpop.f32.mrf.mxu0
        %v1606 = vadd.f32 0.0, %v1605
        %1607 = vmatmul.bf16.gmra.mxu0 %v1461
        %v1608 = vpop.f32.mrf.mxu0
        %v1609 = vadd.f32 0.0, %v1608
        %v1610 = vpop.f32.mrf.mxu0
        %v1611 = vadd.f32 0.0, %v1610
        %1612 = vmatmul.bf16.gmra.mxu0 %v1464
        %v1613 = vpop.f32.mrf.mxu0
        %v1614 = vadd.f32 0.0, %v1613
        %v1615 = vpop.f32.mrf.mxu0
        %v1616 = vadd.f32 0.0, %v1615
        %1617 = vmatmul.bf16.gmra.mxu0 %v1467
        %v1618 = vpop.f32.mrf.mxu0
        %v1619 = vadd.f32 0.0, %v1618
        %v1620 = vpop.f32.mrf.mxu0
        %v1621 = vadd.f32 0.0, %v1620
        %1622 = vmatmul.bf16.gmra.mxu0 %v1470
        %v1623 = vpop.f32.mrf.mxu0
        %v1624 = vadd.f32 0.0, %v1623
        %v1625 = vpop.f32.mrf.mxu0
        %v1626 = vadd.f32 0.0, %v1625
        %1627 = vmatmul.bf16.gmra.mxu0 %v1473
        %v1628 = vpop.f32.mrf.mxu0
        %v1629 = vadd.f32 0.0, %v1628
        %v1630 = vpop.f32.mrf.mxu0
        %v1631 = vadd.f32 0.0, %v1630
        %1632 = vmatmul.bf16.gmra.mxu0 %v1476
        %v1633 = vpop.f32.mrf.mxu0
        %v1634 = vadd.f32 0.0, %v1633
        %v1635 = vpop.f32.mrf.mxu0
        %v1636 = vadd.f32 0.0, %v1635
        %1637 = vmatmul.bf16.gmra.mxu0 %v1479
        %v1638 = vpop.f32.mrf.mxu0
        %v1639 = vadd.f32 0.0, %v1638
        %v1640 = vpop.f32.mrf.mxu0
        %v1641 = vadd.f32 0.0, %v1640
        %1642 = vmatmul.bf16.gmra.mxu0 %v1482
        %v1643 = vpop.f32.mrf.mxu0
        %v1644 = vadd.f32 0.0, %v1643
        %v1645 = vpop.f32.mrf.mxu0
        %v1646 = vadd.f32 0.0, %v1645
        %1647 = vmatmul.bf16.gmra.mxu0 %v1485
        %v1648 = vpop.f32.mrf.mxu0
        %v1649 = vadd.f32 0.0, %v1648
        %v1650 = vpop.f32.mrf.mxu0
        %v1651 = vadd.f32 0.0, %v1650
        %1652 = vmatmul.bf16.gmra.mxu0 %v1488
        %v1653 = vpop.f32.mrf.mxu0
        %v1654 = vadd.f32 0.0, %v1653
        %v1655 = vpop.f32.mrf.mxu0
        %v1656 = vadd.f32 0.0, %v1655
        %1657 = vmatmul.bf16.gmra.mxu0 %v1491
        %v1658 = vpop.f32.mrf.mxu0
        %v1659 = vadd.f32 0.0, %v1658
        %v1660 = vpop.f32.mrf.mxu0
        %v1661 = vadd.f32 0.0, %v1660
        %1662 = vmatmul.bf16.gmra.mxu0 %v1494
        %v1663 = vpop.f32.mrf.mxu0
        %v1664 = vadd.f32 0.0, %v1663
        %v1665 = vpop.f32.mrf.mxu0
        %v1666 = vadd.f32 0.0, %v1665
        %1667 = vmatmul.bf16.gmra.mxu0 %v1497
        %v1668 = vpop.f32.mrf.mxu0
        %v1669 = vadd.f32 0.0, %v1668
        %v1670 = vpop.f32.mrf.mxu0
        %v1671 = vadd.f32 0.0, %v1670
        %1672 = vmatmul.bf16.gmra.mxu0 %v1500
        %v1673 = vpop.f32.mrf.mxu0
        %v1674 = vadd.f32 0.0, %v1673
        %v1675 = vpop.f32.mrf.mxu0
        %v1676 = vadd.f32 0.0, %v1675
        %1677 = vmatmul.bf16.gmra.mxu0 %v1503
        %v1678 = vpop.f32.mrf.mxu0
        %v1679 = vadd.f32 0.0, %v1678
        %v1680 = vpop.f32.mrf.mxu0
        %v1681 = vadd.f32 0.0, %v1680
        %1682 = vdwg.mxu0
        %v1683 = vadd.f32 %v1216, %v1515
        %v1684 = vadd.f32 %v1305, %v1604
        %v1685 = vadd.f32 %v1218, %v1517
        %v1686 = vadd.f32 %v1307, %v1606
        %v1687 = vadd.f32 %v1221, %v1520
        %v1688 = vadd.f32 %v1310, %v1609
        %v1689 = vadd.f32 %v1223, %v1522
        %v1690 = vadd.f32 %v1312, %v1611
        %v1691 = vadd.f32 %v1226, %v1525
        %v1692 = vadd.f32 %v1315, %v1614
        %v1693 = vadd.f32 %v1228, %v1527
        %v1694 = vadd.f32 %v1317, %v1616
        %v1695 = vadd.f32 %v1231, %v1530
        %v1696 = vadd.f32 %v1320, %v1619
        %v1697 = vadd.f32 %v1233, %v1532
        %v1698 = vadd.f32 %v1322, %v1621
        %v1699 = vadd.f32 %v1236, %v1535
        %v1700 = vadd.f32 %v1325, %v1624
        %v1701 = vadd.f32 %v1238, %v1537
        %v1702 = vadd.f32 %v1327, %v1626
        %v1703 = vadd.f32 %v1241, %v1540
        %v1704 = vadd.f32 %v1330, %v1629
        %v1705 = vadd.f32 %v1243, %v1542
        %v1706 = vadd.f32 %v1332, %v1631
        %v1707 = vadd.f32 %v1246, %v1545
        %v1708 = vadd.f32 %v1335, %v1634
        %v1709 = vadd.f32 %v1248, %v1547
        %v1710 = vadd.f32 %v1337, %v1636
        %v1711 = vadd.f32 %v1251, %v1550
        %v1712 = vadd.f32 %v1340, %v1639
        %v1713 = vadd.f32 %v1253, %v1552
        %v1714 = vadd.f32 %v1342, %v1641
        %v1715 = vadd.f32 %v1256, %v1555
        %v1716 = vadd.f32 %v1345, %v1644
        %v1717 = vadd.f32 %v1258, %v1557
        %v1718 = vadd.f32 %v1347, %v1646
        %v1719 = vadd.f32 %v1261, %v1560
        %v1720 = vadd.f32 %v1350, %v1649
        %v1721 = vadd.f32 %v1263, %v1562
        %v1722 = vadd.f32 %v1352, %v1651
        %v1723 = vadd.f32 %v1266, %v1565
        %v1724 = vadd.f32 %v1355, %v1654
        %v1725 = vadd.f32 %v1268, %v1567
        %v1726 = vadd.f32 %v1357, %v1656
        %v1727 = vadd.f32 %v1271, %v1570
        %v1728 = vadd.f32 %v1360, %v1659
        %v1729 = vadd.f32 %v1273, %v1572
        %v1730 = vadd.f32 %v1362, %v1661
        %v1731 = vadd.f32 %v1276, %v1575
        %v1732 = vadd.f32 %v1365, %v1664
        %v1733 = vadd.f32 %v1278, %v1577
        %v1734 = vadd.f32 %v1367, %v1666
        %v1735 = vadd.f32 %v1281, %v1580
        %v1736 = vadd.f32 %v1370, %v1669
        %v1737 = vadd.f32 %v1283, %v1582
        %v1738 = vadd.f32 %v1372, %v1671
        %v1739 = vadd.f32 %v1286, %v1585
        %v1740 = vadd.f32 %v1375, %v1674
        %v1741 = vadd.f32 %v1288, %v1587
        %v1742 = vadd.f32 %v1377, %v1676
        %v1743 = vadd.f32 %v1291, %v1590
        %v1744 = vadd.f32 %v1380, %v1679
        %v1745 = vadd.f32 %v1293, %v1592
        %v1746 = vadd.f32 %v1382, %v1681
        %s1747 = scalar_lea.vmem [#allocation5], 96
        %v1748 = vld [vmem:[%s1747] sm:$0xff]
        %v1749 = vld [vmem:[%s1747 + $0x8] sm:$0xff]
        %v1750 = vld [vmem:[%s1747 + $0x10] sm:$0xff]
        %v1751 = vld [vmem:[%s1747 + $0x18] sm:$0xff]
        %vm1752 = vsmask.f32 6400
        %v1753 = vrot.slane %v781, 1
        %v1754 = vrot.slane %v783, 2
        %v1755 = vor.u32 %v1753, %v1754
        %v1756 = vrot.slane %v792, 1
        %v1757 = vrot.slane %v788, 2
        %v1758 = vor.u32 %v1756, %v1757
        %v1759 = vsel %vm1752, %v1755, %v1758
        %v1760 = vrot.slane %v800, 1
        %v1761 = vrot.slane %v796, 2
        %v1762 = vor.u32 %v1760, %v1761
        %v1763 = vsel %vm1752, %v1758, %v1762
        %v1764 = vrot.slane %v808, 1
        %v1765 = vrot.slane %v804, 2
        %v1766 = vor.u32 %v1764, %v1765
        %v1767 = vsel %vm1752, %v1762, %v1766
        %v1768 = vrot.slane %v816, 1
        %v1769 = vrot.slane %v812, 2
        %v1770 = vor.u32 %v1768, %v1769
        %v1771 = vsel %vm1752, %v1766, %v1770
        %v1772 = vrot.slane %v824, 1
        %v1773 = vrot.slane %v820, 2
        %v1774 = vor.u32 %v1772, %v1773
        %v1775 = vsel %vm1752, %v1770, %v1774
        %v1776 = vrot.slane %v832, 1
        %v1777 = vrot.slane %v828, 2
        %v1778 = vor.u32 %v1776, %v1777
        %v1779 = vsel %vm1752, %v1774, %v1778
        %v1780 = vrot.slane %v840, 1
        %v1781 = vrot.slane %v836, 2
        %v1782 = vor.u32 %v1780, %v1781
        %v1783 = vsel %vm1752, %v1778, %v1782
        %v1784 = vrot.slane %v848, 1
        %v1785 = vrot.slane %v844, 2
        %v1786 = vor.u32 %v1784, %v1785
        %v1787 = vsel %vm1752, %v1782, %v1786
        %v1788 = vrot.slane %v856, 1
        %v1789 = vrot.slane %v852, 2
        %v1790 = vor.u32 %v1788, %v1789
        %v1791 = vsel %vm1752, %v1786, %v1790
        %v1792 = vrot.slane %v864, 1
        %v1793 = vrot.slane %v860, 2
        %v1794 = vor.u32 %v1792, %v1793
        %v1795 = vsel %vm1752, %v1790, %v1794
        %v1796 = vrot.slane %v872, 1
        %v1797 = vrot.slane %v868, 2
        %v1798 = vor.u32 %v1796, %v1797
        %v1799 = vsel %vm1752, %v1794, %v1798
        %v1800 = vrot.slane %v880, 1
        %v1801 = vrot.slane %v876, 2
        %v1802 = vor.u32 %v1800, %v1801
        %v1803 = vsel %vm1752, %v1798, %v1802
        %v1804 = vrot.slane %v888, 1
        %v1805 = vrot.slane %v884, 2
        %v1806 = vor.u32 %v1804, %v1805
        %v1807 = vsel %vm1752, %v1802, %v1806
        %v1808 = vrot.slane %v896, 1
        %v1809 = vrot.slane %v892, 2
        %v1810 = vor.u32 %v1808, %v1809
        %v1811 = vsel %vm1752, %v1806, %v1810
        %v1812 = vrot.slane %v904, 1
        %v1813 = vrot.slane %v900, 2
        %v1814 = vor.u32 %v1812, %v1813
        %v1815 = vsel %vm1752, %v1810, %v1814
        %v1820 = vunpack.c.l.b16 %v1748
        %v1821 = vunpack.c.h.b16 %v1748
        %v1822 = vunpack.c.l.b16 %v1749
        %v1823 = vunpack.c.h.b16 %v1749
        %v1824 = vunpack.c.l.b16 %v1750
        %v1825 = vunpack.c.h.b16 %v1750
        %v1826 = vunpack.c.l.b16 %v1751
        %v1827 = vunpack.c.h.b16 %v1751
        %v1828 = vpack.c.b16 %v1822, %v1820
        %v1829 = vpack.c.b16 %v1823, %v1821
        %v1830 = vpack.c.b16 %v1826, %v1824
        %v1831 = vpack.c.b16 %v1827, %v1825
        %v1837 = vsel %vm927, %v1759, 0
        %v1840 = vsel %vm927, %v1763, 0
        %v1843 = vsel %vm927, %v1767, 0
        %v1846 = vsel %vm927, %v1771, 0
        %v1849 = vsel %vm927, %v1775, 0
        %v1852 = vsel %vm927, %v1779, 0
        %v1855 = vsel %vm927, %v1783, 0
        %v1858 = vsel %vm927, %v1787, 0
        %v1861 = vsel %vm927, %v1791, 0
        %v1864 = vsel %vm927, %v1795, 0
        %v1867 = vsel %vm927, %v1799, 0
        %v1870 = vsel %vm927, %v1803, 0
        %v1873 = vsel %vm927, %v1807, 0
        %v1876 = vsel %vm927, %v1811, 0
        %v1879 = vsel %vm927, %v1815, 0
        %v1882 = vsel %vm927, %v1814, 0
        %1884 = vmatpush.bf16.msra.mxu0 0
        %1885 = vmatpush.bf16.msra.mxu0 0
        %1886 = vmatpush.bf16.msra.mxu0 0
        %1887 = vmatpush.bf16.msra.mxu0 0
        %1888 = vmatpush.bf16.msra.mxu0 0
        %1889 = vmatpush.bf16.msra.mxu0 0
        %1890 = vmatpush.bf16.msra.mxu0 %v1830
        %1891 = vmatpush.bf16.msra.mxu0 %v1828
        %1892 = vmatmul.bf16.gmra.mxu0 %v1837
        %v1893 = vpop.f32.mrf.mxu0
        %v1894 = vadd.f32 0.0, %v1893
        %v1895 = vpop.f32.mrf.mxu0
        %v1896 = vadd.f32 0.0, %v1895
        %1897 = vmatmul.bf16.gmra.mxu0 %v1840
        %v1898 = vpop.f32.mrf.mxu0
        %v1899 = vadd.f32 0.0, %v1898
        %v1900 = vpop.f32.mrf.mxu0
        %v1901 = vadd.f32 0.0, %v1900
        %1902 = vmatmul.bf16.gmra.mxu0 %v1843
        %v1903 = vpop.f32.mrf.mxu0
        %v1904 = vadd.f32 0.0, %v1903
        %v1905 = vpop.f32.mrf.mxu0
        %v1906 = vadd.f32 0.0, %v1905
        %1907 = vmatmul.bf16.gmra.mxu0 %v1846
        %v1908 = vpop.f32.mrf.mxu0
        %v1909 = vadd.f32 0.0, %v1908
        %v1910 = vpop.f32.mrf.mxu0
        %v1911 = vadd.f32 0.0, %v1910
        %1912 = vmatmul.bf16.gmra.mxu0 %v1849
        %v1913 = vpop.f32.mrf.mxu0
        %v1914 = vadd.f32 0.0, %v1913
        %v1915 = vpop.f32.mrf.mxu0
        %v1916 = vadd.f32 0.0, %v1915
        %1917 = vmatmul.bf16.gmra.mxu0 %v1852
        %v1918 = vpop.f32.mrf.mxu0
        %v1919 = vadd.f32 0.0, %v1918
        %v1920 = vpop.f32.mrf.mxu0
        %v1921 = vadd.f32 0.0, %v1920
        %1922 = vmatmul.bf16.gmra.mxu0 %v1855
        %v1923 = vpop.f32.mrf.mxu0
        %v1924 = vadd.f32 0.0, %v1923
        %v1925 = vpop.f32.mrf.mxu0
        %v1926 = vadd.f32 0.0, %v1925
        %1927 = vmatmul.bf16.gmra.mxu0 %v1858
        %v1928 = vpop.f32.mrf.mxu0
        %v1929 = vadd.f32 0.0, %v1928
        %v1930 = vpop.f32.mrf.mxu0
        %v1931 = vadd.f32 0.0, %v1930
        %1932 = vmatmul.bf16.gmra.mxu0 %v1861
        %v1933 = vpop.f32.mrf.mxu0
        %v1934 = vadd.f32 0.0, %v1933
        %v1935 = vpop.f32.mrf.mxu0
        %v1936 = vadd.f32 0.0, %v1935
        %1937 = vmatmul.bf16.gmra.mxu0 %v1864
        %v1938 = vpop.f32.mrf.mxu0
        %v1939 = vadd.f32 0.0, %v1938
        %v1940 = vpop.f32.mrf.mxu0
        %v1941 = vadd.f32 0.0, %v1940
        %1942 = vmatmul.bf16.gmra.mxu0 %v1867
        %v1943 = vpop.f32.mrf.mxu0
        %v1944 = vadd.f32 0.0, %v1943
        %v1945 = vpop.f32.mrf.mxu0
        %v1946 = vadd.f32 0.0, %v1945
        %1947 = vmatmul.bf16.gmra.mxu0 %v1870
        %v1948 = vpop.f32.mrf.mxu0
        %v1949 = vadd.f32 0.0, %v1948
        %v1950 = vpop.f32.mrf.mxu0
        %v1951 = vadd.f32 0.0, %v1950
        %1952 = vmatmul.bf16.gmra.mxu0 %v1873
        %v1953 = vpop.f32.mrf.mxu0
        %v1954 = vadd.f32 0.0, %v1953
        %v1955 = vpop.f32.mrf.mxu0
        %v1956 = vadd.f32 0.0, %v1955
        %1957 = vmatmul.bf16.gmra.mxu0 %v1876
        %v1958 = vpop.f32.mrf.mxu0
        %v1959 = vadd.f32 0.0, %v1958
        %v1960 = vpop.f32.mrf.mxu0
        %v1961 = vadd.f32 0.0, %v1960
        %1962 = vmatmul.bf16.gmra.mxu0 %v1879
        %v1963 = vpop.f32.mrf.mxu0
        %v1964 = vadd.f32 0.0, %v1963
        %v1965 = vpop.f32.mrf.mxu0
        %v1966 = vadd.f32 0.0, %v1965
        %1967 = vmatmul.bf16.gmra.mxu0 %v1882
        %v1968 = vpop.f32.mrf.mxu0
        %v1969 = vadd.f32 0.0, %v1968
        %v1970 = vpop.f32.mrf.mxu0
        %v1971 = vadd.f32 0.0, %v1970
        %1972 = vdwg.mxu0
        %1973 = vmatpush.bf16.msra.mxu0 0
        %1974 = vmatpush.bf16.msra.mxu0 0
        %1975 = vmatpush.bf16.msra.mxu0 0
        %1976 = vmatpush.bf16.msra.mxu0 0
        %1977 = vmatpush.bf16.msra.mxu0 0
        %1978 = vmatpush.bf16.msra.mxu0 0
        %1979 = vmatpush.bf16.msra.mxu0 %v1831
        %1980 = vmatpush.bf16.msra.mxu0 %v1829
        %1981 = vmatmul.bf16.gmra.mxu0 %v1837
        %v1982 = vpop.f32.mrf.mxu0
        %v1983 = vadd.f32 0.0, %v1982
        %v1984 = vpop.f32.mrf.mxu0
        %v1985 = vadd.f32 0.0, %v1984
        %1986 = vmatmul.bf16.gmra.mxu0 %v1840
        %v1987 = vpop.f32.mrf.mxu0
        %v1988 = vadd.f32 0.0, %v1987
        %v1989 = vpop.f32.mrf.mxu0
        %v1990 = vadd.f32 0.0, %v1989
        %1991 = vmatmul.bf16.gmra.mxu0 %v1843
        %v1992 = vpop.f32.mrf.mxu0
        %v1993 = vadd.f32 0.0, %v1992
        %v1994 = vpop.f32.mrf.mxu0
        %v1995 = vadd.f32 0.0, %v1994
        %1996 = vmatmul.bf16.gmra.mxu0 %v1846
        %v1997 = vpop.f32.mrf.mxu0
        %v1998 = vadd.f32 0.0, %v1997
        %v1999 = vpop.f32.mrf.mxu0
        %v2000 = vadd.f32 0.0, %v1999
        %2001 = vmatmul.bf16.gmra.mxu0 %v1849
        %v2002 = vpop.f32.mrf.mxu0
        %v2003 = vadd.f32 0.0, %v2002
        %v2004 = vpop.f32.mrf.mxu0
        %v2005 = vadd.f32 0.0, %v2004
        %2006 = vmatmul.bf16.gmra.mxu0 %v1852
        %v2007 = vpop.f32.mrf.mxu0
        %v2008 = vadd.f32 0.0, %v2007
        %v2009 = vpop.f32.mrf.mxu0
        %v2010 = vadd.f32 0.0, %v2009
        %2011 = vmatmul.bf16.gmra.mxu0 %v1855
        %v2012 = vpop.f32.mrf.mxu0
        %v2013 = vadd.f32 0.0, %v2012
        %v2014 = vpop.f32.mrf.mxu0
        %v2015 = vadd.f32 0.0, %v2014
        %2016 = vmatmul.bf16.gmra.mxu0 %v1858
        %v2017 = vpop.f32.mrf.mxu0
        %v2018 = vadd.f32 0.0, %v2017
        %v2019 = vpop.f32.mrf.mxu0
        %v2020 = vadd.f32 0.0, %v2019
        %2021 = vmatmul.bf16.gmra.mxu0 %v1861
        %v2022 = vpop.f32.mrf.mxu0
        %v2023 = vadd.f32 0.0, %v2022
        %v2024 = vpop.f32.mrf.mxu0
        %v2025 = vadd.f32 0.0, %v2024
        %2026 = vmatmul.bf16.gmra.mxu0 %v1864
        %v2027 = vpop.f32.mrf.mxu0
        %v2028 = vadd.f32 0.0, %v2027
        %v2029 = vpop.f32.mrf.mxu0
        %v2030 = vadd.f32 0.0, %v2029
        %2031 = vmatmul.bf16.gmra.mxu0 %v1867
        %v2032 = vpop.f32.mrf.mxu0
        %v2033 = vadd.f32 0.0, %v2032
        %v2034 = vpop.f32.mrf.mxu0
        %v2035 = vadd.f32 0.0, %v2034
        %2036 = vmatmul.bf16.gmra.mxu0 %v1870
        %v2037 = vpop.f32.mrf.mxu0
        %v2038 = vadd.f32 0.0, %v2037
        %v2039 = vpop.f32.mrf.mxu0
        %v2040 = vadd.f32 0.0, %v2039
        %2041 = vmatmul.bf16.gmra.mxu0 %v1873
        %v2042 = vpop.f32.mrf.mxu0
        %v2043 = vadd.f32 0.0, %v2042
        %v2044 = vpop.f32.mrf.mxu0
        %v2045 = vadd.f32 0.0, %v2044
        %2046 = vmatmul.bf16.gmra.mxu0 %v1876
        %v2047 = vpop.f32.mrf.mxu0
        %v2048 = vadd.f32 0.0, %v2047
        %v2049 = vpop.f32.mrf.mxu0
        %v2050 = vadd.f32 0.0, %v2049
        %2051 = vmatmul.bf16.gmra.mxu0 %v1879
        %v2052 = vpop.f32.mrf.mxu0
        %v2053 = vadd.f32 0.0, %v2052
        %v2054 = vpop.f32.mrf.mxu0
        %v2055 = vadd.f32 0.0, %v2054
        %2056 = vmatmul.bf16.gmra.mxu0 %v1882
        %v2057 = vpop.f32.mrf.mxu0
        %v2058 = vadd.f32 0.0, %v2057
        %v2059 = vpop.f32.mrf.mxu0
        %v2060 = vadd.f32 0.0, %v2059
        %2061 = vdwg.mxu0
        %v2062 = vadd.f32 %v1683, %v1894
        %v2063 = vadd.f32 %v1684, %v1983
        %v2064 = vadd.f32 %v1685, %v1896
        %v2065 = vadd.f32 %v1686, %v1985
        %v2066 = vadd.f32 %v1687, %v1899
        %v2067 = vadd.f32 %v1688, %v1988
        %v2068 = vadd.f32 %v1689, %v1901
        %v2069 = vadd.f32 %v1690, %v1990
        %v2070 = vadd.f32 %v1691, %v1904
        %v2071 = vadd.f32 %v1692, %v1993
        %v2072 = vadd.f32 %v1693, %v1906
        %v2073 = vadd.f32 %v1694, %v1995
        %v2074 = vadd.f32 %v1695, %v1909
        %v2075 = vadd.f32 %v1696, %v1998
        %v2076 = vadd.f32 %v1697, %v1911
        %v2077 = vadd.f32 %v1698, %v2000
        %v2078 = vadd.f32 %v1699, %v1914
        %v2079 = vadd.f32 %v1700, %v2003
        %v2080 = vadd.f32 %v1701, %v1916
        %v2081 = vadd.f32 %v1702, %v2005
        %v2082 = vadd.f32 %v1703, %v1919
        %v2083 = vadd.f32 %v1704, %v2008
        %v2084 = vadd.f32 %v1705, %v1921
        %v2085 = vadd.f32 %v1706, %v2010
        %v2086 = vadd.f32 %v1707, %v1924
        %v2087 = vadd.f32 %v1708, %v2013
        %v2088 = vadd.f32 %v1709, %v1926
        %v2089 = vadd.f32 %v1710, %v2015
        %v2090 = vadd.f32 %v1711, %v1929
        %v2091 = vadd.f32 %v1712, %v2018
        %v2092 = vadd.f32 %v1713, %v1931
        %v2093 = vadd.f32 %v1714, %v2020
        %v2094 = vadd.f32 %v1715, %v1934
        %v2095 = vadd.f32 %v1716, %v2023
        %v2096 = vadd.f32 %v1717, %v1936
        %v2097 = vadd.f32 %v1718, %v2025
        %v2098 = vadd.f32 %v1719, %v1939
        %v2099 = vadd.f32 %v1720, %v2028
        %v2100 = vadd.f32 %v1721, %v1941
        %v2101 = vadd.f32 %v1722, %v2030
        %v2102 = vadd.f32 %v1723, %v1944
        %v2103 = vadd.f32 %v1724, %v2033
        %v2104 = vadd.f32 %v1725, %v1946
        %v2105 = vadd.f32 %v1726, %v2035
        %v2106 = vadd.f32 %v1727, %v1949
        %v2107 = vadd.f32 %v1728, %v2038
        %v2108 = vadd.f32 %v1729, %v1951
        %v2109 = vadd.f32 %v1730, %v2040
        %v2110 = vadd.f32 %v1731, %v1954
        %v2111 = vadd.f32 %v1732, %v2043
        %v2112 = vadd.f32 %v1733, %v1956
        %v2113 = vadd.f32 %v1734, %v2045
        %v2114 = vadd.f32 %v1735, %v1959
        %v2115 = vadd.f32 %v1736, %v2048
        %v2116 = vadd.f32 %v1737, %v1961
        %v2117 = vadd.f32 %v1738, %v2050
        %v2118 = vadd.f32 %v1739, %v1964
        %v2119 = vadd.f32 %v1740, %v2053
        %v2120 = vadd.f32 %v1741, %v1966
        %v2121 = vadd.f32 %v1742, %v2055
        %v2122 = vadd.f32 %v1743, %v1969
        %v2123 = vadd.f32 %v1744, %v2058
        %v2124 = vadd.f32 %v1745, %v1971
        %v2125 = vadd.f32 %v1746, %v2060
        %s2126 = scalar_lea.vmem [#allocation5], 128
        %v2127 = vld [vmem:[%s2126] sm:$0xff]
        %v2128 = vld [vmem:[%s2126 + $0x8] sm:$0xff]
        %v2129 = vld [vmem:[%s2126 + $0x10] sm:$0xff]
        %v2130 = vld [vmem:[%s2126 + $0x18] sm:$0xff]
        %vm2131 = vcmask 1045504
        %v2132 = vrot.slane %v754, 2
        %v2133 = vrot.slane %v755, 2
        %v2134 = vsel %vm2131, %v2132, %v2133
        %v2135 = vrot.slane %v756, 2
        %v2136 = vsel %vm2131, %v2133, %v2135
        %v2137 = vrot.slane %v757, 2
        %v2138 = vsel %vm2131, %v2135, %v2137
        %v2139 = vrot.slane %v758, 2
        %v2140 = vsel %vm2131, %v2137, %v2139
        %v2141 = vrot.slane %v759, 2
        %v2142 = vsel %vm2131, %v2139, %v2141
        %v2143 = vrot.slane %v760, 2
        %v2144 = vsel %vm2131, %v2141, %v2143
        %v2145 = vrot.slane %v761, 2
        %v2146 = vsel %vm2131, %v2143, %v2145
        %v2147 = vrot.slane %v762, 2
        %v2148 = vsel %vm2131, %v2145, %v2147
        %v2149 = vrot.slane %v763, 2
        %v2150 = vsel %vm2131, %v2147, %v2149
        %v2151 = vrot.slane %v764, 2
        %v2152 = vsel %vm2131, %v2149, %v2151
        %v2153 = vrot.slane %v765, 2
        %v2154 = vsel %vm2131, %v2151, %v2153
        %v2155 = vrot.slane %v766, 2
        %v2156 = vsel %vm2131, %v2153, %v2155
        %v2157 = vrot.slane %v767, 2
        %v2158 = vsel %vm2131, %v2155, %v2157
        %v2159 = vrot.slane %v768, 2
        %v2160 = vsel %vm2131, %v2157, %v2159
        %v2161 = vrot.slane %v769, 2
        %v2162 = vsel %vm2131, %v2159, %v2161
        %v2167 = vunpack.c.l.b16 %v2127
        %v2168 = vunpack.c.h.b16 %v2127
        %v2169 = vunpack.c.l.b16 %v2128
        %v2170 = vunpack.c.h.b16 %v2128
        %v2171 = vunpack.c.l.b16 %v2129
        %v2172 = vunpack.c.h.b16 %v2129
        %v2173 = vunpack.c.l.b16 %v2130
        %v2174 = vunpack.c.h.b16 %v2130
        %v2175 = vpack.c.b16 %v2169, %v2167
        %v2176 = vpack.c.b16 %v2170, %v2168
        %v2177 = vpack.c.b16 %v2173, %v2171
        %v2178 = vpack.c.b16 %v2174, %v2172
        %v2184 = vsel %vm927, %v2134, 0
        %v2187 = vsel %vm927, %v2136, 0
        %v2190 = vsel %vm927, %v2138, 0
        %v2193 = vsel %vm927, %v2140, 0
        %v2196 = vsel %vm927, %v2142, 0
        %v2199 = vsel %vm927, %v2144, 0
        %v2202 = vsel %vm927, %v2146, 0
        %v2205 = vsel %vm927, %v2148, 0
        %v2208 = vsel %vm927, %v2150, 0
        %v2211 = vsel %vm927, %v2152, 0
        %v2214 = vsel %vm927, %v2154, 0
        %v2217 = vsel %vm927, %v2156, 0
        %v2220 = vsel %vm927, %v2158, 0
        %v2223 = vsel %vm927, %v2160, 0
        %v2226 = vsel %vm927, %v2162, 0
        %v2229 = vsel %vm927, %v2161, 0
        %2231 = vmatpush.bf16.msra.mxu0 0
        %2232 = vmatpush.bf16.msra.mxu0 0
        %2233 = vmatpush.bf16.msra.mxu0 0
        %2234 = vmatpush.bf16.msra.mxu0 0
        %2235 = vmatpush.bf16.msra.mxu0 0
        %2236 = vmatpush.bf16.msra.mxu0 0
        %2237 = vmatpush.bf16.msra.mxu0 %v2177
        %2238 = vmatpush.bf16.msra.mxu0 %v2175
        %2239 = vmatmul.bf16.gmra.mxu0 %v2184
        %v2240 = vpop.f32.mrf.mxu0
        %v2241 = vadd.f32 0.0, %v2240
        %v2242 = vpop.f32.mrf.mxu0
        %v2243 = vadd.f32 0.0, %v2242
        %2244 = vmatmul.bf16.gmra.mxu0 %v2187
        %v2245 = vpop.f32.mrf.mxu0
        %v2246 = vadd.f32 0.0, %v2245
        %v2247 = vpop.f32.mrf.mxu0
        %v2248 = vadd.f32 0.0, %v2247
        %2249 = vmatmul.bf16.gmra.mxu0 %v2190
        %v2250 = vpop.f32.mrf.mxu0
        %v2251 = vadd.f32 0.0, %v2250
        %v2252 = vpop.f32.mrf.mxu0
        %v2253 = vadd.f32 0.0, %v2252
        %2254 = vmatmul.bf16.gmra.mxu0 %v2193
        %v2255 = vpop.f32.mrf.mxu0
        %v2256 = vadd.f32 0.0, %v2255
        %v2257 = vpop.f32.mrf.mxu0
        %v2258 = vadd.f32 0.0, %v2257
        %2259 = vmatmul.bf16.gmra.mxu0 %v2196
        %v2260 = vpop.f32.mrf.mxu0
        %v2261 = vadd.f32 0.0, %v2260
        %v2262 = vpop.f32.mrf.mxu0
        %v2263 = vadd.f32 0.0, %v2262
        %2264 = vmatmul.bf16.gmra.mxu0 %v2199
        %v2265 = vpop.f32.mrf.mxu0
        %v2266 = vadd.f32 0.0, %v2265
        %v2267 = vpop.f32.mrf.mxu0
        %v2268 = vadd.f32 0.0, %v2267
        %2269 = vmatmul.bf16.gmra.mxu0 %v2202
        %v2270 = vpop.f32.mrf.mxu0
        %v2271 = vadd.f32 0.0, %v2270
        %v2272 = vpop.f32.mrf.mxu0
        %v2273 = vadd.f32 0.0, %v2272
        %2274 = vmatmul.bf16.gmra.mxu0 %v2205
        %v2275 = vpop.f32.mrf.mxu0
        %v2276 = vadd.f32 0.0, %v2275
        %v2277 = vpop.f32.mrf.mxu0
        %v2278 = vadd.f32 0.0, %v2277
        %2279 = vmatmul.bf16.gmra.mxu0 %v2208
        %v2280 = vpop.f32.mrf.mxu0
        %v2281 = vadd.f32 0.0, %v2280
        %v2282 = vpop.f32.mrf.mxu0
        %v2283 = vadd.f32 0.0, %v2282
        %2284 = vmatmul.bf16.gmra.mxu0 %v2211
        %v2285 = vpop.f32.mrf.mxu0
        %v2286 = vadd.f32 0.0, %v2285
        %v2287 = vpop.f32.mrf.mxu0
        %v2288 = vadd.f32 0.0, %v2287
        %2289 = vmatmul.bf16.gmra.mxu0 %v2214
        %v2290 = vpop.f32.mrf.mxu0
        %v2291 = vadd.f32 0.0, %v2290
        %v2292 = vpop.f32.mrf.mxu0
        %v2293 = vadd.f32 0.0, %v2292
        %2294 = vmatmul.bf16.gmra.mxu0 %v2217
        %v2295 = vpop.f32.mrf.mxu0
        %v2296 = vadd.f32 0.0, %v2295
        %v2297 = vpop.f32.mrf.mxu0
        %v2298 = vadd.f32 0.0, %v2297
        %2299 = vmatmul.bf16.gmra.mxu0 %v2220
        %v2300 = vpop.f32.mrf.mxu0
        %v2301 = vadd.f32 0.0, %v2300
        %v2302 = vpop.f32.mrf.mxu0
        %v2303 = vadd.f32 0.0, %v2302
        %2304 = vmatmul.bf16.gmra.mxu0 %v2223
        %v2305 = vpop.f32.mrf.mxu0
        %v2306 = vadd.f32 0.0, %v2305
        %v2307 = vpop.f32.mrf.mxu0
        %v2308 = vadd.f32 0.0, %v2307
        %2309 = vmatmul.bf16.gmra.mxu0 %v2226
        %v2310 = vpop.f32.mrf.mxu0
        %v2311 = vadd.f32 0.0, %v2310
        %v2312 = vpop.f32.mrf.mxu0
        %v2313 = vadd.f32 0.0, %v2312
        %2314 = vmatmul.bf16.gmra.mxu0 %v2229
        %v2315 = vpop.f32.mrf.mxu0
        %v2316 = vadd.f32 0.0, %v2315
        %v2317 = vpop.f32.mrf.mxu0
        %v2318 = vadd.f32 0.0, %v2317
        %2319 = vdwg.mxu0
        %2320 = vmatpush.bf16.msra.mxu0 0
        %2321 = vmatpush.bf16.msra.mxu0 0
        %2322 = vmatpush.bf16.msra.mxu0 0
        %2323 = vmatpush.bf16.msra.mxu0 0
        %2324 = vmatpush.bf16.msra.mxu0 0
        %2325 = vmatpush.bf16.msra.mxu0 0
        %2326 = vmatpush.bf16.msra.mxu0 %v2178
        %2327 = vmatpush.bf16.msra.mxu0 %v2176
        %2328 = vmatmul.bf16.gmra.mxu0 %v2184
        %v2329 = vpop.f32.mrf.mxu0
        %v2330 = vadd.f32 0.0, %v2329
        %v2331 = vpop.f32.mrf.mxu0
        %v2332 = vadd.f32 0.0, %v2331
        %2333 = vmatmul.bf16.gmra.mxu0 %v2187
        %v2334 = vpop.f32.mrf.mxu0
        %v2335 = vadd.f32 0.0, %v2334
        %v2336 = vpop.f32.mrf.mxu0
        %v2337 = vadd.f32 0.0, %v2336
        %2338 = vmatmul.bf16.gmra.mxu0 %v2190
        %v2339 = vpop.f32.mrf.mxu0
        %v2340 = vadd.f32 0.0, %v2339
        %v2341 = vpop.f32.mrf.mxu0
        %v2342 = vadd.f32 0.0, %v2341
        %2343 = vmatmul.bf16.gmra.mxu0 %v2193
        %v2344 = vpop.f32.mrf.mxu0
        %v2345 = vadd.f32 0.0, %v2344
        %v2346 = vpop.f32.mrf.mxu0
        %v2347 = vadd.f32 0.0, %v2346
        %2348 = vmatmul.bf16.gmra.mxu0 %v2196
        %v2349 = vpop.f32.mrf.mxu0
        %v2350 = vadd.f32 0.0, %v2349
        %v2351 = vpop.f32.mrf.mxu0
        %v2352 = vadd.f32 0.0, %v2351
        %2353 = vmatmul.bf16.gmra.mxu0 %v2199
        %v2354 = vpop.f32.mrf.mxu0
        %v2355 = vadd.f32 0.0, %v2354
        %v2356 = vpop.f32.mrf.mxu0
        %v2357 = vadd.f32 0.0, %v2356
        %2358 = vmatmul.bf16.gmra.mxu0 %v2202
        %v2359 = vpop.f32.mrf.mxu0
        %v2360 = vadd.f32 0.0, %v2359
        %v2361 = vpop.f32.mrf.mxu0
        %v2362 = vadd.f32 0.0, %v2361
        %2363 = vmatmul.bf16.gmra.mxu0 %v2205
        %v2364 = vpop.f32.mrf.mxu0
        %v2365 = vadd.f32 0.0, %v2364
        %v2366 = vpop.f32.mrf.mxu0
        %v2367 = vadd.f32 0.0, %v2366
        %2368 = vmatmul.bf16.gmra.mxu0 %v2208
        %v2369 = vpop.f32.mrf.mxu0
        %v2370 = vadd.f32 0.0, %v2369
        %v2371 = vpop.f32.mrf.mxu0
        %v2372 = vadd.f32 0.0, %v2371
        %2373 = vmatmul.bf16.gmra.mxu0 %v2211
        %v2374 = vpop.f32.mrf.mxu0
        %v2375 = vadd.f32 0.0, %v2374
        %v2376 = vpop.f32.mrf.mxu0
        %v2377 = vadd.f32 0.0, %v2376
        %2378 = vmatmul.bf16.gmra.mxu0 %v2214
        %v2379 = vpop.f32.mrf.mxu0
        %v2380 = vadd.f32 0.0, %v2379
        %v2381 = vpop.f32.mrf.mxu0
        %v2382 = vadd.f32 0.0, %v2381
        %2383 = vmatmul.bf16.gmra.mxu0 %v2217
        %v2384 = vpop.f32.mrf.mxu0
        %v2385 = vadd.f32 0.0, %v2384
        %v2386 = vpop.f32.mrf.mxu0
        %v2387 = vadd.f32 0.0, %v2386
        %2388 = vmatmul.bf16.gmra.mxu0 %v2220
        %v2389 = vpop.f32.mrf.mxu0
        %v2390 = vadd.f32 0.0, %v2389
        %v2391 = vpop.f32.mrf.mxu0
        %v2392 = vadd.f32 0.0, %v2391
        %2393 = vmatmul.bf16.gmra.mxu0 %v2223
        %v2394 = vpop.f32.mrf.mxu0
        %v2395 = vadd.f32 0.0, %v2394
        %v2396 = vpop.f32.mrf.mxu0
        %v2397 = vadd.f32 0.0, %v2396
        %2398 = vmatmul.bf16.gmra.mxu0 %v2226
        %v2399 = vpop.f32.mrf.mxu0
        %v2400 = vadd.f32 0.0, %v2399
        %v2401 = vpop.f32.mrf.mxu0
        %v2402 = vadd.f32 0.0, %v2401
        %2403 = vmatmul.bf16.gmra.mxu0 %v2229
        %v2404 = vpop.f32.mrf.mxu0
        %v2405 = vadd.f32 0.0, %v2404
        %v2406 = vpop.f32.mrf.mxu0
        %v2407 = vadd.f32 0.0, %v2406
        %2408 = vdwg.mxu0
        %v2409 = vadd.f32 %v2062, %v2241
        %v2410 = vadd.f32 %v2063, %v2330
        %v2411 = vadd.f32 %v2064, %v2243
        %v2412 = vadd.f32 %v2065, %v2332
        %v2413 = vadd.f32 %v2066, %v2246
        %v2414 = vadd.f32 %v2067, %v2335
        %v2415 = vadd.f32 %v2068, %v2248
        %v2416 = vadd.f32 %v2069, %v2337
        %v2417 = vadd.f32 %v2070, %v2251
        %v2418 = vadd.f32 %v2071, %v2340
        %v2419 = vadd.f32 %v2072, %v2253
        %v2420 = vadd.f32 %v2073, %v2342
        %v2421 = vadd.f32 %v2074, %v2256
        %v2422 = vadd.f32 %v2075, %v2345
        %v2423 = vadd.f32 %v2076, %v2258
        %v2424 = vadd.f32 %v2077, %v2347
        %v2425 = vadd.f32 %v2078, %v2261
        %v2426 = vadd.f32 %v2079, %v2350
        %v2427 = vadd.f32 %v2080, %v2263
        %v2428 = vadd.f32 %v2081, %v2352
        %v2429 = vadd.f32 %v2082, %v2266
        %v2430 = vadd.f32 %v2083, %v2355
        %v2431 = vadd.f32 %v2084, %v2268
        %v2432 = vadd.f32 %v2085, %v2357
        %v2433 = vadd.f32 %v2086, %v2271
        %v2434 = vadd.f32 %v2087, %v2360
        %v2435 = vadd.f32 %v2088, %v2273
        %v2436 = vadd.f32 %v2089, %v2362
        %v2437 = vadd.f32 %v2090, %v2276
        %v2438 = vadd.f32 %v2091, %v2365
        %v2439 = vadd.f32 %v2092, %v2278
        %v2440 = vadd.f32 %v2093, %v2367
        %v2441 = vadd.f32 %v2094, %v2281
        %v2442 = vadd.f32 %v2095, %v2370
        %v2443 = vadd.f32 %v2096, %v2283
        %v2444 = vadd.f32 %v2097, %v2372
        %v2445 = vadd.f32 %v2098, %v2286
        %v2446 = vadd.f32 %v2099, %v2375
        %v2447 = vadd.f32 %v2100, %v2288
        %v2448 = vadd.f32 %v2101, %v2377
        %v2449 = vadd.f32 %v2102, %v2291
        %v2450 = vadd.f32 %v2103, %v2380
        %v2451 = vadd.f32 %v2104, %v2293
        %v2452 = vadd.f32 %v2105, %v2382
        %v2453 = vadd.f32 %v2106, %v2296
        %v2454 = vadd.f32 %v2107, %v2385
        %v2455 = vadd.f32 %v2108, %v2298
        %v2456 = vadd.f32 %v2109, %v2387
        %v2457 = vadd.f32 %v2110, %v2301
        %v2458 = vadd.f32 %v2111, %v2390
        %v2459 = vadd.f32 %v2112, %v2303
        %v2460 = vadd.f32 %v2113, %v2392
        %v2461 = vadd.f32 %v2114, %v2306
        %v2462 = vadd.f32 %v2115, %v2395
        %v2463 = vadd.f32 %v2116, %v2308
        %v2464 = vadd.f32 %v2117, %v2397
        %v2465 = vadd.f32 %v2118, %v2311
        %v2466 = vadd.f32 %v2119, %v2400
        %v2467 = vadd.f32 %v2120, %v2313
        %v2468 = vadd.f32 %v2121, %v2402
        %v2469 = vadd.f32 %v2122, %v2316
        %v2470 = vadd.f32 %v2123, %v2405
        %v2471 = vadd.f32 %v2124, %v2318
        %v2472 = vadd.f32 %v2125, %v2407
        %v2473 = vld [vmem:[#allocation7] sm:$0x3]
        %v2475 = vperm.slane %v2473, 0
        %v2476 = vperm.slane %v2473, 1
        %v2479 = vadd.f32 %v2409, %v2475
        %v2480 = vadd.f32 %v2410, %v2476
        %v2481 = vadd.f32 %v2411, %v2475
        %v2482 = vadd.f32 %v2412, %v2476
        %v2483 = vadd.f32 %v2413, %v2475
        %v2484 = vadd.f32 %v2414, %v2476
        %v2485 = vadd.f32 %v2415, %v2475
        %v2486 = vadd.f32 %v2416, %v2476
        %v2487 = vadd.f32 %v2417, %v2475
        %v2488 = vadd.f32 %v2418, %v2476
        %v2489 = vadd.f32 %v2419, %v2475
        %v2490 = vadd.f32 %v2420, %v2476
        %v2491 = vadd.f32 %v2421, %v2475
        %v2492 = vadd.f32 %v2422, %v2476
        %v2493 = vadd.f32 %v2423, %v2475
        %v2494 = vadd.f32 %v2424, %v2476
        %v2495 = vadd.f32 %v2425, %v2475
        %v2496 = vadd.f32 %v2426, %v2476
        %v2497 = vadd.f32 %v2427, %v2475
        %v2498 = vadd.f32 %v2428, %v2476
        %v2499 = vadd.f32 %v2429, %v2475
        %v2500 = vadd.f32 %v2430, %v2476
        %v2501 = vadd.f32 %v2431, %v2475
        %v2502 = vadd.f32 %v2432, %v2476
        %v2503 = vadd.f32 %v2433, %v2475
        %v2504 = vadd.f32 %v2434, %v2476
        %v2505 = vadd.f32 %v2435, %v2475
        %v2506 = vadd.f32 %v2436, %v2476
        %v2507 = vadd.f32 %v2437, %v2475
        %v2508 = vadd.f32 %v2438, %v2476
        %v2509 = vadd.f32 %v2439, %v2475
        %v2510 = vadd.f32 %v2440, %v2476
        %v2511 = vadd.f32 %v2441, %v2475
        %v2512 = vadd.f32 %v2442, %v2476
        %v2513 = vadd.f32 %v2443, %v2475
        %v2514 = vadd.f32 %v2444, %v2476
        %v2515 = vadd.f32 %v2445, %v2475
        %v2516 = vadd.f32 %v2446, %v2476
        %v2517 = vadd.f32 %v2447, %v2475
        %v2518 = vadd.f32 %v2448, %v2476
        %v2519 = vadd.f32 %v2449, %v2475
        %v2520 = vadd.f32 %v2450, %v2476
        %v2521 = vadd.f32 %v2451, %v2475
        %v2522 = vadd.f32 %v2452, %v2476
        %v2523 = vadd.f32 %v2453, %v2475
        %v2524 = vadd.f32 %v2454, %v2476
        %v2525 = vadd.f32 %v2455, %v2475
        %v2526 = vadd.f32 %v2456, %v2476
        %v2527 = vadd.f32 %v2457, %v2475
        %v2528 = vadd.f32 %v2458, %v2476
        %v2529 = vadd.f32 %v2459, %v2475
        %v2530 = vadd.f32 %v2460, %v2476
        %v2531 = vadd.f32 %v2461, %v2475
        %v2532 = vadd.f32 %v2462, %v2476
        %v2533 = vadd.f32 %v2463, %v2475
        %v2534 = vadd.f32 %v2464, %v2476
        %v2535 = vadd.f32 %v2465, %v2475
        %v2536 = vadd.f32 %v2466, %v2476
        %v2537 = vadd.f32 %v2467, %v2475
        %v2538 = vadd.f32 %v2468, %v2476
        %v2539 = vadd.f32 %v2469, %v2475
        %v2540 = vadd.f32 %v2470, %v2476
        %v2541 = vadd.f32 %v2471, %v2475
        %v2542 = vadd.f32 %v2472, %v2476
        %v2543 = vmax.f32 %v2479, 0.0
        %v2544 = vmax.f32 %v2480, 0.0
        %v2545 = vmax.f32 %v2481, 0.0
        %v2546 = vmax.f32 %v2482, 0.0
        %v2547 = vmax.f32 %v2483, 0.0
        %v2548 = vmax.f32 %v2484, 0.0
        %v2549 = vmax.f32 %v2485, 0.0
        %v2550 = vmax.f32 %v2486, 0.0
        %v2551 = vmax.f32 %v2487, 0.0
        %v2552 = vmax.f32 %v2488, 0.0
        %v2553 = vmax.f32 %v2489, 0.0
        %v2554 = vmax.f32 %v2490, 0.0
        %v2555 = vmax.f32 %v2491, 0.0
        %v2556 = vmax.f32 %v2492, 0.0
        %v2557 = vmax.f32 %v2493, 0.0
        %v2558 = vmax.f32 %v2494, 0.0
        %v2559 = vmax.f32 %v2495, 0.0
        %v2560 = vmax.f32 %v2496, 0.0
        %v2561 = vmax.f32 %v2497, 0.0
        %v2562 = vmax.f32 %v2498, 0.0
        %v2563 = vmax.f32 %v2499, 0.0
        %v2564 = vmax.f32 %v2500, 0.0
        %v2565 = vmax.f32 %v2501, 0.0
        %v2566 = vmax.f32 %v2502, 0.0
        %v2567 = vmax.f32 %v2503, 0.0
        %v2568 = vmax.f32 %v2504, 0.0
        %v2569 = vmax.f32 %v2505, 0.0
        %v2570 = vmax.f32 %v2506, 0.0
        %v2571 = vmax.f32 %v2507, 0.0
        %v2572 = vmax.f32 %v2508, 0.0
        %v2573 = vmax.f32 %v2509, 0.0
        %v2574 = vmax.f32 %v2510, 0.0
        %v2575 = vmax.f32 %v2511, 0.0
        %v2576 = vmax.f32 %v2512, 0.0
        %v2577 = vmax.f32 %v2513, 0.0
        %v2578 = vmax.f32 %v2514, 0.0
        %v2579 = vmax.f32 %v2515, 0.0
        %v2580 = vmax.f32 %v2516, 0.0
        %v2581 = vmax.f32 %v2517, 0.0
        %v2582 = vmax.f32 %v2518, 0.0
        %v2583 = vmax.f32 %v2519, 0.0
        %v2584 = vmax.f32 %v2520, 0.0
        %v2585 = vmax.f32 %v2521, 0.0
        %v2586 = vmax.f32 %v2522, 0.0
        %v2587 = vmax.f32 %v2523, 0.0
        %v2588 = vmax.f32 %v2524, 0.0
        %v2589 = vmax.f32 %v2525, 0.0
        %v2590 = vmax.f32 %v2526, 0.0
        %v2591 = vmax.f32 %v2527, 0.0
        %v2592 = vmax.f32 %v2528, 0.0
        %v2593 = vmax.f32 %v2529, 0.0
        %v2594 = vmax.f32 %v2530, 0.0
        %v2595 = vmax.f32 %v2531, 0.0
        %v2596 = vmax.f32 %v2532, 0.0
        %v2597 = vmax.f32 %v2533, 0.0
        %v2598 = vmax.f32 %v2534, 0.0
        %v2599 = vmax.f32 %v2535, 0.0
        %v2600 = vmax.f32 %v2536, 0.0
        %v2601 = vmax.f32 %v2537, 0.0
        %v2602 = vmax.f32 %v2538, 0.0
        %v2603 = vmax.f32 %v2539, 0.0
        %v2604 = vmax.f32 %v2540, 0.0
        %v2605 = vmax.f32 %v2541, 0.0
        %v2606 = vmax.f32 %v2542, 0.0
        %vm2671 = vcmask 1046528
        %v2672 = vrot.slane %v2543, 1
        %v2673 = vrot.slane %v2545, 1
        %v2674 = vsel %vm2671, %v2672, %v2673
        %v2675 = vrot.slane %v2544, 1
        %v2676 = vrot.slane %v2546, 1
        %v2677 = vsel %vm2671, %v2675, %v2676
        %v2678 = vrot.slane %v2547, 1
        %v2679 = vsel %vm2671, %v2673, %v2678
        %v2680 = vrot.slane %v2548, 1
        %v2681 = vsel %vm2671, %v2676, %v2680
        %v2682 = vrot.slane %v2549, 1
        %v2683 = vsel %vm2671, %v2678, %v2682
        %v2684 = vrot.slane %v2550, 1
        %v2685 = vsel %vm2671, %v2680, %v2684
        %v2686 = vrot.slane %v2551, 1
        %v2687 = vsel %vm2671, %v2682, %v2686
        %v2688 = vrot.slane %v2552, 1
        %v2689 = vsel %vm2671, %v2684, %v2688
        %v2690 = vrot.slane %v2553, 1
        %v2691 = vsel %vm2671, %v2686, %v2690
        %v2692 = vrot.slane %v2554, 1
        %v2693 = vsel %vm2671, %v2688, %v2692
        %v2694 = vrot.slane %v2555, 1
        %v2695 = vsel %vm2671, %v2690, %v2694
        %v2696 = vrot.slane %v2556, 1
        %v2697 = vsel %vm2671, %v2692, %v2696
        %v2698 = vrot.slane %v2557, 1
        %v2699 = vsel %vm2671, %v2694, %v2698
        %v2700 = vrot.slane %v2558, 1
        %v2701 = vsel %vm2671, %v2696, %v2700
        %v2702 = vrot.slane %v2559, 1
        %v2703 = vsel %vm2671, %v2698, %v2702
        %v2704 = vrot.slane %v2560, 1
        %v2705 = vsel %vm2671, %v2700, %v2704
        %v2706 = vrot.slane %v2561, 1
        %v2707 = vsel %vm2671, %v2702, %v2706
        %v2708 = vrot.slane %v2562, 1
        %v2709 = vsel %vm2671, %v2704, %v2708
        %v2710 = vrot.slane %v2563, 1
        %v2711 = vsel %vm2671, %v2706, %v2710
        %v2712 = vrot.slane %v2564, 1
        %v2713 = vsel %vm2671, %v2708, %v2712
        %v2714 = vrot.slane %v2565, 1
        %v2715 = vsel %vm2671, %v2710, %v2714
        %v2716 = vrot.slane %v2566, 1
        %v2717 = vsel %vm2671, %v2712, %v2716
        %v2718 = vrot.slane %v2567, 1
        %v2719 = vsel %vm2671, %v2714, %v2718
        %v2720 = vrot.slane %v2568, 1
        %v2721 = vsel %vm2671, %v2716, %v2720
        %v2722 = vrot.slane %v2569, 1
        %v2723 = vsel %vm2671, %v2718, %v2722
        %v2724 = vrot.slane %v2570, 1
        %v2725 = vsel %vm2671, %v2720, %v2724
        %v2726 = vrot.slane %v2571, 1
        %v2727 = vsel %vm2671, %v2722, %v2726
        %v2728 = vrot.slane %v2572, 1
        %v2729 = vsel %vm2671, %v2724, %v2728
        %v2730 = vrot.slane %v2573, 1
        %v2731 = vsel %vm2671, %v2726, %v2730
        %v2732 = vrot.slane %v2574, 1
        %v2733 = vsel %vm2671, %v2728, %v2732
        %v2734 = vrot.slane %v2575, 1
        %v2735 = vsel %vm2671, %v2730, %v2734
        %v2736 = vrot.slane %v2576, 1
        %v2737 = vsel %vm2671, %v2732, %v2736
        %v2738 = vrot.slane %v2577, 1
        %v2739 = vsel %vm2671, %v2734, %v2738
        %v2740 = vrot.slane %v2578, 1
        %v2741 = vsel %vm2671, %v2736, %v2740
        %v2742 = vrot.slane %v2579, 1
        %v2743 = vsel %vm2671, %v2738, %v2742
        %v2744 = vrot.slane %v2580, 1
        %v2745 = vsel %vm2671, %v2740, %v2744
        %v2746 = vrot.slane %v2581, 1
        %v2747 = vsel %vm2671, %v2742, %v2746
        %v2748 = vrot.slane %v2582, 1
        %v2749 = vsel %vm2671, %v2744, %v2748
        %v2750 = vrot.slane %v2583, 1
        %v2751 = vsel %vm2671, %v2746, %v2750
        %v2752 = vrot.slane %v2584, 1
        %v2753 = vsel %vm2671, %v2748, %v2752
        %v2754 = vrot.slane %v2585, 1
        %v2755 = vsel %vm2671, %v2750, %v2754
        %v2756 = vrot.slane %v2586, 1
        %v2757 = vsel %vm2671, %v2752, %v2756
        %v2758 = vrot.slane %v2587, 1
        %v2759 = vsel %vm2671, %v2754, %v2758
        %v2760 = vrot.slane %v2588, 1
        %v2761 = vsel %vm2671, %v2756, %v2760
        %v2762 = vrot.slane %v2589, 1
        %v2763 = vsel %vm2671, %v2758, %v2762
        %v2764 = vrot.slane %v2590, 1
        %v2765 = vsel %vm2671, %v2760, %v2764
        %v2766 = vrot.slane %v2591, 1
        %v2767 = vsel %vm2671, %v2762, %v2766
        %v2768 = vrot.slane %v2592, 1
        %v2769 = vsel %vm2671, %v2764, %v2768
        %v2770 = vrot.slane %v2593, 1
        %v2771 = vsel %vm2671, %v2766, %v2770
        %v2772 = vrot.slane %v2594, 1
        %v2773 = vsel %vm2671, %v2768, %v2772
        %v2774 = vrot.slane %v2595, 1
        %v2775 = vsel %vm2671, %v2770, %v2774
        %v2776 = vrot.slane %v2596, 1
        %v2777 = vsel %vm2671, %v2772, %v2776
        %v2778 = vrot.slane %v2597, 1
        %v2779 = vsel %vm2671, %v2774, %v2778
        %v2780 = vrot.slane %v2598, 1
        %v2781 = vsel %vm2671, %v2776, %v2780
        %v2782 = vrot.slane %v2599, 1
        %v2783 = vsel %vm2671, %v2778, %v2782
        %v2784 = vrot.slane %v2600, 1
        %v2785 = vsel %vm2671, %v2780, %v2784
        %v2786 = vrot.slane %v2601, 1
        %v2787 = vsel %vm2671, %v2782, %v2786
        %v2788 = vrot.slane %v2602, 1
        %v2789 = vsel %vm2671, %v2784, %v2788
        %v2790 = vrot.slane %v2603, 1
        %v2791 = vsel %vm2671, %v2786, %v2790
        %v2792 = vrot.slane %v2604, 1
        %v2793 = vsel %vm2671, %v2788, %v2792
        %v2794 = vrot.slane %v2605, 1
        %v2795 = vsel %vm2671, %v2790, %v2794
        %v2796 = vrot.slane %v2606, 1
        %v2797 = vsel %vm2671, %v2792, %v2796
        %v2862 = vmax.f32 %v2543, %v2674
        %v2863 = vmax.f32 %v2544, %v2677
        %v2864 = vmax.f32 %v2545, %v2679
        %v2865 = vmax.f32 %v2546, %v2681
        %v2866 = vmax.f32 %v2547, %v2683
        %v2867 = vmax.f32 %v2548, %v2685
        %v2868 = vmax.f32 %v2549, %v2687
        %v2869 = vmax.f32 %v2550, %v2689
        %v2870 = vmax.f32 %v2551, %v2691
        %v2871 = vmax.f32 %v2552, %v2693
        %v2872 = vmax.f32 %v2553, %v2695
        %v2873 = vmax.f32 %v2554, %v2697
        %v2874 = vmax.f32 %v2555, %v2699
        %v2875 = vmax.f32 %v2556, %v2701
        %v2876 = vmax.f32 %v2557, %v2703
        %v2877 = vmax.f32 %v2558, %v2705
        %v2878 = vmax.f32 %v2559, %v2707
        %v2879 = vmax.f32 %v2560, %v2709
        %v2880 = vmax.f32 %v2561, %v2711
        %v2881 = vmax.f32 %v2562, %v2713
        %v2882 = vmax.f32 %v2563, %v2715
        %v2883 = vmax.f32 %v2564, %v2717
        %v2884 = vmax.f32 %v2565, %v2719
        %v2885 = vmax.f32 %v2566, %v2721
        %v2886 = vmax.f32 %v2567, %v2723
        %v2887 = vmax.f32 %v2568, %v2725
        %v2888 = vmax.f32 %v2569, %v2727
        %v2889 = vmax.f32 %v2570, %v2729
        %v2890 = vmax.f32 %v2571, %v2731
        %v2891 = vmax.f32 %v2572, %v2733
        %v2892 = vmax.f32 %v2573, %v2735
        %v2893 = vmax.f32 %v2574, %v2737
        %v2894 = vmax.f32 %v2575, %v2739
        %v2895 = vmax.f32 %v2576, %v2741
        %v2896 = vmax.f32 %v2577, %v2743
        %v2897 = vmax.f32 %v2578, %v2745
        %v2898 = vmax.f32 %v2579, %v2747
        %v2899 = vmax.f32 %v2580, %v2749
        %v2900 = vmax.f32 %v2581, %v2751
        %v2901 = vmax.f32 %v2582, %v2753
        %v2902 = vmax.f32 %v2583, %v2755
        %v2903 = vmax.f32 %v2584, %v2757
        %v2904 = vmax.f32 %v2585, %v2759
        %v2905 = vmax.f32 %v2586, %v2761
        %v2906 = vmax.f32 %v2587, %v2763
        %v2907 = vmax.f32 %v2588, %v2765
        %v2908 = vmax.f32 %v2589, %v2767
        %v2909 = vmax.f32 %v2590, %v2769
        %v2910 = vmax.f32 %v2591, %v2771
        %v2911 = vmax.f32 %v2592, %v2773
        %v2912 = vmax.f32 %v2593, %v2775
        %v2913 = vmax.f32 %v2594, %v2777
        %v2914 = vmax.f32 %v2595, %v2779
        %v2915 = vmax.f32 %v2596, %v2781
        %v2916 = vmax.f32 %v2597, %v2783
        %v2917 = vmax.f32 %v2598, %v2785
        %v2918 = vmax.f32 %v2599, %v2787
        %v2919 = vmax.f32 %v2600, %v2789
        %v2920 = vmax.f32 %v2601, %v2791
        %v2921 = vmax.f32 %v2602, %v2793
        %v2922 = vmax.f32 %v2603, %v2795
        %v2923 = vmax.f32 %v2604, %v2797
        %v2924 = vmax.f32 %v2605, %v2794
        %v2925 = vmax.f32 %v2606, %v2796
        %v2926 = vpack.c.bf16 %v2864, %v2862
        %v2927 = vpack.c.bf16 %v2865, %v2863
        %v2928 = vpack.c.bf16 %v2868, %v2866
        %v2929 = vpack.c.bf16 %v2869, %v2867
        %v2930 = vpack.c.bf16 %v2872, %v2870
        %v2931 = vpack.c.bf16 %v2873, %v2871
        %v2932 = vpack.c.bf16 %v2876, %v2874
        %v2933 = vpack.c.bf16 %v2877, %v2875
        %v2934 = vpack.c.bf16 %v2880, %v2878
        %v2935 = vpack.c.bf16 %v2881, %v2879
        %v2936 = vpack.c.bf16 %v2884, %v2882
        %v2937 = vpack.c.bf16 %v2885, %v2883
        %v2938 = vpack.c.bf16 %v2888, %v2886
        %v2939 = vpack.c.bf16 %v2889, %v2887
        %v2940 = vpack.c.bf16 %v2892, %v2890
        %v2941 = vpack.c.bf16 %v2893, %v2891
        %v2942 = vpack.c.bf16 %v2896, %v2894
        %v2943 = vpack.c.bf16 %v2897, %v2895
        %v2944 = vpack.c.bf16 %v2900, %v2898
        %v2945 = vpack.c.bf16 %v2901, %v2899
        %v2946 = vpack.c.bf16 %v2904, %v2902
        %v2947 = vpack.c.bf16 %v2905, %v2903
        %v2948 = vpack.c.bf16 %v2908, %v2906
        %v2949 = vpack.c.bf16 %v2909, %v2907
        %v2950 = vpack.c.bf16 %v2912, %v2910
        %v2951 = vpack.c.bf16 %v2913, %v2911
        %v2952 = vpack.c.bf16 %v2916, %v2914
        %v2953 = vpack.c.bf16 %v2917, %v2915
        %v2954 = vpack.c.bf16 %v2920, %v2918
        %v2955 = vpack.c.bf16 %v2921, %v2919
        %v2956 = vpack.c.bf16 %v2924, %v2922
        %v2957 = vpack.c.bf16 %v2925, %v2923
        %v2958 = vld [vmem:[#allocation8] sm:$0xf]
        %v2959 = vld [vmem:[#allocation8 + $0x4] sm:$0xf]
        %v2960 = vld [vmem:[#allocation8 + $0x8] sm:$0xf]
        %v2961 = vld [vmem:[#allocation8 + $0xc] sm:$0xf]
        %v2962 = vld [vmem:[#allocation8 + $0x10] sm:$0xf]
        %v2963 = vld [vmem:[#allocation8 + $0x14] sm:$0xf]
        %v2964 = vld [vmem:[#allocation8 + $0x18] sm:$0xf]
        %v2965 = vld [vmem:[#allocation8 + $0x1c] sm:$0xf]
        %v2966 = vld [vmem:[#allocation8 + $0x20] sm:$0xf]
        %v2967 = vld [vmem:[#allocation8 + $0x24] sm:$0xf]
        %v2968 = vld [vmem:[#allocation8 + $0x28] sm:$0xf]
        %v2969 = vld [vmem:[#allocation8 + $0x2c] sm:$0xf]
        %v2970 = vld [vmem:[#allocation8 + $0x30] sm:$0xf]
        %v2971 = vld [vmem:[#allocation8 + $0x34] sm:$0xf]
        %v2972 = vld [vmem:[#allocation8 + $0x38] sm:$0xf]
        %v2973 = vld [vmem:[#allocation8 + $0x3c] sm:$0xf]
        %v2974 = vld [vmem:[#allocation8 + $0x40] sm:$0xf]
        %v2975 = vld [vmem:[#allocation8 + $0x44] sm:$0xf]
        %v2976 = vld [vmem:[#allocation8 + $0x48] sm:$0xf]
        %v2977 = vld [vmem:[#allocation8 + $0x4c] sm:$0xf]
        %v2978 = vld [vmem:[#allocation8 + $0x50] sm:$0xf]
        %v3000 = vunpack.c.l.b16 %v2958
        %v3001 = vunpack.c.l.b16 %v2959
        %v3002 = vunpack.c.l.b16 %v2960
        %v3003 = vunpack.c.l.b16 %v2961
        %v3004 = vunpack.c.l.b16 %v2962
        %v3005 = vunpack.c.l.b16 %v2963
        %v3006 = vunpack.c.l.b16 %v2964
        %v3007 = vunpack.c.l.b16 %v2965
        %v3008 = vunpack.c.l.b16 %v2966
        %v3009 = vunpack.c.l.b16 %v2967
        %v3010 = vunpack.c.l.b16 %v2968
        %v3011 = vunpack.c.l.b16 %v2969
        %v3012 = vunpack.c.l.b16 %v2970
        %v3013 = vunpack.c.l.b16 %v2971
        %v3014 = vunpack.c.l.b16 %v2972
        %v3015 = vunpack.c.l.b16 %v2973
        %v3016 = vunpack.c.l.b16 %v2974
        %v3017 = vunpack.c.l.b16 %v2975
        %v3018 = vunpack.c.l.b16 %v2976
        %v3019 = vunpack.c.l.b16 %v2977
        %v3020 = vunpack.c.l.b16 %v2978
        %v3021 = vpack.c.b16 %v3001, %v3000
        %v3022 = vpack.c.b16 %v3003, %v3002
        %v3023 = vpack.c.b16 %v3005, %v3004
        %v3024 = vpack.c.b16 %v3007, %v3006
        %v3025 = vpack.c.b16 %v3009, %v3008
        %v3026 = vpack.c.b16 %v3011, %v3010
        %v3027 = vpack.c.b16 %v3013, %v3012
        %v3028 = vpack.c.b16 %v3015, %v3014
        %v3029 = vpack.c.b16 %v3017, %v3016
        %v3030 = vpack.c.b16 %v3019, %v3018
        %v3031 = vpack.c.b16 %v3020, %v3020
        %vm3042 = vcmask 326656
        %v3044 = vsel %vm3042, %v2927, 0
        %v3047 = vsel %vm3042, %v2929, 0
        %v3050 = vsel %vm3042, %v2931, 0
        %v3053 = vsel %vm3042, %v2933, 0
        %v3056 = vsel %vm3042, %v2935, 0
        %v3059 = vsel %vm3042, %v2937, 0
        %v3062 = vsel %vm3042, %v2939, 0
        %v3065 = vsel %vm3042, %v2941, 0
        %v3068 = vsel %vm3042, %v2943, 0
        %v3071 = vsel %vm3042, %v2945, 0
        %v3074 = vsel %vm3042, %v2947, 0
        %v3077 = vsel %vm3042, %v2949, 0
        %v3080 = vsel %vm3042, %v2951, 0
        %v3083 = vsel %vm3042, %v2953, 0
        %v3086 = vsel %vm3042, %v2955, 0
        %v3089 = vsel %vm3042, %v2957, 0
        %vm3091 = vcmask 1043456
        %v3093 = vsel %vm3091, %v3031, 0
        %3095 = vmatpush.bf16.msra.mxu0 %v3028
        %3096 = vmatpush.bf16.msra.mxu0 %v3027
        %3097 = vmatpush.bf16.msra.mxu0 %v3026
        %3098 = vmatpush.bf16.msra.mxu0 %v3025
        %3099 = vmatpush.bf16.msra.mxu0 %v3024
        %3100 = vmatpush.bf16.msra.mxu0 %v3023
        %3101 = vmatpush.bf16.msra.mxu0 %v3022
        %3102 = vmatpush.bf16.msra.mxu0 %v3021
        %3103 = vmatmul.bf16.gmra.mxu0 %v2926
        %v3104 = vpop.f32.mrf.mxu0
        %v3105 = vadd.f32 0.0, %v3104
        %v3106 = vpop.f32.mrf.mxu0
        %v3107 = vadd.f32 0.0, %v3106
        %3108 = vmatmul.bf16.gmra.mxu0 %v2928
        %v3109 = vpop.f32.mrf.mxu0
        %v3110 = vadd.f32 0.0, %v3109
        %v3111 = vpop.f32.mrf.mxu0
        %v3112 = vadd.f32 0.0, %v3111
        %3113 = vmatmul.bf16.gmra.mxu0 %v2930
        %v3114 = vpop.f32.mrf.mxu0
        %v3115 = vadd.f32 0.0, %v3114
        %v3116 = vpop.f32.mrf.mxu0
        %v3117 = vadd.f32 0.0, %v3116
        %3118 = vmatmul.bf16.gmra.mxu0 %v2932
        %v3119 = vpop.f32.mrf.mxu0
        %v3120 = vadd.f32 0.0, %v3119
        %v3121 = vpop.f32.mrf.mxu0
        %v3122 = vadd.f32 0.0, %v3121
        %3123 = vmatmul.bf16.gmra.mxu0 %v2934
        %v3124 = vpop.f32.mrf.mxu0
        %v3125 = vadd.f32 0.0, %v3124
        %v3126 = vpop.f32.mrf.mxu0
        %v3127 = vadd.f32 0.0, %v3126
        %3128 = vmatmul.bf16.gmra.mxu0 %v2936
        %v3129 = vpop.f32.mrf.mxu0
        %v3130 = vadd.f32 0.0, %v3129
        %v3131 = vpop.f32.mrf.mxu0
        %v3132 = vadd.f32 0.0, %v3131
        %3133 = vmatmul.bf16.gmra.mxu0 %v2938
        %v3134 = vpop.f32.mrf.mxu0
        %v3135 = vadd.f32 0.0, %v3134
        %v3136 = vpop.f32.mrf.mxu0
        %v3137 = vadd.f32 0.0, %v3136
        %3138 = vmatmul.bf16.gmra.mxu0 %v2940
        %v3139 = vpop.f32.mrf.mxu0
        %v3140 = vadd.f32 0.0, %v3139
        %v3141 = vpop.f32.mrf.mxu0
        %v3142 = vadd.f32 0.0, %v3141
        %3143 = vmatmul.bf16.gmra.mxu0 %v2942
        %v3144 = vpop.f32.mrf.mxu0
        %v3145 = vadd.f32 0.0, %v3144
        %v3146 = vpop.f32.mrf.mxu0
        %v3147 = vadd.f32 0.0, %v3146
        %3148 = vmatmul.bf16.gmra.mxu0 %v2944
        %v3149 = vpop.f32.mrf.mxu0
        %v3150 = vadd.f32 0.0, %v3149
        %v3151 = vpop.f32.mrf.mxu0
        %v3152 = vadd.f32 0.0, %v3151
        %3153 = vmatmul.bf16.gmra.mxu0 %v2946
        %v3154 = vpop.f32.mrf.mxu0
        %v3155 = vadd.f32 0.0, %v3154
        %v3156 = vpop.f32.mrf.mxu0
        %v3157 = vadd.f32 0.0, %v3156
        %3158 = vmatmul.bf16.gmra.mxu0 %v2948
        %v3159 = vpop.f32.mrf.mxu0
        %v3160 = vadd.f32 0.0, %v3159
        %v3161 = vpop.f32.mrf.mxu0
        %v3162 = vadd.f32 0.0, %v3161
        %3163 = vmatmul.bf16.gmra.mxu0 %v2950
        %v3164 = vpop.f32.mrf.mxu0
        %v3165 = vadd.f32 0.0, %v3164
        %v3166 = vpop.f32.mrf.mxu0
        %v3167 = vadd.f32 0.0, %v3166
        %3168 = vmatmul.bf16.gmra.mxu0 %v2952
        %v3169 = vpop.f32.mrf.mxu0
        %v3170 = vadd.f32 0.0, %v3169
        %v3171 = vpop.f32.mrf.mxu0
        %v3172 = vadd.f32 0.0, %v3171
        %3173 = vmatmul.bf16.gmra.mxu0 %v2954
        %v3174 = vpop.f32.mrf.mxu0
        %v3175 = vadd.f32 0.0, %v3174
        %v3176 = vpop.f32.mrf.mxu0
        %v3177 = vadd.f32 0.0, %v3176
        %3178 = vmatmul.bf16.gmra.mxu0 %v2956
        %v3179 = vpop.f32.mrf.mxu0
        %v3180 = vadd.f32 0.0, %v3179
        %v3181 = vpop.f32.mrf.mxu0
        %v3182 = vadd.f32 0.0, %v3181
        %3183 = vdwg.mxu0
        %3184 = vmatpush.bf16.msra.mxu0 0
        %3185 = vmatpush.bf16.msra.mxu0 0
        %3186 = vmatpush.bf16.msra.mxu0 0
        %3187 = vmatpush.bf16.msra.mxu0 0
        %3188 = vmatpush.bf16.msra.mxu0 0
        %3189 = vmatpush.bf16.msra.mxu0 %v3093
        %3190 = vmatpush.bf16.msra.mxu0 %v3030
        %3191 = vmatpush.bf16.msra.mxu0 %v3029
        %3192 = vmatmul.bf16.gmra.mxu0 %v3044
        %v3193 = vpop.f32.mrf.mxu0
        %v3194 = vadd.f32 %v3105, %v3193
        %v3195 = vpop.f32.mrf.mxu0
        %v3196 = vadd.f32 %v3107, %v3195
        %3197 = vmatmul.bf16.gmra.mxu0 %v3047
        %v3198 = vpop.f32.mrf.mxu0
        %v3199 = vadd.f32 %v3110, %v3198
        %v3200 = vpop.f32.mrf.mxu0
        %v3201 = vadd.f32 %v3112, %v3200
        %3202 = vmatmul.bf16.gmra.mxu0 %v3050
        %v3203 = vpop.f32.mrf.mxu0
        %v3204 = vadd.f32 %v3115, %v3203
        %v3205 = vpop.f32.mrf.mxu0
        %v3206 = vadd.f32 %v3117, %v3205
        %3207 = vmatmul.bf16.gmra.mxu0 %v3053
        %v3208 = vpop.f32.mrf.mxu0
        %v3209 = vadd.f32 %v3120, %v3208
        %v3210 = vpop.f32.mrf.mxu0
        %v3211 = vadd.f32 %v3122, %v3210
        %3212 = vmatmul.bf16.gmra.mxu0 %v3056
        %v3213 = vpop.f32.mrf.mxu0
        %v3214 = vadd.f32 %v3125, %v3213
        %v3215 = vpop.f32.mrf.mxu0
        %v3216 = vadd.f32 %v3127, %v3215
        %3217 = vmatmul.bf16.gmra.mxu0 %v3059
        %v3218 = vpop.f32.mrf.mxu0
        %v3219 = vadd.f32 %v3130, %v3218
        %v3220 = vpop.f32.mrf.mxu0
        %v3221 = vadd.f32 %v3132, %v3220
        %3222 = vmatmul.bf16.gmra.mxu0 %v3062
        %v3223 = vpop.f32.mrf.mxu0
        %v3224 = vadd.f32 %v3135, %v3223
        %v3225 = vpop.f32.mrf.mxu0
        %v3226 = vadd.f32 %v3137, %v3225
        %3227 = vmatmul.bf16.gmra.mxu0 %v3065
        %v3228 = vpop.f32.mrf.mxu0
        %v3229 = vadd.f32 %v3140, %v3228
        %v3230 = vpop.f32.mrf.mxu0
        %v3231 = vadd.f32 %v3142, %v3230
        %3232 = vmatmul.bf16.gmra.mxu0 %v3068
        %v3233 = vpop.f32.mrf.mxu0
        %v3234 = vadd.f32 %v3145, %v3233
        %v3235 = vpop.f32.mrf.mxu0
        %v3236 = vadd.f32 %v3147, %v3235
        %3237 = vmatmul.bf16.gmra.mxu0 %v3071
        %v3238 = vpop.f32.mrf.mxu0
        %v3239 = vadd.f32 %v3150, %v3238
        %v3240 = vpop.f32.mrf.mxu0
        %v3241 = vadd.f32 %v3152, %v3240
        %3242 = vmatmul.bf16.gmra.mxu0 %v3074
        %v3243 = vpop.f32.mrf.mxu0
        %v3244 = vadd.f32 %v3155, %v3243
        %v3245 = vpop.f32.mrf.mxu0
        %v3246 = vadd.f32 %v3157, %v3245
        %3247 = vmatmul.bf16.gmra.mxu0 %v3077
        %v3248 = vpop.f32.mrf.mxu0
        %v3249 = vadd.f32 %v3160, %v3248
        %v3250 = vpop.f32.mrf.mxu0
        %v3251 = vadd.f32 %v3162, %v3250
        %3252 = vmatmul.bf16.gmra.mxu0 %v3080
        %v3253 = vpop.f32.mrf.mxu0
        %v3254 = vadd.f32 %v3165, %v3253
        %v3255 = vpop.f32.mrf.mxu0
        %v3256 = vadd.f32 %v3167, %v3255
        %3257 = vmatmul.bf16.gmra.mxu0 %v3083
        %v3258 = vpop.f32.mrf.mxu0
        %v3259 = vadd.f32 %v3170, %v3258
        %v3260 = vpop.f32.mrf.mxu0
        %v3261 = vadd.f32 %v3172, %v3260
        %3262 = vmatmul.bf16.gmra.mxu0 %v3086
        %v3263 = vpop.f32.mrf.mxu0
        %v3264 = vadd.f32 %v3175, %v3263
        %v3265 = vpop.f32.mrf.mxu0
        %v3266 = vadd.f32 %v3177, %v3265
        %3267 = vmatmul.bf16.gmra.mxu0 %v3089
        %v3268 = vpop.f32.mrf.mxu0
        %v3269 = vadd.f32 %v3180, %v3268
        %v3270 = vpop.f32.mrf.mxu0
        %v3271 = vadd.f32 %v3182, %v3270
        %3272 = vdwg.mxu0
        %v3273 = vld [vmem:[#allocation10] sm:$0xf]
        %v3274 = vld [vmem:[#allocation10 + $0x4] sm:$0xf]
        %v3275 = vld [vmem:[#allocation10 + $0x8] sm:$0xf]
        %v3276 = vld [vmem:[#allocation10 + $0xc] sm:$0xf]
        %v3277 = vld [vmem:[#allocation10 + $0x10] sm:$0xf]
        %v3278 = vld [vmem:[#allocation10 + $0x14] sm:$0xf]
        %v3279 = vld [vmem:[#allocation10 + $0x18] sm:$0xf]
        %v3280 = vld [vmem:[#allocation10 + $0x1c] sm:$0xf]
        %v3281 = vld [vmem:[#allocation10 + $0x20] sm:$0xf]
        %v3282 = vld [vmem:[#allocation10 + $0x24] sm:$0xf]
        %v3283 = vld [vmem:[#allocation10 + $0x28] sm:$0xf]
        %v3284 = vld [vmem:[#allocation10 + $0x2c] sm:$0xf]
        %v3285 = vld [vmem:[#allocation10 + $0x30] sm:$0xf]
        %v3286 = vld [vmem:[#allocation10 + $0x34] sm:$0xf]
        %v3287 = vld [vmem:[#allocation10 + $0x38] sm:$0xf]
        %v3288 = vld [vmem:[#allocation10 + $0x3c] sm:$0xf]
        %v3289 = vld [vmem:[#allocation10 + $0x40] sm:$0xf]
        %v3290 = vld [vmem:[#allocation10 + $0x44] sm:$0xf]
        %v3291 = vld [vmem:[#allocation10 + $0x48] sm:$0xf]
        %v3292 = vld [vmem:[#allocation10 + $0x4c] sm:$0xf]
        %v3293 = vld [vmem:[#allocation10 + $0x50] sm:$0xf]
        %v3315 = vunpack.c.l.b16 %v3273
        %v3316 = vunpack.c.l.b16 %v3274
        %v3317 = vunpack.c.l.b16 %v3275
        %v3318 = vunpack.c.l.b16 %v3276
        %v3319 = vunpack.c.l.b16 %v3277
        %v3320 = vunpack.c.l.b16 %v3278
        %v3321 = vunpack.c.l.b16 %v3279
        %v3322 = vunpack.c.l.b16 %v3280
        %v3323 = vunpack.c.l.b16 %v3281
        %v3324 = vunpack.c.l.b16 %v3282
        %v3325 = vunpack.c.l.b16 %v3283
        %v3326 = vunpack.c.l.b16 %v3284
        %v3327 = vunpack.c.l.b16 %v3285
        %v3328 = vunpack.c.l.b16 %v3286
        %v3329 = vunpack.c.l.b16 %v3287
        %v3330 = vunpack.c.l.b16 %v3288
        %v3331 = vunpack.c.l.b16 %v3289
        %v3332 = vunpack.c.l.b16 %v3290
        %v3333 = vunpack.c.l.b16 %v3291
        %v3334 = vunpack.c.l.b16 %v3292
        %v3335 = vunpack.c.l.b16 %v3293
        %v3336 = vpack.c.b16 %v3316, %v3315
        %v3337 = vpack.c.b16 %v3318, %v3317
        %v3338 = vpack.c.b16 %v3320, %v3319
        %v3339 = vpack.c.b16 %v3322, %v3321
        %v3340 = vpack.c.b16 %v3324, %v3323
        %v3341 = vpack.c.b16 %v3326, %v3325
        %v3342 = vpack.c.b16 %v3328, %v3327
        %v3343 = vpack.c.b16 %v3330, %v3329
        %v3344 = vpack.c.b16 %v3332, %v3331
        %v3345 = vpack.c.b16 %v3334, %v3333
        %v3346 = vpack.c.b16 %v3335, %v3335
        %v3358 = vsel %vm3091, %v3346, 0
        %3360 = vmatpush.bf16.msra.mxu0 %v3343
        %3361 = vmatpush.bf16.msra.mxu0 %v3342
        %3362 = vmatpush.bf16.msra.mxu0 %v3341
        %3363 = vmatpush.bf16.msra.mxu0 %v3340
        %3364 = vmatpush.bf16.msra.mxu0 %v3339
        %3365 = vmatpush.bf16.msra.mxu0 %v3338
        %3366 = vmatpush.bf16.msra.mxu0 %v3337
        %3367 = vmatpush.bf16.msra.mxu0 %v3336
        %3368 = vmatmul.bf16.gmra.mxu0 %v2926
        %v3369 = vpop.f32.mrf.mxu0
        %v3370 = vadd.f32 0.0, %v3369
        %v3371 = vpop.f32.mrf.mxu0
        %v3372 = vadd.f32 0.0, %v3371
        %3373 = vmatmul.bf16.gmra.mxu0 %v2928
        %v3374 = vpop.f32.mrf.mxu0
        %v3375 = vadd.f32 0.0, %v3374
        %v3376 = vpop.f32.mrf.mxu0
        %v3377 = vadd.f32 0.0, %v3376
        %3378 = vmatmul.bf16.gmra.mxu0 %v2930
        %v3379 = vpop.f32.mrf.mxu0
        %v3380 = vadd.f32 0.0, %v3379
        %v3381 = vpop.f32.mrf.mxu0
        %v3382 = vadd.f32 0.0, %v3381
        %3383 = vmatmul.bf16.gmra.mxu0 %v2932
        %v3384 = vpop.f32.mrf.mxu0
        %v3385 = vadd.f32 0.0, %v3384
        %v3386 = vpop.f32.mrf.mxu0
        %v3387 = vadd.f32 0.0, %v3386
        %3388 = vmatmul.bf16.gmra.mxu0 %v2934
        %v3389 = vpop.f32.mrf.mxu0
        %v3390 = vadd.f32 0.0, %v3389
        %v3391 = vpop.f32.mrf.mxu0
        %v3392 = vadd.f32 0.0, %v3391
        %3393 = vmatmul.bf16.gmra.mxu0 %v2936
        %v3394 = vpop.f32.mrf.mxu0
        %v3395 = vadd.f32 0.0, %v3394
        %v3396 = vpop.f32.mrf.mxu0
        %v3397 = vadd.f32 0.0, %v3396
        %3398 = vmatmul.bf16.gmra.mxu0 %v2938
        %v3399 = vpop.f32.mrf.mxu0
        %v3400 = vadd.f32 0.0, %v3399
        %v3401 = vpop.f32.mrf.mxu0
        %v3402 = vadd.f32 0.0, %v3401
        %3403 = vmatmul.bf16.gmra.mxu0 %v2940
        %v3404 = vpop.f32.mrf.mxu0
        %v3405 = vadd.f32 0.0, %v3404
        %v3406 = vpop.f32.mrf.mxu0
        %v3407 = vadd.f32 0.0, %v3406
        %3408 = vmatmul.bf16.gmra.mxu0 %v2942
        %v3409 = vpop.f32.mrf.mxu0
        %v3410 = vadd.f32 0.0, %v3409
        %v3411 = vpop.f32.mrf.mxu0
        %v3412 = vadd.f32 0.0, %v3411
        %3413 = vmatmul.bf16.gmra.mxu0 %v2944
        %v3414 = vpop.f32.mrf.mxu0
        %v3415 = vadd.f32 0.0, %v3414
        %v3416 = vpop.f32.mrf.mxu0
        %v3417 = vadd.f32 0.0, %v3416
        %3418 = vmatmul.bf16.gmra.mxu0 %v2946
        %v3419 = vpop.f32.mrf.mxu0
        %v3420 = vadd.f32 0.0, %v3419
        %v3421 = vpop.f32.mrf.mxu0
        %v3422 = vadd.f32 0.0, %v3421
        %3423 = vmatmul.bf16.gmra.mxu0 %v2948
        %v3424 = vpop.f32.mrf.mxu0
        %v3425 = vadd.f32 0.0, %v3424
        %v3426 = vpop.f32.mrf.mxu0
        %v3427 = vadd.f32 0.0, %v3426
        %3428 = vmatmul.bf16.gmra.mxu0 %v2950
        %v3429 = vpop.f32.mrf.mxu0
        %v3430 = vadd.f32 0.0, %v3429
        %v3431 = vpop.f32.mrf.mxu0
        %v3432 = vadd.f32 0.0, %v3431
        %3433 = vmatmul.bf16.gmra.mxu0 %v2952
        %v3434 = vpop.f32.mrf.mxu0
        %v3435 = vadd.f32 0.0, %v3434
        %v3436 = vpop.f32.mrf.mxu0
        %v3437 = vadd.f32 0.0, %v3436
        %3438 = vmatmul.bf16.gmra.mxu0 %v2954
        %v3439 = vpop.f32.mrf.mxu0
        %v3440 = vadd.f32 0.0, %v3439
        %v3441 = vpop.f32.mrf.mxu0
        %v3442 = vadd.f32 0.0, %v3441
        %3443 = vmatmul.bf16.gmra.mxu0 %v2956
        %v3444 = vpop.f32.mrf.mxu0
        %v3445 = vadd.f32 0.0, %v3444
        %v3446 = vpop.f32.mrf.mxu0
        %v3447 = vadd.f32 0.0, %v3446
        %3448 = vdwg.mxu0
        %3449 = vmatpush.bf16.msra.mxu0 0
        %3450 = vmatpush.bf16.msra.mxu0 0
        %3451 = vmatpush.bf16.msra.mxu0 0
        %3452 = vmatpush.bf16.msra.mxu0 0
        %3453 = vmatpush.bf16.msra.mxu0 0
        %3454 = vmatpush.bf16.msra.mxu0 %v3358
        %3455 = vmatpush.bf16.msra.mxu0 %v3345
        %3456 = vmatpush.bf16.msra.mxu0 %v3344
        %3457 = vmatmul.bf16.gmra.mxu0 %v3044
        %v3458 = vpop.f32.mrf.mxu0
        %v3459 = vadd.f32 %v3370, %v3458
        %v3460 = vpop.f32.mrf.mxu0
        %v3461 = vadd.f32 %v3372, %v3460
        %3462 = vmatmul.bf16.gmra.mxu0 %v3047
        %v3463 = vpop.f32.mrf.mxu0
        %v3464 = vadd.f32 %v3375, %v3463
        %v3465 = vpop.f32.mrf.mxu0
        %v3466 = vadd.f32 %v3377, %v3465
        %3467 = vmatmul.bf16.gmra.mxu0 %v3050
        %v3468 = vpop.f32.mrf.mxu0
        %v3469 = vadd.f32 %v3380, %v3468
        %v3470 = vpop.f32.mrf.mxu0
        %v3471 = vadd.f32 %v3382, %v3470
        %3472 = vmatmul.bf16.gmra.mxu0 %v3053
        %v3473 = vpop.f32.mrf.mxu0
        %v3474 = vadd.f32 %v3385, %v3473
        %v3475 = vpop.f32.mrf.mxu0
        %v3476 = vadd.f32 %v3387, %v3475
        %3477 = vmatmul.bf16.gmra.mxu0 %v3056
        %v3478 = vpop.f32.mrf.mxu0
        %v3479 = vadd.f32 %v3390, %v3478
        %v3480 = vpop.f32.mrf.mxu0
        %v3481 = vadd.f32 %v3392, %v3480
        %3482 = vmatmul.bf16.gmra.mxu0 %v3059
        %v3483 = vpop.f32.mrf.mxu0
        %v3484 = vadd.f32 %v3395, %v3483
        %v3485 = vpop.f32.mrf.mxu0
        %v3486 = vadd.f32 %v3397, %v3485
        %3487 = vmatmul.bf16.gmra.mxu0 %v3062
        %v3488 = vpop.f32.mrf.mxu0
        %v3489 = vadd.f32 %v3400, %v3488
        %v3490 = vpop.f32.mrf.mxu0
        %v3491 = vadd.f32 %v3402, %v3490
        %3492 = vmatmul.bf16.gmra.mxu0 %v3065
        %v3493 = vpop.f32.mrf.mxu0
        %v3494 = vadd.f32 %v3405, %v3493
        %v3495 = vpop.f32.mrf.mxu0
        %v3496 = vadd.f32 %v3407, %v3495
        %3497 = vmatmul.bf16.gmra.mxu0 %v3068
        %v3498 = vpop.f32.mrf.mxu0
        %v3499 = vadd.f32 %v3410, %v3498
        %v3500 = vpop.f32.mrf.mxu0
        %v3501 = vadd.f32 %v3412, %v3500
        %3502 = vmatmul.bf16.gmra.mxu0 %v3071
        %v3503 = vpop.f32.mrf.mxu0
        %v3504 = vadd.f32 %v3415, %v3503
        %v3505 = vpop.f32.mrf.mxu0
        %v3506 = vadd.f32 %v3417, %v3505
        %3507 = vmatmul.bf16.gmra.mxu0 %v3074
        %v3508 = vpop.f32.mrf.mxu0
        %v3509 = vadd.f32 %v3420, %v3508
        %v3510 = vpop.f32.mrf.mxu0
        %v3511 = vadd.f32 %v3422, %v3510
        %3512 = vmatmul.bf16.gmra.mxu0 %v3077
        %v3513 = vpop.f32.mrf.mxu0
        %v3514 = vadd.f32 %v3425, %v3513
        %v3515 = vpop.f32.mrf.mxu0
        %v3516 = vadd.f32 %v3427, %v3515
        %3517 = vmatmul.bf16.gmra.mxu0 %v3080
        %v3518 = vpop.f32.mrf.mxu0
        %v3519 = vadd.f32 %v3430, %v3518
        %v3520 = vpop.f32.mrf.mxu0
        %v3521 = vadd.f32 %v3432, %v3520
        %3522 = vmatmul.bf16.gmra.mxu0 %v3083
        %v3523 = vpop.f32.mrf.mxu0
        %v3524 = vadd.f32 %v3435, %v3523
        %v3525 = vpop.f32.mrf.mxu0
        %v3526 = vadd.f32 %v3437, %v3525
        %3527 = vmatmul.bf16.gmra.mxu0 %v3086
        %v3528 = vpop.f32.mrf.mxu0
        %v3529 = vadd.f32 %v3440, %v3528
        %v3530 = vpop.f32.mrf.mxu0
        %v3531 = vadd.f32 %v3442, %v3530
        %3532 = vmatmul.bf16.gmra.mxu0 %v3089
        %v3533 = vpop.f32.mrf.mxu0
        %v3534 = vadd.f32 %v3445, %v3533
        %v3535 = vpop.f32.mrf.mxu0
        %v3536 = vadd.f32 %v3447, %v3535
        %3537 = vdwg.mxu0
        %v3538 = vmax.f32 %v3194, %v3459
        %v3539 = vmax.f32 %v3196, %v3461
        %v3540 = vmax.f32 %v3199, %v3464
        %v3541 = vmax.f32 %v3201, %v3466
        %v3542 = vmax.f32 %v3204, %v3469
        %v3543 = vmax.f32 %v3206, %v3471
        %v3544 = vmax.f32 %v3209, %v3474
        %v3545 = vmax.f32 %v3211, %v3476
        %v3546 = vmax.f32 %v3214, %v3479
        %v3547 = vmax.f32 %v3216, %v3481
        %v3548 = vmax.f32 %v3219, %v3484
        %v3549 = vmax.f32 %v3221, %v3486
        %v3550 = vmax.f32 %v3224, %v3489
        %v3551 = vmax.f32 %v3226, %v3491
        %v3552 = vmax.f32 %v3229, %v3494
        %v3553 = vmax.f32 %v3231, %v3496
        %v3554 = vmax.f32 %v3234, %v3499
        %v3555 = vmax.f32 %v3236, %v3501
        %v3556 = vmax.f32 %v3239, %v3504
        %v3557 = vmax.f32 %v3241, %v3506
        %v3558 = vmax.f32 %v3244, %v3509
        %v3559 = vmax.f32 %v3246, %v3511
        %v3560 = vmax.f32 %v3249, %v3514
        %v3561 = vmax.f32 %v3251, %v3516
        %v3562 = vmax.f32 %v3254, %v3519
        %v3563 = vmax.f32 %v3256, %v3521
        %v3564 = vmax.f32 %v3259, %v3524
        %v3565 = vmax.f32 %v3261, %v3526
        %v3566 = vmax.f32 %v3264, %v3529
        %v3567 = vmax.f32 %v3266, %v3531
        %v3568 = vmax.f32 %v3269, %v3534
        %v3569 = vmax.f32 %v3271, %v3536
        %v3570 = vpack.c.bf16 %v3539, %v3538
        %v3571 = vpack.c.bf16 %v3541, %v3540
        %v3572 = vpack.c.bf16 %v3543, %v3542
        %v3573 = vpack.c.bf16 %v3545, %v3544
        %v3574 = vpack.c.bf16 %v3547, %v3546
        %v3575 = vpack.c.bf16 %v3549, %v3548
        %v3576 = vpack.c.bf16 %v3551, %v3550
        %v3577 = vpack.c.bf16 %v3553, %v3552
        %v3578 = vpack.c.bf16 %v3555, %v3554
        %v3579 = vpack.c.bf16 %v3557, %v3556
        %v3580 = vpack.c.bf16 %v3559, %v3558
        %v3581 = vpack.c.bf16 %v3561, %v3560
        %v3582 = vpack.c.bf16 %v3563, %v3562
        %v3583 = vpack.c.bf16 %v3565, %v3564
        %v3584 = vpack.c.bf16 %v3567, %v3566
        %v3585 = vpack.c.bf16 %v3568, %v3568
        %v3586 = vld [vmem:[#allocation11] sm:$0xff]
        %v3587 = vld [vmem:[#allocation11 + $0x8] sm:$0xff]
        %v3588 = vld [vmem:[#allocation11 + $0x10] sm:$0xff]
        %v3589 = vld [vmem:[#allocation11 + $0x18] sm:$0xff]
        %v3590 = vld [vmem:[#allocation11 + $0x20] sm:$0xff]
        %v3591 = vld [vmem:[#allocation11 + $0x28] sm:$0xff]
        %v3592 = vld [vmem:[#allocation11 + $0x30] sm:$0xff]
        %v3593 = vld [vmem:[#allocation11 + $0x38] sm:$0xff]
        %v3594 = vld [vmem:[#allocation11 + $0x40] sm:$0xff]
        %v3595 = vld [vmem:[#allocation11 + $0x48] sm:$0xff]
        %v3596 = vld [vmem:[#allocation11 + $0x50] sm:$0x33]
        %s3597 = scalar_lea.vmem [#allocation11], 88
        %v3598 = vld [vmem:[%s3597] sm:$0xff]
        %v3599 = vld [vmem:[%s3597 + $0x8] sm:$0xff]
        %v3600 = vld [vmem:[%s3597 + $0x10] sm:$0xff]
        %v3601 = vld [vmem:[%s3597 + $0x18] sm:$0xff]
        %v3602 = vld [vmem:[%s3597 + $0x20] sm:$0xff]
        %v3603 = vld [vmem:[%s3597 + $0x28] sm:$0xff]
        %v3604 = vld [vmem:[%s3597 + $0x30] sm:$0xff]
        %v3605 = vld [vmem:[%s3597 + $0x38] sm:$0xff]
        %v3606 = vld [vmem:[%s3597 + $0x40] sm:$0xff]
        %v3607 = vld [vmem:[%s3597 + $0x48] sm:$0xff]
        %v3608 = vld [vmem:[%s3597 + $0x50] sm:$0x33]
        %v3625 = vrot.slane %v3570, 1
        %v3626 = vrot.slane %v3571, 1
        %v3627 = vsel %vm1405, %v3625, %v3626
        %v3628 = vrot.slane %v3572, 1
        %v3629 = vsel %vm1405, %v3626, %v3628
        %v3630 = vrot.slane %v3573, 1
        %v3631 = vsel %vm1405, %v3628, %v3630
        %v3632 = vrot.slane %v3574, 1
        %v3633 = vsel %vm1405, %v3630, %v3632
        %v3634 = vrot.slane %v3575, 1
        %v3635 = vsel %vm1405, %v3632, %v3634
        %v3636 = vrot.slane %v3576, 1
        %v3637 = vsel %vm1405, %v3634, %v3636
        %v3638 = vrot.slane %v3577, 1
        %v3639 = vsel %vm1405, %v3636, %v3638
        %v3640 = vrot.slane %v3578, 1
        %v3641 = vsel %vm1405, %v3638, %v3640
        %v3642 = vrot.slane %v3579, 1
        %v3643 = vsel %vm1405, %v3640, %v3642
        %v3644 = vrot.slane %v3580, 1
        %v3645 = vsel %vm1405, %v3642, %v3644
        %v3646 = vrot.slane %v3581, 1
        %v3647 = vsel %vm1405, %v3644, %v3646
        %v3648 = vrot.slane %v3582, 1
        %v3649 = vsel %vm1405, %v3646, %v3648
        %v3650 = vrot.slane %v3583, 1
        %v3651 = vsel %vm1405, %v3648, %v3650
        %v3652 = vrot.slane %v3584, 1
        %v3653 = vsel %vm1405, %v3650, %v3652
        %v3654 = vrot.slane %v3585, 1
        %v3655 = vsel %vm1405, %v3652, %v3654
        %v3667 = vunpack.c.l.b16 %v3598
        %v3668 = vunpack.c.h.b16 %v3598
        %v3669 = vunpack.c.l.b16 %v3599
        %v3670 = vunpack.c.h.b16 %v3599
        %v3671 = vunpack.c.l.b16 %v3600
        %v3672 = vunpack.c.h.b16 %v3600
        %v3673 = vunpack.c.l.b16 %v3601
        %v3674 = vunpack.c.h.b16 %v3601
        %v3675 = vunpack.c.l.b16 %v3602
        %v3676 = vunpack.c.h.b16 %v3602
        %v3677 = vunpack.c.l.b16 %v3603
        %v3678 = vunpack.c.h.b16 %v3603
        %v3679 = vunpack.c.l.b16 %v3604
        %v3680 = vunpack.c.h.b16 %v3604
        %v3681 = vunpack.c.l.b16 %v3605
        %v3682 = vunpack.c.h.b16 %v3605
        %v3683 = vunpack.c.l.b16 %v3606
        %v3684 = vunpack.c.h.b16 %v3606
        %v3685 = vunpack.c.l.b16 %v3607
        %v3686 = vunpack.c.h.b16 %v3607
        %v3687 = vunpack.c.l.b16 %v3608
        %v3688 = vunpack.c.h.b16 %v3608
        %v3689 = vpack.c.b16 %v3669, %v3667
        %v3690 = vpack.c.b16 %v3670, %v3668
        %v3691 = vpack.c.b16 %v3673, %v3671
        %v3692 = vpack.c.b16 %v3674, %v3672
        %v3693 = vpack.c.b16 %v3677, %v3675
        %v3694 = vpack.c.b16 %v3678, %v3676
        %v3695 = vpack.c.b16 %v3681, %v3679
        %v3696 = vpack.c.b16 %v3682, %v3680
        %v3697 = vpack.c.b16 %v3685, %v3683
        %v3698 = vpack.c.b16 %v3686, %v3684
        %v3699 = vpack.c.b16 %v3687, %v3687
        %v3700 = vpack.c.b16 %v3688, %v3688
        %vm3711 = vcmask 687104
        %v3713 = vsel %vm3711, %v3627, 0
        %v3716 = vsel %vm3711, %v3629, 0
        %v3719 = vsel %vm3711, %v3631, 0
        %v3722 = vsel %vm3711, %v3633, 0
        %v3725 = vsel %vm3711, %v3635, 0
        %v3728 = vsel %vm3711, %v3637, 0
        %v3731 = vsel %vm3711, %v3639, 0
        %v3734 = vsel %vm3711, %v3641, 0
        %v3737 = vsel %vm3711, %v3643, 0
        %v3740 = vsel %vm3711, %v3645, 0
        %v3743 = vsel %vm3711, %v3647, 0
        %v3746 = vsel %vm3711, %v3649, 0
        %v3749 = vsel %vm3711, %v3651, 0
        %v3752 = vsel %vm3711, %v3653, 0
        %v3755 = vsel %vm3711, %v3655, 0
        %v3758 = vsel %vm3711, %v3654, 0
        %vm3760 = vcmask 1041408
        %v3762 = vsel %vm3760, %v3699, 0
        %v3765 = vsel %vm3760, %v3700, 0
        %3767 = vmatpush.bf16.msra.mxu0 0
        %3768 = vmatpush.bf16.msra.mxu0 0
        %3769 = vmatpush.bf16.msra.mxu0 %v3762
        %3770 = vmatpush.bf16.msra.mxu0 %v3697
        %3771 = vmatpush.bf16.msra.mxu0 %v3695
        %3772 = vmatpush.bf16.msra.mxu0 %v3693
        %3773 = vmatpush.bf16.msra.mxu0 %v3691
        %3774 = vmatpush.bf16.msra.mxu0 %v3689
        %3775 = vmatmul.bf16.gmra.mxu0 %v3713
        %v3776 = vpop.f32.mrf.mxu0
        %v3777 = vadd.f32 0.0, %v3776
        %v3778 = vpop.f32.mrf.mxu0
        %v3779 = vadd.f32 0.0, %v3778
        %3780 = vmatmul.bf16.gmra.mxu0 %v3716
        %v3781 = vpop.f32.mrf.mxu0
        %v3782 = vadd.f32 0.0, %v3781
        %v3783 = vpop.f32.mrf.mxu0
        %v3784 = vadd.f32 0.0, %v3783
        %3785 = vmatmul.bf16.gmra.mxu0 %v3719
        %v3786 = vpop.f32.mrf.mxu0
        %v3787 = vadd.f32 0.0, %v3786
        %v3788 = vpop.f32.mrf.mxu0
        %v3789 = vadd.f32 0.0, %v3788
        %3790 = vmatmul.bf16.gmra.mxu0 %v3722
        %v3791 = vpop.f32.mrf.mxu0
        %v3792 = vadd.f32 0.0, %v3791
        %v3793 = vpop.f32.mrf.mxu0
        %v3794 = vadd.f32 0.0, %v3793
        %3795 = vmatmul.bf16.gmra.mxu0 %v3725
        %v3796 = vpop.f32.mrf.mxu0
        %v3797 = vadd.f32 0.0, %v3796
        %v3798 = vpop.f32.mrf.mxu0
        %v3799 = vadd.f32 0.0, %v3798
        %3800 = vmatmul.bf16.gmra.mxu0 %v3728
        %v3801 = vpop.f32.mrf.mxu0
        %v3802 = vadd.f32 0.0, %v3801
        %v3803 = vpop.f32.mrf.mxu0
        %v3804 = vadd.f32 0.0, %v3803
        %3805 = vmatmul.bf16.gmra.mxu0 %v3731
        %v3806 = vpop.f32.mrf.mxu0
        %v3807 = vadd.f32 0.0, %v3806
        %v3808 = vpop.f32.mrf.mxu0
        %v3809 = vadd.f32 0.0, %v3808
        %3810 = vmatmul.bf16.gmra.mxu0 %v3734
        %v3811 = vpop.f32.mrf.mxu0
        %v3812 = vadd.f32 0.0, %v3811
        %v3813 = vpop.f32.mrf.mxu0
        %v3814 = vadd.f32 0.0, %v3813
        %3815 = vmatmul.bf16.gmra.mxu0 %v3737
        %v3816 = vpop.f32.mrf.mxu0
        %v3817 = vadd.f32 0.0, %v3816
        %v3818 = vpop.f32.mrf.mxu0
        %v3819 = vadd.f32 0.0, %v3818
        %3820 = vmatmul.bf16.gmra.mxu0 %v3740
        %v3821 = vpop.f32.mrf.mxu0
        %v3822 = vadd.f32 0.0, %v3821
        %v3823 = vpop.f32.mrf.mxu0
        %v3824 = vadd.f32 0.0, %v3823
        %3825 = vmatmul.bf16.gmra.mxu0 %v3743
        %v3826 = vpop.f32.mrf.mxu0
        %v3827 = vadd.f32 0.0, %v3826
        %v3828 = vpop.f32.mrf.mxu0
        %v3829 = vadd.f32 0.0, %v3828
        %3830 = vmatmul.bf16.gmra.mxu0 %v3746
        %v3831 = vpop.f32.mrf.mxu0
        %v3832 = vadd.f32 0.0, %v3831
        %v3833 = vpop.f32.mrf.mxu0
        %v3834 = vadd.f32 0.0, %v3833
        %3835 = vmatmul.bf16.gmra.mxu0 %v3749
        %v3836 = vpop.f32.mrf.mxu0
        %v3837 = vadd.f32 0.0, %v3836
        %v3838 = vpop.f32.mrf.mxu0
        %v3839 = vadd.f32 0.0, %v3838
        %3840 = vmatmul.bf16.gmra.mxu0 %v3752
        %v3841 = vpop.f32.mrf.mxu0
        %v3842 = vadd.f32 0.0, %v3841
        %v3843 = vpop.f32.mrf.mxu0
        %v3844 = vadd.f32 0.0, %v3843
        %3845 = vmatmul.bf16.gmra.mxu0 %v3755
        %v3846 = vpop.f32.mrf.mxu0
        %v3847 = vadd.f32 0.0, %v3846
        %v3848 = vpop.f32.mrf.mxu0
        %v3849 = vadd.f32 0.0, %v3848
        %3850 = vmatmul.bf16.gmra.mxu0 %v3758
        %v3851 = vpop.f32.mrf.mxu0
        %v3852 = vadd.f32 0.0, %v3851
        %v3853 = vpop.f32.mrf.mxu0
        %3854 = vdwg.mxu0
        %3855 = vmatpush.bf16.msra.mxu0 0
        %3856 = vmatpush.bf16.msra.mxu0 0
        %3857 = vmatpush.bf16.msra.mxu0 %v3765
        %3858 = vmatpush.bf16.msra.mxu0 %v3698
        %3859 = vmatpush.bf16.msra.mxu0 %v3696
        %3860 = vmatpush.bf16.msra.mxu0 %v3694
        %3861 = vmatpush.bf16.msra.mxu0 %v3692
        %3862 = vmatpush.bf16.msra.mxu0 %v3690
        %3863 = vmatmul.bf16.gmra.mxu0 %v3713
        %v3864 = vpop.f32.mrf.mxu0
        %v3865 = vadd.f32 0.0, %v3864
        %v3866 = vpop.f32.mrf.mxu0
        %v3867 = vadd.f32 0.0, %v3866
        %3868 = vmatmul.bf16.gmra.mxu0 %v3716
        %v3869 = vpop.f32.mrf.mxu0
        %v3870 = vadd.f32 0.0, %v3869
        %v3871 = vpop.f32.mrf.mxu0
        %v3872 = vadd.f32 0.0, %v3871
        %3873 = vmatmul.bf16.gmra.mxu0 %v3719
        %v3874 = vpop.f32.mrf.mxu0
        %v3875 = vadd.f32 0.0, %v3874
        %v3876 = vpop.f32.mrf.mxu0
        %v3877 = vadd.f32 0.0, %v3876
        %3878 = vmatmul.bf16.gmra.mxu0 %v3722
        %v3879 = vpop.f32.mrf.mxu0
        %v3880 = vadd.f32 0.0, %v3879
        %v3881 = vpop.f32.mrf.mxu0
        %v3882 = vadd.f32 0.0, %v3881
        %3883 = vmatmul.bf16.gmra.mxu0 %v3725
        %v3884 = vpop.f32.mrf.mxu0
        %v3885 = vadd.f32 0.0, %v3884
        %v3886 = vpop.f32.mrf.mxu0
        %v3887 = vadd.f32 0.0, %v3886
        %3888 = vmatmul.bf16.gmra.mxu0 %v3728
        %v3889 = vpop.f32.mrf.mxu0
        %v3890 = vadd.f32 0.0, %v3889
        %v3891 = vpop.f32.mrf.mxu0
        %v3892 = vadd.f32 0.0, %v3891
        %3893 = vmatmul.bf16.gmra.mxu0 %v3731
        %v3894 = vpop.f32.mrf.mxu0
        %v3895 = vadd.f32 0.0, %v3894
        %v3896 = vpop.f32.mrf.mxu0
        %v3897 = vadd.f32 0.0, %v3896
        %3898 = vmatmul.bf16.gmra.mxu0 %v3734
        %v3899 = vpop.f32.mrf.mxu0
        %v3900 = vadd.f32 0.0, %v3899
        %v3901 = vpop.f32.mrf.mxu0
        %v3902 = vadd.f32 0.0, %v3901
        %3903 = vmatmul.bf16.gmra.mxu0 %v3737
        %v3904 = vpop.f32.mrf.mxu0
        %v3905 = vadd.f32 0.0, %v3904
        %v3906 = vpop.f32.mrf.mxu0
        %v3907 = vadd.f32 0.0, %v3906
        %3908 = vmatmul.bf16.gmra.mxu0 %v3740
        %v3909 = vpop.f32.mrf.mxu0
        %v3910 = vadd.f32 0.0, %v3909
        %v3911 = vpop.f32.mrf.mxu0
        %v3912 = vadd.f32 0.0, %v3911
        %3913 = vmatmul.bf16.gmra.mxu0 %v3743
        %v3914 = vpop.f32.mrf.mxu0
        %v3915 = vadd.f32 0.0, %v3914
        %v3916 = vpop.f32.mrf.mxu0
        %v3917 = vadd.f32 0.0, %v3916
        %3918 = vmatmul.bf16.gmra.mxu0 %v3746
        %v3919 = vpop.f32.mrf.mxu0
        %v3920 = vadd.f32 0.0, %v3919
        %v3921 = vpop.f32.mrf.mxu0
        %v3922 = vadd.f32 0.0, %v3921
        %3923 = vmatmul.bf16.gmra.mxu0 %v3749
        %v3924 = vpop.f32.mrf.mxu0
        %v3925 = vadd.f32 0.0, %v3924
        %v3926 = vpop.f32.mrf.mxu0
        %v3927 = vadd.f32 0.0, %v3926
        %3928 = vmatmul.bf16.gmra.mxu0 %v3752
        %v3929 = vpop.f32.mrf.mxu0
        %v3930 = vadd.f32 0.0, %v3929
        %v3931 = vpop.f32.mrf.mxu0
        %v3932 = vadd.f32 0.0, %v3931
        %3933 = vmatmul.bf16.gmra.mxu0 %v3755
        %v3934 = vpop.f32.mrf.mxu0
        %v3935 = vadd.f32 0.0, %v3934
        %v3936 = vpop.f32.mrf.mxu0
        %v3937 = vadd.f32 0.0, %v3936
        %3938 = vmatmul.bf16.gmra.mxu0 %v3758
        %v3939 = vpop.f32.mrf.mxu0
        %v3940 = vadd.f32 0.0, %v3939
        %v3941 = vpop.f32.mrf.mxu0
        %3942 = vdwg.mxu0
        %v3954 = vunpack.c.l.b16 %v3586
        %v3955 = vunpack.c.h.b16 %v3586
        %v3956 = vunpack.c.l.b16 %v3587
        %v3957 = vunpack.c.h.b16 %v3587
        %v3958 = vunpack.c.l.b16 %v3588
        %v3959 = vunpack.c.h.b16 %v3588
        %v3960 = vunpack.c.l.b16 %v3589
        %v3961 = vunpack.c.h.b16 %v3589
        %v3962 = vunpack.c.l.b16 %v3590
        %v3963 = vunpack.c.h.b16 %v3590
        %v3964 = vunpack.c.l.b16 %v3591
        %v3965 = vunpack.c.h.b16 %v3591
        %v3966 = vunpack.c.l.b16 %v3592
        %v3967 = vunpack.c.h.b16 %v3592
        %v3968 = vunpack.c.l.b16 %v3593
        %v3969 = vunpack.c.h.b16 %v3593
        %v3970 = vunpack.c.l.b16 %v3594
        %v3971 = vunpack.c.h.b16 %v3594
        %v3972 = vunpack.c.l.b16 %v3595
        %v3973 = vunpack.c.h.b16 %v3595
        %v3974 = vunpack.c.l.b16 %v3596
        %v3975 = vunpack.c.h.b16 %v3596
        %v3976 = vpack.c.b16 %v3956, %v3954
        %v3977 = vpack.c.b16 %v3957, %v3955
        %v3978 = vpack.c.b16 %v3960, %v3958
        %v3979 = vpack.c.b16 %v3961, %v3959
        %v3980 = vpack.c.b16 %v3964, %v3962
        %v3981 = vpack.c.b16 %v3965, %v3963
        %v3982 = vpack.c.b16 %v3968, %v3966
        %v3983 = vpack.c.b16 %v3969, %v3967
        %v3984 = vpack.c.b16 %v3972, %v3970
        %v3985 = vpack.c.b16 %v3973, %v3971
        %v3986 = vpack.c.b16 %v3974, %v3974
        %v3987 = vpack.c.b16 %v3975, %v3975
        %v3999 = vsel %vm3711, %v3570, 0
        %v4002 = vsel %vm3711, %v3571, 0
        %v4005 = vsel %vm3711, %v3572, 0
        %v4008 = vsel %vm3711, %v3573, 0
        %v4011 = vsel %vm3711, %v3574, 0
        %v4014 = vsel %vm3711, %v3575, 0
        %v4017 = vsel %vm3711, %v3576, 0
        %v4020 = vsel %vm3711, %v3577, 0
        %v4023 = vsel %vm3711, %v3578, 0
        %v4026 = vsel %vm3711, %v3579, 0
        %v4029 = vsel %vm3711, %v3580, 0
        %v4032 = vsel %vm3711, %v3581, 0
        %v4035 = vsel %vm3711, %v3582, 0
        %v4038 = vsel %vm3711, %v3583, 0
        %v4041 = vsel %vm3711, %v3584, 0
        %v4044 = vsel %vm3711, %v3585, 0
        %v4047 = vsel %vm3760, %v3986, 0
        %v4050 = vsel %vm3760, %v3987, 0
        %4052 = vmatpush.bf16.msra.mxu0 0
        %4053 = vmatpush.bf16.msra.mxu0 0
        %4054 = vmatpush.bf16.msra.mxu0 %v4047
        %4055 = vmatpush.bf16.msra.mxu0 %v3984
        %4056 = vmatpush.bf16.msra.mxu0 %v3982
        %4057 = vmatpush.bf16.msra.mxu0 %v3980
        %4058 = vmatpush.bf16.msra.mxu0 %v3978
        %4059 = vmatpush.bf16.msra.mxu0 %v3976
        %4060 = vmatmul.bf16.gmra.mxu0 %v3999
        %v4061 = vpop.f32.mrf.mxu0
        %v4062 = vadd.f32 %v3777, %v4061
        %v4063 = vpop.f32.mrf.mxu0
        %v4064 = vadd.f32 %v3779, %v4063
        %4065 = vmatmul.bf16.gmra.mxu0 %v4002
        %v4066 = vpop.f32.mrf.mxu0
        %v4067 = vadd.f32 %v3782, %v4066
        %v4068 = vpop.f32.mrf.mxu0
        %v4069 = vadd.f32 %v3784, %v4068
        %4070 = vmatmul.bf16.gmra.mxu0 %v4005
        %v4071 = vpop.f32.mrf.mxu0
        %v4072 = vadd.f32 %v3787, %v4071
        %v4073 = vpop.f32.mrf.mxu0
        %v4074 = vadd.f32 %v3789, %v4073
        %4075 = vmatmul.bf16.gmra.mxu0 %v4008
        %v4076 = vpop.f32.mrf.mxu0
        %v4077 = vadd.f32 %v3792, %v4076
        %v4078 = vpop.f32.mrf.mxu0
        %v4079 = vadd.f32 %v3794, %v4078
        %4080 = vmatmul.bf16.gmra.mxu0 %v4011
        %v4081 = vpop.f32.mrf.mxu0
        %v4082 = vadd.f32 %v3797, %v4081
        %v4083 = vpop.f32.mrf.mxu0
        %v4084 = vadd.f32 %v3799, %v4083
        %4085 = vmatmul.bf16.gmra.mxu0 %v4014
        %v4086 = vpop.f32.mrf.mxu0
        %v4087 = vadd.f32 %v3802, %v4086
        %v4088 = vpop.f32.mrf.mxu0
        %v4089 = vadd.f32 %v3804, %v4088
        %4090 = vmatmul.bf16.gmra.mxu0 %v4017
        %v4091 = vpop.f32.mrf.mxu0
        %v4092 = vadd.f32 %v3807, %v4091
        %v4093 = vpop.f32.mrf.mxu0
        %v4094 = vadd.f32 %v3809, %v4093
        %4095 = vmatmul.bf16.gmra.mxu0 %v4020
        %v4096 = vpop.f32.mrf.mxu0
        %v4097 = vadd.f32 %v3812, %v4096
        %v4098 = vpop.f32.mrf.mxu0
        %v4099 = vadd.f32 %v3814, %v4098
        %4100 = vmatmul.bf16.gmra.mxu0 %v4023
        %v4101 = vpop.f32.mrf.mxu0
        %v4102 = vadd.f32 %v3817, %v4101
        %v4103 = vpop.f32.mrf.mxu0
        %v4104 = vadd.f32 %v3819, %v4103
        %4105 = vmatmul.bf16.gmra.mxu0 %v4026
        %v4106 = vpop.f32.mrf.mxu0
        %v4107 = vadd.f32 %v3822, %v4106
        %v4108 = vpop.f32.mrf.mxu0
        %v4109 = vadd.f32 %v3824, %v4108
        %4110 = vmatmul.bf16.gmra.mxu0 %v4029
        %v4111 = vpop.f32.mrf.mxu0
        %v4112 = vadd.f32 %v3827, %v4111
        %v4113 = vpop.f32.mrf.mxu0
        %v4114 = vadd.f32 %v3829, %v4113
        %4115 = vmatmul.bf16.gmra.mxu0 %v4032
        %v4116 = vpop.f32.mrf.mxu0
        %v4117 = vadd.f32 %v3832, %v4116
        %v4118 = vpop.f32.mrf.mxu0
        %v4119 = vadd.f32 %v3834, %v4118
        %4120 = vmatmul.bf16.gmra.mxu0 %v4035
        %v4121 = vpop.f32.mrf.mxu0
        %v4122 = vadd.f32 %v3837, %v4121
        %v4123 = vpop.f32.mrf.mxu0
        %v4124 = vadd.f32 %v3839, %v4123
        %4125 = vmatmul.bf16.gmra.mxu0 %v4038
        %v4126 = vpop.f32.mrf.mxu0
        %v4127 = vadd.f32 %v3842, %v4126
        %v4128 = vpop.f32.mrf.mxu0
        %v4129 = vadd.f32 %v3844, %v4128
        %4130 = vmatmul.bf16.gmra.mxu0 %v4041
        %v4131 = vpop.f32.mrf.mxu0
        %v4132 = vadd.f32 %v3847, %v4131
        %v4133 = vpop.f32.mrf.mxu0
        %v4134 = vadd.f32 %v3849, %v4133
        %4135 = vmatmul.bf16.gmra.mxu0 %v4044
        %v4136 = vpop.f32.mrf.mxu0
        %v4137 = vadd.f32 %v3852, %v4136
        %v4138 = vpop.f32.mrf.mxu0
        %4139 = vdwg.mxu0
        %4140 = vmatpush.bf16.msra.mxu0 0
        %4141 = vmatpush.bf16.msra.mxu0 0
        %4142 = vmatpush.bf16.msra.mxu0 %v4050
        %4143 = vmatpush.bf16.msra.mxu0 %v3985
        %4144 = vmatpush.bf16.msra.mxu0 %v3983
        %4145 = vmatpush.bf16.msra.mxu0 %v3981
        %4146 = vmatpush.bf16.msra.mxu0 %v3979
        %4147 = vmatpush.bf16.msra.mxu0 %v3977
        %4148 = vmatmul.bf16.gmra.mxu0 %v3999
        %v4149 = vpop.f32.mrf.mxu0
        %v4150 = vadd.f32 %v3865, %v4149
        %v4151 = vpop.f32.mrf.mxu0
        %v4152 = vadd.f32 %v3867, %v4151
        %4153 = vmatmul.bf16.gmra.mxu0 %v4002
        %v4154 = vpop.f32.mrf.mxu0
        %v4155 = vadd.f32 %v3870, %v4154
        %v4156 = vpop.f32.mrf.mxu0
        %v4157 = vadd.f32 %v3872, %v4156
        %4158 = vmatmul.bf16.gmra.mxu0 %v4005
        %v4159 = vpop.f32.mrf.mxu0
        %v4160 = vadd.f32 %v3875, %v4159
        %v4161 = vpop.f32.mrf.mxu0
        %v4162 = vadd.f32 %v3877, %v4161
        %4163 = vmatmul.bf16.gmra.mxu0 %v4008
        %v4164 = vpop.f32.mrf.mxu0
        %v4165 = vadd.f32 %v3880, %v4164
        %v4166 = vpop.f32.mrf.mxu0
        %v4167 = vadd.f32 %v3882, %v4166
        %4168 = vmatmul.bf16.gmra.mxu0 %v4011
        %v4169 = vpop.f32.mrf.mxu0
        %v4170 = vadd.f32 %v3885, %v4169
        %v4171 = vpop.f32.mrf.mxu0
        %v4172 = vadd.f32 %v3887, %v4171
        %4173 = vmatmul.bf16.gmra.mxu0 %v4014
        %v4174 = vpop.f32.mrf.mxu0
        %v4175 = vadd.f32 %v3890, %v4174
        %v4176 = vpop.f32.mrf.mxu0
        %v4177 = vadd.f32 %v3892, %v4176
        %4178 = vmatmul.bf16.gmra.mxu0 %v4017
        %v4179 = vpop.f32.mrf.mxu0
        %v4180 = vadd.f32 %v3895, %v4179
        %v4181 = vpop.f32.mrf.mxu0
        %v4182 = vadd.f32 %v3897, %v4181
        %4183 = vmatmul.bf16.gmra.mxu0 %v4020
        %v4184 = vpop.f32.mrf.mxu0
        %v4185 = vadd.f32 %v3900, %v4184
        %v4186 = vpop.f32.mrf.mxu0
        %v4187 = vadd.f32 %v3902, %v4186
        %4188 = vmatmul.bf16.gmra.mxu0 %v4023
        %v4189 = vpop.f32.mrf.mxu0
        %v4190 = vadd.f32 %v3905, %v4189
        %v4191 = vpop.f32.mrf.mxu0
        %v4192 = vadd.f32 %v3907, %v4191
        %4193 = vmatmul.bf16.gmra.mxu0 %v4026
        %v4194 = vpop.f32.mrf.mxu0
        %v4195 = vadd.f32 %v3910, %v4194
        %v4196 = vpop.f32.mrf.mxu0
        %v4197 = vadd.f32 %v3912, %v4196
        %4198 = vmatmul.bf16.gmra.mxu0 %v4029
        %v4199 = vpop.f32.mrf.mxu0
        %v4200 = vadd.f32 %v3915, %v4199
        %v4201 = vpop.f32.mrf.mxu0
        %v4202 = vadd.f32 %v3917, %v4201
        %4203 = vmatmul.bf16.gmra.mxu0 %v4032
        %v4204 = vpop.f32.mrf.mxu0
        %v4205 = vadd.f32 %v3920, %v4204
        %v4206 = vpop.f32.mrf.mxu0
        %v4207 = vadd.f32 %v3922, %v4206
        %4208 = vmatmul.bf16.gmra.mxu0 %v4035
        %v4209 = vpop.f32.mrf.mxu0
        %v4210 = vadd.f32 %v3925, %v4209
        %v4211 = vpop.f32.mrf.mxu0
        %v4212 = vadd.f32 %v3927, %v4211
        %4213 = vmatmul.bf16.gmra.mxu0 %v4038
        %v4214 = vpop.f32.mrf.mxu0
        %v4215 = vadd.f32 %v3930, %v4214
        %v4216 = vpop.f32.mrf.mxu0
        %v4217 = vadd.f32 %v3932, %v4216
        %4218 = vmatmul.bf16.gmra.mxu0 %v4041
        %v4219 = vpop.f32.mrf.mxu0
        %v4220 = vadd.f32 %v3935, %v4219
        %v4221 = vpop.f32.mrf.mxu0
        %v4222 = vadd.f32 %v3937, %v4221
        %4223 = vmatmul.bf16.gmra.mxu0 %v4044
        %v4224 = vpop.f32.mrf.mxu0
        %v4225 = vadd.f32 %v3940, %v4224
        %v4226 = vpop.f32.mrf.mxu0
        %4227 = vdwg.mxu0
        %s4228 = scalar_lea.vmem [#allocation11], 176
        %v4229 = vld [vmem:[%s4228] sm:$0xff]
        %v4230 = vld [vmem:[%s4228 + $0x8] sm:$0xff]
        %v4231 = vld [vmem:[%s4228 + $0x10] sm:$0xff]
        %v4232 = vld [vmem:[%s4228 + $0x18] sm:$0xff]
        %v4233 = vld [vmem:[%s4228 + $0x20] sm:$0xff]
        %v4234 = vld [vmem:[%s4228 + $0x28] sm:$0xff]
        %v4235 = vld [vmem:[%s4228 + $0x30] sm:$0xff]
        %v4236 = vld [vmem:[%s4228 + $0x38] sm:$0xff]
        %v4237 = vld [vmem:[%s4228 + $0x40] sm:$0xff]
        %v4238 = vld [vmem:[%s4228 + $0x48] sm:$0xff]
        %v4239 = vld [vmem:[%s4228 + $0x50] sm:$0x33]
        %v4240 = vrot.slane %v3570, 2
        %v4241 = vrot.slane %v3571, 2
        %v4242 = vsel %vm2131, %v4240, %v4241
        %v4243 = vrot.slane %v3572, 2
        %v4244 = vsel %vm2131, %v4241, %v4243
        %v4245 = vrot.slane %v3573, 2
        %v4246 = vsel %vm2131, %v4243, %v4245
        %v4247 = vrot.slane %v3574, 2
        %v4248 = vsel %vm2131, %v4245, %v4247
        %v4249 = vrot.slane %v3575, 2
        %v4250 = vsel %vm2131, %v4247, %v4249
        %v4251 = vrot.slane %v3576, 2
        %v4252 = vsel %vm2131, %v4249, %v4251
        %v4253 = vrot.slane %v3577, 2
        %v4254 = vsel %vm2131, %v4251, %v4253
        %v4255 = vrot.slane %v3578, 2
        %v4256 = vsel %vm2131, %v4253, %v4255
        %v4257 = vrot.slane %v3579, 2
        %v4258 = vsel %vm2131, %v4255, %v4257
        %v4259 = vrot.slane %v3580, 2
        %v4260 = vsel %vm2131, %v4257, %v4259
        %v4261 = vrot.slane %v3581, 2
        %v4262 = vsel %vm2131, %v4259, %v4261
        %v4263 = vrot.slane %v3582, 2
        %v4264 = vsel %vm2131, %v4261, %v4263
        %v4265 = vrot.slane %v3583, 2
        %v4266 = vsel %vm2131, %v4263, %v4265
        %v4267 = vrot.slane %v3584, 2
        %v4268 = vsel %vm2131, %v4265, %v4267
        %v4269 = vrot.slane %v3585, 2
        %v4270 = vsel %vm2131, %v4267, %v4269
        %v4282 = vunpack.c.l.b16 %v4229
        %v4283 = vunpack.c.h.b16 %v4229
        %v4284 = vunpack.c.l.b16 %v4230
        %v4285 = vunpack.c.h.b16 %v4230
        %v4286 = vunpack.c.l.b16 %v4231
        %v4287 = vunpack.c.h.b16 %v4231
        %v4288 = vunpack.c.l.b16 %v4232
        %v4289 = vunpack.c.h.b16 %v4232
        %v4290 = vunpack.c.l.b16 %v4233
        %v4291 = vunpack.c.h.b16 %v4233
        %v4292 = vunpack.c.l.b16 %v4234
        %v4293 = vunpack.c.h.b16 %v4234
        %v4294 = vunpack.c.l.b16 %v4235
        %v4295 = vunpack.c.h.b16 %v4235
        %v4296 = vunpack.c.l.b16 %v4236
        %v4297 = vunpack.c.h.b16 %v4236
        %v4298 = vunpack.c.l.b16 %v4237
        %v4299 = vunpack.c.h.b16 %v4237
        %v4300 = vunpack.c.l.b16 %v4238
        %v4301 = vunpack.c.h.b16 %v4238
        %v4302 = vunpack.c.l.b16 %v4239
        %v4303 = vunpack.c.h.b16 %v4239
        %v4304 = vpack.c.b16 %v4284, %v4282
        %v4305 = vpack.c.b16 %v4285, %v4283
        %v4306 = vpack.c.b16 %v4288, %v4286
        %v4307 = vpack.c.b16 %v4289, %v4287
        %v4308 = vpack.c.b16 %v4292, %v4290
        %v4309 = vpack.c.b16 %v4293, %v4291
        %v4310 = vpack.c.b16 %v4296, %v4294
        %v4311 = vpack.c.b16 %v4297, %v4295
        %v4312 = vpack.c.b16 %v4300, %v4298
        %v4313 = vpack.c.b16 %v4301, %v4299
        %v4314 = vpack.c.b16 %v4302, %v4302
        %v4315 = vpack.c.b16 %v4303, %v4303
        %v4327 = vsel %vm3711, %v4242, 0
        %v4330 = vsel %vm3711, %v4244, 0
        %v4333 = vsel %vm3711, %v4246, 0
        %v4336 = vsel %vm3711, %v4248, 0
        %v4339 = vsel %vm3711, %v4250, 0
        %v4342 = vsel %vm3711, %v4252, 0
        %v4345 = vsel %vm3711, %v4254, 0
        %v4348 = vsel %vm3711, %v4256, 0
        %v4351 = vsel %vm3711, %v4258, 0
        %v4354 = vsel %vm3711, %v4260, 0
        %v4357 = vsel %vm3711, %v4262, 0
        %v4360 = vsel %vm3711, %v4264, 0
        %v4363 = vsel %vm3711, %v4266, 0
        %v4366 = vsel %vm3711, %v4268, 0
        %v4369 = vsel %vm3711, %v4270, 0
        %v4372 = vsel %vm3711, %v4269, 0
        %v4375 = vsel %vm3760, %v4314, 0
        %v4378 = vsel %vm3760, %v4315, 0
        %4380 = vmatpush.bf16.msra.mxu0 0
        %4381 = vmatpush.bf16.msra.mxu0 0
        %4382 = vmatpush.bf16.msra.mxu0 %v4375
        %4383 = vmatpush.bf16.msra.mxu0 %v4312
        %4384 = vmatpush.bf16.msra.mxu0 %v4310
        %4385 = vmatpush.bf16.msra.mxu0 %v4308
        %4386 = vmatpush.bf16.msra.mxu0 %v4306
        %4387 = vmatpush.bf16.msra.mxu0 %v4304
        %4388 = vmatmul.bf16.gmra.mxu0 %v4327
        %v4389 = vpop.f32.mrf.mxu0
        %v4390 = vadd.f32 0.0, %v4389
        %v4391 = vpop.f32.mrf.mxu0
        %v4392 = vadd.f32 0.0, %v4391
        %4393 = vmatmul.bf16.gmra.mxu0 %v4330
        %v4394 = vpop.f32.mrf.mxu0
        %v4395 = vadd.f32 0.0, %v4394
        %v4396 = vpop.f32.mrf.mxu0
        %v4397 = vadd.f32 0.0, %v4396
        %4398 = vmatmul.bf16.gmra.mxu0 %v4333
        %v4399 = vpop.f32.mrf.mxu0
        %v4400 = vadd.f32 0.0, %v4399
        %v4401 = vpop.f32.mrf.mxu0
        %v4402 = vadd.f32 0.0, %v4401
        %4403 = vmatmul.bf16.gmra.mxu0 %v4336
        %v4404 = vpop.f32.mrf.mxu0
        %v4405 = vadd.f32 0.0, %v4404
        %v4406 = vpop.f32.mrf.mxu0
        %v4407 = vadd.f32 0.0, %v4406
        %4408 = vmatmul.bf16.gmra.mxu0 %v4339
        %v4409 = vpop.f32.mrf.mxu0
        %v4410 = vadd.f32 0.0, %v4409
        %v4411 = vpop.f32.mrf.mxu0
        %v4412 = vadd.f32 0.0, %v4411
        %4413 = vmatmul.bf16.gmra.mxu0 %v4342
        %v4414 = vpop.f32.mrf.mxu0
        %v4415 = vadd.f32 0.0, %v4414
        %v4416 = vpop.f32.mrf.mxu0
        %v4417 = vadd.f32 0.0, %v4416
        %4418 = vmatmul.bf16.gmra.mxu0 %v4345
        %v4419 = vpop.f32.mrf.mxu0
        %v4420 = vadd.f32 0.0, %v4419
        %v4421 = vpop.f32.mrf.mxu0
        %v4422 = vadd.f32 0.0, %v4421
        %4423 = vmatmul.bf16.gmra.mxu0 %v4348
        %v4424 = vpop.f32.mrf.mxu0
        %v4425 = vadd.f32 0.0, %v4424
        %v4426 = vpop.f32.mrf.mxu0
        %v4427 = vadd.f32 0.0, %v4426
        %4428 = vmatmul.bf16.gmra.mxu0 %v4351
        %v4429 = vpop.f32.mrf.mxu0
        %v4430 = vadd.f32 0.0, %v4429
        %v4431 = vpop.f32.mrf.mxu0
        %v4432 = vadd.f32 0.0, %v4431
        %4433 = vmatmul.bf16.gmra.mxu0 %v4354
        %v4434 = vpop.f32.mrf.mxu0
        %v4435 = vadd.f32 0.0, %v4434
        %v4436 = vpop.f32.mrf.mxu0
        %v4437 = vadd.f32 0.0, %v4436
        %4438 = vmatmul.bf16.gmra.mxu0 %v4357
        %v4439 = vpop.f32.mrf.mxu0
        %v4440 = vadd.f32 0.0, %v4439
        %v4441 = vpop.f32.mrf.mxu0
        %v4442 = vadd.f32 0.0, %v4441
        %4443 = vmatmul.bf16.gmra.mxu0 %v4360
        %v4444 = vpop.f32.mrf.mxu0
        %v4445 = vadd.f32 0.0, %v4444
        %v4446 = vpop.f32.mrf.mxu0
        %v4447 = vadd.f32 0.0, %v4446
        %4448 = vmatmul.bf16.gmra.mxu0 %v4363
        %v4449 = vpop.f32.mrf.mxu0
        %v4450 = vadd.f32 0.0, %v4449
        %v4451 = vpop.f32.mrf.mxu0
        %v4452 = vadd.f32 0.0, %v4451
        %4453 = vmatmul.bf16.gmra.mxu0 %v4366
        %v4454 = vpop.f32.mrf.mxu0
        %v4455 = vadd.f32 0.0, %v4454
        %v4456 = vpop.f32.mrf.mxu0
        %v4457 = vadd.f32 0.0, %v4456
        %4458 = vmatmul.bf16.gmra.mxu0 %v4369
        %v4459 = vpop.f32.mrf.mxu0
        %v4460 = vadd.f32 0.0, %v4459
        %v4461 = vpop.f32.mrf.mxu0
        %v4462 = vadd.f32 0.0, %v4461
        %4463 = vmatmul.bf16.gmra.mxu0 %v4372
        %v4464 = vpop.f32.mrf.mxu0
        %v4465 = vadd.f32 0.0, %v4464
        %v4466 = vpop.f32.mrf.mxu0
        %4467 = vdwg.mxu0
        %4468 = vmatpush.bf16.msra.mxu0 0
        %4469 = vmatpush.bf16.msra.mxu0 0
        %4470 = vmatpush.bf16.msra.mxu0 %v4378
        %4471 = vmatpush.bf16.msra.mxu0 %v4313
        %4472 = vmatpush.bf16.msra.mxu0 %v4311
        %4473 = vmatpush.bf16.msra.mxu0 %v4309
        %4474 = vmatpush.bf16.msra.mxu0 %v4307
        %4475 = vmatpush.bf16.msra.mxu0 %v4305
        %4476 = vmatmul.bf16.gmra.mxu0 %v4327
        %v4477 = vpop.f32.mrf.mxu0
        %v4478 = vadd.f32 0.0, %v4477
        %v4479 = vpop.f32.mrf.mxu0
        %v4480 = vadd.f32 0.0, %v4479
        %4481 = vmatmul.bf16.gmra.mxu0 %v4330
        %v4482 = vpop.f32.mrf.mxu0
        %v4483 = vadd.f32 0.0, %v4482
        %v4484 = vpop.f32.mrf.mxu0
        %v4485 = vadd.f32 0.0, %v4484
        %4486 = vmatmul.bf16.gmra.mxu0 %v4333
        %v4487 = vpop.f32.mrf.mxu0
        %v4488 = vadd.f32 0.0, %v4487
        %v4489 = vpop.f32.mrf.mxu0
        %v4490 = vadd.f32 0.0, %v4489
        %4491 = vmatmul.bf16.gmra.mxu0 %v4336
        %v4492 = vpop.f32.mrf.mxu0
        %v4493 = vadd.f32 0.0, %v4492
        %v4494 = vpop.f32.mrf.mxu0
        %v4495 = vadd.f32 0.0, %v4494
        %4496 = vmatmul.bf16.gmra.mxu0 %v4339
        %v4497 = vpop.f32.mrf.mxu0
        %v4498 = vadd.f32 0.0, %v4497
        %v4499 = vpop.f32.mrf.mxu0
        %v4500 = vadd.f32 0.0, %v4499
        %4501 = vmatmul.bf16.gmra.mxu0 %v4342
        %v4502 = vpop.f32.mrf.mxu0
        %v4503 = vadd.f32 0.0, %v4502
        %v4504 = vpop.f32.mrf.mxu0
        %v4505 = vadd.f32 0.0, %v4504
        %4506 = vmatmul.bf16.gmra.mxu0 %v4345
        %v4507 = vpop.f32.mrf.mxu0
        %v4508 = vadd.f32 0.0, %v4507
        %v4509 = vpop.f32.mrf.mxu0
        %v4510 = vadd.f32 0.0, %v4509
        %4511 = vmatmul.bf16.gmra.mxu0 %v4348
        %v4512 = vpop.f32.mrf.mxu0
        %v4513 = vadd.f32 0.0, %v4512
        %v4514 = vpop.f32.mrf.mxu0
        %v4515 = vadd.f32 0.0, %v4514
        %4516 = vmatmul.bf16.gmra.mxu0 %v4351
        %v4517 = vpop.f32.mrf.mxu0
        %v4518 = vadd.f32 0.0, %v4517
        %v4519 = vpop.f32.mrf.mxu0
        %v4520 = vadd.f32 0.0, %v4519
        %4521 = vmatmul.bf16.gmra.mxu0 %v4354
        %v4522 = vpop.f32.mrf.mxu0
        %v4523 = vadd.f32 0.0, %v4522
        %v4524 = vpop.f32.mrf.mxu0
        %v4525 = vadd.f32 0.0, %v4524
        %4526 = vmatmul.bf16.gmra.mxu0 %v4357
        %v4527 = vpop.f32.mrf.mxu0
        %v4528 = vadd.f32 0.0, %v4527
        %v4529 = vpop.f32.mrf.mxu0
        %v4530 = vadd.f32 0.0, %v4529
        %4531 = vmatmul.bf16.gmra.mxu0 %v4360
        %v4532 = vpop.f32.mrf.mxu0
        %v4533 = vadd.f32 0.0, %v4532
        %v4534 = vpop.f32.mrf.mxu0
        %v4535 = vadd.f32 0.0, %v4534
        %4536 = vmatmul.bf16.gmra.mxu0 %v4363
        %v4537 = vpop.f32.mrf.mxu0
        %v4538 = vadd.f32 0.0, %v4537
        %v4539 = vpop.f32.mrf.mxu0
        %v4540 = vadd.f32 0.0, %v4539
        %4541 = vmatmul.bf16.gmra.mxu0 %v4366
        %v4542 = vpop.f32.mrf.mxu0
        %v4543 = vadd.f32 0.0, %v4542
        %v4544 = vpop.f32.mrf.mxu0
        %v4545 = vadd.f32 0.0, %v4544
        %4546 = vmatmul.bf16.gmra.mxu0 %v4369
        %v4547 = vpop.f32.mrf.mxu0
        %v4548 = vadd.f32 0.0, %v4547
        %v4549 = vpop.f32.mrf.mxu0
        %v4550 = vadd.f32 0.0, %v4549
        %4551 = vmatmul.bf16.gmra.mxu0 %v4372
        %v4552 = vpop.f32.mrf.mxu0
        %v4553 = vadd.f32 0.0, %v4552
        %v4554 = vpop.f32.mrf.mxu0
        %4555 = vdwg.mxu0
        %v4556 = vadd.f32 %v4062, %v4390
        %v4557 = vadd.f32 %v4150, %v4478
        %v4558 = vadd.f32 %v4064, %v4392
        %v4559 = vadd.f32 %v4152, %v4480
        %v4560 = vadd.f32 %v4067, %v4395
        %v4561 = vadd.f32 %v4155, %v4483
        %v4562 = vadd.f32 %v4069, %v4397
        %v4563 = vadd.f32 %v4157, %v4485
        %v4564 = vadd.f32 %v4072, %v4400
        %v4565 = vadd.f32 %v4160, %v4488
        %v4566 = vadd.f32 %v4074, %v4402
        %v4567 = vadd.f32 %v4162, %v4490
        %v4568 = vadd.f32 %v4077, %v4405
        %v4569 = vadd.f32 %v4165, %v4493
        %v4570 = vadd.f32 %v4079, %v4407
        %v4571 = vadd.f32 %v4167, %v4495
        %v4572 = vadd.f32 %v4082, %v4410
        %v4573 = vadd.f32 %v4170, %v4498
        %v4574 = vadd.f32 %v4084, %v4412
        %v4575 = vadd.f32 %v4172, %v4500
        %v4576 = vadd.f32 %v4087, %v4415
        %v4577 = vadd.f32 %v4175, %v4503
        %v4578 = vadd.f32 %v4089, %v4417
        %v4579 = vadd.f32 %v4177, %v4505
        %v4580 = vadd.f32 %v4092, %v4420
        %v4581 = vadd.f32 %v4180, %v4508
        %v4582 = vadd.f32 %v4094, %v4422
        %v4583 = vadd.f32 %v4182, %v4510
        %v4584 = vadd.f32 %v4097, %v4425
        %v4585 = vadd.f32 %v4185, %v4513
        %v4586 = vadd.f32 %v4099, %v4427
        %v4587 = vadd.f32 %v4187, %v4515
        %v4588 = vadd.f32 %v4102, %v4430
        %v4589 = vadd.f32 %v4190, %v4518
        %v4590 = vadd.f32 %v4104, %v4432
        %v4591 = vadd.f32 %v4192, %v4520
        %v4592 = vadd.f32 %v4107, %v4435
        %v4593 = vadd.f32 %v4195, %v4523
        %v4594 = vadd.f32 %v4109, %v4437
        %v4595 = vadd.f32 %v4197, %v4525
        %v4596 = vadd.f32 %v4112, %v4440
        %v4597 = vadd.f32 %v4200, %v4528
        %v4598 = vadd.f32 %v4114, %v4442
        %v4599 = vadd.f32 %v4202, %v4530
        %v4600 = vadd.f32 %v4117, %v4445
        %v4601 = vadd.f32 %v4205, %v4533
        %v4602 = vadd.f32 %v4119, %v4447
        %v4603 = vadd.f32 %v4207, %v4535
        %v4604 = vadd.f32 %v4122, %v4450
        %v4605 = vadd.f32 %v4210, %v4538
        %v4606 = vadd.f32 %v4124, %v4452
        %v4607 = vadd.f32 %v4212, %v4540
        %v4608 = vadd.f32 %v4127, %v4455
        %v4609 = vadd.f32 %v4215, %v4543
        %v4610 = vadd.f32 %v4129, %v4457
        %v4611 = vadd.f32 %v4217, %v4545
        %v4612 = vadd.f32 %v4132, %v4460
        %v4613 = vadd.f32 %v4220, %v4548
        %v4614 = vadd.f32 %v4134, %v4462
        %v4615 = vadd.f32 %v4222, %v4550
        %v4616 = vadd.f32 %v4137, %v4465
        %v4617 = vadd.f32 %v4225, %v4553
        %v4618 = vpack.c.bf16 %v3569, %v3568
        %s4619 = scalar_lea.vmem [#allocation11], 264
        %v4620 = vld [vmem:[%s4619] sm:$0xff]
        %v4621 = vld [vmem:[%s4619 + $0x8] sm:$0xff]
        %v4622 = vld [vmem:[%s4619 + $0x10] sm:$0xff]
        %v4623 = vld [vmem:[%s4619 + $0x18] sm:$0xff]
        %v4624 = vld [vmem:[%s4619 + $0x20] sm:$0xff]
        %v4625 = vld [vmem:[%s4619 + $0x28] sm:$0xff]
        %v4626 = vld [vmem:[%s4619 + $0x30] sm:$0xff]
        %v4627 = vld [vmem:[%s4619 + $0x38] sm:$0xff]
        %v4628 = vld [vmem:[%s4619 + $0x40] sm:$0xff]
        %v4629 = vld [vmem:[%s4619 + $0x48] sm:$0xff]
        %v4630 = vld [vmem:[%s4619 + $0x50] sm:$0x33]
        %vm4632 = vcmask 1044480
        %v4633 = vrot.slane %v3570, 3
        %v4634 = vrot.slane %v3571, 3
        %v4635 = vsel %vm4632, %v4633, %v4634
        %v4636 = vrot.slane %v3572, 3
        %v4637 = vsel %vm4632, %v4634, %v4636
        %v4638 = vrot.slane %v3573, 3
        %v4639 = vsel %vm4632, %v4636, %v4638
        %v4640 = vrot.slane %v3574, 3
        %v4641 = vsel %vm4632, %v4638, %v4640
        %v4642 = vrot.slane %v3575, 3
        %v4643 = vsel %vm4632, %v4640, %v4642
        %v4644 = vrot.slane %v3576, 3
        %v4645 = vsel %vm4632, %v4642, %v4644
        %v4646 = vrot.slane %v3577, 3
        %v4647 = vsel %vm4632, %v4644, %v4646
        %v4648 = vrot.slane %v3578, 3
        %v4649 = vsel %vm4632, %v4646, %v4648
        %v4650 = vrot.slane %v3579, 3
        %v4651 = vsel %vm4632, %v4648, %v4650
        %v4652 = vrot.slane %v3580, 3
        %v4653 = vsel %vm4632, %v4650, %v4652
        %v4654 = vrot.slane %v3581, 3
        %v4655 = vsel %vm4632, %v4652, %v4654
        %v4656 = vrot.slane %v3582, 3
        %v4657 = vsel %vm4632, %v4654, %v4656
        %v4658 = vrot.slane %v3583, 3
        %v4659 = vsel %vm4632, %v4656, %v4658
        %v4660 = vrot.slane %v3584, 3
        %v4661 = vsel %vm4632, %v4658, %v4660
        %v4662 = vrot.slane %v4618, 3
        %v4663 = vsel %vm4632, %v4660, %v4662
        %v4675 = vunpack.c.l.b16 %v4620
        %v4676 = vunpack.c.h.b16 %v4620
        %v4677 = vunpack.c.l.b16 %v4621
        %v4678 = vunpack.c.h.b16 %v4621
        %v4679 = vunpack.c.l.b16 %v4622
        %v4680 = vunpack.c.h.b16 %v4622
        %v4681 = vunpack.c.l.b16 %v4623
        %v4682 = vunpack.c.h.b16 %v4623
        %v4683 = vunpack.c.l.b16 %v4624
        %v4684 = vunpack.c.h.b16 %v4624
        %v4685 = vunpack.c.l.b16 %v4625
        %v4686 = vunpack.c.h.b16 %v4625
        %v4687 = vunpack.c.l.b16 %v4626
        %v4688 = vunpack.c.h.b16 %v4626
        %v4689 = vunpack.c.l.b16 %v4627
        %v4690 = vunpack.c.h.b16 %v4627
        %v4691 = vunpack.c.l.b16 %v4628
        %v4692 = vunpack.c.h.b16 %v4628
        %v4693 = vunpack.c.l.b16 %v4629
        %v4694 = vunpack.c.h.b16 %v4629
        %v4695 = vunpack.c.l.b16 %v4630
        %v4696 = vunpack.c.h.b16 %v4630
        %v4697 = vpack.c.b16 %v4677, %v4675
        %v4698 = vpack.c.b16 %v4678, %v4676
        %v4699 = vpack.c.b16 %v4681, %v4679
        %v4700 = vpack.c.b16 %v4682, %v4680
        %v4701 = vpack.c.b16 %v4685, %v4683
        %v4702 = vpack.c.b16 %v4686, %v4684
        %v4703 = vpack.c.b16 %v4689, %v4687
        %v4704 = vpack.c.b16 %v4690, %v4688
        %v4705 = vpack.c.b16 %v4693, %v4691
        %v4706 = vpack.c.b16 %v4694, %v4692
        %v4707 = vpack.c.b16 %v4695, %v4695
        %v4708 = vpack.c.b16 %v4696, %v4696
        %v4720 = vsel %vm3711, %v4635, 0
        %v4723 = vsel %vm3711, %v4637, 0
        %v4726 = vsel %vm3711, %v4639, 0
        %v4729 = vsel %vm3711, %v4641, 0
        %v4732 = vsel %vm3711, %v4643, 0
        %v4735 = vsel %vm3711, %v4645, 0
        %v4738 = vsel %vm3711, %v4647, 0
        %v4741 = vsel %vm3711, %v4649, 0
        %v4744 = vsel %vm3711, %v4651, 0
        %v4747 = vsel %vm3711, %v4653, 0
        %v4750 = vsel %vm3711, %v4655, 0
        %v4753 = vsel %vm3711, %v4657, 0
        %v4756 = vsel %vm3711, %v4659, 0
        %v4759 = vsel %vm3711, %v4661, 0
        %v4762 = vsel %vm3711, %v4663, 0
        %v4765 = vsel %vm3711, %v4662, 0
        %v4768 = vsel %vm3760, %v4707, 0
        %v4771 = vsel %vm3760, %v4708, 0
        %4773 = vmatpush.bf16.msra.mxu0 0
        %4774 = vmatpush.bf16.msra.mxu0 0
        %4775 = vmatpush.bf16.msra.mxu0 %v4768
        %4776 = vmatpush.bf16.msra.mxu0 %v4705
        %4777 = vmatpush.bf16.msra.mxu0 %v4703
        %4778 = vmatpush.bf16.msra.mxu0 %v4701
        %4779 = vmatpush.bf16.msra.mxu0 %v4699
        %4780 = vmatpush.bf16.msra.mxu0 %v4697
        %4781 = vmatmul.bf16.gmra.mxu0 %v4720
        %v4782 = vpop.f32.mrf.mxu0
        %v4783 = vadd.f32 0.0, %v4782
        %v4784 = vpop.f32.mrf.mxu0
        %v4785 = vadd.f32 0.0, %v4784
        %4786 = vmatmul.bf16.gmra.mxu0 %v4723
        %v4787 = vpop.f32.mrf.mxu0
        %v4788 = vadd.f32 0.0, %v4787
        %v4789 = vpop.f32.mrf.mxu0
        %v4790 = vadd.f32 0.0, %v4789
        %4791 = vmatmul.bf16.gmra.mxu0 %v4726
        %v4792 = vpop.f32.mrf.mxu0
        %v4793 = vadd.f32 0.0, %v4792
        %v4794 = vpop.f32.mrf.mxu0
        %v4795 = vadd.f32 0.0, %v4794
        %4796 = vmatmul.bf16.gmra.mxu0 %v4729
        %v4797 = vpop.f32.mrf.mxu0
        %v4798 = vadd.f32 0.0, %v4797
        %v4799 = vpop.f32.mrf.mxu0
        %v4800 = vadd.f32 0.0, %v4799
        %4801 = vmatmul.bf16.gmra.mxu0 %v4732
        %v4802 = vpop.f32.mrf.mxu0
        %v4803 = vadd.f32 0.0, %v4802
        %v4804 = vpop.f32.mrf.mxu0
        %v4805 = vadd.f32 0.0, %v4804
        %4806 = vmatmul.bf16.gmra.mxu0 %v4735
        %v4807 = vpop.f32.mrf.mxu0
        %v4808 = vadd.f32 0.0, %v4807
        %v4809 = vpop.f32.mrf.mxu0
        %v4810 = vadd.f32 0.0, %v4809
        %4811 = vmatmul.bf16.gmra.mxu0 %v4738
        %v4812 = vpop.f32.mrf.mxu0
        %v4813 = vadd.f32 0.0, %v4812
        %v4814 = vpop.f32.mrf.mxu0
        %v4815 = vadd.f32 0.0, %v4814
        %4816 = vmatmul.bf16.gmra.mxu0 %v4741
        %v4817 = vpop.f32.mrf.mxu0
        %v4818 = vadd.f32 0.0, %v4817
        %v4819 = vpop.f32.mrf.mxu0
        %v4820 = vadd.f32 0.0, %v4819
        %4821 = vmatmul.bf16.gmra.mxu0 %v4744
        %v4822 = vpop.f32.mrf.mxu0
        %v4823 = vadd.f32 0.0, %v4822
        %v4824 = vpop.f32.mrf.mxu0
        %v4825 = vadd.f32 0.0, %v4824
        %4826 = vmatmul.bf16.gmra.mxu0 %v4747
        %v4827 = vpop.f32.mrf.mxu0
        %v4828 = vadd.f32 0.0, %v4827
        %v4829 = vpop.f32.mrf.mxu0
        %v4830 = vadd.f32 0.0, %v4829
        %4831 = vmatmul.bf16.gmra.mxu0 %v4750
        %v4832 = vpop.f32.mrf.mxu0
        %v4833 = vadd.f32 0.0, %v4832
        %v4834 = vpop.f32.mrf.mxu0
        %v4835 = vadd.f32 0.0, %v4834
        %4836 = vmatmul.bf16.gmra.mxu0 %v4753
        %v4837 = vpop.f32.mrf.mxu0
        %v4838 = vadd.f32 0.0, %v4837
        %v4839 = vpop.f32.mrf.mxu0
        %v4840 = vadd.f32 0.0, %v4839
        %4841 = vmatmul.bf16.gmra.mxu0 %v4756
        %v4842 = vpop.f32.mrf.mxu0
        %v4843 = vadd.f32 0.0, %v4842
        %v4844 = vpop.f32.mrf.mxu0
        %v4845 = vadd.f32 0.0, %v4844
        %4846 = vmatmul.bf16.gmra.mxu0 %v4759
        %v4847 = vpop.f32.mrf.mxu0
        %v4848 = vadd.f32 0.0, %v4847
        %v4849 = vpop.f32.mrf.mxu0
        %v4850 = vadd.f32 0.0, %v4849
        %4851 = vmatmul.bf16.gmra.mxu0 %v4762
        %v4852 = vpop.f32.mrf.mxu0
        %v4853 = vadd.f32 0.0, %v4852
        %v4854 = vpop.f32.mrf.mxu0
        %v4855 = vadd.f32 0.0, %v4854
        %4856 = vmatmul.bf16.gmra.mxu0 %v4765
        %v4857 = vpop.f32.mrf.mxu0
        %v4858 = vadd.f32 0.0, %v4857
        %v4859 = vpop.f32.mrf.mxu0
        %4860 = vdwg.mxu0
        %4861 = vmatpush.bf16.msra.mxu0 0
        %4862 = vmatpush.bf16.msra.mxu0 0
        %4863 = vmatpush.bf16.msra.mxu0 %v4771
        %4864 = vmatpush.bf16.msra.mxu0 %v4706
        %4865 = vmatpush.bf16.msra.mxu0 %v4704
        %4866 = vmatpush.bf16.msra.mxu0 %v4702
        %4867 = vmatpush.bf16.msra.mxu0 %v4700
        %4868 = vmatpush.bf16.msra.mxu0 %v4698
        %4869 = vmatmul.bf16.gmra.mxu0 %v4720
        %v4870 = vpop.f32.mrf.mxu0
        %v4871 = vadd.f32 0.0, %v4870
        %v4872 = vpop.f32.mrf.mxu0
        %v4873 = vadd.f32 0.0, %v4872
        %4874 = vmatmul.bf16.gmra.mxu0 %v4723
        %v4875 = vpop.f32.mrf.mxu0
        %v4876 = vadd.f32 0.0, %v4875
        %v4877 = vpop.f32.mrf.mxu0
        %v4878 = vadd.f32 0.0, %v4877
        %4879 = vmatmul.bf16.gmra.mxu0 %v4726
        %v4880 = vpop.f32.mrf.mxu0
        %v4881 = vadd.f32 0.0, %v4880
        %v4882 = vpop.f32.mrf.mxu0
        %v4883 = vadd.f32 0.0, %v4882
        %4884 = vmatmul.bf16.gmra.mxu0 %v4729
        %v4885 = vpop.f32.mrf.mxu0
        %v4886 = vadd.f32 0.0, %v4885
        %v4887 = vpop.f32.mrf.mxu0
        %v4888 = vadd.f32 0.0, %v4887
        %4889 = vmatmul.bf16.gmra.mxu0 %v4732
        %v4890 = vpop.f32.mrf.mxu0
        %v4891 = vadd.f32 0.0, %v4890
        %v4892 = vpop.f32.mrf.mxu0
        %v4893 = vadd.f32 0.0, %v4892
        %4894 = vmatmul.bf16.gmra.mxu0 %v4735
        %v4895 = vpop.f32.mrf.mxu0
        %v4896 = vadd.f32 0.0, %v4895
        %v4897 = vpop.f32.mrf.mxu0
        %v4898 = vadd.f32 0.0, %v4897
        %4899 = vmatmul.bf16.gmra.mxu0 %v4738
        %v4900 = vpop.f32.mrf.mxu0
        %v4901 = vadd.f32 0.0, %v4900
        %v4902 = vpop.f32.mrf.mxu0
        %v4903 = vadd.f32 0.0, %v4902
        %4904 = vmatmul.bf16.gmra.mxu0 %v4741
        %v4905 = vpop.f32.mrf.mxu0
        %v4906 = vadd.f32 0.0, %v4905
        %v4907 = vpop.f32.mrf.mxu0
        %v4908 = vadd.f32 0.0, %v4907
        %4909 = vmatmul.bf16.gmra.mxu0 %v4744
        %v4910 = vpop.f32.mrf.mxu0
        %v4911 = vadd.f32 0.0, %v4910
        %v4912 = vpop.f32.mrf.mxu0
        %v4913 = vadd.f32 0.0, %v4912
        %4914 = vmatmul.bf16.gmra.mxu0 %v4747
        %v4915 = vpop.f32.mrf.mxu0
        %v4916 = vadd.f32 0.0, %v4915
        %v4917 = vpop.f32.mrf.mxu0
        %v4918 = vadd.f32 0.0, %v4917
        %4919 = vmatmul.bf16.gmra.mxu0 %v4750
        %v4920 = vpop.f32.mrf.mxu0
        %v4921 = vadd.f32 0.0, %v4920
        %v4922 = vpop.f32.mrf.mxu0
        %v4923 = vadd.f32 0.0, %v4922
        %4924 = vmatmul.bf16.gmra.mxu0 %v4753
        %v4925 = vpop.f32.mrf.mxu0
        %v4926 = vadd.f32 0.0, %v4925
        %v4927 = vpop.f32.mrf.mxu0
        %v4928 = vadd.f32 0.0, %v4927
        %4929 = vmatmul.bf16.gmra.mxu0 %v4756
        %v4930 = vpop.f32.mrf.mxu0
        %v4931 = vadd.f32 0.0, %v4930
        %v4932 = vpop.f32.mrf.mxu0
        %v4933 = vadd.f32 0.0, %v4932
        %4934 = vmatmul.bf16.gmra.mxu0 %v4759
        %v4935 = vpop.f32.mrf.mxu0
        %v4936 = vadd.f32 0.0, %v4935
        %v4937 = vpop.f32.mrf.mxu0
        %v4938 = vadd.f32 0.0, %v4937
        %4939 = vmatmul.bf16.gmra.mxu0 %v4762
        %v4940 = vpop.f32.mrf.mxu0
        %v4941 = vadd.f32 0.0, %v4940
        %v4942 = vpop.f32.mrf.mxu0
        %v4943 = vadd.f32 0.0, %v4942
        %4944 = vmatmul.bf16.gmra.mxu0 %v4765
        %v4945 = vpop.f32.mrf.mxu0
        %v4946 = vadd.f32 0.0, %v4945
        %v4947 = vpop.f32.mrf.mxu0
        %4948 = vdwg.mxu0
        %v4949 = vadd.f32 %v4556, %v4783
        %v4950 = vadd.f32 %v4557, %v4871
        %v4951 = vadd.f32 %v4558, %v4785
        %v4952 = vadd.f32 %v4559, %v4873
        %v4953 = vadd.f32 %v4560, %v4788
        %v4954 = vadd.f32 %v4561, %v4876
        %v4955 = vadd.f32 %v4562, %v4790
        %v4956 = vadd.f32 %v4563, %v4878
        %v4957 = vadd.f32 %v4564, %v4793
        %v4958 = vadd.f32 %v4565, %v4881
        %v4959 = vadd.f32 %v4566, %v4795
        %v4960 = vadd.f32 %v4567, %v4883
        %v4961 = vadd.f32 %v4568, %v4798
        %v4962 = vadd.f32 %v4569, %v4886
        %v4963 = vadd.f32 %v4570, %v4800
        %v4964 = vadd.f32 %v4571, %v4888
        %v4965 = vadd.f32 %v4572, %v4803
        %v4966 = vadd.f32 %v4573, %v4891
        %v4967 = vadd.f32 %v4574, %v4805
        %v4968 = vadd.f32 %v4575, %v4893
        %v4969 = vadd.f32 %v4576, %v4808
        %v4970 = vadd.f32 %v4577, %v4896
        %v4971 = vadd.f32 %v4578, %v4810
        %v4972 = vadd.f32 %v4579, %v4898
        %v4973 = vadd.f32 %v4580, %v4813
        %v4974 = vadd.f32 %v4581, %v4901
        %v4975 = vadd.f32 %v4582, %v4815
        %v4976 = vadd.f32 %v4583, %v4903
        %v4977 = vadd.f32 %v4584, %v4818
        %v4978 = vadd.f32 %v4585, %v4906
        %v4979 = vadd.f32 %v4586, %v4820
        %v4980 = vadd.f32 %v4587, %v4908
        %v4981 = vadd.f32 %v4588, %v4823
        %v4982 = vadd.f32 %v4589, %v4911
        %v4983 = vadd.f32 %v4590, %v4825
        %v4984 = vadd.f32 %v4591, %v4913
        %v4985 = vadd.f32 %v4592, %v4828
        %v4986 = vadd.f32 %v4593, %v4916
        %v4987 = vadd.f32 %v4594, %v4830
        %v4988 = vadd.f32 %v4595, %v4918
        %v4989 = vadd.f32 %v4596, %v4833
        %v4990 = vadd.f32 %v4597, %v4921
        %v4991 = vadd.f32 %v4598, %v4835
        %v4992 = vadd.f32 %v4599, %v4923
        %v4993 = vadd.f32 %v4600, %v4838
        %v4994 = vadd.f32 %v4601, %v4926
        %v4995 = vadd.f32 %v4602, %v4840
        %v4996 = vadd.f32 %v4603, %v4928
        %v4997 = vadd.f32 %v4604, %v4843
        %v4998 = vadd.f32 %v4605, %v4931
        %v4999 = vadd.f32 %v4606, %v4845
        %v5000 = vadd.f32 %v4607, %v4933
        %v5001 = vadd.f32 %v4608, %v4848
        %v5002 = vadd.f32 %v4609, %v4936
        %v5003 = vadd.f32 %v4610, %v4850
        %v5004 = vadd.f32 %v4611, %v4938
        %v5005 = vadd.f32 %v4612, %v4853
        %v5006 = vadd.f32 %v4613, %v4941
        %v5007 = vadd.f32 %v4614, %v4855
        %v5008 = vadd.f32 %v4615, %v4943
        %v5009 = vadd.f32 %v4616, %v4858
        %v5010 = vadd.f32 %v4617, %v4946
        %v5011 = vpack.c.bf16 %v3540, %v3539
        %v5012 = vpack.c.bf16 %v3542, %v3541
        %v5013 = vpack.c.bf16 %v3544, %v3543
        %v5014 = vpack.c.bf16 %v3546, %v3545
        %v5015 = vpack.c.bf16 %v3548, %v3547
        %v5016 = vpack.c.bf16 %v3550, %v3549
        %v5017 = vpack.c.bf16 %v3552, %v3551
        %v5018 = vpack.c.bf16 %v3554, %v3553
        %v5019 = vpack.c.bf16 %v3556, %v3555
        %v5020 = vpack.c.bf16 %v3558, %v3557
        %v5021 = vpack.c.bf16 %v3560, %v3559
        %v5022 = vpack.c.bf16 %v3562, %v3561
        %v5023 = vpack.c.bf16 %v3564, %v3563
        %v5024 = vpack.c.bf16 %v3566, %v3565
        %v5025 = vpack.c.bf16 %v3568, %v3567
        %v5026 = vpack.c.bf16 %v3569, %v3569
        %s5027 = scalar_lea.vmem [#allocation11], 352
        %v5028 = vld [vmem:[%s5027] sm:$0xff]
        %v5029 = vld [vmem:[%s5027 + $0x8] sm:$0xff]
        %v5030 = vld [vmem:[%s5027 + $0x10] sm:$0xff]
        %v5031 = vld [vmem:[%s5027 + $0x18] sm:$0xff]
        %v5032 = vld [vmem:[%s5027 + $0x20] sm:$0xff]
        %v5033 = vld [vmem:[%s5027 + $0x28] sm:$0xff]
        %v5034 = vld [vmem:[%s5027 + $0x30] sm:$0xff]
        %v5035 = vld [vmem:[%s5027 + $0x38] sm:$0xff]
        %v5036 = vld [vmem:[%s5027 + $0x40] sm:$0xff]
        %v5037 = vld [vmem:[%s5027 + $0x48] sm:$0xff]
        %v5038 = vld [vmem:[%s5027 + $0x50] sm:$0x33]
        %v5050 = vunpack.c.l.b16 %v5028
        %v5051 = vunpack.c.h.b16 %v5028
        %v5052 = vunpack.c.l.b16 %v5029
        %v5053 = vunpack.c.h.b16 %v5029
        %v5054 = vunpack.c.l.b16 %v5030
        %v5055 = vunpack.c.h.b16 %v5030
        %v5056 = vunpack.c.l.b16 %v5031
        %v5057 = vunpack.c.h.b16 %v5031
        %v5058 = vunpack.c.l.b16 %v5032
        %v5059 = vunpack.c.h.b16 %v5032
        %v5060 = vunpack.c.l.b16 %v5033
        %v5061 = vunpack.c.h.b16 %v5033
        %v5062 = vunpack.c.l.b16 %v5034
        %v5063 = vunpack.c.h.b16 %v5034
        %v5064 = vunpack.c.l.b16 %v5035
        %v5065 = vunpack.c.h.b16 %v5035
        %v5066 = vunpack.c.l.b16 %v5036
        %v5067 = vunpack.c.h.b16 %v5036
        %v5068 = vunpack.c.l.b16 %v5037
        %v5069 = vunpack.c.h.b16 %v5037
        %v5070 = vunpack.c.l.b16 %v5038
        %v5071 = vunpack.c.h.b16 %v5038
        %v5072 = vpack.c.b16 %v5052, %v5050
        %v5073 = vpack.c.b16 %v5053, %v5051
        %v5074 = vpack.c.b16 %v5056, %v5054
        %v5075 = vpack.c.b16 %v5057, %v5055
        %v5076 = vpack.c.b16 %v5060, %v5058
        %v5077 = vpack.c.b16 %v5061, %v5059
        %v5078 = vpack.c.b16 %v5064, %v5062
        %v5079 = vpack.c.b16 %v5065, %v5063
        %v5080 = vpack.c.b16 %v5068, %v5066
        %v5081 = vpack.c.b16 %v5069, %v5067
        %v5082 = vpack.c.b16 %v5070, %v5070
        %v5083 = vpack.c.b16 %v5071, %v5071
        %v5095 = vsel %vm3711, %v5011, 0
        %v5098 = vsel %vm3711, %v5012, 0
        %v5101 = vsel %vm3711, %v5013, 0
        %v5104 = vsel %vm3711, %v5014, 0
        %v5107 = vsel %vm3711, %v5015, 0
        %v5110 = vsel %vm3711, %v5016, 0
        %v5113 = vsel %vm3711, %v5017, 0
        %v5116 = vsel %vm3711, %v5018, 0
        %v5119 = vsel %vm3711, %v5019, 0
        %v5122 = vsel %vm3711, %v5020, 0
        %v5125 = vsel %vm3711, %v5021, 0
        %v5128 = vsel %vm3711, %v5022, 0
        %v5131 = vsel %vm3711, %v5023, 0
        %v5134 = vsel %vm3711, %v5024, 0
        %v5137 = vsel %vm3711, %v5025, 0
        %v5140 = vsel %vm3711, %v5026, 0
        %v5143 = vsel %vm3760, %v5082, 0
        %v5146 = vsel %vm3760, %v5083, 0
        %5148 = vmatpush.bf16.msra.mxu0 0
        %5149 = vmatpush.bf16.msra.mxu0 0
        %5150 = vmatpush.bf16.msra.mxu0 %v5143
        %5151 = vmatpush.bf16.msra.mxu0 %v5080
        %5152 = vmatpush.bf16.msra.mxu0 %v5078
        %5153 = vmatpush.bf16.msra.mxu0 %v5076
        %5154 = vmatpush.bf16.msra.mxu0 %v5074
        %5155 = vmatpush.bf16.msra.mxu0 %v5072
        %5156 = vmatmul.bf16.gmra.mxu0 %v5095
        %v5157 = vpop.f32.mrf.mxu0
        %v5158 = vadd.f32 0.0, %v5157
        %v5159 = vpop.f32.mrf.mxu0
        %v5160 = vadd.f32 0.0, %v5159
        %5161 = vmatmul.bf16.gmra.mxu0 %v5098
        %v5162 = vpop.f32.mrf.mxu0
        %v5163 = vadd.f32 0.0, %v5162
        %v5164 = vpop.f32.mrf.mxu0
        %v5165 = vadd.f32 0.0, %v5164
        %5166 = vmatmul.bf16.gmra.mxu0 %v5101
        %v5167 = vpop.f32.mrf.mxu0
        %v5168 = vadd.f32 0.0, %v5167
        %v5169 = vpop.f32.mrf.mxu0
        %v5170 = vadd.f32 0.0, %v5169
        %5171 = vmatmul.bf16.gmra.mxu0 %v5104
        %v5172 = vpop.f32.mrf.mxu0
        %v5173 = vadd.f32 0.0, %v5172
        %v5174 = vpop.f32.mrf.mxu0
        %v5175 = vadd.f32 0.0, %v5174
        %5176 = vmatmul.bf16.gmra.mxu0 %v5107
        %v5177 = vpop.f32.mrf.mxu0
        %v5178 = vadd.f32 0.0, %v5177
        %v5179 = vpop.f32.mrf.mxu0
        %v5180 = vadd.f32 0.0, %v5179
        %5181 = vmatmul.bf16.gmra.mxu0 %v5110
        %v5182 = vpop.f32.mrf.mxu0
        %v5183 = vadd.f32 0.0, %v5182
        %v5184 = vpop.f32.mrf.mxu0
        %v5185 = vadd.f32 0.0, %v5184
        %5186 = vmatmul.bf16.gmra.mxu0 %v5113
        %v5187 = vpop.f32.mrf.mxu0
        %v5188 = vadd.f32 0.0, %v5187
        %v5189 = vpop.f32.mrf.mxu0
        %v5190 = vadd.f32 0.0, %v5189
        %5191 = vmatmul.bf16.gmra.mxu0 %v5116
        %v5192 = vpop.f32.mrf.mxu0
        %v5193 = vadd.f32 0.0, %v5192
        %v5194 = vpop.f32.mrf.mxu0
        %v5195 = vadd.f32 0.0, %v5194
        %5196 = vmatmul.bf16.gmra.mxu0 %v5119
        %v5197 = vpop.f32.mrf.mxu0
        %v5198 = vadd.f32 0.0, %v5197
        %v5199 = vpop.f32.mrf.mxu0
        %v5200 = vadd.f32 0.0, %v5199
        %5201 = vmatmul.bf16.gmra.mxu0 %v5122
        %v5202 = vpop.f32.mrf.mxu0
        %v5203 = vadd.f32 0.0, %v5202
        %v5204 = vpop.f32.mrf.mxu0
        %v5205 = vadd.f32 0.0, %v5204
        %5206 = vmatmul.bf16.gmra.mxu0 %v5125
        %v5207 = vpop.f32.mrf.mxu0
        %v5208 = vadd.f32 0.0, %v5207
        %v5209 = vpop.f32.mrf.mxu0
        %v5210 = vadd.f32 0.0, %v5209
        %5211 = vmatmul.bf16.gmra.mxu0 %v5128
        %v5212 = vpop.f32.mrf.mxu0
        %v5213 = vadd.f32 0.0, %v5212
        %v5214 = vpop.f32.mrf.mxu0
        %v5215 = vadd.f32 0.0, %v5214
        %5216 = vmatmul.bf16.gmra.mxu0 %v5131
        %v5217 = vpop.f32.mrf.mxu0
        %v5218 = vadd.f32 0.0, %v5217
        %v5219 = vpop.f32.mrf.mxu0
        %v5220 = vadd.f32 0.0, %v5219
        %5221 = vmatmul.bf16.gmra.mxu0 %v5134
        %v5222 = vpop.f32.mrf.mxu0
        %v5223 = vadd.f32 0.0, %v5222
        %v5224 = vpop.f32.mrf.mxu0
        %v5225 = vadd.f32 0.0, %v5224
        %5226 = vmatmul.bf16.gmra.mxu0 %v5137
        %v5227 = vpop.f32.mrf.mxu0
        %v5228 = vadd.f32 0.0, %v5227
        %v5229 = vpop.f32.mrf.mxu0
        %v5230 = vadd.f32 0.0, %v5229
        %5231 = vmatmul.bf16.gmra.mxu0 %v5140
        %v5232 = vpop.f32.mrf.mxu0
        %v5233 = vadd.f32 0.0, %v5232
        %v5234 = vpop.f32.mrf.mxu0
        %5235 = vdwg.mxu0
        %5236 = vmatpush.bf16.msra.mxu0 0
        %5237 = vmatpush.bf16.msra.mxu0 0
        %5238 = vmatpush.bf16.msra.mxu0 %v5146
        %5239 = vmatpush.bf16.msra.mxu0 %v5081
        %5240 = vmatpush.bf16.msra.mxu0 %v5079
        %5241 = vmatpush.bf16.msra.mxu0 %v5077
        %5242 = vmatpush.bf16.msra.mxu0 %v5075
        %5243 = vmatpush.bf16.msra.mxu0 %v5073
        %5244 = vmatmul.bf16.gmra.mxu0 %v5095
        %v5245 = vpop.f32.mrf.mxu0
        %v5246 = vadd.f32 0.0, %v5245
        %v5247 = vpop.f32.mrf.mxu0
        %v5248 = vadd.f32 0.0, %v5247
        %5249 = vmatmul.bf16.gmra.mxu0 %v5098
        %v5250 = vpop.f32.mrf.mxu0
        %v5251 = vadd.f32 0.0, %v5250
        %v5252 = vpop.f32.mrf.mxu0
        %v5253 = vadd.f32 0.0, %v5252
        %5254 = vmatmul.bf16.gmra.mxu0 %v5101
        %v5255 = vpop.f32.mrf.mxu0
        %v5256 = vadd.f32 0.0, %v5255
        %v5257 = vpop.f32.mrf.mxu0
        %v5258 = vadd.f32 0.0, %v5257
        %5259 = vmatmul.bf16.gmra.mxu0 %v5104
        %v5260 = vpop.f32.mrf.mxu0
        %v5261 = vadd.f32 0.0, %v5260
        %v5262 = vpop.f32.mrf.mxu0
        %v5263 = vadd.f32 0.0, %v5262
        %5264 = vmatmul.bf16.gmra.mxu0 %v5107
        %v5265 = vpop.f32.mrf.mxu0
        %v5266 = vadd.f32 0.0, %v5265
        %v5267 = vpop.f32.mrf.mxu0
        %v5268 = vadd.f32 0.0, %v5267
        %5269 = vmatmul.bf16.gmra.mxu0 %v5110
        %v5270 = vpop.f32.mrf.mxu0
        %v5271 = vadd.f32 0.0, %v5270
        %v5272 = vpop.f32.mrf.mxu0
        %v5273 = vadd.f32 0.0, %v5272
        %5274 = vmatmul.bf16.gmra.mxu0 %v5113
        %v5275 = vpop.f32.mrf.mxu0
        %v5276 = vadd.f32 0.0, %v5275
        %v5277 = vpop.f32.mrf.mxu0
        %v5278 = vadd.f32 0.0, %v5277
        %5279 = vmatmul.bf16.gmra.mxu0 %v5116
        %v5280 = vpop.f32.mrf.mxu0
        %v5281 = vadd.f32 0.0, %v5280
        %v5282 = vpop.f32.mrf.mxu0
        %v5283 = vadd.f32 0.0, %v5282
        %5284 = vmatmul.bf16.gmra.mxu0 %v5119
        %v5285 = vpop.f32.mrf.mxu0
        %v5286 = vadd.f32 0.0, %v5285
        %v5287 = vpop.f32.mrf.mxu0
        %v5288 = vadd.f32 0.0, %v5287
        %5289 = vmatmul.bf16.gmra.mxu0 %v5122
        %v5290 = vpop.f32.mrf.mxu0
        %v5291 = vadd.f32 0.0, %v5290
        %v5292 = vpop.f32.mrf.mxu0
        %v5293 = vadd.f32 0.0, %v5292
        %5294 = vmatmul.bf16.gmra.mxu0 %v5125
        %v5295 = vpop.f32.mrf.mxu0
        %v5296 = vadd.f32 0.0, %v5295
        %v5297 = vpop.f32.mrf.mxu0
        %v5298 = vadd.f32 0.0, %v5297
        %5299 = vmatmul.bf16.gmra.mxu0 %v5128
        %v5300 = vpop.f32.mrf.mxu0
        %v5301 = vadd.f32 0.0, %v5300
        %v5302 = vpop.f32.mrf.mxu0
        %v5303 = vadd.f32 0.0, %v5302
        %5304 = vmatmul.bf16.gmra.mxu0 %v5131
        %v5305 = vpop.f32.mrf.mxu0
        %v5306 = vadd.f32 0.0, %v5305
        %v5307 = vpop.f32.mrf.mxu0
        %v5308 = vadd.f32 0.0, %v5307
        %5309 = vmatmul.bf16.gmra.mxu0 %v5134
        %v5310 = vpop.f32.mrf.mxu0
        %v5311 = vadd.f32 0.0, %v5310
        %v5312 = vpop.f32.mrf.mxu0
        %v5313 = vadd.f32 0.0, %v5312
        %5314 = vmatmul.bf16.gmra.mxu0 %v5137
        %v5315 = vpop.f32.mrf.mxu0
        %v5316 = vadd.f32 0.0, %v5315
        %v5317 = vpop.f32.mrf.mxu0
        %v5318 = vadd.f32 0.0, %v5317
        %5319 = vmatmul.bf16.gmra.mxu0 %v5140
        %v5320 = vpop.f32.mrf.mxu0
        %v5321 = vadd.f32 0.0, %v5320
        %v5322 = vpop.f32.mrf.mxu0
        %5323 = vdwg.mxu0
        %v5324 = vadd.f32 %v4949, %v5158
        %v5325 = vadd.f32 %v4950, %v5246
        %v5326 = vadd.f32 %v4951, %v5160
        %v5327 = vadd.f32 %v4952, %v5248
        %v5328 = vadd.f32 %v4953, %v5163
        %v5329 = vadd.f32 %v4954, %v5251
        %v5330 = vadd.f32 %v4955, %v5165
        %v5331 = vadd.f32 %v4956, %v5253
        %v5332 = vadd.f32 %v4957, %v5168
        %v5333 = vadd.f32 %v4958, %v5256
        %v5334 = vadd.f32 %v4959, %v5170
        %v5335 = vadd.f32 %v4960, %v5258
        %v5336 = vadd.f32 %v4961, %v5173
        %v5337 = vadd.f32 %v4962, %v5261
        %v5338 = vadd.f32 %v4963, %v5175
        %v5339 = vadd.f32 %v4964, %v5263
        %v5340 = vadd.f32 %v4965, %v5178
        %v5341 = vadd.f32 %v4966, %v5266
        %v5342 = vadd.f32 %v4967, %v5180
        %v5343 = vadd.f32 %v4968, %v5268
        %v5344 = vadd.f32 %v4969, %v5183
        %v5345 = vadd.f32 %v4970, %v5271
        %v5346 = vadd.f32 %v4971, %v5185
        %v5347 = vadd.f32 %v4972, %v5273
        %v5348 = vadd.f32 %v4973, %v5188
        %v5349 = vadd.f32 %v4974, %v5276
        %v5350 = vadd.f32 %v4975, %v5190
        %v5351 = vadd.f32 %v4976, %v5278
        %v5352 = vadd.f32 %v4977, %v5193
        %v5353 = vadd.f32 %v4978, %v5281
        %v5354 = vadd.f32 %v4979, %v5195
        %v5355 = vadd.f32 %v4980, %v5283
        %v5356 = vadd.f32 %v4981, %v5198
        %v5357 = vadd.f32 %v4982, %v5286
        %v5358 = vadd.f32 %v4983, %v5200
        %v5359 = vadd.f32 %v4984, %v5288
        %v5360 = vadd.f32 %v4985, %v5203
        %v5361 = vadd.f32 %v4986, %v5291
        %v5362 = vadd.f32 %v4987, %v5205
        %v5363 = vadd.f32 %v4988, %v5293
        %v5364 = vadd.f32 %v4989, %v5208
        %v5365 = vadd.f32 %v4990, %v5296
        %v5366 = vadd.f32 %v4991, %v5210
        %v5367 = vadd.f32 %v4992, %v5298
        %v5368 = vadd.f32 %v4993, %v5213
        %v5369 = vadd.f32 %v4994, %v5301
        %v5370 = vadd.f32 %v4995, %v5215
        %v5371 = vadd.f32 %v4996, %v5303
        %v5372 = vadd.f32 %v4997, %v5218
        %v5373 = vadd.f32 %v4998, %v5306
        %v5374 = vadd.f32 %v4999, %v5220
        %v5375 = vadd.f32 %v5000, %v5308
        %v5376 = vadd.f32 %v5001, %v5223
        %v5377 = vadd.f32 %v5002, %v5311
        %v5378 = vadd.f32 %v5003, %v5225
        %v5379 = vadd.f32 %v5004, %v5313
        %v5380 = vadd.f32 %v5005, %v5228
        %v5381 = vadd.f32 %v5006, %v5316
        %v5382 = vadd.f32 %v5007, %v5230
        %v5383 = vadd.f32 %v5008, %v5318
        %v5384 = vadd.f32 %v5009, %v5233
        %v5385 = vadd.f32 %v5010, %v5321
        %v5386 = vld [vmem:[%s6] sm:$0x3]
        %v5388 = vperm.slane %v5386, 0
        %v5389 = vperm.slane %v5386, 1
        %v5392 = vadd.f32 %v5324, %v5388
        %v5393 = vadd.f32 %v5325, %v5389
        %v5394 = vadd.f32 %v5326, %v5388
        %v5395 = vadd.f32 %v5327, %v5389
        %v5396 = vadd.f32 %v5328, %v5388
        %v5397 = vadd.f32 %v5329, %v5389
        %v5398 = vadd.f32 %v5330, %v5388
        %v5399 = vadd.f32 %v5331, %v5389
        %v5400 = vadd.f32 %v5332, %v5388
        %v5401 = vadd.f32 %v5333, %v5389
        %v5402 = vadd.f32 %v5334, %v5388
        %v5403 = vadd.f32 %v5335, %v5389
        %v5404 = vadd.f32 %v5336, %v5388
        %v5405 = vadd.f32 %v5337, %v5389
        %v5406 = vadd.f32 %v5338, %v5388
        %v5407 = vadd.f32 %v5339, %v5389
        %v5408 = vadd.f32 %v5340, %v5388
        %v5409 = vadd.f32 %v5341, %v5389
        %v5410 = vadd.f32 %v5342, %v5388
        %v5411 = vadd.f32 %v5343, %v5389
        %v5412 = vadd.f32 %v5344, %v5388
        %v5413 = vadd.f32 %v5345, %v5389
        %v5414 = vadd.f32 %v5346, %v5388
        %v5415 = vadd.f32 %v5347, %v5389
        %v5416 = vadd.f32 %v5348, %v5388
        %v5417 = vadd.f32 %v5349, %v5389
        %v5418 = vadd.f32 %v5350, %v5388
        %v5419 = vadd.f32 %v5351, %v5389
        %v5420 = vadd.f32 %v5352, %v5388
        %v5421 = vadd.f32 %v5353, %v5389
        %v5422 = vadd.f32 %v5354, %v5388
        %v5423 = vadd.f32 %v5355, %v5389
        %v5424 = vadd.f32 %v5356, %v5388
        %v5425 = vadd.f32 %v5357, %v5389
        %v5426 = vadd.f32 %v5358, %v5388
        %v5427 = vadd.f32 %v5359, %v5389
        %v5428 = vadd.f32 %v5360, %v5388
        %v5429 = vadd.f32 %v5361, %v5389
        %v5430 = vadd.f32 %v5362, %v5388
        %v5431 = vadd.f32 %v5363, %v5389
        %v5432 = vadd.f32 %v5364, %v5388
        %v5433 = vadd.f32 %v5365, %v5389
        %v5434 = vadd.f32 %v5366, %v5388
        %v5435 = vadd.f32 %v5367, %v5389
        %v5436 = vadd.f32 %v5368, %v5388
        %v5437 = vadd.f32 %v5369, %v5389
        %v5438 = vadd.f32 %v5370, %v5388
        %v5439 = vadd.f32 %v5371, %v5389
        %v5440 = vadd.f32 %v5372, %v5388
        %v5441 = vadd.f32 %v5373, %v5389
        %v5442 = vadd.f32 %v5374, %v5388
        %v5443 = vadd.f32 %v5375, %v5389
        %v5444 = vadd.f32 %v5376, %v5388
        %v5445 = vadd.f32 %v5377, %v5389
        %v5446 = vadd.f32 %v5378, %v5388
        %v5447 = vadd.f32 %v5379, %v5389
        %v5448 = vadd.f32 %v5380, %v5388
        %v5449 = vadd.f32 %v5381, %v5389
        %v5450 = vadd.f32 %v5382, %v5388
        %v5451 = vadd.f32 %v5383, %v5389
        %v5452 = vadd.f32 %v5384, %v5388
        %v5453 = vadd.f32 %v5385, %v5389
        %v5454 = vmax.f32 %v5392, 0.0
        %v5455 = vmax.f32 %v5393, 0.0
        %v5456 = vmax.f32 %v5394, 0.0
        %v5457 = vmax.f32 %v5395, 0.0
        %v5458 = vmax.f32 %v5396, 0.0
        %v5459 = vmax.f32 %v5397, 0.0
        %v5460 = vmax.f32 %v5398, 0.0
        %v5461 = vmax.f32 %v5399, 0.0
        %v5462 = vmax.f32 %v5400, 0.0
        %v5463 = vmax.f32 %v5401, 0.0
        %v5464 = vmax.f32 %v5402, 0.0
        %v5465 = vmax.f32 %v5403, 0.0
        %v5466 = vmax.f32 %v5404, 0.0
        %v5467 = vmax.f32 %v5405, 0.0
        %v5468 = vmax.f32 %v5406, 0.0
        %v5469 = vmax.f32 %v5407, 0.0
        %v5470 = vmax.f32 %v5408, 0.0
        %v5471 = vmax.f32 %v5409, 0.0
        %v5472 = vmax.f32 %v5410, 0.0
        %v5473 = vmax.f32 %v5411, 0.0
        %v5474 = vmax.f32 %v5412, 0.0
        %v5475 = vmax.f32 %v5413, 0.0
        %v5476 = vmax.f32 %v5414, 0.0
        %v5477 = vmax.f32 %v5415, 0.0
        %v5478 = vmax.f32 %v5416, 0.0
        %v5479 = vmax.f32 %v5417, 0.0
        %v5480 = vmax.f32 %v5418, 0.0
        %v5481 = vmax.f32 %v5419, 0.0
        %v5482 = vmax.f32 %v5420, 0.0
        %v5483 = vmax.f32 %v5421, 0.0
        %v5484 = vmax.f32 %v5422, 0.0
        %v5485 = vmax.f32 %v5423, 0.0
        %v5486 = vmax.f32 %v5424, 0.0
        %v5487 = vmax.f32 %v5425, 0.0
        %v5488 = vmax.f32 %v5426, 0.0
        %v5489 = vmax.f32 %v5427, 0.0
        %v5490 = vmax.f32 %v5428, 0.0
        %v5491 = vmax.f32 %v5429, 0.0
        %v5492 = vmax.f32 %v5430, 0.0
        %v5493 = vmax.f32 %v5431, 0.0
        %v5494 = vmax.f32 %v5432, 0.0
        %v5495 = vmax.f32 %v5433, 0.0
        %v5496 = vmax.f32 %v5434, 0.0
        %v5497 = vmax.f32 %v5435, 0.0
        %v5498 = vmax.f32 %v5436, 0.0
        %v5499 = vmax.f32 %v5437, 0.0
        %v5500 = vmax.f32 %v5438, 0.0
        %v5501 = vmax.f32 %v5439, 0.0
        %v5502 = vmax.f32 %v5440, 0.0
        %v5503 = vmax.f32 %v5441, 0.0
        %v5504 = vmax.f32 %v5442, 0.0
        %v5505 = vmax.f32 %v5443, 0.0
        %v5506 = vmax.f32 %v5444, 0.0
        %v5507 = vmax.f32 %v5445, 0.0
        %v5508 = vmax.f32 %v5446, 0.0
        %v5509 = vmax.f32 %v5447, 0.0
        %v5510 = vmax.f32 %v5448, 0.0
        %v5511 = vmax.f32 %v5449, 0.0
        %v5512 = vmax.f32 %v5450, 0.0
        %v5513 = vmax.f32 %v5451, 0.0
        %v5514 = vmax.f32 %v5452, 0.0
        %v5515 = vmax.f32 %v5453, 0.0
        %vm5578 = vcmask 1045504
        %v5579 = vrot.slane %v5454, 2
        %v5580 = vrot.slane %v5456, 2
        %v5581 = vsel %vm5578, %v5579, %v5580
        %v5582 = vrot.slane %v5455, 2
        %v5583 = vrot.slane %v5457, 2
        %v5584 = vsel %vm5578, %v5582, %v5583
        %v5585 = vrot.slane %v5458, 2
        %v5586 = vsel %vm5578, %v5580, %v5585
        %v5587 = vrot.slane %v5459, 2
        %v5588 = vsel %vm5578, %v5583, %v5587
        %v5589 = vrot.slane %v5460, 2
        %v5590 = vsel %vm5578, %v5585, %v5589
        %v5591 = vrot.slane %v5461, 2
        %v5592 = vsel %vm5578, %v5587, %v5591
        %v5593 = vrot.slane %v5462, 2
        %v5594 = vsel %vm5578, %v5589, %v5593
        %v5595 = vrot.slane %v5463, 2
        %v5596 = vsel %vm5578, %v5591, %v5595
        %v5597 = vrot.slane %v5464, 2
        %v5598 = vsel %vm5578, %v5593, %v5597
        %v5599 = vrot.slane %v5465, 2
        %v5600 = vsel %vm5578, %v5595, %v5599
        %v5601 = vrot.slane %v5466, 2
        %v5602 = vsel %vm5578, %v5597, %v5601
        %v5603 = vrot.slane %v5467, 2
        %v5604 = vsel %vm5578, %v5599, %v5603
        %v5605 = vrot.slane %v5468, 2
        %v5606 = vsel %vm5578, %v5601, %v5605
        %v5607 = vrot.slane %v5469, 2
        %v5608 = vsel %vm5578, %v5603, %v5607
        %v5609 = vrot.slane %v5470, 2
        %v5610 = vsel %vm5578, %v5605, %v5609
        %v5611 = vrot.slane %v5471, 2
        %v5612 = vsel %vm5578, %v5607, %v5611
        %v5613 = vrot.slane %v5472, 2
        %v5614 = vsel %vm5578, %v5609, %v5613
        %v5615 = vrot.slane %v5473, 2
        %v5616 = vsel %vm5578, %v5611, %v5615
        %v5617 = vrot.slane %v5474, 2
        %v5618 = vsel %vm5578, %v5613, %v5617
        %v5619 = vrot.slane %v5475, 2
        %v5620 = vsel %vm5578, %v5615, %v5619
        %v5621 = vrot.slane %v5476, 2
        %v5622 = vsel %vm5578, %v5617, %v5621
        %v5623 = vrot.slane %v5477, 2
        %v5624 = vsel %vm5578, %v5619, %v5623
        %v5625 = vrot.slane %v5478, 2
        %v5626 = vsel %vm5578, %v5621, %v5625
        %v5627 = vrot.slane %v5479, 2
        %v5628 = vsel %vm5578, %v5623, %v5627
        %v5629 = vrot.slane %v5480, 2
        %v5630 = vsel %vm5578, %v5625, %v5629
        %v5631 = vrot.slane %v5481, 2
        %v5632 = vsel %vm5578, %v5627, %v5631
        %v5633 = vrot.slane %v5482, 2
        %v5634 = vsel %vm5578, %v5629, %v5633
        %v5635 = vrot.slane %v5483, 2
        %v5636 = vsel %vm5578, %v5631, %v5635
        %v5637 = vrot.slane %v5484, 2
        %v5638 = vsel %vm5578, %v5633, %v5637
        %v5639 = vrot.slane %v5485, 2
        %v5640 = vsel %vm5578, %v5635, %v5639
        %v5641 = vrot.slane %v5486, 2
        %v5642 = vsel %vm5578, %v5637, %v5641
        %v5643 = vrot.slane %v5487, 2
        %v5644 = vsel %vm5578, %v5639, %v5643
        %v5645 = vrot.slane %v5488, 2
        %v5646 = vsel %vm5578, %v5641, %v5645
        %v5647 = vrot.slane %v5489, 2
        %v5648 = vsel %vm5578, %v5643, %v5647
        %v5649 = vrot.slane %v5490, 2
        %v5650 = vsel %vm5578, %v5645, %v5649
        %v5651 = vrot.slane %v5491, 2
        %v5652 = vsel %vm5578, %v5647, %v5651
        %v5653 = vrot.slane %v5492, 2
        %v5654 = vsel %vm5578, %v5649, %v5653
        %v5655 = vrot.slane %v5493, 2
        %v5656 = vsel %vm5578, %v5651, %v5655
        %v5657 = vrot.slane %v5494, 2
        %v5658 = vsel %vm5578, %v5653, %v5657
        %v5659 = vrot.slane %v5495, 2
        %v5660 = vsel %vm5578, %v5655, %v5659
        %v5661 = vrot.slane %v5496, 2
        %v5662 = vsel %vm5578, %v5657, %v5661
        %v5663 = vrot.slane %v5497, 2
        %v5664 = vsel %vm5578, %v5659, %v5663
        %v5665 = vrot.slane %v5498, 2
        %v5666 = vsel %vm5578, %v5661, %v5665
        %v5667 = vrot.slane %v5499, 2
        %v5668 = vsel %vm5578, %v5663, %v5667
        %v5669 = vrot.slane %v5500, 2
        %v5670 = vsel %vm5578, %v5665, %v5669
        %v5671 = vrot.slane %v5501, 2
        %v5672 = vsel %vm5578, %v5667, %v5671
        %v5673 = vrot.slane %v5502, 2
        %v5674 = vsel %vm5578, %v5669, %v5673
        %v5675 = vrot.slane %v5503, 2
        %v5676 = vsel %vm5578, %v5671, %v5675
        %v5677 = vrot.slane %v5504, 2
        %v5678 = vsel %vm5578, %v5673, %v5677
        %v5679 = vrot.slane %v5505, 2
        %v5680 = vsel %vm5578, %v5675, %v5679
        %v5681 = vrot.slane %v5506, 2
        %v5682 = vsel %vm5578, %v5677, %v5681
        %v5683 = vrot.slane %v5507, 2
        %v5684 = vsel %vm5578, %v5679, %v5683
        %v5685 = vrot.slane %v5508, 2
        %v5686 = vsel %vm5578, %v5681, %v5685
        %v5687 = vrot.slane %v5509, 2
        %v5688 = vsel %vm5578, %v5683, %v5687
        %v5689 = vrot.slane %v5510, 2
        %v5690 = vsel %vm5578, %v5685, %v5689
        %v5691 = vrot.slane %v5511, 2
        %v5692 = vsel %vm5578, %v5687, %v5691
        %v5693 = vrot.slane %v5512, 2
        %v5694 = vsel %vm5578, %v5689, %v5693
        %v5695 = vrot.slane %v5513, 2
        %v5696 = vsel %vm5578, %v5691, %v5695
        %v5697 = vrot.slane %v5514, 2
        %v5698 = vsel %vm5578, %v5693, %v5697
        %v5699 = vrot.slane %v5515, 2
        %v5700 = vsel %vm5578, %v5695, %v5699
        %v5763 = vmax.f32 %v5454, %v5581
        %v5764 = vmax.f32 %v5455, %v5584
        %v5765 = vmax.f32 %v5456, %v5586
        %v5766 = vmax.f32 %v5457, %v5588
        %v5767 = vmax.f32 %v5458, %v5590
        %v5768 = vmax.f32 %v5459, %v5592
        %v5769 = vmax.f32 %v5460, %v5594
        %v5770 = vmax.f32 %v5461, %v5596
        %v5771 = vmax.f32 %v5462, %v5598
        %v5772 = vmax.f32 %v5463, %v5600
        %v5773 = vmax.f32 %v5464, %v5602
        %v5774 = vmax.f32 %v5465, %v5604
        %v5775 = vmax.f32 %v5466, %v5606
        %v5776 = vmax.f32 %v5467, %v5608
        %v5777 = vmax.f32 %v5468, %v5610
        %v5778 = vmax.f32 %v5469, %v5612
        %v5779 = vmax.f32 %v5470, %v5614
        %v5780 = vmax.f32 %v5471, %v5616
        %v5781 = vmax.f32 %v5472, %v5618
        %v5782 = vmax.f32 %v5473, %v5620
        %v5783 = vmax.f32 %v5474, %v5622
        %v5784 = vmax.f32 %v5475, %v5624
        %v5785 = vmax.f32 %v5476, %v5626
        %v5786 = vmax.f32 %v5477, %v5628
        %v5787 = vmax.f32 %v5478, %v5630
        %v5788 = vmax.f32 %v5479, %v5632
        %v5789 = vmax.f32 %v5480, %v5634
        %v5790 = vmax.f32 %v5481, %v5636
        %v5791 = vmax.f32 %v5482, %v5638
        %v5792 = vmax.f32 %v5483, %v5640
        %v5793 = vmax.f32 %v5484, %v5642
        %v5794 = vmax.f32 %v5485, %v5644
        %v5795 = vmax.f32 %v5486, %v5646
        %v5796 = vmax.f32 %v5487, %v5648
        %v5797 = vmax.f32 %v5488, %v5650
        %v5798 = vmax.f32 %v5489, %v5652
        %v5799 = vmax.f32 %v5490, %v5654
        %v5800 = vmax.f32 %v5491, %v5656
        %v5801 = vmax.f32 %v5492, %v5658
        %v5802 = vmax.f32 %v5493, %v5660
        %v5803 = vmax.f32 %v5494, %v5662
        %v5804 = vmax.f32 %v5495, %v5664
        %v5805 = vmax.f32 %v5496, %v5666
        %v5806 = vmax.f32 %v5497, %v5668
        %v5807 = vmax.f32 %v5498, %v5670
        %v5808 = vmax.f32 %v5499, %v5672
        %v5809 = vmax.f32 %v5500, %v5674
        %v5810 = vmax.f32 %v5501, %v5676
        %v5811 = vmax.f32 %v5502, %v5678
        %v5812 = vmax.f32 %v5503, %v5680
        %v5813 = vmax.f32 %v5504, %v5682
        %v5814 = vmax.f32 %v5505, %v5684
        %v5815 = vmax.f32 %v5506, %v5686
        %v5816 = vmax.f32 %v5507, %v5688
        %v5817 = vmax.f32 %v5508, %v5690
        %v5818 = vmax.f32 %v5509, %v5692
        %v5819 = vmax.f32 %v5510, %v5694
        %v5820 = vmax.f32 %v5511, %v5696
        %v5821 = vmax.f32 %v5512, %v5698
        %v5822 = vmax.f32 %v5513, %v5700
        %v5823 = vmax.f32 %v5514, %v5697
        %v5824 = vmax.f32 %v5515, %v5699
        %v5825 = vpack.c.bf16 %v5765, %v5763
        %v5826 = vpack.c.bf16 %v5766, %v5764
        %v5827 = vpack.c.bf16 %v5769, %v5767
        %v5828 = vpack.c.bf16 %v5770, %v5768
        %v5829 = vpack.c.bf16 %v5773, %v5771
        %v5830 = vpack.c.bf16 %v5774, %v5772
        %v5831 = vpack.c.bf16 %v5777, %v5775
        %v5832 = vpack.c.bf16 %v5778, %v5776
        %v5833 = vpack.c.bf16 %v5781, %v5779
        %v5834 = vpack.c.bf16 %v5782, %v5780
        %v5835 = vpack.c.bf16 %v5785, %v5783
        %v5836 = vpack.c.bf16 %v5786, %v5784
        %v5837 = vpack.c.bf16 %v5789, %v5787
        %v5838 = vpack.c.bf16 %v5790, %v5788
        %v5839 = vpack.c.bf16 %v5793, %v5791
        %v5840 = vpack.c.bf16 %v5794, %v5792
        %v5841 = vpack.c.bf16 %v5797, %v5795
        %v5842 = vpack.c.bf16 %v5798, %v5796
        %v5843 = vpack.c.bf16 %v5801, %v5799
        %v5844 = vpack.c.bf16 %v5802, %v5800
        %v5845 = vpack.c.bf16 %v5805, %v5803
        %v5846 = vpack.c.bf16 %v5806, %v5804
        %v5847 = vpack.c.bf16 %v5809, %v5807
        %v5848 = vpack.c.bf16 %v5810, %v5808
        %v5849 = vpack.c.bf16 %v5813, %v5811
        %v5850 = vpack.c.bf16 %v5814, %v5812
        %v5851 = vpack.c.bf16 %v5817, %v5815
        %v5852 = vpack.c.bf16 %v5818, %v5816
        %v5853 = vpack.c.bf16 %v5821, %v5819
        %v5854 = vpack.c.bf16 %v5822, %v5820
        %v5855 = vpack.c.bf16 %v5823, %v5823
        %v5856 = vpack.c.bf16 %v5824, %v5824
        %v5857 = vld [vmem:[#allocation13] sm:$0xf]
        %v5858 = vld [vmem:[#allocation13 + $0x4] sm:$0xf]
        %v5859 = vld [vmem:[#allocation13 + $0x8] sm:$0xf]
        %v5860 = vld [vmem:[#allocation13 + $0xc] sm:$0xf]
        %v5861 = vld [vmem:[#allocation13 + $0x10] sm:$0xf]
        %v5862 = vld [vmem:[#allocation13 + $0x14] sm:$0xf]
        %v5863 = vld [vmem:[#allocation13 + $0x18] sm:$0xf]
        %v5864 = vld [vmem:[#allocation13 + $0x1c] sm:$0xf]
        %v5865 = vld [vmem:[#allocation13 + $0x20] sm:$0xf]
        %v5866 = vld [vmem:[#allocation13 + $0x24] sm:$0xf]
        %v5867 = vld [vmem:[#allocation13 + $0x28] sm:$0xf]
        %v5868 = vld [vmem:[#allocation13 + $0x2c] sm:$0xf]
        %v5869 = vld [vmem:[#allocation13 + $0x30] sm:$0xf]
        %v5870 = vld [vmem:[#allocation13 + $0x34] sm:$0xf]
        %v5871 = vld [vmem:[#allocation13 + $0x38] sm:$0xf]
        %v5872 = vld [vmem:[#allocation13 + $0x3c] sm:$0xf]
        %v5873 = vld [vmem:[#allocation13 + $0x40] sm:$0xf]
        %v5874 = vld [vmem:[#allocation13 + $0x44] sm:$0xf]
        %v5875 = vld [vmem:[#allocation13 + $0x48] sm:$0xf]
        %v5876 = vld [vmem:[#allocation13 + $0x4c] sm:$0xf]
        %v5897 = vunpack.c.l.b16 %v5857
        %v5898 = vunpack.c.l.b16 %v5858
        %v5899 = vunpack.c.l.b16 %v5859
        %v5900 = vunpack.c.l.b16 %v5860
        %v5901 = vunpack.c.l.b16 %v5861
        %v5902 = vunpack.c.l.b16 %v5862
        %v5903 = vunpack.c.l.b16 %v5863
        %v5904 = vunpack.c.l.b16 %v5864
        %v5905 = vunpack.c.l.b16 %v5865
        %v5906 = vunpack.c.l.b16 %v5866
        %v5907 = vunpack.c.l.b16 %v5867
        %v5908 = vunpack.c.l.b16 %v5868
        %v5909 = vunpack.c.l.b16 %v5869
        %v5910 = vunpack.c.l.b16 %v5870
        %v5911 = vunpack.c.l.b16 %v5871
        %v5912 = vunpack.c.l.b16 %v5872
        %v5913 = vunpack.c.l.b16 %v5873
        %v5914 = vunpack.c.l.b16 %v5874
        %v5915 = vunpack.c.l.b16 %v5875
        %v5916 = vunpack.c.l.b16 %v5876
        %v5917 = vpack.c.b16 %v5898, %v5897
        %v5918 = vpack.c.b16 %v5900, %v5899
        %v5919 = vpack.c.b16 %v5902, %v5901
        %v5920 = vpack.c.b16 %v5904, %v5903
        %v5921 = vpack.c.b16 %v5906, %v5905
        %v5922 = vpack.c.b16 %v5908, %v5907
        %v5923 = vpack.c.b16 %v5910, %v5909
        %v5924 = vpack.c.b16 %v5912, %v5911
        %v5925 = vpack.c.b16 %v5914, %v5913
        %v5926 = vpack.c.b16 %v5916, %v5915
        %v5938 = vsel %vm927, %v5826, 0
        %v5941 = vsel %vm927, %v5828, 0
        %v5944 = vsel %vm927, %v5830, 0
        %v5947 = vsel %vm927, %v5832, 0
        %v5950 = vsel %vm927, %v5834, 0
        %v5953 = vsel %vm927, %v5836, 0
        %v5956 = vsel %vm927, %v5838, 0
        %v5959 = vsel %vm927, %v5840, 0
        %v5962 = vsel %vm927, %v5842, 0
        %v5965 = vsel %vm927, %v5844, 0
        %v5968 = vsel %vm927, %v5846, 0
        %v5971 = vsel %vm927, %v5848, 0
        %v5974 = vsel %vm927, %v5850, 0
        %v5977 = vsel %vm927, %v5852, 0
        %v5980 = vsel %vm927, %v5854, 0
        %v5983 = vsel %vm927, %v5856, 0
        %5985 = vmatpush.bf16.msra.mxu0 %v5924
        %5986 = vmatpush.bf16.msra.mxu0 %v5923
        %5987 = vmatpush.bf16.msra.mxu0 %v5922
        %5988 = vmatpush.bf16.msra.mxu0 %v5921
        %5989 = vmatpush.bf16.msra.mxu0 %v5920
        %5990 = vmatpush.bf16.msra.mxu0 %v5919
        %5991 = vmatpush.bf16.msra.mxu0 %v5918
        %5992 = vmatpush.bf16.msra.mxu0 %v5917
        %5993 = vmatmul.bf16.gmra.mxu0 %v5825
        %v5994 = vpop.f32.mrf.mxu0
        %v5995 = vadd.f32 0.0, %v5994
        %v5996 = vpop.f32.mrf.mxu0
        %v5997 = vadd.f32 0.0, %v5996
        %5998 = vmatmul.bf16.gmra.mxu0 %v5827
        %v5999 = vpop.f32.mrf.mxu0
        %v6000 = vadd.f32 0.0, %v5999
        %v6001 = vpop.f32.mrf.mxu0
        %v6002 = vadd.f32 0.0, %v6001
        %6003 = vmatmul.bf16.gmra.mxu0 %v5829
        %v6004 = vpop.f32.mrf.mxu0
        %v6005 = vadd.f32 0.0, %v6004
        %v6006 = vpop.f32.mrf.mxu0
        %v6007 = vadd.f32 0.0, %v6006
        %6008 = vmatmul.bf16.gmra.mxu0 %v5831
        %v6009 = vpop.f32.mrf.mxu0
        %v6010 = vadd.f32 0.0, %v6009
        %v6011 = vpop.f32.mrf.mxu0
        %v6012 = vadd.f32 0.0, %v6011
        %6013 = vmatmul.bf16.gmra.mxu0 %v5833
        %v6014 = vpop.f32.mrf.mxu0
        %v6015 = vadd.f32 0.0, %v6014
        %v6016 = vpop.f32.mrf.mxu0
        %v6017 = vadd.f32 0.0, %v6016
        %6018 = vmatmul.bf16.gmra.mxu0 %v5835
        %v6019 = vpop.f32.mrf.mxu0
        %v6020 = vadd.f32 0.0, %v6019
        %v6021 = vpop.f32.mrf.mxu0
        %v6022 = vadd.f32 0.0, %v6021
        %6023 = vmatmul.bf16.gmra.mxu0 %v5837
        %v6024 = vpop.f32.mrf.mxu0
        %v6025 = vadd.f32 0.0, %v6024
        %v6026 = vpop.f32.mrf.mxu0
        %v6027 = vadd.f32 0.0, %v6026
        %6028 = vmatmul.bf16.gmra.mxu0 %v5839
        %v6029 = vpop.f32.mrf.mxu0
        %v6030 = vadd.f32 0.0, %v6029
        %v6031 = vpop.f32.mrf.mxu0
        %v6032 = vadd.f32 0.0, %v6031
        %6033 = vmatmul.bf16.gmra.mxu0 %v5841
        %v6034 = vpop.f32.mrf.mxu0
        %v6035 = vadd.f32 0.0, %v6034
        %v6036 = vpop.f32.mrf.mxu0
        %v6037 = vadd.f32 0.0, %v6036
        %6038 = vmatmul.bf16.gmra.mxu0 %v5843
        %v6039 = vpop.f32.mrf.mxu0
        %v6040 = vadd.f32 0.0, %v6039
        %v6041 = vpop.f32.mrf.mxu0
        %v6042 = vadd.f32 0.0, %v6041
        %6043 = vmatmul.bf16.gmra.mxu0 %v5845
        %v6044 = vpop.f32.mrf.mxu0
        %v6045 = vadd.f32 0.0, %v6044
        %v6046 = vpop.f32.mrf.mxu0
        %v6047 = vadd.f32 0.0, %v6046
        %6048 = vmatmul.bf16.gmra.mxu0 %v5847
        %v6049 = vpop.f32.mrf.mxu0
        %v6050 = vadd.f32 0.0, %v6049
        %v6051 = vpop.f32.mrf.mxu0
        %v6052 = vadd.f32 0.0, %v6051
        %6053 = vmatmul.bf16.gmra.mxu0 %v5849
        %v6054 = vpop.f32.mrf.mxu0
        %v6055 = vadd.f32 0.0, %v6054
        %v6056 = vpop.f32.mrf.mxu0
        %v6057 = vadd.f32 0.0, %v6056
        %6058 = vmatmul.bf16.gmra.mxu0 %v5851
        %v6059 = vpop.f32.mrf.mxu0
        %v6060 = vadd.f32 0.0, %v6059
        %v6061 = vpop.f32.mrf.mxu0
        %v6062 = vadd.f32 0.0, %v6061
        %6063 = vmatmul.bf16.gmra.mxu0 %v5853
        %v6064 = vpop.f32.mrf.mxu0
        %v6065 = vadd.f32 0.0, %v6064
        %v6066 = vpop.f32.mrf.mxu0
        %v6067 = vadd.f32 0.0, %v6066
        %6068 = vmatmul.bf16.gmra.mxu0 %v5855
        %v6069 = vpop.f32.mrf.mxu0
        %v6070 = vadd.f32 0.0, %v6069
        %v6071 = vpop.f32.mrf.mxu0
        %6072 = vdwg.mxu0
        %6073 = vmatpush.bf16.msra.mxu0 0
        %6074 = vmatpush.bf16.msra.mxu0 0
        %6075 = vmatpush.bf16.msra.mxu0 0
        %6076 = vmatpush.bf16.msra.mxu0 0
        %6077 = vmatpush.bf16.msra.mxu0 0
        %6078 = vmatpush.bf16.msra.mxu0 0
        %6079 = vmatpush.bf16.msra.mxu0 %v5926
        %6080 = vmatpush.bf16.msra.mxu0 %v5925
        %6081 = vmatmul.bf16.gmra.mxu0 %v5938
        %v6082 = vpop.f32.mrf.mxu0
        %v6083 = vadd.f32 %v5995, %v6082
        %v6084 = vpop.f32.mrf.mxu0
        %v6085 = vadd.f32 %v5997, %v6084
        %6086 = vmatmul.bf16.gmra.mxu0 %v5941
        %v6087 = vpop.f32.mrf.mxu0
        %v6088 = vadd.f32 %v6000, %v6087
        %v6089 = vpop.f32.mrf.mxu0
        %v6090 = vadd.f32 %v6002, %v6089
        %6091 = vmatmul.bf16.gmra.mxu0 %v5944
        %v6092 = vpop.f32.mrf.mxu0
        %v6093 = vadd.f32 %v6005, %v6092
        %v6094 = vpop.f32.mrf.mxu0
        %v6095 = vadd.f32 %v6007, %v6094
        %6096 = vmatmul.bf16.gmra.mxu0 %v5947
        %v6097 = vpop.f32.mrf.mxu0
        %v6098 = vadd.f32 %v6010, %v6097
        %v6099 = vpop.f32.mrf.mxu0
        %v6100 = vadd.f32 %v6012, %v6099
        %6101 = vmatmul.bf16.gmra.mxu0 %v5950
        %v6102 = vpop.f32.mrf.mxu0
        %v6103 = vadd.f32 %v6015, %v6102
        %v6104 = vpop.f32.mrf.mxu0
        %v6105 = vadd.f32 %v6017, %v6104
        %6106 = vmatmul.bf16.gmra.mxu0 %v5953
        %v6107 = vpop.f32.mrf.mxu0
        %v6108 = vadd.f32 %v6020, %v6107
        %v6109 = vpop.f32.mrf.mxu0
        %v6110 = vadd.f32 %v6022, %v6109
        %6111 = vmatmul.bf16.gmra.mxu0 %v5956
        %v6112 = vpop.f32.mrf.mxu0
        %v6113 = vadd.f32 %v6025, %v6112
        %v6114 = vpop.f32.mrf.mxu0
        %v6115 = vadd.f32 %v6027, %v6114
        %6116 = vmatmul.bf16.gmra.mxu0 %v5959
        %v6117 = vpop.f32.mrf.mxu0
        %v6118 = vadd.f32 %v6030, %v6117
        %v6119 = vpop.f32.mrf.mxu0
        %v6120 = vadd.f32 %v6032, %v6119
        %6121 = vmatmul.bf16.gmra.mxu0 %v5962
        %v6122 = vpop.f32.mrf.mxu0
        %v6123 = vadd.f32 %v6035, %v6122
        %v6124 = vpop.f32.mrf.mxu0
        %v6125 = vadd.f32 %v6037, %v6124
        %6126 = vmatmul.bf16.gmra.mxu0 %v5965
        %v6127 = vpop.f32.mrf.mxu0
        %v6128 = vadd.f32 %v6040, %v6127
        %v6129 = vpop.f32.mrf.mxu0
        %v6130 = vadd.f32 %v6042, %v6129
        %6131 = vmatmul.bf16.gmra.mxu0 %v5968
        %v6132 = vpop.f32.mrf.mxu0
        %v6133 = vadd.f32 %v6045, %v6132
        %v6134 = vpop.f32.mrf.mxu0
        %v6135 = vadd.f32 %v6047, %v6134
        %6136 = vmatmul.bf16.gmra.mxu0 %v5971
        %v6137 = vpop.f32.mrf.mxu0
        %v6138 = vadd.f32 %v6050, %v6137
        %v6139 = vpop.f32.mrf.mxu0
        %v6140 = vadd.f32 %v6052, %v6139
        %6141 = vmatmul.bf16.gmra.mxu0 %v5974
        %v6142 = vpop.f32.mrf.mxu0
        %v6143 = vadd.f32 %v6055, %v6142
        %v6144 = vpop.f32.mrf.mxu0
        %v6145 = vadd.f32 %v6057, %v6144
        %6146 = vmatmul.bf16.gmra.mxu0 %v5977
        %v6147 = vpop.f32.mrf.mxu0
        %v6148 = vadd.f32 %v6060, %v6147
        %v6149 = vpop.f32.mrf.mxu0
        %v6150 = vadd.f32 %v6062, %v6149
        %6151 = vmatmul.bf16.gmra.mxu0 %v5980
        %v6152 = vpop.f32.mrf.mxu0
        %v6153 = vadd.f32 %v6065, %v6152
        %v6154 = vpop.f32.mrf.mxu0
        %v6155 = vadd.f32 %v6067, %v6154
        %6156 = vmatmul.bf16.gmra.mxu0 %v5983
        %v6157 = vpop.f32.mrf.mxu0
        %v6158 = vadd.f32 %v6070, %v6157
        %v6159 = vpop.f32.mrf.mxu0
        %6160 = vdwg.mxu0
        %v6161 = vld [vmem:[#allocation14] sm:$0xf]
        %v6162 = vld [vmem:[#allocation14 + $0x4] sm:$0xf]
        %v6163 = vld [vmem:[#allocation14 + $0x8] sm:$0xf]
        %v6164 = vld [vmem:[#allocation14 + $0xc] sm:$0xf]
        %v6165 = vld [vmem:[#allocation14 + $0x10] sm:$0xf]
        %v6166 = vld [vmem:[#allocation14 + $0x14] sm:$0xf]
        %v6167 = vld [vmem:[#allocation14 + $0x18] sm:$0xf]
        %v6168 = vld [vmem:[#allocation14 + $0x1c] sm:$0xf]
        %v6169 = vld [vmem:[#allocation14 + $0x20] sm:$0xf]
        %v6170 = vld [vmem:[#allocation14 + $0x24] sm:$0xf]
        %v6171 = vld [vmem:[#allocation14 + $0x28] sm:$0xf]
        %v6172 = vld [vmem:[#allocation14 + $0x2c] sm:$0xf]
        %v6173 = vld [vmem:[#allocation14 + $0x30] sm:$0xf]
        %v6174 = vld [vmem:[#allocation14 + $0x34] sm:$0xf]
        %v6175 = vld [vmem:[#allocation14 + $0x38] sm:$0xf]
        %v6176 = vld [vmem:[#allocation14 + $0x3c] sm:$0xf]
        %v6177 = vld [vmem:[#allocation14 + $0x40] sm:$0xf]
        %v6178 = vld [vmem:[#allocation14 + $0x44] sm:$0xf]
        %v6179 = vld [vmem:[#allocation14 + $0x48] sm:$0xf]
        %v6180 = vld [vmem:[#allocation14 + $0x4c] sm:$0xf]
        %v6201 = vunpack.c.l.b16 %v6161
        %v6202 = vunpack.c.l.b16 %v6162
        %v6203 = vunpack.c.l.b16 %v6163
        %v6204 = vunpack.c.l.b16 %v6164
        %v6205 = vunpack.c.l.b16 %v6165
        %v6206 = vunpack.c.l.b16 %v6166
        %v6207 = vunpack.c.l.b16 %v6167
        %v6208 = vunpack.c.l.b16 %v6168
        %v6209 = vunpack.c.l.b16 %v6169
        %v6210 = vunpack.c.l.b16 %v6170
        %v6211 = vunpack.c.l.b16 %v6171
        %v6212 = vunpack.c.l.b16 %v6172
        %v6213 = vunpack.c.l.b16 %v6173
        %v6214 = vunpack.c.l.b16 %v6174
        %v6215 = vunpack.c.l.b16 %v6175
        %v6216 = vunpack.c.l.b16 %v6176
        %v6217 = vunpack.c.l.b16 %v6177
        %v6218 = vunpack.c.l.b16 %v6178
        %v6219 = vunpack.c.l.b16 %v6179
        %v6220 = vunpack.c.l.b16 %v6180
        %v6221 = vpack.c.b16 %v6202, %v6201
        %v6222 = vpack.c.b16 %v6204, %v6203
        %v6223 = vpack.c.b16 %v6206, %v6205
        %v6224 = vpack.c.b16 %v6208, %v6207
        %v6225 = vpack.c.b16 %v6210, %v6209
        %v6226 = vpack.c.b16 %v6212, %v6211
        %v6227 = vpack.c.b16 %v6214, %v6213
        %v6228 = vpack.c.b16 %v6216, %v6215
        %v6229 = vpack.c.b16 %v6218, %v6217
        %v6230 = vpack.c.b16 %v6220, %v6219
        %6241 = vmatpush.bf16.msra.mxu0 %v6228
        %6242 = vmatpush.bf16.msra.mxu0 %v6227
        %6243 = vmatpush.bf16.msra.mxu0 %v6226
        %6244 = vmatpush.bf16.msra.mxu0 %v6225
        %6245 = vmatpush.bf16.msra.mxu0 %v6224
        %6246 = vmatpush.bf16.msra.mxu0 %v6223
        %6247 = vmatpush.bf16.msra.mxu0 %v6222
        %6248 = vmatpush.bf16.msra.mxu0 %v6221
        %6249 = vmatmul.bf16.gmra.mxu0 %v5825
        %v6250 = vpop.f32.mrf.mxu0
        %v6251 = vadd.f32 0.0, %v6250
        %v6252 = vpop.f32.mrf.mxu0
        %v6253 = vadd.f32 0.0, %v6252
        %6254 = vmatmul.bf16.gmra.mxu0 %v5827
        %v6255 = vpop.f32.mrf.mxu0
        %v6256 = vadd.f32 0.0, %v6255
        %v6257 = vpop.f32.mrf.mxu0
        %v6258 = vadd.f32 0.0, %v6257
        %6259 = vmatmul.bf16.gmra.mxu0 %v5829
        %v6260 = vpop.f32.mrf.mxu0
        %v6261 = vadd.f32 0.0, %v6260
        %v6262 = vpop.f32.mrf.mxu0
        %v6263 = vadd.f32 0.0, %v6262
        %6264 = vmatmul.bf16.gmra.mxu0 %v5831
        %v6265 = vpop.f32.mrf.mxu0
        %v6266 = vadd.f32 0.0, %v6265
        %v6267 = vpop.f32.mrf.mxu0
        %v6268 = vadd.f32 0.0, %v6267
        %6269 = vmatmul.bf16.gmra.mxu0 %v5833
        %v6270 = vpop.f32.mrf.mxu0
        %v6271 = vadd.f32 0.0, %v6270
        %v6272 = vpop.f32.mrf.mxu0
        %v6273 = vadd.f32 0.0, %v6272
        %6274 = vmatmul.bf16.gmra.mxu0 %v5835
        %v6275 = vpop.f32.mrf.mxu0
        %v6276 = vadd.f32 0.0, %v6275
        %v6277 = vpop.f32.mrf.mxu0
        %v6278 = vadd.f32 0.0, %v6277
        %6279 = vmatmul.bf16.gmra.mxu0 %v5837
        %v6280 = vpop.f32.mrf.mxu0
        %v6281 = vadd.f32 0.0, %v6280
        %v6282 = vpop.f32.mrf.mxu0
        %v6283 = vadd.f32 0.0, %v6282
        %6284 = vmatmul.bf16.gmra.mxu0 %v5839
        %v6285 = vpop.f32.mrf.mxu0
        %v6286 = vadd.f32 0.0, %v6285
        %v6287 = vpop.f32.mrf.mxu0
        %v6288 = vadd.f32 0.0, %v6287
        %6289 = vmatmul.bf16.gmra.mxu0 %v5841
        %v6290 = vpop.f32.mrf.mxu0
        %v6291 = vadd.f32 0.0, %v6290
        %v6292 = vpop.f32.mrf.mxu0
        %v6293 = vadd.f32 0.0, %v6292
        %6294 = vmatmul.bf16.gmra.mxu0 %v5843
        %v6295 = vpop.f32.mrf.mxu0
        %v6296 = vadd.f32 0.0, %v6295
        %v6297 = vpop.f32.mrf.mxu0
        %v6298 = vadd.f32 0.0, %v6297
        %6299 = vmatmul.bf16.gmra.mxu0 %v5845
        %v6300 = vpop.f32.mrf.mxu0
        %v6301 = vadd.f32 0.0, %v6300
        %v6302 = vpop.f32.mrf.mxu0
        %v6303 = vadd.f32 0.0, %v6302
        %6304 = vmatmul.bf16.gmra.mxu0 %v5847
        %v6305 = vpop.f32.mrf.mxu0
        %v6306 = vadd.f32 0.0, %v6305
        %v6307 = vpop.f32.mrf.mxu0
        %v6308 = vadd.f32 0.0, %v6307
        %6309 = vmatmul.bf16.gmra.mxu0 %v5849
        %v6310 = vpop.f32.mrf.mxu0
        %v6311 = vadd.f32 0.0, %v6310
        %v6312 = vpop.f32.mrf.mxu0
        %v6313 = vadd.f32 0.0, %v6312
        %6314 = vmatmul.bf16.gmra.mxu0 %v5851
        %v6315 = vpop.f32.mrf.mxu0
        %v6316 = vadd.f32 0.0, %v6315
        %v6317 = vpop.f32.mrf.mxu0
        %v6318 = vadd.f32 0.0, %v6317
        %6319 = vmatmul.bf16.gmra.mxu0 %v5853
        %v6320 = vpop.f32.mrf.mxu0
        %v6321 = vadd.f32 0.0, %v6320
        %v6322 = vpop.f32.mrf.mxu0
        %v6323 = vadd.f32 0.0, %v6322
        %6324 = vmatmul.bf16.gmra.mxu0 %v5855
        %v6325 = vpop.f32.mrf.mxu0
        %v6326 = vadd.f32 0.0, %v6325
        %v6327 = vpop.f32.mrf.mxu0
        %6328 = vdwg.mxu0
        %6329 = vmatpush.bf16.msra.mxu0 0
        %6330 = vmatpush.bf16.msra.mxu0 0
        %6331 = vmatpush.bf16.msra.mxu0 0
        %6332 = vmatpush.bf16.msra.mxu0 0
        %6333 = vmatpush.bf16.msra.mxu0 0
        %6334 = vmatpush.bf16.msra.mxu0 0
        %6335 = vmatpush.bf16.msra.mxu0 %v6230
        %6336 = vmatpush.bf16.msra.mxu0 %v6229
        %6337 = vmatmul.bf16.gmra.mxu0 %v5938
        %v6338 = vpop.f32.mrf.mxu0
        %v6339 = vadd.f32 %v6251, %v6338
        %v6340 = vpop.f32.mrf.mxu0
        %v6341 = vadd.f32 %v6253, %v6340
        %6342 = vmatmul.bf16.gmra.mxu0 %v5941
        %v6343 = vpop.f32.mrf.mxu0
        %v6344 = vadd.f32 %v6256, %v6343
        %v6345 = vpop.f32.mrf.mxu0
        %v6346 = vadd.f32 %v6258, %v6345
        %6347 = vmatmul.bf16.gmra.mxu0 %v5944
        %v6348 = vpop.f32.mrf.mxu0
        %v6349 = vadd.f32 %v6261, %v6348
        %v6350 = vpop.f32.mrf.mxu0
        %v6351 = vadd.f32 %v6263, %v6350
        %6352 = vmatmul.bf16.gmra.mxu0 %v5947
        %v6353 = vpop.f32.mrf.mxu0
        %v6354 = vadd.f32 %v6266, %v6353
        %v6355 = vpop.f32.mrf.mxu0
        %v6356 = vadd.f32 %v6268, %v6355
        %6357 = vmatmul.bf16.gmra.mxu0 %v5950
        %v6358 = vpop.f32.mrf.mxu0
        %v6359 = vadd.f32 %v6271, %v6358
        %v6360 = vpop.f32.mrf.mxu0
        %v6361 = vadd.f32 %v6273, %v6360
        %6362 = vmatmul.bf16.gmra.mxu0 %v5953
        %v6363 = vpop.f32.mrf.mxu0
        %v6364 = vadd.f32 %v6276, %v6363
        %v6365 = vpop.f32.mrf.mxu0
        %v6366 = vadd.f32 %v6278, %v6365
        %6367 = vmatmul.bf16.gmra.mxu0 %v5956
        %v6368 = vpop.f32.mrf.mxu0
        %v6369 = vadd.f32 %v6281, %v6368
        %v6370 = vpop.f32.mrf.mxu0
        %v6371 = vadd.f32 %v6283, %v6370
        %6372 = vmatmul.bf16.gmra.mxu0 %v5959
        %v6373 = vpop.f32.mrf.mxu0
        %v6374 = vadd.f32 %v6286, %v6373
        %v6375 = vpop.f32.mrf.mxu0
        %v6376 = vadd.f32 %v6288, %v6375
        %6377 = vmatmul.bf16.gmra.mxu0 %v5962
        %v6378 = vpop.f32.mrf.mxu0
        %v6379 = vadd.f32 %v6291, %v6378
        %v6380 = vpop.f32.mrf.mxu0
        %v6381 = vadd.f32 %v6293, %v6380
        %6382 = vmatmul.bf16.gmra.mxu0 %v5965
        %v6383 = vpop.f32.mrf.mxu0
        %v6384 = vadd.f32 %v6296, %v6383
        %v6385 = vpop.f32.mrf.mxu0
        %v6386 = vadd.f32 %v6298, %v6385
        %6387 = vmatmul.bf16.gmra.mxu0 %v5968
        %v6388 = vpop.f32.mrf.mxu0
        %v6389 = vadd.f32 %v6301, %v6388
        %v6390 = vpop.f32.mrf.mxu0
        %v6391 = vadd.f32 %v6303, %v6390
        %6392 = vmatmul.bf16.gmra.mxu0 %v5971
        %v6393 = vpop.f32.mrf.mxu0
        %v6394 = vadd.f32 %v6306, %v6393
        %v6395 = vpop.f32.mrf.mxu0
        %v6396 = vadd.f32 %v6308, %v6395
        %6397 = vmatmul.bf16.gmra.mxu0 %v5974
        %v6398 = vpop.f32.mrf.mxu0
        %v6399 = vadd.f32 %v6311, %v6398
        %v6400 = vpop.f32.mrf.mxu0
        %v6401 = vadd.f32 %v6313, %v6400
        %6402 = vmatmul.bf16.gmra.mxu0 %v5977
        %v6403 = vpop.f32.mrf.mxu0
        %v6404 = vadd.f32 %v6316, %v6403
        %v6405 = vpop.f32.mrf.mxu0
        %v6406 = vadd.f32 %v6318, %v6405
        %6407 = vmatmul.bf16.gmra.mxu0 %v5980
        %v6408 = vpop.f32.mrf.mxu0
        %v6409 = vadd.f32 %v6321, %v6408
        %v6410 = vpop.f32.mrf.mxu0
        %v6411 = vadd.f32 %v6323, %v6410
        %6412 = vmatmul.bf16.gmra.mxu0 %v5983
        %v6413 = vpop.f32.mrf.mxu0
        %v6414 = vadd.f32 %v6326, %v6413
        %v6415 = vpop.f32.mrf.mxu0
        %6416 = vdwg.mxu0
        %v6417 = vmax.f32 %v6083, %v6339
        %v6418 = vmax.f32 %v6085, %v6341
        %v6419 = vmax.f32 %v6088, %v6344
        %v6420 = vmax.f32 %v6090, %v6346
        %v6421 = vmax.f32 %v6093, %v6349
        %v6422 = vmax.f32 %v6095, %v6351
        %v6423 = vmax.f32 %v6098, %v6354
        %v6424 = vmax.f32 %v6100, %v6356
        %v6425 = vmax.f32 %v6103, %v6359
        %v6426 = vmax.f32 %v6105, %v6361
        %v6427 = vmax.f32 %v6108, %v6364
        %v6428 = vmax.f32 %v6110, %v6366
        %v6429 = vmax.f32 %v6113, %v6369
        %v6430 = vmax.f32 %v6115, %v6371
        %v6431 = vmax.f32 %v6118, %v6374
        %v6432 = vmax.f32 %v6120, %v6376
        %v6433 = vmax.f32 %v6123, %v6379
        %v6434 = vmax.f32 %v6125, %v6381
        %v6435 = vmax.f32 %v6128, %v6384
        %v6436 = vmax.f32 %v6130, %v6386
        %v6437 = vmax.f32 %v6133, %v6389
        %v6438 = vmax.f32 %v6135, %v6391
        %v6439 = vmax.f32 %v6138, %v6394
        %v6440 = vmax.f32 %v6140, %v6396
        %v6441 = vmax.f32 %v6143, %v6399
        %v6442 = vmax.f32 %v6145, %v6401
        %v6443 = vmax.f32 %v6148, %v6404
        %v6444 = vmax.f32 %v6150, %v6406
        %v6445 = vmax.f32 %v6153, %v6409
        %v6446 = vmax.f32 %v6155, %v6411
        %v6447 = vmax.f32 %v6158, %v6414
        %v6448 = vpack.c.bf16 %v6418, %v6417
        %v6449 = vpack.c.bf16 %v6420, %v6419
        %v6450 = vpack.c.bf16 %v6422, %v6421
        %v6451 = vpack.c.bf16 %v6424, %v6423
        %v6452 = vpack.c.bf16 %v6426, %v6425
        %v6453 = vpack.c.bf16 %v6428, %v6427
        %v6454 = vpack.c.bf16 %v6430, %v6429
        %v6455 = vpack.c.bf16 %v6432, %v6431
        %v6456 = vpack.c.bf16 %v6434, %v6433
        %v6457 = vpack.c.bf16 %v6436, %v6435
        %v6458 = vpack.c.bf16 %v6438, %v6437
        %v6459 = vpack.c.bf16 %v6440, %v6439
        %v6460 = vpack.c.bf16 %v6442, %v6441
        %v6461 = vpack.c.bf16 %v6444, %v6443
        %v6462 = vpack.c.bf16 %v6445, %v6445
        %v6463 = vld [vmem:[#allocation16] sm:$0xf]
        %v6464 = vld [vmem:[#allocation16 + $0x4] sm:$0xf]
        %v6465 = vld [vmem:[#allocation16 + $0x8] sm:$0xf]
        %v6466 = vld [vmem:[#allocation16 + $0xc] sm:$0xf]
        %v6467 = vld [vmem:[#allocation16 + $0x10] sm:$0xf]
        %v6468 = vld [vmem:[#allocation16 + $0x14] sm:$0xf]
        %v6469 = vld [vmem:[#allocation16 + $0x18] sm:$0xf]
        %v6470 = vld [vmem:[#allocation16 + $0x1c] sm:$0xf]
        %v6471 = vld [vmem:[#allocation16 + $0x20] sm:$0xf]
        %v6472 = vld [vmem:[#allocation16 + $0x24] sm:$0xf]
        %s6473 = scalar_lea.vmem [#allocation16], 40
        %v6474 = vld [vmem:[%s6473] sm:$0xf]
        %v6475 = vld [vmem:[%s6473 + $0x4] sm:$0xf]
        %v6476 = vld [vmem:[%s6473 + $0x8] sm:$0xf]
        %v6477 = vld [vmem:[%s6473 + $0xc] sm:$0xf]
        %v6478 = vld [vmem:[%s6473 + $0x10] sm:$0xf]
        %v6479 = vld [vmem:[%s6473 + $0x14] sm:$0xf]
        %v6480 = vld [vmem:[%s6473 + $0x18] sm:$0xf]
        %v6481 = vld [vmem:[%s6473 + $0x1c] sm:$0xf]
        %v6482 = vld [vmem:[%s6473 + $0x20] sm:$0xf]
        %v6483 = vld [vmem:[%s6473 + $0x24] sm:$0xf]
        %v6499 = vrot.slane %v6448, 2
        %v6500 = vrot.slane %v6449, 2
        %v6501 = vsel %vm2131, %v6499, %v6500
        %v6502 = vrot.slane %v6450, 2
        %v6503 = vsel %vm2131, %v6500, %v6502
        %v6504 = vrot.slane %v6451, 2
        %v6505 = vsel %vm2131, %v6502, %v6504
        %v6506 = vrot.slane %v6452, 2
        %v6507 = vsel %vm2131, %v6504, %v6506
        %v6508 = vrot.slane %v6453, 2
        %v6509 = vsel %vm2131, %v6506, %v6508
        %v6510 = vrot.slane %v6454, 2
        %v6511 = vsel %vm2131, %v6508, %v6510
        %v6512 = vrot.slane %v6455, 2
        %v6513 = vsel %vm2131, %v6510, %v6512
        %v6514 = vrot.slane %v6456, 2
        %v6515 = vsel %vm2131, %v6512, %v6514
        %v6516 = vrot.slane %v6457, 2
        %v6517 = vsel %vm2131, %v6514, %v6516
        %v6518 = vrot.slane %v6458, 2
        %v6519 = vsel %vm2131, %v6516, %v6518
        %v6520 = vrot.slane %v6459, 2
        %v6521 = vsel %vm2131, %v6518, %v6520
        %v6522 = vrot.slane %v6460, 2
        %v6523 = vsel %vm2131, %v6520, %v6522
        %v6524 = vrot.slane %v6461, 2
        %v6525 = vsel %vm2131, %v6522, %v6524
        %v6526 = vrot.slane %v6462, 2
        %v6527 = vsel %vm2131, %v6524, %v6526
        %v6538 = vunpack.c.l.b16 %v6474
        %v6539 = vunpack.c.l.b16 %v6475
        %v6540 = vunpack.c.l.b16 %v6476
        %v6541 = vunpack.c.l.b16 %v6477
        %v6542 = vunpack.c.l.b16 %v6478
        %v6543 = vunpack.c.l.b16 %v6479
        %v6544 = vunpack.c.l.b16 %v6480
        %v6545 = vunpack.c.l.b16 %v6481
        %v6546 = vunpack.c.l.b16 %v6482
        %v6547 = vunpack.c.l.b16 %v6483
        %v6548 = vpack.c.b16 %v6539, %v6538
        %v6549 = vpack.c.b16 %v6541, %v6540
        %v6550 = vpack.c.b16 %v6543, %v6542
        %v6551 = vpack.c.b16 %v6545, %v6544
        %v6552 = vpack.c.b16 %v6547, %v6546
        %vm6558 = vcmask 654336
        %v6560 = vsel %vm6558, %v6501, 0
        %v6563 = vsel %vm6558, %v6503, 0
        %v6566 = vsel %vm6558, %v6505, 0
        %v6569 = vsel %vm6558, %v6507, 0
        %v6572 = vsel %vm6558, %v6509, 0
        %v6575 = vsel %vm6558, %v6511, 0
        %v6578 = vsel %vm6558, %v6513, 0
        %v6581 = vsel %vm6558, %v6515, 0
        %v6584 = vsel %vm6558, %v6517, 0
        %v6587 = vsel %vm6558, %v6519, 0
        %v6590 = vsel %vm6558, %v6521, 0
        %v6593 = vsel %vm6558, %v6523, 0
        %v6596 = vsel %vm6558, %v6525, 0
        %v6599 = vsel %vm6558, %v6527, 0
        %v6602 = vsel %vm6558, %v6526, 0
        %6604 = vmatpush.bf16.msra.mxu0 0
        %6605 = vmatpush.bf16.msra.mxu0 0
        %6606 = vmatpush.bf16.msra.mxu0 0
        %6607 = vmatpush.bf16.msra.mxu0 %v6552
        %6608 = vmatpush.bf16.msra.mxu0 %v6551
        %6609 = vmatpush.bf16.msra.mxu0 %v6550
        %6610 = vmatpush.bf16.msra.mxu0 %v6549
        %6611 = vmatpush.bf16.msra.mxu0 %v6548
        %6612 = vmatmul.bf16.gmra.mxu0 %v6560
        %v6613 = vpop.f32.mrf.mxu0
        %v6614 = vadd.f32 0.0, %v6613
        %v6615 = vpop.f32.mrf.mxu0
        %v6616 = vadd.f32 0.0, %v6615
        %6617 = vmatmul.bf16.gmra.mxu0 %v6563
        %v6618 = vpop.f32.mrf.mxu0
        %v6619 = vadd.f32 0.0, %v6618
        %v6620 = vpop.f32.mrf.mxu0
        %v6621 = vadd.f32 0.0, %v6620
        %6622 = vmatmul.bf16.gmra.mxu0 %v6566
        %v6623 = vpop.f32.mrf.mxu0
        %v6624 = vadd.f32 0.0, %v6623
        %v6625 = vpop.f32.mrf.mxu0
        %v6626 = vadd.f32 0.0, %v6625
        %6627 = vmatmul.bf16.gmra.mxu0 %v6569
        %v6628 = vpop.f32.mrf.mxu0
        %v6629 = vadd.f32 0.0, %v6628
        %v6630 = vpop.f32.mrf.mxu0
        %v6631 = vadd.f32 0.0, %v6630
        %6632 = vmatmul.bf16.gmra.mxu0 %v6572
        %v6633 = vpop.f32.mrf.mxu0
        %v6634 = vadd.f32 0.0, %v6633
        %v6635 = vpop.f32.mrf.mxu0
        %v6636 = vadd.f32 0.0, %v6635
        %6637 = vmatmul.bf16.gmra.mxu0 %v6575
        %v6638 = vpop.f32.mrf.mxu0
        %v6639 = vadd.f32 0.0, %v6638
        %v6640 = vpop.f32.mrf.mxu0
        %v6641 = vadd.f32 0.0, %v6640
        %6642 = vmatmul.bf16.gmra.mxu0 %v6578
        %v6643 = vpop.f32.mrf.mxu0
        %v6644 = vadd.f32 0.0, %v6643
        %v6645 = vpop.f32.mrf.mxu0
        %v6646 = vadd.f32 0.0, %v6645
        %6647 = vmatmul.bf16.gmra.mxu0 %v6581
        %v6648 = vpop.f32.mrf.mxu0
        %v6649 = vadd.f32 0.0, %v6648
        %v6650 = vpop.f32.mrf.mxu0
        %v6651 = vadd.f32 0.0, %v6650
        %6652 = vmatmul.bf16.gmra.mxu0 %v6584
        %v6653 = vpop.f32.mrf.mxu0
        %v6654 = vadd.f32 0.0, %v6653
        %v6655 = vpop.f32.mrf.mxu0
        %v6656 = vadd.f32 0.0, %v6655
        %6657 = vmatmul.bf16.gmra.mxu0 %v6587
        %v6658 = vpop.f32.mrf.mxu0
        %v6659 = vadd.f32 0.0, %v6658
        %v6660 = vpop.f32.mrf.mxu0
        %v6661 = vadd.f32 0.0, %v6660
        %6662 = vmatmul.bf16.gmra.mxu0 %v6590
        %v6663 = vpop.f32.mrf.mxu0
        %v6664 = vadd.f32 0.0, %v6663
        %v6665 = vpop.f32.mrf.mxu0
        %v6666 = vadd.f32 0.0, %v6665
        %6667 = vmatmul.bf16.gmra.mxu0 %v6593
        %v6668 = vpop.f32.mrf.mxu0
        %v6669 = vadd.f32 0.0, %v6668
        %v6670 = vpop.f32.mrf.mxu0
        %v6671 = vadd.f32 0.0, %v6670
        %6672 = vmatmul.bf16.gmra.mxu0 %v6596
        %v6673 = vpop.f32.mrf.mxu0
        %v6674 = vadd.f32 0.0, %v6673
        %v6675 = vpop.f32.mrf.mxu0
        %v6676 = vadd.f32 0.0, %v6675
        %6677 = vmatmul.bf16.gmra.mxu0 %v6599
        %v6678 = vpop.f32.mrf.mxu0
        %v6679 = vadd.f32 0.0, %v6678
        %v6680 = vpop.f32.mrf.mxu0
        %v6681 = vadd.f32 0.0, %v6680
        %6682 = vmatmul.bf16.gmra.mxu0 %v6602
        %v6683 = vpop.f32.mrf.mxu0
        %v6684 = vadd.f32 0.0, %v6683
        %v6685 = vpop.f32.mrf.mxu0
        %6686 = vdwg.mxu0
        %v6697 = vunpack.c.l.b16 %v6463
        %v6698 = vunpack.c.l.b16 %v6464
        %v6699 = vunpack.c.l.b16 %v6465
        %v6700 = vunpack.c.l.b16 %v6466
        %v6701 = vunpack.c.l.b16 %v6467
        %v6702 = vunpack.c.l.b16 %v6468
        %v6703 = vunpack.c.l.b16 %v6469
        %v6704 = vunpack.c.l.b16 %v6470
        %v6705 = vunpack.c.l.b16 %v6471
        %v6706 = vunpack.c.l.b16 %v6472
        %v6707 = vpack.c.b16 %v6698, %v6697
        %v6708 = vpack.c.b16 %v6700, %v6699
        %v6709 = vpack.c.b16 %v6702, %v6701
        %v6710 = vpack.c.b16 %v6704, %v6703
        %v6711 = vpack.c.b16 %v6706, %v6705
        %v6718 = vsel %vm6558, %v6448, 0
        %v6721 = vsel %vm6558, %v6449, 0
        %v6724 = vsel %vm6558, %v6450, 0
        %v6727 = vsel %vm6558, %v6451, 0
        %v6730 = vsel %vm6558, %v6452, 0
        %v6733 = vsel %vm6558, %v6453, 0
        %v6736 = vsel %vm6558, %v6454, 0
        %v6739 = vsel %vm6558, %v6455, 0
        %v6742 = vsel %vm6558, %v6456, 0
        %v6745 = vsel %vm6558, %v6457, 0
        %v6748 = vsel %vm6558, %v6458, 0
        %v6751 = vsel %vm6558, %v6459, 0
        %v6754 = vsel %vm6558, %v6460, 0
        %v6757 = vsel %vm6558, %v6461, 0
        %v6760 = vsel %vm6558, %v6462, 0
        %6762 = vmatpush.bf16.msra.mxu0 0
        %6763 = vmatpush.bf16.msra.mxu0 0
        %6764 = vmatpush.bf16.msra.mxu0 0
        %6765 = vmatpush.bf16.msra.mxu0 %v6711
        %6766 = vmatpush.bf16.msra.mxu0 %v6710
        %6767 = vmatpush.bf16.msra.mxu0 %v6709
        %6768 = vmatpush.bf16.msra.mxu0 %v6708
        %6769 = vmatpush.bf16.msra.mxu0 %v6707
        %6770 = vmatmul.bf16.gmra.mxu0 %v6718
        %v6771 = vpop.f32.mrf.mxu0
        %v6772 = vadd.f32 %v6614, %v6771
        %v6773 = vpop.f32.mrf.mxu0
        %v6774 = vadd.f32 %v6616, %v6773
        %6775 = vmatmul.bf16.gmra.mxu0 %v6721
        %v6776 = vpop.f32.mrf.mxu0
        %v6777 = vadd.f32 %v6619, %v6776
        %v6778 = vpop.f32.mrf.mxu0
        %v6779 = vadd.f32 %v6621, %v6778
        %6780 = vmatmul.bf16.gmra.mxu0 %v6724
        %v6781 = vpop.f32.mrf.mxu0
        %v6782 = vadd.f32 %v6624, %v6781
        %v6783 = vpop.f32.mrf.mxu0
        %v6784 = vadd.f32 %v6626, %v6783
        %6785 = vmatmul.bf16.gmra.mxu0 %v6727
        %v6786 = vpop.f32.mrf.mxu0
        %v6787 = vadd.f32 %v6629, %v6786
        %v6788 = vpop.f32.mrf.mxu0
        %v6789 = vadd.f32 %v6631, %v6788
        %6790 = vmatmul.bf16.gmra.mxu0 %v6730
        %v6791 = vpop.f32.mrf.mxu0
        %v6792 = vadd.f32 %v6634, %v6791
        %v6793 = vpop.f32.mrf.mxu0
        %v6794 = vadd.f32 %v6636, %v6793
        %6795 = vmatmul.bf16.gmra.mxu0 %v6733
        %v6796 = vpop.f32.mrf.mxu0
        %v6797 = vadd.f32 %v6639, %v6796
        %v6798 = vpop.f32.mrf.mxu0
        %v6799 = vadd.f32 %v6641, %v6798
        %6800 = vmatmul.bf16.gmra.mxu0 %v6736
        %v6801 = vpop.f32.mrf.mxu0
        %v6802 = vadd.f32 %v6644, %v6801
        %v6803 = vpop.f32.mrf.mxu0
        %v6804 = vadd.f32 %v6646, %v6803
        %6805 = vmatmul.bf16.gmra.mxu0 %v6739
        %v6806 = vpop.f32.mrf.mxu0
        %v6807 = vadd.f32 %v6649, %v6806
        %v6808 = vpop.f32.mrf.mxu0
        %v6809 = vadd.f32 %v6651, %v6808
        %6810 = vmatmul.bf16.gmra.mxu0 %v6742
        %v6811 = vpop.f32.mrf.mxu0
        %v6812 = vadd.f32 %v6654, %v6811
        %v6813 = vpop.f32.mrf.mxu0
        %v6814 = vadd.f32 %v6656, %v6813
        %6815 = vmatmul.bf16.gmra.mxu0 %v6745
        %v6816 = vpop.f32.mrf.mxu0
        %v6817 = vadd.f32 %v6659, %v6816
        %v6818 = vpop.f32.mrf.mxu0
        %v6819 = vadd.f32 %v6661, %v6818
        %6820 = vmatmul.bf16.gmra.mxu0 %v6748
        %v6821 = vpop.f32.mrf.mxu0
        %v6822 = vadd.f32 %v6664, %v6821
        %v6823 = vpop.f32.mrf.mxu0
        %v6824 = vadd.f32 %v6666, %v6823
        %6825 = vmatmul.bf16.gmra.mxu0 %v6751
        %v6826 = vpop.f32.mrf.mxu0
        %v6827 = vadd.f32 %v6669, %v6826
        %v6828 = vpop.f32.mrf.mxu0
        %v6829 = vadd.f32 %v6671, %v6828
        %6830 = vmatmul.bf16.gmra.mxu0 %v6754
        %v6831 = vpop.f32.mrf.mxu0
        %v6832 = vadd.f32 %v6674, %v6831
        %v6833 = vpop.f32.mrf.mxu0
        %v6834 = vadd.f32 %v6676, %v6833
        %6835 = vmatmul.bf16.gmra.mxu0 %v6757
        %v6836 = vpop.f32.mrf.mxu0
        %v6837 = vadd.f32 %v6679, %v6836
        %v6838 = vpop.f32.mrf.mxu0
        %v6839 = vadd.f32 %v6681, %v6838
        %6840 = vmatmul.bf16.gmra.mxu0 %v6760
        %v6841 = vpop.f32.mrf.mxu0
        %v6842 = vadd.f32 %v6684, %v6841
        %v6843 = vpop.f32.mrf.mxu0
        %6844 = vdwg.mxu0
        %v6845 = vpack.c.bf16 %v6419, %v6418
        %v6846 = vpack.c.bf16 %v6421, %v6420
        %v6847 = vpack.c.bf16 %v6423, %v6422
        %v6848 = vpack.c.bf16 %v6425, %v6424
        %v6849 = vpack.c.bf16 %v6427, %v6426
        %v6850 = vpack.c.bf16 %v6429, %v6428
        %v6851 = vpack.c.bf16 %v6431, %v6430
        %v6852 = vpack.c.bf16 %v6433, %v6432
        %v6853 = vpack.c.bf16 %v6435, %v6434
        %v6854 = vpack.c.bf16 %v6437, %v6436
        %v6855 = vpack.c.bf16 %v6439, %v6438
        %v6856 = vpack.c.bf16 %v6441, %v6440
        %v6857 = vpack.c.bf16 %v6443, %v6442
        %v6858 = vpack.c.bf16 %v6445, %v6444
        %v6859 = vpack.c.bf16 %v6446, %v6446
        %s6860 = scalar_lea.vmem [#allocation16], 80
        %v6861 = vld [vmem:[%s6860] sm:$0xf]
        %v6862 = vld [vmem:[%s6860 + $0x4] sm:$0xf]
        %v6863 = vld [vmem:[%s6860 + $0x8] sm:$0xf]
        %v6864 = vld [vmem:[%s6860 + $0xc] sm:$0xf]
        %v6865 = vld [vmem:[%s6860 + $0x10] sm:$0xf]
        %v6866 = vld [vmem:[%s6860 + $0x14] sm:$0xf]
        %v6867 = vld [vmem:[%s6860 + $0x18] sm:$0xf]
        %v6868 = vld [vmem:[%s6860 + $0x1c] sm:$0xf]
        %v6869 = vld [vmem:[%s6860 + $0x20] sm:$0xf]
        %v6870 = vld [vmem:[%s6860 + $0x24] sm:$0xf]
        %v6881 = vunpack.c.l.b16 %v6861
        %v6882 = vunpack.c.l.b16 %v6862
        %v6883 = vunpack.c.l.b16 %v6863
        %v6884 = vunpack.c.l.b16 %v6864
        %v6885 = vunpack.c.l.b16 %v6865
        %v6886 = vunpack.c.l.b16 %v6866
        %v6887 = vunpack.c.l.b16 %v6867
        %v6888 = vunpack.c.l.b16 %v6868
        %v6889 = vunpack.c.l.b16 %v6869
        %v6890 = vunpack.c.l.b16 %v6870
        %v6891 = vpack.c.b16 %v6882, %v6881
        %v6892 = vpack.c.b16 %v6884, %v6883
        %v6893 = vpack.c.b16 %v6886, %v6885
        %v6894 = vpack.c.b16 %v6888, %v6887
        %v6895 = vpack.c.b16 %v6890, %v6889
        %v6902 = vsel %vm6558, %v6845, 0
        %v6905 = vsel %vm6558, %v6846, 0
        %v6908 = vsel %vm6558, %v6847, 0
        %v6911 = vsel %vm6558, %v6848, 0
        %v6914 = vsel %vm6558, %v6849, 0
        %v6917 = vsel %vm6558, %v6850, 0
        %v6920 = vsel %vm6558, %v6851, 0
        %v6923 = vsel %vm6558, %v6852, 0
        %v6926 = vsel %vm6558, %v6853, 0
        %v6929 = vsel %vm6558, %v6854, 0
        %v6932 = vsel %vm6558, %v6855, 0
        %v6935 = vsel %vm6558, %v6856, 0
        %v6938 = vsel %vm6558, %v6857, 0
        %v6941 = vsel %vm6558, %v6858, 0
        %v6944 = vsel %vm6558, %v6859, 0
        %6946 = vmatpush.bf16.msra.mxu0 0
        %6947 = vmatpush.bf16.msra.mxu0 0
        %6948 = vmatpush.bf16.msra.mxu0 0
        %6949 = vmatpush.bf16.msra.mxu0 %v6895
        %6950 = vmatpush.bf16.msra.mxu0 %v6894
        %6951 = vmatpush.bf16.msra.mxu0 %v6893
        %6952 = vmatpush.bf16.msra.mxu0 %v6892
        %6953 = vmatpush.bf16.msra.mxu0 %v6891
        %6954 = vmatmul.bf16.gmra.mxu0 %v6902
        %v6955 = vpop.f32.mrf.mxu0
        %v6956 = vadd.f32 0.0, %v6955
        %v6957 = vpop.f32.mrf.mxu0
        %v6958 = vadd.f32 0.0, %v6957
        %6959 = vmatmul.bf16.gmra.mxu0 %v6905
        %v6960 = vpop.f32.mrf.mxu0
        %v6961 = vadd.f32 0.0, %v6960
        %v6962 = vpop.f32.mrf.mxu0
        %v6963 = vadd.f32 0.0, %v6962
        %6964 = vmatmul.bf16.gmra.mxu0 %v6908
        %v6965 = vpop.f32.mrf.mxu0
        %v6966 = vadd.f32 0.0, %v6965
        %v6967 = vpop.f32.mrf.mxu0
        %v6968 = vadd.f32 0.0, %v6967
        %6969 = vmatmul.bf16.gmra.mxu0 %v6911
        %v6970 = vpop.f32.mrf.mxu0
        %v6971 = vadd.f32 0.0, %v6970
        %v6972 = vpop.f32.mrf.mxu0
        %v6973 = vadd.f32 0.0, %v6972
        %6974 = vmatmul.bf16.gmra.mxu0 %v6914
        %v6975 = vpop.f32.mrf.mxu0
        %v6976 = vadd.f32 0.0, %v6975
        %v6977 = vpop.f32.mrf.mxu0
        %v6978 = vadd.f32 0.0, %v6977
        %6979 = vmatmul.bf16.gmra.mxu0 %v6917
        %v6980 = vpop.f32.mrf.mxu0
        %v6981 = vadd.f32 0.0, %v6980
        %v6982 = vpop.f32.mrf.mxu0
        %v6983 = vadd.f32 0.0, %v6982
        %6984 = vmatmul.bf16.gmra.mxu0 %v6920
        %v6985 = vpop.f32.mrf.mxu0
        %v6986 = vadd.f32 0.0, %v6985
        %v6987 = vpop.f32.mrf.mxu0
        %v6988 = vadd.f32 0.0, %v6987
        %6989 = vmatmul.bf16.gmra.mxu0 %v6923
        %v6990 = vpop.f32.mrf.mxu0
        %v6991 = vadd.f32 0.0, %v6990
        %v6992 = vpop.f32.mrf.mxu0
        %v6993 = vadd.f32 0.0, %v6992
        %6994 = vmatmul.bf16.gmra.mxu0 %v6926
        %v6995 = vpop.f32.mrf.mxu0
        %v6996 = vadd.f32 0.0, %v6995
        %v6997 = vpop.f32.mrf.mxu0
        %v6998 = vadd.f32 0.0, %v6997
        %6999 = vmatmul.bf16.gmra.mxu0 %v6929
        %v7000 = vpop.f32.mrf.mxu0
        %v7001 = vadd.f32 0.0, %v7000
        %v7002 = vpop.f32.mrf.mxu0
        %v7003 = vadd.f32 0.0, %v7002
        %7004 = vmatmul.bf16.gmra.mxu0 %v6932
        %v7005 = vpop.f32.mrf.mxu0
        %v7006 = vadd.f32 0.0, %v7005
        %v7007 = vpop.f32.mrf.mxu0
        %v7008 = vadd.f32 0.0, %v7007
        %7009 = vmatmul.bf16.gmra.mxu0 %v6935
        %v7010 = vpop.f32.mrf.mxu0
        %v7011 = vadd.f32 0.0, %v7010
        %v7012 = vpop.f32.mrf.mxu0
        %v7013 = vadd.f32 0.0, %v7012
        %7014 = vmatmul.bf16.gmra.mxu0 %v6938
        %v7015 = vpop.f32.mrf.mxu0
        %v7016 = vadd.f32 0.0, %v7015
        %v7017 = vpop.f32.mrf.mxu0
        %v7018 = vadd.f32 0.0, %v7017
        %7019 = vmatmul.bf16.gmra.mxu0 %v6941
        %v7020 = vpop.f32.mrf.mxu0
        %v7021 = vadd.f32 0.0, %v7020
        %v7022 = vpop.f32.mrf.mxu0
        %v7023 = vadd.f32 0.0, %v7022
        %7024 = vmatmul.bf16.gmra.mxu0 %v6944
        %v7025 = vpop.f32.mrf.mxu0
        %v7026 = vadd.f32 0.0, %v7025
        %v7027 = vpop.f32.mrf.mxu0
        %7028 = vdwg.mxu0
        %v7029 = vadd.f32 %v6772, %v6956
        %v7030 = vadd.f32 %v6774, %v6958
        %v7031 = vadd.f32 %v6777, %v6961
        %v7032 = vadd.f32 %v6779, %v6963
        %v7033 = vadd.f32 %v6782, %v6966
        %v7034 = vadd.f32 %v6784, %v6968
        %v7035 = vadd.f32 %v6787, %v6971
        %v7036 = vadd.f32 %v6789, %v6973
        %v7037 = vadd.f32 %v6792, %v6976
        %v7038 = vadd.f32 %v6794, %v6978
        %v7039 = vadd.f32 %v6797, %v6981
        %v7040 = vadd.f32 %v6799, %v6983
        %v7041 = vadd.f32 %v6802, %v6986
        %v7042 = vadd.f32 %v6804, %v6988
        %v7043 = vadd.f32 %v6807, %v6991
        %v7044 = vadd.f32 %v6809, %v6993
        %v7045 = vadd.f32 %v6812, %v6996
        %v7046 = vadd.f32 %v6814, %v6998
        %v7047 = vadd.f32 %v6817, %v7001
        %v7048 = vadd.f32 %v6819, %v7003
        %v7049 = vadd.f32 %v6822, %v7006
        %v7050 = vadd.f32 %v6824, %v7008
        %v7051 = vadd.f32 %v6827, %v7011
        %v7052 = vadd.f32 %v6829, %v7013
        %v7053 = vadd.f32 %v6832, %v7016
        %v7054 = vadd.f32 %v6834, %v7018
        %v7055 = vadd.f32 %v6837, %v7021
        %v7056 = vadd.f32 %v6839, %v7023
        %v7057 = vadd.f32 %v6842, %v7026
        %s7058 = scalar_lea.vmem [#allocation16], 120
        %v7059 = vld [vmem:[%s7058] sm:$0xf]
        %v7060 = vld [vmem:[%s7058 + $0x4] sm:$0xf]
        %v7061 = vld [vmem:[%s7058 + $0x8] sm:$0xf]
        %v7062 = vld [vmem:[%s7058 + $0xc] sm:$0xf]
        %v7063 = vld [vmem:[%s7058 + $0x10] sm:$0xf]
        %v7064 = vld [vmem:[%s7058 + $0x14] sm:$0xf]
        %v7065 = vld [vmem:[%s7058 + $0x18] sm:$0xf]
        %v7066 = vld [vmem:[%s7058 + $0x1c] sm:$0xf]
        %v7067 = vld [vmem:[%s7058 + $0x20] sm:$0xf]
        %v7068 = vld [vmem:[%s7058 + $0x24] sm:$0xf]
        %v7084 = vrot.slane %v6845, 2
        %v7085 = vrot.slane %v6846, 2
        %v7086 = vsel %vm2131, %v7084, %v7085
        %v7087 = vrot.slane %v6847, 2
        %v7088 = vsel %vm2131, %v7085, %v7087
        %v7089 = vrot.slane %v6848, 2
        %v7090 = vsel %vm2131, %v7087, %v7089
        %v7091 = vrot.slane %v6849, 2
        %v7092 = vsel %vm2131, %v7089, %v7091
        %v7093 = vrot.slane %v6850, 2
        %v7094 = vsel %vm2131, %v7091, %v7093
        %v7095 = vrot.slane %v6851, 2
        %v7096 = vsel %vm2131, %v7093, %v7095
        %v7097 = vrot.slane %v6852, 2
        %v7098 = vsel %vm2131, %v7095, %v7097
        %v7099 = vrot.slane %v6853, 2
        %v7100 = vsel %vm2131, %v7097, %v7099
        %v7101 = vrot.slane %v6854, 2
        %v7102 = vsel %vm2131, %v7099, %v7101
        %v7103 = vrot.slane %v6855, 2
        %v7104 = vsel %vm2131, %v7101, %v7103
        %v7105 = vrot.slane %v6856, 2
        %v7106 = vsel %vm2131, %v7103, %v7105
        %v7107 = vrot.slane %v6857, 2
        %v7108 = vsel %vm2131, %v7105, %v7107
        %v7109 = vrot.slane %v6858, 2
        %v7110 = vsel %vm2131, %v7107, %v7109
        %v7111 = vrot.slane %v6859, 2
        %v7112 = vsel %vm2131, %v7109, %v7111
        %v7123 = vunpack.c.l.b16 %v7059
        %v7124 = vunpack.c.l.b16 %v7060
        %v7125 = vunpack.c.l.b16 %v7061
        %v7126 = vunpack.c.l.b16 %v7062
        %v7127 = vunpack.c.l.b16 %v7063
        %v7128 = vunpack.c.l.b16 %v7064
        %v7129 = vunpack.c.l.b16 %v7065
        %v7130 = vunpack.c.l.b16 %v7066
        %v7131 = vunpack.c.l.b16 %v7067
        %v7132 = vunpack.c.l.b16 %v7068
        %v7133 = vpack.c.b16 %v7124, %v7123
        %v7134 = vpack.c.b16 %v7126, %v7125
        %v7135 = vpack.c.b16 %v7128, %v7127
        %v7136 = vpack.c.b16 %v7130, %v7129
        %v7137 = vpack.c.b16 %v7132, %v7131
        %v7144 = vsel %vm6558, %v7086, 0
        %v7147 = vsel %vm6558, %v7088, 0
        %v7150 = vsel %vm6558, %v7090, 0
        %v7153 = vsel %vm6558, %v7092, 0
        %v7156 = vsel %vm6558, %v7094, 0
        %v7159 = vsel %vm6558, %v7096, 0
        %v7162 = vsel %vm6558, %v7098, 0
        %v7165 = vsel %vm6558, %v7100, 0
        %v7168 = vsel %vm6558, %v7102, 0
        %v7171 = vsel %vm6558, %v7104, 0
        %v7174 = vsel %vm6558, %v7106, 0
        %v7177 = vsel %vm6558, %v7108, 0
        %v7180 = vsel %vm6558, %v7110, 0
        %v7183 = vsel %vm6558, %v7112, 0
        %v7186 = vsel %vm6558, %v7111, 0
        %7188 = vmatpush.bf16.msra.mxu0 0
        %7189 = vmatpush.bf16.msra.mxu0 0
        %7190 = vmatpush.bf16.msra.mxu0 0
        %7191 = vmatpush.bf16.msra.mxu0 %v7137
        %7192 = vmatpush.bf16.msra.mxu0 %v7136
        %7193 = vmatpush.bf16.msra.mxu0 %v7135
        %7194 = vmatpush.bf16.msra.mxu0 %v7134
        %7195 = vmatpush.bf16.msra.mxu0 %v7133
        %7196 = vmatmul.bf16.gmra.mxu0 %v7144
        %v7197 = vpop.f32.mrf.mxu0
        %v7198 = vadd.f32 0.0, %v7197
        %v7199 = vpop.f32.mrf.mxu0
        %v7200 = vadd.f32 0.0, %v7199
        %7201 = vmatmul.bf16.gmra.mxu0 %v7147
        %v7202 = vpop.f32.mrf.mxu0
        %v7203 = vadd.f32 0.0, %v7202
        %v7204 = vpop.f32.mrf.mxu0
        %v7205 = vadd.f32 0.0, %v7204
        %7206 = vmatmul.bf16.gmra.mxu0 %v7150
        %v7207 = vpop.f32.mrf.mxu0
        %v7208 = vadd.f32 0.0, %v7207
        %v7209 = vpop.f32.mrf.mxu0
        %v7210 = vadd.f32 0.0, %v7209
        %7211 = vmatmul.bf16.gmra.mxu0 %v7153
        %v7212 = vpop.f32.mrf.mxu0
        %v7213 = vadd.f32 0.0, %v7212
        %v7214 = vpop.f32.mrf.mxu0
        %v7215 = vadd.f32 0.0, %v7214
        %7216 = vmatmul.bf16.gmra.mxu0 %v7156
        %v7217 = vpop.f32.mrf.mxu0
        %v7218 = vadd.f32 0.0, %v7217
        %v7219 = vpop.f32.mrf.mxu0
        %v7220 = vadd.f32 0.0, %v7219
        %7221 = vmatmul.bf16.gmra.mxu0 %v7159
        %v7222 = vpop.f32.mrf.mxu0
        %v7223 = vadd.f32 0.0, %v7222
        %v7224 = vpop.f32.mrf.mxu0
        %v7225 = vadd.f32 0.0, %v7224
        %7226 = vmatmul.bf16.gmra.mxu0 %v7162
        %v7227 = vpop.f32.mrf.mxu0
        %v7228 = vadd.f32 0.0, %v7227
        %v7229 = vpop.f32.mrf.mxu0
        %v7230 = vadd.f32 0.0, %v7229
        %7231 = vmatmul.bf16.gmra.mxu0 %v7165
        %v7232 = vpop.f32.mrf.mxu0
        %v7233 = vadd.f32 0.0, %v7232
        %v7234 = vpop.f32.mrf.mxu0
        %v7235 = vadd.f32 0.0, %v7234
        %7236 = vmatmul.bf16.gmra.mxu0 %v7168
        %v7237 = vpop.f32.mrf.mxu0
        %v7238 = vadd.f32 0.0, %v7237
        %v7239 = vpop.f32.mrf.mxu0
        %v7240 = vadd.f32 0.0, %v7239
        %7241 = vmatmul.bf16.gmra.mxu0 %v7171
        %v7242 = vpop.f32.mrf.mxu0
        %v7243 = vadd.f32 0.0, %v7242
        %v7244 = vpop.f32.mrf.mxu0
        %v7245 = vadd.f32 0.0, %v7244
        %7246 = vmatmul.bf16.gmra.mxu0 %v7174
        %v7247 = vpop.f32.mrf.mxu0
        %v7248 = vadd.f32 0.0, %v7247
        %v7249 = vpop.f32.mrf.mxu0
        %v7250 = vadd.f32 0.0, %v7249
        %7251 = vmatmul.bf16.gmra.mxu0 %v7177
        %v7252 = vpop.f32.mrf.mxu0
        %v7253 = vadd.f32 0.0, %v7252
        %v7254 = vpop.f32.mrf.mxu0
        %v7255 = vadd.f32 0.0, %v7254
        %7256 = vmatmul.bf16.gmra.mxu0 %v7180
        %v7257 = vpop.f32.mrf.mxu0
        %v7258 = vadd.f32 0.0, %v7257
        %v7259 = vpop.f32.mrf.mxu0
        %v7260 = vadd.f32 0.0, %v7259
        %7261 = vmatmul.bf16.gmra.mxu0 %v7183
        %v7262 = vpop.f32.mrf.mxu0
        %v7263 = vadd.f32 0.0, %v7262
        %v7264 = vpop.f32.mrf.mxu0
        %v7265 = vadd.f32 0.0, %v7264
        %7266 = vmatmul.bf16.gmra.mxu0 %v7186
        %v7267 = vpop.f32.mrf.mxu0
        %v7268 = vadd.f32 0.0, %v7267
        %v7269 = vpop.f32.mrf.mxu0
        %7270 = vdwg.mxu0
        %v7271 = vadd.f32 %v7029, %v7198
        %v7272 = vadd.f32 %v7030, %v7200
        %v7273 = vadd.f32 %v7031, %v7203
        %v7274 = vadd.f32 %v7032, %v7205
        %v7275 = vadd.f32 %v7033, %v7208
        %v7276 = vadd.f32 %v7034, %v7210
        %v7277 = vadd.f32 %v7035, %v7213
        %v7278 = vadd.f32 %v7036, %v7215
        %v7279 = vadd.f32 %v7037, %v7218
        %v7280 = vadd.f32 %v7038, %v7220
        %v7281 = vadd.f32 %v7039, %v7223
        %v7282 = vadd.f32 %v7040, %v7225
        %v7283 = vadd.f32 %v7041, %v7228
        %v7284 = vadd.f32 %v7042, %v7230
        %v7285 = vadd.f32 %v7043, %v7233
        %v7286 = vadd.f32 %v7044, %v7235
        %v7287 = vadd.f32 %v7045, %v7238
        %v7288 = vadd.f32 %v7046, %v7240
        %v7289 = vadd.f32 %v7047, %v7243
        %v7290 = vadd.f32 %v7048, %v7245
        %v7291 = vadd.f32 %v7049, %v7248
        %v7292 = vadd.f32 %v7050, %v7250
        %v7293 = vadd.f32 %v7051, %v7253
        %v7294 = vadd.f32 %v7052, %v7255
        %v7295 = vadd.f32 %v7053, %v7258
        %v7296 = vadd.f32 %v7054, %v7260
        %v7297 = vadd.f32 %v7055, %v7263
        %v7298 = vadd.f32 %v7056, %v7265
        %v7299 = vadd.f32 %v7057, %v7268
        %v7300 = vpack.c.bf16 %v6446, %v6445
        %v7301 = vpack.c.bf16 %v6447, %v6447
        %s7302 = scalar_lea.vmem [#allocation16], 160
        %v7303 = vld [vmem:[%s7302] sm:$0xf]
        %v7304 = vld [vmem:[%s7302 + $0x4] sm:$0xf]
        %v7305 = vld [vmem:[%s7302 + $0x8] sm:$0xf]
        %v7306 = vld [vmem:[%s7302 + $0xc] sm:$0xf]
        %v7307 = vld [vmem:[%s7302 + $0x10] sm:$0xf]
        %v7308 = vld [vmem:[%s7302 + $0x14] sm:$0xf]
        %v7309 = vld [vmem:[%s7302 + $0x18] sm:$0xf]
        %v7310 = vld [vmem:[%s7302 + $0x1c] sm:$0xf]
        %v7311 = vld [vmem:[%s7302 + $0x20] sm:$0xf]
        %v7312 = vld [vmem:[%s7302 + $0x24] sm:$0xf]
        %v7323 = vunpack.c.l.b16 %v7303
        %v7324 = vunpack.c.l.b16 %v7304
        %v7325 = vunpack.c.l.b16 %v7305
        %v7326 = vunpack.c.l.b16 %v7306
        %v7327 = vunpack.c.l.b16 %v7307
        %v7328 = vunpack.c.l.b16 %v7308
        %v7329 = vunpack.c.l.b16 %v7309
        %v7330 = vunpack.c.l.b16 %v7310
        %v7331 = vunpack.c.l.b16 %v7311
        %v7332 = vunpack.c.l.b16 %v7312
        %v7333 = vpack.c.b16 %v7324, %v7323
        %v7334 = vpack.c.b16 %v7326, %v7325
        %v7335 = vpack.c.b16 %v7328, %v7327
        %v7336 = vpack.c.b16 %v7330, %v7329
        %v7337 = vpack.c.b16 %v7332, %v7331
        %v7344 = vsel %vm6558, %v7300, 0
        %v7347 = vsel %vm6558, %v7301, 0
        %7349 = vmatpush.bf16.msra.mxu0 0
        %7350 = vmatpush.bf16.msra.mxu0 0
        %7351 = vmatpush.bf16.msra.mxu0 0
        %7352 = vmatpush.bf16.msra.mxu0 %v7337
        %7353 = vmatpush.bf16.msra.mxu0 %v7336
        %7354 = vmatpush.bf16.msra.mxu0 %v7335
        %7355 = vmatpush.bf16.msra.mxu0 %v7334
        %7356 = vmatpush.bf16.msra.mxu0 %v7333
        %7357 = vmatmul.bf16.gmra.mxu0 %v6721
        %v7358 = vpop.f32.mrf.mxu0
        %v7359 = vadd.f32 0.0, %v7358
        %v7360 = vpop.f32.mrf.mxu0
        %v7361 = vadd.f32 0.0, %v7360
        %7362 = vmatmul.bf16.gmra.mxu0 %v6724
        %v7363 = vpop.f32.mrf.mxu0
        %v7364 = vadd.f32 0.0, %v7363
        %v7365 = vpop.f32.mrf.mxu0
        %v7366 = vadd.f32 0.0, %v7365
        %7367 = vmatmul.bf16.gmra.mxu0 %v6727
        %v7368 = vpop.f32.mrf.mxu0
        %v7369 = vadd.f32 0.0, %v7368
        %v7370 = vpop.f32.mrf.mxu0
        %v7371 = vadd.f32 0.0, %v7370
        %7372 = vmatmul.bf16.gmra.mxu0 %v6730
        %v7373 = vpop.f32.mrf.mxu0
        %v7374 = vadd.f32 0.0, %v7373
        %v7375 = vpop.f32.mrf.mxu0
        %v7376 = vadd.f32 0.0, %v7375
        %7377 = vmatmul.bf16.gmra.mxu0 %v6733
        %v7378 = vpop.f32.mrf.mxu0
        %v7379 = vadd.f32 0.0, %v7378
        %v7380 = vpop.f32.mrf.mxu0
        %v7381 = vadd.f32 0.0, %v7380
        %7382 = vmatmul.bf16.gmra.mxu0 %v6736
        %v7383 = vpop.f32.mrf.mxu0
        %v7384 = vadd.f32 0.0, %v7383
        %v7385 = vpop.f32.mrf.mxu0
        %v7386 = vadd.f32 0.0, %v7385
        %7387 = vmatmul.bf16.gmra.mxu0 %v6739
        %v7388 = vpop.f32.mrf.mxu0
        %v7389 = vadd.f32 0.0, %v7388
        %v7390 = vpop.f32.mrf.mxu0
        %v7391 = vadd.f32 0.0, %v7390
        %7392 = vmatmul.bf16.gmra.mxu0 %v6742
        %v7393 = vpop.f32.mrf.mxu0
        %v7394 = vadd.f32 0.0, %v7393
        %v7395 = vpop.f32.mrf.mxu0
        %v7396 = vadd.f32 0.0, %v7395
        %7397 = vmatmul.bf16.gmra.mxu0 %v6745
        %v7398 = vpop.f32.mrf.mxu0
        %v7399 = vadd.f32 0.0, %v7398
        %v7400 = vpop.f32.mrf.mxu0
        %v7401 = vadd.f32 0.0, %v7400
        %7402 = vmatmul.bf16.gmra.mxu0 %v6748
        %v7403 = vpop.f32.mrf.mxu0
        %v7404 = vadd.f32 0.0, %v7403
        %v7405 = vpop.f32.mrf.mxu0
        %v7406 = vadd.f32 0.0, %v7405
        %7407 = vmatmul.bf16.gmra.mxu0 %v6751
        %v7408 = vpop.f32.mrf.mxu0
        %v7409 = vadd.f32 0.0, %v7408
        %v7410 = vpop.f32.mrf.mxu0
        %v7411 = vadd.f32 0.0, %v7410
        %7412 = vmatmul.bf16.gmra.mxu0 %v6754
        %v7413 = vpop.f32.mrf.mxu0
        %v7414 = vadd.f32 0.0, %v7413
        %v7415 = vpop.f32.mrf.mxu0
        %v7416 = vadd.f32 0.0, %v7415
        %7417 = vmatmul.bf16.gmra.mxu0 %v6757
        %v7418 = vpop.f32.mrf.mxu0
        %v7419 = vadd.f32 0.0, %v7418
        %v7420 = vpop.f32.mrf.mxu0
        %v7421 = vadd.f32 0.0, %v7420
        %7422 = vmatmul.bf16.gmra.mxu0 %v7344
        %v7423 = vpop.f32.mrf.mxu0
        %v7424 = vadd.f32 0.0, %v7423
        %v7425 = vpop.f32.mrf.mxu0
        %v7426 = vadd.f32 0.0, %v7425
        %7427 = vmatmul.bf16.gmra.mxu0 %v7347
        %v7428 = vpop.f32.mrf.mxu0
        %v7429 = vadd.f32 0.0, %v7428
        %v7430 = vpop.f32.mrf.mxu0
        %7431 = vdwg.mxu0
        %v7432 = vadd.f32 %v7271, %v7359
        %v7433 = vadd.f32 %v7272, %v7361
        %v7434 = vadd.f32 %v7273, %v7364
        %v7435 = vadd.f32 %v7274, %v7366
        %v7436 = vadd.f32 %v7275, %v7369
        %v7437 = vadd.f32 %v7276, %v7371
        %v7438 = vadd.f32 %v7277, %v7374
        %v7439 = vadd.f32 %v7278, %v7376
        %v7440 = vadd.f32 %v7279, %v7379
        %v7441 = vadd.f32 %v7280, %v7381
        %v7442 = vadd.f32 %v7281, %v7384
        %v7443 = vadd.f32 %v7282, %v7386
        %v7444 = vadd.f32 %v7283, %v7389
        %v7445 = vadd.f32 %v7284, %v7391
        %v7446 = vadd.f32 %v7285, %v7394
        %v7447 = vadd.f32 %v7286, %v7396
        %v7448 = vadd.f32 %v7287, %v7399
        %v7449 = vadd.f32 %v7288, %v7401
        %v7450 = vadd.f32 %v7289, %v7404
        %v7451 = vadd.f32 %v7290, %v7406
        %v7452 = vadd.f32 %v7291, %v7409
        %v7453 = vadd.f32 %v7292, %v7411
        %v7454 = vadd.f32 %v7293, %v7414
        %v7455 = vadd.f32 %v7294, %v7416
        %v7456 = vadd.f32 %v7295, %v7419
        %v7457 = vadd.f32 %v7296, %v7421
        %v7458 = vadd.f32 %v7297, %v7424
        %v7459 = vadd.f32 %v7298, %v7426
        %v7460 = vadd.f32 %v7299, %v7429
        %v7461 = vld [vmem:[%s11] sm:$0xff]
        %v7462 = vpack.c.bf16 %v7433, %v7432
        %v7463 = vpack.c.bf16 %v7435, %v7434
        %v7464 = vpack.c.bf16 %v7437, %v7436
        %v7465 = vpack.c.bf16 %v7439, %v7438
        %v7466 = vpack.c.bf16 %v7441, %v7440
        %v7467 = vpack.c.bf16 %v7443, %v7442
        %v7468 = vpack.c.bf16 %v7445, %v7444
        %v7469 = vpack.c.bf16 %v7447, %v7446
        %v7470 = vpack.c.bf16 %v7449, %v7448
        %v7471 = vpack.c.bf16 %v7451, %v7450
        %v7472 = vpack.c.bf16 %v7453, %v7452
        %v7473 = vpack.c.bf16 %v7455, %v7454
        %v7474 = vpack.c.bf16 %v7457, %v7456
        %v7475 = vpack.c.bf16 %v7459, %v7458
        %v7476 = vpack.c.bf16 %v7460, %v7460
        %v7477 = vld [vmem:[#allocation17] sm:$0x1]
        %v7479 = vperm.slane %v7477, 0
        %v7482 = vunpack.c.l.b16 %v7461
        %v7483 = vunpack.c.h.b16 %v7461
        %v7484 = vpack.c.b16 %v7482, %v7482
        %v7485 = vpack.c.b16 %v7483, %v7483
        %vm7487 = vcmask 793600
        %v7489 = vsel %vm7487, %v7485, 0
        %vm7491 = vcmask 1040384
        %v7492 = vsel 0, 4294967295, 65535
        %v7493 = vsel %vm7491, %v7492, 0
        %v7495 = vand.u32 %v7476, %v7493
        %7497 = vmatpush.bf16.msra.mxu0 %v7469
        %7498 = vmatpush.bf16.msra.mxu0 %v7468
        %7499 = vmatpush.bf16.msra.mxu0 %v7467
        %7500 = vmatpush.bf16.msra.mxu0 %v7466
        %7501 = vmatpush.bf16.msra.mxu0 %v7465
        %7502 = vmatpush.bf16.msra.mxu0 %v7464
        %7503 = vmatpush.bf16.msra.mxu0 %v7463
        %7504 = vmatpush.bf16.msra.mxu0 %v7462
        %7505 = vmatmul.bf16.gmra.mxu0 %v7484
        %v7506 = vpop.f32.mrf.mxu0
        %v7507 = vadd.f32 %v7479, %v7506
        %v7508 = vpop.f32.mrf.mxu0
        %7509 = vdwg.mxu0
        %7510 = vmatpush.bf16.msra.mxu0 0
        %7511 = vmatpush.bf16.msra.mxu0 %v7495
        %7512 = vmatpush.bf16.msra.mxu0 %v7475
        %7513 = vmatpush.bf16.msra.mxu0 %v7474
        %7514 = vmatpush.bf16.msra.mxu0 %v7473
        %7515 = vmatpush.bf16.msra.mxu0 %v7472
        %7516 = vmatpush.bf16.msra.mxu0 %v7471
        %7517 = vmatpush.bf16.msra.mxu0 %v7470
        %7518 = vmatmul.bf16.gmra.mxu0 %v7489
        %v7519 = vpop.f32.mrf.mxu0
        %v7520 = vadd.f32 %v7507, %v7519
        %v7521 = vpop.f32.mrf.mxu0
        %7522 = vdwg.mxu0
        %v7523 = vmax.f32 %v7520, 0.0
        %v7524 = vpack.c.bf16 %v7523, %v7523
        %v7525 = vld [vmem:[#allocation19] sm:$0xf]
        %v7526 = vld [vmem:[#allocation19 + $0x4] sm:$0xf]
        %v7527 = vld [vmem:[#allocation19 + $0x8] sm:$0xf]
        %v7528 = vld [vmem:[#allocation19 + $0xc] sm:$0xf]
        %v7529 = vld [vmem:[#allocation19 + $0x10] sm:$0xf]
        %v7530 = vld [vmem:[#allocation19 + $0x14] sm:$0xf]
        %v7531 = vld [vmem:[#allocation19 + $0x18] sm:$0xf]
        %v7532 = vld [vmem:[#allocation19 + $0x1c] sm:$0xf]
        %v7533 = vld [vmem:[#allocation19 + $0x20] sm:$0xf]
        %v7534 = vld [vmem:[#allocation19 + $0x24] sm:$0xf]
        %v7535 = vld [vmem:[#allocation19 + $0x28] sm:$0xf]
        %v7536 = vld [vmem:[#allocation19 + $0x2c] sm:$0xf]
        %v7537 = vld [vmem:[#allocation19 + $0x30] sm:$0xf]
        %v7538 = vld [vmem:[#allocation19 + $0x34] sm:$0xf]
        %v7539 = vld [vmem:[#allocation19 + $0x38] sm:$0xf]
        %v7540 = vld [vmem:[%s13] sm:$0x1]
        %v7542 = vperm.slane %v7540, 0
        %v7559 = vunpack.c.l.b16 %v7525
        %v7560 = vunpack.c.l.b16 %v7526
        %v7561 = vunpack.c.l.b16 %v7527
        %v7562 = vunpack.c.l.b16 %v7528
        %v7563 = vunpack.c.l.b16 %v7529
        %v7564 = vunpack.c.l.b16 %v7530
        %v7565 = vunpack.c.l.b16 %v7531
        %v7566 = vunpack.c.l.b16 %v7532
        %v7567 = vunpack.c.l.b16 %v7533
        %v7568 = vunpack.c.l.b16 %v7534
        %v7569 = vunpack.c.l.b16 %v7535
        %v7570 = vunpack.c.l.b16 %v7536
        %v7571 = vunpack.c.l.b16 %v7537
        %v7572 = vunpack.c.l.b16 %v7538
        %v7573 = vunpack.c.l.b16 %v7539
        %v7574 = vpack.c.b16 %v7560, %v7559
        %v7575 = vpack.c.b16 %v7562, %v7561
        %v7576 = vpack.c.b16 %v7564, %v7563
        %v7577 = vpack.c.b16 %v7566, %v7565
        %v7578 = vpack.c.b16 %v7568, %v7567
        %v7579 = vpack.c.b16 %v7570, %v7569
        %v7580 = vpack.c.b16 %v7572, %v7571
        %v7581 = vpack.c.b16 %v7573, %v7573
        %vm7589 = vcmask 982016
        %v7591 = vsel %vm7589, %v7524, 0
        %v7594 = vsel %vm3091, %v7581, 0
        %7596 = vmatpush.bf16.msra.mxu0 %v7594
        %7597 = vmatpush.bf16.msra.mxu0 %v7580
        %7598 = vmatpush.bf16.msra.mxu0 %v7579
        %7599 = vmatpush.bf16.msra.mxu0 %v7578
        %7600 = vmatpush.bf16.msra.mxu0 %v7577
        %7601 = vmatpush.bf16.msra.mxu0 %v7576
        %7602 = vmatpush.bf16.msra.mxu0 %v7575
        %7603 = vmatpush.bf16.msra.mxu0 %v7574
        %7604 = vmatmul.bf16.gmra.mxu0 %v7591
        %v7605 = vpop.f32.mrf.mxu0
        %v7606 = vadd.f32 %v7542, %v7605
        %v7607 = vpop.f32.mrf.mxu0
        %7608 = vdwg.mxu0
        %v7609 = vmax.f32 %v7606, 0.0
        %v7610 = vpack.c.bf16 %v7609, %v7609
        %v7611 = vld [vmem:[#allocation20] sm:$0xf]
        %v7612 = vld [vmem:[#allocation20 + $0x4] sm:$0xf]
        %v7613 = vld [vmem:[#allocation20 + $0x8] sm:$0xf]
        %v7614 = vld [vmem:[#allocation20 + $0xc] sm:$0xf]
        %v7615 = vld [vmem:[#allocation20 + $0x10] sm:$0xf]
        %v7616 = vld [vmem:[#allocation20 + $0x14] sm:$0xf]
        %v7617 = vld [vmem:[#allocation20 + $0x18] sm:$0xf]
        %v7618 = vld [vmem:[#allocation20 + $0x1c] sm:$0xf]
        %v7619 = vld [vmem:[#allocation20 + $0x20] sm:$0xf]
        %v7620 = vld [vmem:[#allocation20 + $0x24] sm:$0xf]
        %v7621 = vld [vmem:[#allocation20 + $0x28] sm:$0x3]
        %v7622 = vld [vmem:[%s15] sm:$0x1]
        %v7624 = vperm.slane %v7622, 0
        %v7637 = vunpack.c.l.b16 %v7611
        %v7638 = vunpack.c.l.b16 %v7612
        %v7639 = vunpack.c.l.b16 %v7613
        %v7640 = vunpack.c.l.b16 %v7614
        %v7641 = vunpack.c.l.b16 %v7615
        %v7642 = vunpack.c.l.b16 %v7616
        %v7643 = vunpack.c.l.b16 %v7617
        %v7644 = vunpack.c.l.b16 %v7618
        %v7645 = vunpack.c.l.b16 %v7619
        %v7646 = vunpack.c.l.b16 %v7620
        %v7647 = vunpack.c.l.b16 %v7621
        %v7648 = vpack.c.b16 %v7638, %v7637
        %v7649 = vpack.c.b16 %v7640, %v7639
        %v7650 = vpack.c.b16 %v7642, %v7641
        %v7651 = vpack.c.b16 %v7644, %v7643
        %v7652 = vpack.c.b16 %v7646, %v7645
        %v7653 = vpack.c.b16 %v7647, %v7647
        %v7660 = vsel %vm3711, %v7610, 0
        %v7663 = vsel %vm3760, %v7653, 0
        %7665 = vmatpush.bf16.msra.mxu0 0
        %7666 = vmatpush.bf16.msra.mxu0 0
        %7667 = vmatpush.bf16.msra.mxu0 %v7663
        %7668 = vmatpush.bf16.msra.mxu0 %v7652
        %7669 = vmatpush.bf16.msra.mxu0 %v7651
        %7670 = vmatpush.bf16.msra.mxu0 %v7650
        %7671 = vmatpush.bf16.msra.mxu0 %v7649
        %7672 = vmatpush.bf16.msra.mxu0 %v7648
        %7673 = vmatmul.bf16.gmra.mxu0 %v7660
        %v7674 = vpop.f32.mrf.mxu0
        %v7675 = vadd.f32 %v7624, %v7674
        %v7676 = vpop.f32.mrf.mxu0
        %7677 = vdwg.mxu0
        %vm7678 = vcmask 80896
        %7679 = vst.msk [vmem:[%s719] sm:$0xff] %vm7678, %v7675
        %s7680 = sand.u32 %s388, 1
        %s7681 = scalar_lea.sflag [#allocation4], %s7680
        %s7682 = sand.u32 %s388, 1
        %s7683 = smul.addr %s7682, 8
        %s7684 = scalar_lea.vmem [#allocation22], %s7683
        // Predicated region
        $region133: #{fwd.1} parent=83 // pred_check
          %p7685 = pneg %p398
        $region134: #{fwd.1} parent=83 // pred_check_branch
          %7687 = sbr.rel (%p7685) target = $region136
        $region135: #{fwd.1} parent=83 // pred_region
          %7689 = vsyncadd %s7681, 0
          %s7690 = smul.addr %s39, 8
          %s7691 = scalar_lea.hbm %s16, %s7690
          %s7693 = sshll.u32 %s7684, 4
          %s7694 = int_to_ptr.vmem [resolvable:$true] %s7693
          %s7695 = sshll.u32 %s7691, 4
          %s7696 = int_to_ptr.hbm [resolvable:$true] %s7695
          %7698 = dma.vmem_to_hbm [thread:$0]  %s7694, 128, %s7696, %s7681
        $region136: #{fwd.1} parent=83 // pred_fallthru
          _
      $region84: #{fwd.1} parent=5 // pred_fallthru
        _
      %p7699 = scmp.le.s32.totalorder 2, %s34
      // Predicated region
      $region137: #{fwd.1} parent=5 // pred_check
        %p7700 = pneg %p7699
      $region138: #{fwd.1} parent=5 // pred_check_branch
        %7702 = sbr.rel (%p7700) target = $region140
      $region139: #{fwd.1} parent=5 // pred_region
        %s7703 = ssub.s32 %s34, 2
        // Predicated region
        $region141: #{fwd.1} parent=139 // pred_check
          %p7704 = pneg %p404
        $region142: #{fwd.1} parent=139 // pred_check_branch
          %7706 = sbr.rel (%p7704) target = $region144
        $region143: #{fwd.1} parent=139 // pred_region
          %s7707 = sand.u32 %s389, 1
          %s7708 = scalar_lea.sflag [#allocation4], %s7707
          %s7709 = sand.u32 %s389, 1
          %s7710 = smul.addr %s7709, 8
          %s7711 = scalar_lea.vmem [#allocation22], %s7710
          %7713 = dma.done %s7708, 128
        $region144: #{fwd.1} parent=139 // pred_fallthru
          _
      $region140: #{fwd.1} parent=5 // pred_fallthru
        _
    $region6: #{fwd.1} parent=1 // loop_footer
      %s38 = sadd.s32 1, %s34
    $region7: #{fwd.1} parent=1 // loop_footer_branch
      %33 = sbr.rel target = $region3
    $region8: #{fwd.1} parent=1 // loop_exit
      _
    %7714 = vsyncpa [#allocation3], 1
    %s7715 = scalar_lea.sflag [#allocation3], 1
    %7716 = vsyncpa %s7715, 1
    %7717 = vsyncpa [#allocation6], 1
    %7718 = vsyncpa [#allocation9], 1
    %7719 = vsyncpa [#allocation12], 1
    %7720 = vsyncpa [#allocation15], 1
    %7721 = vsyncpa [#allocation18], 1
    %7722 = vsyncpa [#allocation21], 1
    %7723 = vsyncpa [#allocation4], 1
    %s7724 = scalar_lea.sflag [#allocation4], 1
    %7725 = vsyncpa %s7724, 1

</llo_original>
